<compile_context>
chip_gen: v5e
topology: v5e:2x2
jax: 0.10.0
libtpu: 0.0.40
codegen_flags: <defaults>
</compile_context>

<pallas_src>
import functools

import jax
import jax.numpy as jnp
from jax.experimental import pallas as pl
from jax.experimental.pallas import tpu as pltpu


def _mm_classifier_kernel(h_ref, wv_ref, bv_ref, w1_ref, b1_ref,
                          w2_ref, b2_ref, out_ref, pooled_acc,
                          *, inv_seq_len):
    # Grid = (batch_tiles [parallel], seq_tiles [arbitrary / reduction]).
    s = pl.program_id(1)

    @pl.when(s == 0)
    def _():
        pooled_acc[...] = jnp.zeros_like(pooled_acc)

    # f32-accumulated partial sum of this (TB, TS, Hv) sequence chunk.
    # Padded sequence rows (if any) are zero, so they do not perturb the sum.
    pooled_acc[...] += jnp.sum(h_ref[...], axis=1, dtype=jnp.float32)

    @pl.when(s == pl.num_programs(1) - 1)
    def _():
        # torch.mean(vision_hidden_states, dim=1).float() -> (TB, Hv);
        # cast only the small pooled tensor to bf16 as the MXU lhs.
        pooled = (pooled_acc[...] * inv_seq_len).astype(jnp.bfloat16)

        # reduced = relu(vision_fc(pooled)) -> (TB, 2048), f32 accumulate.
        reduced = jnp.dot(pooled, wv_ref[...],
                          preferred_element_type=jnp.float32) + bv_ref[...]
        reduced = jnp.maximum(reduced, 0.0).astype(jnp.bfloat16)

        # x = relu(fc1(reduced)) -> (TB, 1024)
        x = jnp.dot(reduced, w1_ref[...],
                    preferred_element_type=jnp.float32) + b1_ref[...]
        x = jnp.maximum(x, 0.0).astype(jnp.bfloat16)

        # Dropout is identity in eval/inference mode.
        # TODO(synk): training-mode dropout would use pltpu.prng_seed +
        #             pltpu.prng_random_bits to build the keep mask in-kernel.

        # logits = fc2(x) -> (TB, padN) lane-dense padded output.
        logits = jnp.dot(x, w2_ref[...],
                         preferred_element_type=jnp.float32) + b2_ref[...]
        out_ref[...] = logits.astype(out_ref.dtype)


def multimodal_classifier_head(hidden_states, wv, bv, w1, b1, w2, b2,
                               *, batch_tile=64, seq_tile=32):
    """hidden_states: (B, S, Hv) float. Weights stored (in, out), biases (1, out).

    Returns logits (B, num_classes) in float32.
    """
    B, S, Hv = hidden_states.shape
    num_classes = w2.shape[1]

    # ---- dtype staging: bf16 weights (MXU inputs), f32 biases; the large
    # hidden_states tensor streams in its source dtype (no extra HBM pass). ----
    wv_b = wv.astype(jnp.bfloat16)
    w1_b = w1.astype(jnp.bfloat16)
    bv_f = bv.astype(jnp.float32)
    b1_f = b1.astype(jnp.float32)

    # fc2 padded to a lane-dense, num_classes-aware width (unmasked stores).
    padN = int(pl.cdiv(num_classes, 128)) * 128
    w2_p = jnp.zeros((w2.shape[0], padN), jnp.bfloat16)
    w2_p = w2_p.at[:, :num_classes].set(w2.astype(jnp.bfloat16))
    b2_p = jnp.zeros((1, padN), jnp.float32)
    b2_p = b2_p.at[:, :num_classes].set(b2.astype(jnp.float32))

    # ---- batch tiling (avoid padding the big tensor when possible) ----
    if B <= batch_tile:
        # Prefer two batch tiles (v7x dual-TC) when B allows it without padding.
        if B >= 16 and (B % 16) == 0:
            TB = B // 2
        else:
            TB = B
    else:
        TB = batch_tile
    n_b = int(pl.cdiv(B, TB))
    B_pad = n_b * TB
    h = hidden_states
    if B_pad != B:
        # TODO(synk): a masked final-tile store would avoid this extra HBM pass.
        h = jnp.pad(h, ((0, B_pad - B), (0, 0), (0, 0)))

    # ---- sequence tiling: reduction grid axis (last, "arbitrary") ----
    if S <= seq_tile:
        TS, n_s, S_pad = S, 1, S
    else:
        TS = seq_tile                      # multiple of 8 by construction
        n_s = int(pl.cdiv(S, TS))
        S_pad = n_s * TS
        if S_pad != S:
            h = jnp.pad(h, ((0, 0), (0, S_pad - S), (0, 0)))   # zero rows: sum-safe

    kernel = functools.partial(_mm_classifier_kernel,
                               inv_seq_len=1.0 / float(S))

    # ---- VMEM budget: 2x activation chunk (double-buffered) + 1x weights
    # (single-buffered) + outputs + pooled scratch; clamp <= 48 MiB (v7x-safe).
    itemsize = jnp.dtype(h.dtype).itemsize
    need = (2 * TB * TS * Hv * itemsize
            + (wv_b.size + w1_b.size + w2_p.size) * 2
            + (bv_f.size + b1_f.size + b2_p.size) * 4
            + 2 * TB * padN * 4
            + TB * Hv * 4)
    vmem_limit = int(min(max(need + (2 << 20), 32 << 20), 48 << 20))

    const_map = lambda b, s: (0, 0)

    def weight_spec(arr):
        # Constant index_map => block never changes; single buffer is enough.
        return pl.BlockSpec(arr.shape, const_map, pipeline_mode=pl.Buffered(1))

    out = pl.pallas_call(
        kernel,
        out_shape=jax.ShapeDtypeStruct((B_pad, padN), jnp.float32),
        grid=(n_b, n_s),
        in_specs=[
            # activations: one (TB, TS, Hv) chunk per grid step (auto pipelined)
            pl.BlockSpec((TB, TS, Hv), lambda b, s: (b, s, 0)),
            # weights / biases: resident in VMEM, single-buffered
            weight_spec(wv_b),
            weight_spec(bv_f),
            weight_spec(w1_b),
            weight_spec(b1_f),
            weight_spec(w2_p),
            weight_spec(b2_p),
        ],
        out_specs=pl.BlockSpec((TB, padN), lambda b, s: (b, 0)),
        scratch_shapes=[pltpu.VMEM((TB, Hv), jnp.float32)],
        compiler_params=pltpu.CompilerParams(
            dimension_semantics=("parallel", "arbitrary"),
            vmem_limit_bytes=vmem_limit),
    )(h, wv_b, bv_f, w1_b, b1_f, w2_p, b2_p)

    return out[:B, :num_classes]


def _init_linear(key, fan_in, fan_out):
    """Deterministic Linear params, stored as (in, out) + (1, out) bias."""
    kw, kb = jax.random.split(key)
    bound = 1.0 / jnp.sqrt(fan_in)
    w = jax.random.uniform(kw, (fan_in, fan_out), jnp.float32, -bound, bound)
    b = jax.random.uniform(kb, (1, fan_out), jnp.float32, -bound, bound)
    return w, b


if __name__ == "__main__":
    # Small, module-consistent shapes.
    B = 2                      # batch
    S = 8                      # vision sequence length (num patches + cls)
    VISION_HIDDEN = 128        # vision_hidden_size (config-dependent)
    D_VFC = 2048               # vision_fc output
    D_FC1 = 1024               # fc1 output
    NUM_CLASSES = 2

    key = jax.random.PRNGKey(0)
    k_h, k_vfc, k_fc1, k_fc2 = jax.random.split(key, 4)

    # Stand-in for blip_model.vision_model(...).last_hidden_state
    # TODO(synk): the frozen BLIP-2 ViT itself is an external pretrained model
    #             and is not reimplemented here; its output is the kernel input.
    hidden_states = jax.random.normal(k_h, (B, S, VISION_HIDDEN), jnp.float32)

    wv, bv = _init_linear(k_vfc, VISION_HIDDEN, D_VFC)   # vision_fc
    w1, b1 = _init_linear(k_fc1, D_VFC, D_FC1)           # fc1
    w2, b2 = _init_linear(k_fc2, D_FC1, NUM_CLASSES)     # fc2

    logits = multimodal_classifier_head(hidden_states, wv, bv, w1, b1, w2, b2)
    logits = jax.block_until_ready(logits)

    # Pure-JAX f32 reference (module semantics, eval-mode dropout = identity).
    pooled_ref = jnp.mean(hidden_states, axis=1)
    red_ref = jnp.maximum(pooled_ref @ wv + bv, 0.0)
    x_ref = jnp.maximum(red_ref @ w1 + b1, 0.0)
    logits_ref = x_ref @ w2 + b2

    assert logits.shape == (B, NUM_CLASSES)
    # bf16 weights + f32 accumulation: ~1e-3 expected error on these logits.
    assert jnp.allclose(logits, logits_ref, atol=2e-2, rtol=2e-2)
    print("KERNEL_OK")
</pallas_src>

<mosaic_0001>
module attributes {stable_mosaic.version = 11 : i64} {
  func.func @_mm_classifier_kernel(%arg0: i32, %arg1: i32, %arg2: memref<2x8x128xf32, #tpu.memory_space<vmem>>, %arg3: memref<128x2048xbf16, #tpu.memory_space<vmem>>, %arg4: memref<1x2048xf32, #tpu.memory_space<vmem>>, %arg5: memref<2048x1024xbf16, #tpu.memory_space<vmem>>, %arg6: memref<1x1024xf32, #tpu.memory_space<vmem>>, %arg7: memref<1024x128xbf16, #tpu.memory_space<vmem>>, %arg8: memref<1x128xf32, #tpu.memory_space<vmem>>, %arg9: memref<2x128xf32, #tpu.memory_space<vmem>>, %arg10: memref<2x128xf32, #tpu.memory_space<vmem>>) attributes {dimension_semantics = [#tpu.dimension_semantics<parallel>, #tpu.dimension_semantics<arbitrary>], iteration_bounds = array<i64: 1, 1>, scalar_prefetch = 0 : i64, scratch_operands = 1 : i64, tpu.core_type = #tpu.core_type<tc>, window_params = [{transform_indices = @transform_0, window_bounds = array<i64: 2, 8, 128>}, {pipeline_mode = #tpu.pipeline_mode<synchronous>, transform_indices = @transform_1, window_bounds = array<i64: 128, 2048>}, {pipeline_mode = #tpu.pipeline_mode<synchronous>, transform_indices = @transform_2, window_bounds = array<i64: 1, 2048>}, {pipeline_mode = #tpu.pipeline_mode<synchronous>, transform_indices = @transform_3, window_bounds = array<i64: 2048, 1024>}, {pipeline_mode = #tpu.pipeline_mode<synchronous>, transform_indices = @transform_4, window_bounds = array<i64: 1, 1024>}, {pipeline_mode = #tpu.pipeline_mode<synchronous>, transform_indices = @transform_5, window_bounds = array<i64: 1024, 128>}, {pipeline_mode = #tpu.pipeline_mode<synchronous>, transform_indices = @transform_6, window_bounds = array<i64: 1, 128>}, {transform_indices = @transform_7, window_bounds = array<i64: 2, 128>}]} {
    %c0_i32 = arith.constant 0 : i32
    %0 = arith.cmpi eq, %arg1, %c0_i32 : i32
    %1 = arith.extui %0 : i1 to i32
    %c0_i32_0 = arith.constant 0 : i32
    %2 = arith.cmpi ne, %1, %c0_i32_0 : i32
    scf.if %2 {
      %cst_9 = arith.constant 0.000000e+00 : f32
      %11 = vector.broadcast %cst_9 : f32 to vector<2x128xf32>
      %c0_10 = arith.constant 0 : index
      %c0_11 = arith.constant 0 : index
      %12 = vector.load %arg10[%c0_10, %c0_11] : memref<2x128xf32, #tpu.memory_space<vmem>>, vector<2x128xf32>
      tpu.vector_store %arg10[%c0_10, %c0_11], %11 {strides = array<i32>} : memref<2x128xf32, #tpu.memory_space<vmem>>, vector<2x128xf32>,
    } else {
    }
    %c0 = arith.constant 0 : index
    %c0_1 = arith.constant 0 : index
    %3 = vector.load %arg10[%c0, %c0_1] : memref<2x128xf32, #tpu.memory_space<vmem>>, vector<2x128xf32>
    %c0_2 = arith.constant 0 : index
    %c0_3 = arith.constant 0 : index
    %c0_4 = arith.constant 0 : index
    %4 = vector.load %arg2[%c0_2, %c0_3, %c0_4] : memref<2x8x128xf32, #tpu.memory_space<vmem>>, vector<2x8x128xf32>
    %cst = arith.constant dense<0.000000e+00> : vector<2x128xf32>
    %5 = vector.multi_reduction <add>, %4, %cst [1] : vector<2x8x128xf32> to vector<2x128xf32>
    %6 = arith.addf %3, %5 : vector<2x128xf32>
    %c0_5 = arith.constant 0 : index
    %c0_6 = arith.constant 0 : index
    %7 = vector.load %arg10[%c0_5, %c0_6] : memref<2x128xf32, #tpu.memory_space<vmem>>, vector<2x128xf32>
    tpu.vector_store %arg10[%c0_5, %c0_6], %6 {strides = array<i32>} : memref<2x128xf32, #tpu.memory_space<vmem>>, vector<2x128xf32>,
    %c0_i32_7 = arith.constant 0 : i32
    %8 = arith.cmpi eq, %arg1, %c0_i32_7 : i32
    %9 = arith.extui %8 : i1 to i32
    %c0_i32_8 = arith.constant 0 : i32
    %10 = arith.cmpi ne, %9, %c0_i32_8 : i32
    scf.if %10 {
      %c0_9 = arith.constant 0 : index
      %c0_10 = arith.constant 0 : index
      %11 = vector.load %arg10[%c0_9, %c0_10] : memref<2x128xf32, #tpu.memory_space<vmem>>, vector<2x128xf32>
      %cst_11 = arith.constant 1.250000e-01 : f32
      %12 = vector.broadcast %cst_11 : f32 to vector<2x128xf32>
      %13 = arith.mulf %11, %12 : vector<2x128xf32>
      %14 = arith.truncf %13 : vector<2x128xf32> to vector<2x128xbf16>
      %c0_12 = arith.constant 0 : index
      %c0_13 = arith.constant 0 : index
      %15 = vector.load %arg3[%c0_12, %c0_13] : memref<128x2048xbf16, #tpu.memory_space<vmem>>, vector<128x2048xbf16>
      %cst_14 = arith.constant dense<0.000000e+00> : vector<2x2048xf32>
      %16 = tpu.matmul %14, %15, %cst_14 {dimension_numbers = #tpu.dot_dimension_numbers<[1], [0], [0], [1], [0, 0, 1, 1], [], []>} : vector<2x128xbf16>, vector<128x2048xbf16>, vector<2x2048xf32> -> vector<2x2048xf32>
      %c0_15 = arith.constant 0 : index
      %c0_16 = arith.constant 0 : index
      %17 = vector.load %arg4[%c0_15, %c0_16] : memref<1x2048xf32, #tpu.memory_space<vmem>>, vector<1x2048xf32>
      %18 = vector.broadcast %17 : vector<1x2048xf32> to vector<2x2048xf32>
      %19 = arith.addf %16, %18 : vector<2x2048xf32>
      %cst_17 = arith.constant 0.000000e+00 : f32
      %20 = vector.broadcast %cst_17 : f32 to vector<2x2048xf32>
      %21 = arith.maximumf %19, %20 : vector<2x2048xf32>
      %22 = arith.truncf %21 : vector<2x2048xf32> to vector<2x2048xbf16>
      %c0_18 = arith.constant 0 : index
      %c0_19 = arith.constant 0 : index
      %23 = vector.load %arg5[%c0_18, %c0_19] : memref<2048x1024xbf16, #tpu.memory_space<vmem>>, vector<2048x1024xbf16>
      %cst_20 = arith.constant dense<0.000000e+00> : vector<2x1024xf32>
      %24 = tpu.matmul %22, %23, %cst_20 {dimension_numbers = #tpu.dot_dimension_numbers<[1], [0], [0], [1], [0, 0, 1, 1], [], []>} : vector<2x2048xbf16>, vector<2048x1024xbf16>, vector<2x1024xf32> -> vector<2x1024xf32>
      %c0_21 = arith.constant 0 : index
      %c0_22 = arith.constant 0 : index
      %25 = vector.load %arg6[%c0_21, %c0_22] : memref<1x1024xf32, #tpu.memory_space<vmem>>, vector<1x1024xf32>
      %26 = vector.broadcast %25 : vector<1x1024xf32> to vector<2x1024xf32>
      %27 = arith.addf %24, %26 : vector<2x1024xf32>
      %cst_23 = arith.constant 0.000000e+00 : f32
      %28 = vector.broadcast %cst_23 : f32 to vector<2x1024xf32>
      %29 = arith.maximumf %27, %28 : vector<2x1024xf32>
      %30 = arith.truncf %29 : vector<2x1024xf32> to vector<2x1024xbf16>
      %c0_24 = arith.constant 0 : index
      %c0_25 = arith.constant 0 : index
      %31 = vector.load %arg7[%c0_24, %c0_25] : memref<1024x128xbf16, #tpu.memory_space<vmem>>, vector<1024x128xbf16>
      %cst_26 = arith.constant dense<0.000000e+00> : vector<2x128xf32>
      %32 = tpu.matmul %30, %31, %cst_26 {dimension_numbers = #tpu.dot_dimension_numbers<[1], [0], [0], [1], [0, 0, 1, 1], [], []>} : vector<2x1024xbf16>, vector<1024x128xbf16>, vector<2x128xf32> -> vector<2x128xf32>
      %c0_27 = arith.constant 0 : index
      %c0_28 = arith.constant 0 : index
      %33 = vector.load %arg8[%c0_27, %c0_28] : memref<1x128xf32, #tpu.memory_space<vmem>>, vector<1x128xf32>
      %34 = vector.broadcast %33 : vector<1x128xf32> to vector<2x128xf32>
      %35 = arith.addf %32, %34 : vector<2x128xf32>
      %c0_29 = arith.constant 0 : index
      %c0_30 = arith.constant 0 : index
      %36 = vector.load %arg9[%c0_29, %c0_30] : memref<2x128xf32, #tpu.memory_space<vmem>>, vector<2x128xf32>
      tpu.vector_store %arg9[%c0_29, %c0_30], %35 {strides = array<i32>} : memref<2x128xf32, #tpu.memory_space<vmem>>, vector<2x128xf32>,
    } else {
    }
    return
  }
  func.func @transform_0(%arg0: i32, %arg1: i32) -> (i32, i32, i32) {
    %c0_i32 = arith.constant 0 : i32
    %c0_i32_0 = arith.constant 0 : i32
    return %arg0, %arg1, %c0_i32 : i32, i32, i32
  }
  func.func @transform_1(%arg0: i32, %arg1: i32) -> (i32, i32) {
    %c0_i32 = arith.constant 0 : i32
    %c0_i32_0 = arith.constant 0 : i32
    %c0_i32_1 = arith.constant 0 : i32
    return %c0_i32, %c0_i32_0 : i32, i32
  }
  func.func @transform_2(%arg0: i32, %arg1: i32) -> (i32, i32) {
    %c0_i32 = arith.constant 0 : i32
    %c0_i32_0 = arith.constant 0 : i32
    %c0_i32_1 = arith.constant 0 : i32
    return %c0_i32, %c0_i32_0 : i32, i32
  }
  func.func @transform_3(%arg0: i32, %arg1: i32) -> (i32, i32) {
    %c0_i32 = arith.constant 0 : i32
    %c0_i32_0 = arith.constant 0 : i32
    %c0_i32_1 = arith.constant 0 : i32
    return %c0_i32, %c0_i32_0 : i32, i32
  }
  func.func @transform_4(%arg0: i32, %arg1: i32) -> (i32, i32) {
    %c0_i32 = arith.constant 0 : i32
    %c0_i32_0 = arith.constant 0 : i32
    %c0_i32_1 = arith.constant 0 : i32
    return %c0_i32, %c0_i32_0 : i32, i32
  }
  func.func @transform_5(%arg0: i32, %arg1: i32) -> (i32, i32) {
    %c0_i32 = arith.constant 0 : i32
    %c0_i32_0 = arith.constant 0 : i32
    %c0_i32_1 = arith.constant 0 : i32
    return %c0_i32, %c0_i32_0 : i32, i32
  }
  func.func @transform_6(%arg0: i32, %arg1: i32) -> (i32, i32) {
    %c0_i32 = arith.constant 0 : i32
    %c0_i32_0 = arith.constant 0 : i32
    %c0_i32_1 = arith.constant 0 : i32
    return %c0_i32, %c0_i32_0 : i32, i32
  }
  func.func @transform_7(%arg0: i32, %arg1: i32) -> (i32, i32) {
    %c0_i32 = arith.constant 0 : i32
    %c0_i32_0 = arith.constant 0 : i32
    return %arg0, %c0_i32 : i32, i32
  }
}

</mosaic_0001>

<llo_original>
// kernel: tpu_custom_call.1
$region0: #{tpu_custom_call.1}
  #allocation0 [shape = 'u32[]', space=smem, size = 0x4, offset = 0x4, fixed_abs, tag = 'smem constant byte address 0x4 - core index']
  #allocation1 [shape = 'u32[72,128]{1,0:T(1,128)}', space=vmem, size = 0x9000, scoped, tag = 'internal scratch']
  #allocation2 [shape = 'f32[2,128]{1,0:T(2,128)}', space=vmem, size = 0x400, scoped, tag = 'scratch operand']
  %s0 = inlined_call_operand.hbm [shape: f32[2,8,128], index: 0, kind: input, shape index: {}]
  %s1 = inlined_call_operand.hbm [shape: bf16[128,2048], index: 1, kind: input, shape index: {}]
  %s2 = inlined_call_operand.hbm [shape: f32[1,2048], index: 2, kind: input, shape index: {}]
  %s3 = inlined_call_operand.hbm [shape: bf16[2048,1024], index: 3, kind: input, shape index: {}]
  %s4 = inlined_call_operand.hbm [shape: f32[1,1024], index: 4, kind: input, shape index: {}]
  %s5 = inlined_call_operand.hbm [shape: bf16[1024,128], index: 5, kind: input, shape index: {}]
  %s6 = inlined_call_operand.hbm [shape: f32[1,128], index: 6, kind: input, shape index: {}]
  %s7 = inlined_call_operand.hbm [shape: f32[2,128], index: 7, kind: output, shape index: {}]
  %s8 = sld [smem:[#allocation0]]
  $region74: #{tpu_custom_call.1} parent=0
    _
  %s10 = ssub.s32 1, %s8
  %s11 = scalar_select 0, %s10, %s8
  $region1: #{tpu_custom_call.1} parent=0
    #allocation3 [shape = 'u8[8192]{0}', space=vmem, size = 0x2000, scoped, tag = 'input window, operand 0, single buffered']
    #allocation4 [shape = 's32[1]{0}', space=sflag, size = 0x4, scoped, tag = 'scoped memory for tpu_custom_call.1']
    #allocation5 [shape = 's32[1]{0}', space=sflag, size = 0x4, scoped, tag = 'scoped memory for tpu_custom_call.1']
    #allocation6 [shape = 'u8[524288]{0}', space=vmem, size = 0x80000, scoped, tag = 'input window, operand 1, single buffered']
    #allocation7 [shape = 's32[1]{0}', space=sflag, size = 0x4, scoped, tag = 'scoped memory for tpu_custom_call.1']
    #allocation8 [shape = 'u8[8192]{0}', space=vmem, size = 0x2000, scoped, tag = 'input window, operand 2, single buffered']
    #allocation9 [shape = 'u8[4194304]{0}', space=vmem, size = 0x400000, scoped, tag = 'input window, operand 3, single buffered']
    #allocation10 [shape = 's32[1]{0}', space=sflag, size = 0x4, scoped, tag = 'scoped memory for tpu_custom_call.1']
    #allocation11 [shape = 'u8[4096]{0}', space=vmem, size = 0x1000, scoped, tag = 'input window, operand 4, single buffered']
    #allocation12 [shape = 'u8[262144]{0}', space=vmem, size = 0x40000, scoped, tag = 'input window, operand 5, single buffered']
    #allocation13 [shape = 's32[1]{0}', space=sflag, size = 0x4, scoped, tag = 'scoped memory for tpu_custom_call.1']
    #allocation14 [shape = 'u8[512]{0}', space=vmem, size = 0x400, scoped, tag = 'input window, operand 6, single buffered']
    #allocation15 [shape = 'u8[1024]{0}', space=vmem, size = 0x400, scoped, tag = 'output window, operand 0, single buffered']
    %12 = vsyncpa [#allocation4], 0
    %13 = vsyncpa [#allocation7], 0
    %14 = vsyncpa [#allocation10], 0
    %15 = vsyncpa [#allocation13], 0
    %16 = vsyncpa [#allocation5], 0
    // Predicated region
    $region2: #{tpu_custom_call.1} parent=1 // pred_check
      _
    $region3: #{tpu_custom_call.1} parent=1 // pred_check_branch
      %18 = sbr.rel (0) target = $region5
    $region4: #{tpu_custom_call.1} parent=1 // pred_region
      %20 = vsyncadd [#allocation4], 0
      %s21 = sshll.u32 %s0, 4
      %s22 = int_to_ptr.hbm [resolvable:$true] %s21
      %s23 = sshll.u32 [#allocation3], 4
      %s24 = int_to_ptr.vmem [resolvable:$true] %s23
      %29 = dma.hbm_to_vmem [thread:$0]  %s22, 256, %s24, [#allocation4], 128, 128, 8
    $region5: #{tpu_custom_call.1} parent=1 // pred_fallthru
      _
    // Predicated region
    $region6: #{tpu_custom_call.1} parent=1 // pred_check
      _
    $region7: #{tpu_custom_call.1} parent=1 // pred_check_branch
      %31 = sbr.rel (0) target = $region9
    $region8: #{tpu_custom_call.1} parent=1 // pred_region
      %33 = vsyncadd [#allocation7], 0
      %s34 = sshll.u32 %s1, 4
      %s35 = int_to_ptr.hbm [resolvable:$true] %s34
      %s36 = sshll.u32 [#allocation6], 4
      %s37 = int_to_ptr.vmem [resolvable:$true] %s36
      %42 = dma.hbm_to_vmem [thread:$0]  %s35, 16384, %s37, [#allocation7], 1024, 1024, 64
    $region9: #{tpu_custom_call.1} parent=1 // pred_fallthru
      _
    // Predicated region
    $region10: #{tpu_custom_call.1} parent=1 // pred_check
      _
    $region11: #{tpu_custom_call.1} parent=1 // pred_check_branch
      %44 = sbr.rel (0) target = $region13
    $region12: #{tpu_custom_call.1} parent=1 // pred_region
      %46 = vsyncadd [#allocation7], 0
      %s48 = sshll.u32 %s2, 4
      %s49 = int_to_ptr.hbm [resolvable:$true] %s48
      %s50 = sshll.u32 [#allocation8], 4
      %s51 = int_to_ptr.vmem [resolvable:$true] %s50
      %53 = dma.hbm_to_vmem [thread:$0]  %s49, 256, %s51, [#allocation7]
    $region13: #{tpu_custom_call.1} parent=1 // pred_fallthru
      _
    // Predicated region
    $region14: #{tpu_custom_call.1} parent=1 // pred_check
      _
    $region15: #{tpu_custom_call.1} parent=1 // pred_check_branch
      %55 = sbr.rel (0) target = $region17
    $region16: #{tpu_custom_call.1} parent=1 // pred_region
      %57 = vsyncadd [#allocation10], 0
      %s58 = sshll.u32 %s3, 4
      %s59 = int_to_ptr.hbm [resolvable:$true] %s58
      %s60 = sshll.u32 [#allocation9], 4
      %s61 = int_to_ptr.vmem [resolvable:$true] %s60
      %66 = dma.hbm_to_vmem [thread:$0]  %s59, 131072, %s61, [#allocation10], 512, 512, 32
    $region17: #{tpu_custom_call.1} parent=1 // pred_fallthru
      _
    // Predicated region
    $region18: #{tpu_custom_call.1} parent=1 // pred_check
      _
    $region19: #{tpu_custom_call.1} parent=1 // pred_check_branch
      %68 = sbr.rel (0) target = $region21
    $region20: #{tpu_custom_call.1} parent=1 // pred_region
      %70 = vsyncadd [#allocation10], 0
      %s72 = sshll.u32 %s4, 4
      %s73 = int_to_ptr.hbm [resolvable:$true] %s72
      %s74 = sshll.u32 [#allocation11], 4
      %s75 = int_to_ptr.vmem [resolvable:$true] %s74
      %77 = dma.hbm_to_vmem [thread:$0]  %s73, 128, %s75, [#allocation10]
    $region21: #{tpu_custom_call.1} parent=1 // pred_fallthru
      _
    // Predicated region
    $region22: #{tpu_custom_call.1} parent=1 // pred_check
      _
    $region23: #{tpu_custom_call.1} parent=1 // pred_check_branch
      %79 = sbr.rel (0) target = $region25
    $region24: #{tpu_custom_call.1} parent=1 // pred_region
      %81 = vsyncadd [#allocation13], 0
      %s82 = sshll.u32 %s5, 4
      %s83 = int_to_ptr.hbm [resolvable:$true] %s82
      %s84 = sshll.u32 [#allocation12], 4
      %s85 = int_to_ptr.vmem [resolvable:$true] %s84
      %90 = dma.hbm_to_vmem [thread:$0]  %s83, 8192, %s85, [#allocation13], 64, 64, 4
    $region25: #{tpu_custom_call.1} parent=1 // pred_fallthru
      _
    // Predicated region
    $region26: #{tpu_custom_call.1} parent=1 // pred_check
      _
    $region27: #{tpu_custom_call.1} parent=1 // pred_check_branch
      %92 = sbr.rel (0) target = $region29
    $region28: #{tpu_custom_call.1} parent=1 // pred_region
      %94 = vsyncadd [#allocation13], 0
      %s96 = sshll.u32 %s6, 4
      %s97 = int_to_ptr.hbm [resolvable:$true] %s96
      %s98 = sshll.u32 [#allocation14], 4
      %s99 = int_to_ptr.vmem [resolvable:$true] %s98
      %101 = dma.hbm_to_vmem [thread:$0]  %s97, 16, %s99, [#allocation13]
    $region29: #{tpu_custom_call.1} parent=1 // pred_fallthru
      _
    // Predicated region
    $region30: #{tpu_custom_call.1} parent=1 // pred_check
      _
    $region31: #{tpu_custom_call.1} parent=1 // pred_check_branch
      %103 = sbr.rel (0) target = $region33
    $region32: #{tpu_custom_call.1} parent=1 // pred_region
      %105 = dma.done [#allocation4], 256
    $region33: #{tpu_custom_call.1} parent=1 // pred_fallthru
      _
    // Predicated region
    $region34: #{tpu_custom_call.1} parent=1 // pred_check
      _
    $region35: #{tpu_custom_call.1} parent=1 // pred_check_branch
      %107 = sbr.rel (0) target = $region37
    $region36: #{tpu_custom_call.1} parent=1 // pred_region
      %109 = dma.done [#allocation7], 16384
    $region37: #{tpu_custom_call.1} parent=1 // pred_fallthru
      _
    // Predicated region
    $region38: #{tpu_custom_call.1} parent=1 // pred_check
      _
    $region39: #{tpu_custom_call.1} parent=1 // pred_check_branch
      %111 = sbr.rel (0) target = $region41
    $region40: #{tpu_custom_call.1} parent=1 // pred_region
      %113 = dma.done [#allocation7], 256
    $region41: #{tpu_custom_call.1} parent=1 // pred_fallthru
      _
    // Predicated region
    $region42: #{tpu_custom_call.1} parent=1 // pred_check
      _
    $region43: #{tpu_custom_call.1} parent=1 // pred_check_branch
      %115 = sbr.rel (0) target = $region45
    $region44: #{tpu_custom_call.1} parent=1 // pred_region
      %117 = dma.done [#allocation10], 131072
    $region45: #{tpu_custom_call.1} parent=1 // pred_fallthru
      _
    // Predicated region
    $region46: #{tpu_custom_call.1} parent=1 // pred_check
      _
    $region47: #{tpu_custom_call.1} parent=1 // pred_check_branch
      %119 = sbr.rel (0) target = $region49
    $region48: #{tpu_custom_call.1} parent=1 // pred_region
      %121 = dma.done [#allocation10], 128
    $region49: #{tpu_custom_call.1} parent=1 // pred_fallthru
      _
    // Predicated region
    $region50: #{tpu_custom_call.1} parent=1 // pred_check
      _
    $region51: #{tpu_custom_call.1} parent=1 // pred_check_branch
      %123 = sbr.rel (0) target = $region53
    $region52: #{tpu_custom_call.1} parent=1 // pred_region
      %125 = dma.done [#allocation13], 8192
    $region53: #{tpu_custom_call.1} parent=1 // pred_fallthru
      _
    // Predicated region
    $region54: #{tpu_custom_call.1} parent=1 // pred_check
      _
    $region55: #{tpu_custom_call.1} parent=1 // pred_check_branch
      %127 = sbr.rel (0) target = $region57
    $region56: #{tpu_custom_call.1} parent=1 // pred_region
      %129 = dma.done [#allocation13], 16
    $region57: #{tpu_custom_call.1} parent=1 // pred_fallthru
      _
    %p130 = scmp.eq.s32.totalorder 0, 0
    // Predicated region
    $region58: #{tpu_custom_call.1} parent=1 // pred_check
      %p131 = pneg %p130
    $region59: #{tpu_custom_call.1} parent=1 // pred_check_branch
      %133 = sbr.rel (%p131) target = $region61
    $region60: #{tpu_custom_call.1} parent=1 // pred_region
      %134 = vst [vmem:[#allocation2] sm:$0x3] 0.0
    $region61: #{tpu_custom_call.1} parent=1 // pred_fallthru
      _
    %v135 = vld [vmem:[#allocation2] sm:$0x3]
    %v136 = vld [vmem:[#allocation3] sm:$0xff]
    %v137 = vld [vmem:[#allocation3 + $0x8] sm:$0xff]
    %v138 = vrot.slane %v136, 4
    %v139 = vadd.f32 %v136, %v138
    %v140 = vrot.slane %v139, 2
    %v141 = vadd.f32 %v139, %v140
    %v142 = vrot.slane %v141, 1
    %v143 = vadd.f32 %v141, %v142
    %v144 = vrot.slane %v137, 4
    %v145 = vadd.f32 %v137, %v144
    %v146 = vrot.slane %v145, 2
    %v147 = vadd.f32 %v145, %v146
    %v148 = vrot.slane %v147, 1
    %v149 = vadd.f32 %v147, %v148
    %vm152 = vcmask 1041409
    %v153 = vsel %vm152, %v149, %v143
    %v155 = vadd.f32 %v135, %v153
    %156 = vst [vmem:[#allocation2] sm:$0x3] %v155
    // Predicated region
    $region62: #{tpu_custom_call.1} parent=1 // pred_check
      %p157 = pneg %p130
    $region63: #{tpu_custom_call.1} parent=1 // pred_check_branch
      %159 = sbr.rel (%p157) target = $region65
    $region64: #{tpu_custom_call.1} parent=1 // pred_region
      %v160 = vld [vmem:[#allocation2] sm:$0x3]
      %v161 = vmul.f32 %v160, 0.125
      %v162 = vpack.c.bf16 %v161, %v161
      %v163 = vld [vmem:[#allocation6] sm:$0xff]
      %v164 = vld [vmem:[#allocation6 + $0x8] sm:$0xff]
      %v165 = vld [vmem:[#allocation6 + $0x10] sm:$0xff]
      %v166 = vld [vmem:[#allocation6 + $0x18] sm:$0xff]
      %v167 = vld [vmem:[#allocation6 + $0x20] sm:$0xff]
      %v168 = vld [vmem:[#allocation6 + $0x28] sm:$0xff]
      %v169 = vld [vmem:[#allocation6 + $0x30] sm:$0xff]
      %v170 = vld [vmem:[#allocation6 + $0x38] sm:$0xff]
      %v171 = vld [vmem:[#allocation6 + $0x40] sm:$0xff]
      %v172 = vld [vmem:[#allocation6 + $0x48] sm:$0xff]
      %v173 = vld [vmem:[#allocation6 + $0x50] sm:$0xff]
      %v174 = vld [vmem:[#allocation6 + $0x58] sm:$0xff]
      %v175 = vld [vmem:[#allocation6 + $0x60] sm:$0xff]
      %v176 = vld [vmem:[#allocation6 + $0x68] sm:$0xff]
      %v177 = vld [vmem:[#allocation6 + $0x70] sm:$0xff]
      %v178 = vld [vmem:[#allocation6 + $0x78] sm:$0xff]
      %v179 = vld [vmem:[#allocation6 + $0x80] sm:$0xff]
      %v180 = vld [vmem:[#allocation6 + $0x88] sm:$0xff]
      %v181 = vld [vmem:[#allocation6 + $0x90] sm:$0xff]
      %v182 = vld [vmem:[#allocation6 + $0x98] sm:$0xff]
      %v183 = vld [vmem:[#allocation6 + $0xa0] sm:$0xff]
      %v184 = vld [vmem:[#allocation6 + $0xa8] sm:$0xff]
      %v185 = vld [vmem:[#allocation6 + $0xb0] sm:$0xff]
      %v186 = vld [vmem:[#allocation6 + $0xb8] sm:$0xff]
      %v187 = vld [vmem:[#allocation6 + $0xc0] sm:$0xff]
      %v188 = vld [vmem:[#allocation6 + $0xc8] sm:$0xff]
      %v189 = vld [vmem:[#allocation6 + $0xd0] sm:$0xff]
      %v190 = vld [vmem:[#allocation6 + $0xd8] sm:$0xff]
      %v191 = vld [vmem:[#allocation6 + $0xe0] sm:$0xff]
      %v192 = vld [vmem:[#allocation6 + $0xe8] sm:$0xff]
      %v193 = vld [vmem:[#allocation6 + $0xf0] sm:$0xff]
      %v194 = vld [vmem:[#allocation6 + $0xf8] sm:$0xff]
      %v195 = vld [vmem:[#allocation6 + $0x100] sm:$0xff]
      %v196 = vld [vmem:[#allocation6 + $0x108] sm:$0xff]
      %v197 = vld [vmem:[#allocation6 + $0x110] sm:$0xff]
      %v198 = vld [vmem:[#allocation6 + $0x118] sm:$0xff]
      %v199 = vld [vmem:[#allocation6 + $0x120] sm:$0xff]
      %v200 = vld [vmem:[#allocation6 + $0x128] sm:$0xff]
      %v201 = vld [vmem:[#allocation6 + $0x130] sm:$0xff]
      %v202 = vld [vmem:[#allocation6 + $0x138] sm:$0xff]
      %v203 = vld [vmem:[#allocation6 + $0x140] sm:$0xff]
      %v204 = vld [vmem:[#allocation6 + $0x148] sm:$0xff]
      %v205 = vld [vmem:[#allocation6 + $0x150] sm:$0xff]
      %v206 = vld [vmem:[#allocation6 + $0x158] sm:$0xff]
      %v207 = vld [vmem:[#allocation6 + $0x160] sm:$0xff]
      %v208 = vld [vmem:[#allocation6 + $0x168] sm:$0xff]
      %v209 = vld [vmem:[#allocation6 + $0x170] sm:$0xff]
      %v210 = vld [vmem:[#allocation6 + $0x178] sm:$0xff]
      %v211 = vld [vmem:[#allocation6 + $0x180] sm:$0xff]
      %v212 = vld [vmem:[#allocation6 + $0x188] sm:$0xff]
      %v213 = vld [vmem:[#allocation6 + $0x190] sm:$0xff]
      %v214 = vld [vmem:[#allocation6 + $0x198] sm:$0xff]
      %v215 = vld [vmem:[#allocation6 + $0x1a0] sm:$0xff]
      %v216 = vld [vmem:[#allocation6 + $0x1a8] sm:$0xff]
      %v217 = vld [vmem:[#allocation6 + $0x1b0] sm:$0xff]
      %v218 = vld [vmem:[#allocation6 + $0x1b8] sm:$0xff]
      %v219 = vld [vmem:[#allocation6 + $0x1c0] sm:$0xff]
      %v220 = vld [vmem:[#allocation6 + $0x1c8] sm:$0xff]
      %v221 = vld [vmem:[#allocation6 + $0x1d0] sm:$0xff]
      %v222 = vld [vmem:[#allocation6 + $0x1d8] sm:$0xff]
      %v223 = vld [vmem:[#allocation6 + $0x1e0] sm:$0xff]
      %v224 = vld [vmem:[#allocation6 + $0x1e8] sm:$0xff]
      %v225 = vld [vmem:[#allocation6 + $0x1f0] sm:$0xff]
      %v226 = vld [vmem:[#allocation6 + $0x1f8] sm:$0xff]
      %v227 = vld [vmem:[#allocation6 + $0x200] sm:$0xff]
      %v228 = vld [vmem:[#allocation6 + $0x208] sm:$0xff]
      %v229 = vld [vmem:[#allocation6 + $0x210] sm:$0xff]
      %v230 = vld [vmem:[#allocation6 + $0x218] sm:$0xff]
      %v231 = vld [vmem:[#allocation6 + $0x220] sm:$0xff]
      %v232 = vld [vmem:[#allocation6 + $0x228] sm:$0xff]
      %v233 = vld [vmem:[#allocation6 + $0x230] sm:$0xff]
      %v234 = vld [vmem:[#allocation6 + $0x238] sm:$0xff]
      %v235 = vld [vmem:[#allocation6 + $0x240] sm:$0xff]
      %v236 = vld [vmem:[#allocation6 + $0x248] sm:$0xff]
      %v237 = vld [vmem:[#allocation6 + $0x250] sm:$0xff]
      %v238 = vld [vmem:[#allocation6 + $0x258] sm:$0xff]
      %v239 = vld [vmem:[#allocation6 + $0x260] sm:$0xff]
      %v240 = vld [vmem:[#allocation6 + $0x268] sm:$0xff]
      %v241 = vld [vmem:[#allocation6 + $0x270] sm:$0xff]
      %v242 = vld [vmem:[#allocation6 + $0x278] sm:$0xff]
      %v243 = vld [vmem:[#allocation6 + $0x280] sm:$0xff]
      %v244 = vld [vmem:[#allocation6 + $0x288] sm:$0xff]
      %v245 = vld [vmem:[#allocation6 + $0x290] sm:$0xff]
      %v246 = vld [vmem:[#allocation6 + $0x298] sm:$0xff]
      %v247 = vld [vmem:[#allocation6 + $0x2a0] sm:$0xff]
      %v248 = vld [vmem:[#allocation6 + $0x2a8] sm:$0xff]
      %v249 = vld [vmem:[#allocation6 + $0x2b0] sm:$0xff]
      %v250 = vld [vmem:[#allocation6 + $0x2b8] sm:$0xff]
      %v251 = vld [vmem:[#allocation6 + $0x2c0] sm:$0xff]
      %v252 = vld [vmem:[#allocation6 + $0x2c8] sm:$0xff]
      %v253 = vld [vmem:[#allocation6 + $0x2d0] sm:$0xff]
      %v254 = vld [vmem:[#allocation6 + $0x2d8] sm:$0xff]
      %v255 = vld [vmem:[#allocation6 + $0x2e0] sm:$0xff]
      %v256 = vld [vmem:[#allocation6 + $0x2e8] sm:$0xff]
      %v257 = vld [vmem:[#allocation6 + $0x2f0] sm:$0xff]
      %v258 = vld [vmem:[#allocation6 + $0x2f8] sm:$0xff]
      %v259 = vld [vmem:[#allocation6 + $0x300] sm:$0xff]
      %v260 = vld [vmem:[#allocation6 + $0x308] sm:$0xff]
      %v261 = vld [vmem:[#allocation6 + $0x310] sm:$0xff]
      %v262 = vld [vmem:[#allocation6 + $0x318] sm:$0xff]
      %v263 = vld [vmem:[#allocation6 + $0x320] sm:$0xff]
      %v264 = vld [vmem:[#allocation6 + $0x328] sm:$0xff]
      %v265 = vld [vmem:[#allocation6 + $0x330] sm:$0xff]
      %v266 = vld [vmem:[#allocation6 + $0x338] sm:$0xff]
      %v267 = vld [vmem:[#allocation6 + $0x340] sm:$0xff]
      %v268 = vld [vmem:[#allocation6 + $0x348] sm:$0xff]
      %v269 = vld [vmem:[#allocation6 + $0x350] sm:$0xff]
      %v270 = vld [vmem:[#allocation6 + $0x358] sm:$0xff]
      %v271 = vld [vmem:[#allocation6 + $0x360] sm:$0xff]
      %v272 = vld [vmem:[#allocation6 + $0x368] sm:$0xff]
      %v273 = vld [vmem:[#allocation6 + $0x370] sm:$0xff]
      %v274 = vld [vmem:[#allocation6 + $0x378] sm:$0xff]
      %v275 = vld [vmem:[#allocation6 + $0x380] sm:$0xff]
      %v276 = vld [vmem:[#allocation6 + $0x388] sm:$0xff]
      %v277 = vld [vmem:[#allocation6 + $0x390] sm:$0xff]
      %v278 = vld [vmem:[#allocation6 + $0x398] sm:$0xff]
      %v279 = vld [vmem:[#allocation6 + $0x3a0] sm:$0xff]
      %v280 = vld [vmem:[#allocation6 + $0x3a8] sm:$0xff]
      %v281 = vld [vmem:[#allocation6 + $0x3b0] sm:$0xff]
      %v282 = vld [vmem:[#allocation6 + $0x3b8] sm:$0xff]
      %v283 = vld [vmem:[#allocation6 + $0x3c0] sm:$0xff]
      %v284 = vld [vmem:[#allocation6 + $0x3c8] sm:$0xff]
      %v285 = vld [vmem:[#allocation6 + $0x3d0] sm:$0xff]
      %v286 = vld [vmem:[#allocation6 + $0x3d8] sm:$0xff]
      %v287 = vld [vmem:[#allocation6 + $0x3e0] sm:$0xff]
      %v288 = vld [vmem:[#allocation6 + $0x3e8] sm:$0xff]
      %v289 = vld [vmem:[#allocation6 + $0x3f0] sm:$0xff]
      %v290 = vld [vmem:[#allocation6 + $0x3f8] sm:$0xff]
      %v291 = vld [vmem:[#allocation8] sm:$0xff]
      %v292 = vld [vmem:[#allocation8 + $0x8] sm:$0xff]
      %v295 = vperm.slane %v291, 0
      %v296 = vperm.slane %v291, 1
      %v297 = vperm.slane %v291, 2
      %v298 = vperm.slane %v291, 3
      %v299 = vperm.slane %v291, 4
      %v300 = vperm.slane %v291, 5
      %v301 = vperm.slane %v291, 6
      %v302 = vperm.slane %v291, 7
      %v303 = vperm.slane %v292, 0
      %v304 = vperm.slane %v292, 1
      %v305 = vperm.slane %v292, 2
      %v306 = vperm.slane %v292, 3
      %v307 = vperm.slane %v292, 4
      %v308 = vperm.slane %v292, 5
      %v309 = vperm.slane %v292, 6
      %v310 = vperm.slane %v292, 7
      %v455 = vunpack.c.l.b16 %v163
      %v456 = vunpack.c.h.b16 %v163
      %v457 = vunpack.c.l.b16 %v164
      %v458 = vunpack.c.h.b16 %v164
      %v459 = vunpack.c.l.b16 %v165
      %v460 = vunpack.c.h.b16 %v165
      %v461 = vunpack.c.l.b16 %v166
      %v462 = vunpack.c.h.b16 %v166
      %v463 = vunpack.c.l.b16 %v167
      %v464 = vunpack.c.h.b16 %v167
      %v465 = vunpack.c.l.b16 %v168
      %v466 = vunpack.c.h.b16 %v168
      %v467 = vunpack.c.l.b16 %v169
      %v468 = vunpack.c.h.b16 %v169
      %v469 = vunpack.c.l.b16 %v170
      %v470 = vunpack.c.h.b16 %v170
      %v471 = vunpack.c.l.b16 %v171
      %v472 = vunpack.c.h.b16 %v171
      %v473 = vunpack.c.l.b16 %v172
      %v474 = vunpack.c.h.b16 %v172
      %v475 = vunpack.c.l.b16 %v173
      %v476 = vunpack.c.h.b16 %v173
      %v477 = vunpack.c.l.b16 %v174
      %v478 = vunpack.c.h.b16 %v174
      %v479 = vunpack.c.l.b16 %v175
      %v480 = vunpack.c.h.b16 %v175
      %v481 = vunpack.c.l.b16 %v176
      %v482 = vunpack.c.h.b16 %v176
      %v483 = vunpack.c.l.b16 %v177
      %v484 = vunpack.c.h.b16 %v177
      %v485 = vunpack.c.l.b16 %v178
      %v486 = vunpack.c.h.b16 %v178
      %v487 = vunpack.c.l.b16 %v179
      %v488 = vunpack.c.h.b16 %v179
      %v489 = vunpack.c.l.b16 %v180
      %v490 = vunpack.c.h.b16 %v180
      %v491 = vunpack.c.l.b16 %v181
      %v492 = vunpack.c.h.b16 %v181
      %v493 = vunpack.c.l.b16 %v182
      %v494 = vunpack.c.h.b16 %v182
      %v495 = vunpack.c.l.b16 %v183
      %v496 = vunpack.c.h.b16 %v183
      %v497 = vunpack.c.l.b16 %v184
      %v498 = vunpack.c.h.b16 %v184
      %v499 = vunpack.c.l.b16 %v185
      %v500 = vunpack.c.h.b16 %v185
      %v501 = vunpack.c.l.b16 %v186
      %v502 = vunpack.c.h.b16 %v186
      %v503 = vunpack.c.l.b16 %v187
      %v504 = vunpack.c.h.b16 %v187
      %v505 = vunpack.c.l.b16 %v188
      %v506 = vunpack.c.h.b16 %v188
      %v507 = vunpack.c.l.b16 %v189
      %v508 = vunpack.c.h.b16 %v189
      %v509 = vunpack.c.l.b16 %v190
      %v510 = vunpack.c.h.b16 %v190
      %v511 = vunpack.c.l.b16 %v191
      %v512 = vunpack.c.h.b16 %v191
      %v513 = vunpack.c.l.b16 %v192
      %v514 = vunpack.c.h.b16 %v192
      %v515 = vunpack.c.l.b16 %v193
      %v516 = vunpack.c.h.b16 %v193
      %v517 = vunpack.c.l.b16 %v194
      %v518 = vunpack.c.h.b16 %v194
      %v519 = vunpack.c.l.b16 %v195
      %v520 = vunpack.c.h.b16 %v195
      %v521 = vunpack.c.l.b16 %v196
      %v522 = vunpack.c.h.b16 %v196
      %v523 = vunpack.c.l.b16 %v197
      %v524 = vunpack.c.h.b16 %v197
      %v525 = vunpack.c.l.b16 %v198
      %v526 = vunpack.c.h.b16 %v198
      %v527 = vunpack.c.l.b16 %v199
      %v528 = vunpack.c.h.b16 %v199
      %v529 = vunpack.c.l.b16 %v200
      %v530 = vunpack.c.h.b16 %v200
      %v531 = vunpack.c.l.b16 %v201
      %v532 = vunpack.c.h.b16 %v201
      %v533 = vunpack.c.l.b16 %v202
      %v534 = vunpack.c.h.b16 %v202
      %v535 = vunpack.c.l.b16 %v203
      %v536 = vunpack.c.h.b16 %v203
      %v537 = vunpack.c.l.b16 %v204
      %v538 = vunpack.c.h.b16 %v204
      %v539 = vunpack.c.l.b16 %v205
      %v540 = vunpack.c.h.b16 %v205
      %v541 = vunpack.c.l.b16 %v206
      %v542 = vunpack.c.h.b16 %v206
      %v543 = vunpack.c.l.b16 %v207
      %v544 = vunpack.c.h.b16 %v207
      %v545 = vunpack.c.l.b16 %v208
      %v546 = vunpack.c.h.b16 %v208
      %v547 = vunpack.c.l.b16 %v209
      %v548 = vunpack.c.h.b16 %v209
      %v549 = vunpack.c.l.b16 %v210
      %v550 = vunpack.c.h.b16 %v210
      %v551 = vunpack.c.l.b16 %v211
      %v552 = vunpack.c.h.b16 %v211
      %v553 = vunpack.c.l.b16 %v212
      %v554 = vunpack.c.h.b16 %v212
      %v555 = vunpack.c.l.b16 %v213
      %v556 = vunpack.c.h.b16 %v213
      %v557 = vunpack.c.l.b16 %v214
      %v558 = vunpack.c.h.b16 %v214
      %v559 = vunpack.c.l.b16 %v215
      %v560 = vunpack.c.h.b16 %v215
      %v561 = vunpack.c.l.b16 %v216
      %v562 = vunpack.c.h.b16 %v216
      %v563 = vunpack.c.l.b16 %v217
      %v564 = vunpack.c.h.b16 %v217
      %v565 = vunpack.c.l.b16 %v218
      %v566 = vunpack.c.h.b16 %v218
      %v567 = vunpack.c.l.b16 %v219
      %v568 = vunpack.c.h.b16 %v219
      %v569 = vunpack.c.l.b16 %v220
      %v570 = vunpack.c.h.b16 %v220
      %v571 = vunpack.c.l.b16 %v221
      %v572 = vunpack.c.h.b16 %v221
      %v573 = vunpack.c.l.b16 %v222
      %v574 = vunpack.c.h.b16 %v222
      %v575 = vunpack.c.l.b16 %v223
      %v576 = vunpack.c.h.b16 %v223
      %v577 = vunpack.c.l.b16 %v224
      %v578 = vunpack.c.h.b16 %v224
      %v579 = vunpack.c.l.b16 %v225
      %v580 = vunpack.c.h.b16 %v225
      %v581 = vunpack.c.l.b16 %v226
      %v582 = vunpack.c.h.b16 %v226
      %v583 = vunpack.c.l.b16 %v227
      %v584 = vunpack.c.h.b16 %v227
      %v585 = vunpack.c.l.b16 %v228
      %v586 = vunpack.c.h.b16 %v228
      %v587 = vunpack.c.l.b16 %v229
      %v588 = vunpack.c.h.b16 %v229
      %v589 = vunpack.c.l.b16 %v230
      %v590 = vunpack.c.h.b16 %v230
      %v591 = vunpack.c.l.b16 %v231
      %v592 = vunpack.c.h.b16 %v231
      %v593 = vunpack.c.l.b16 %v232
      %v594 = vunpack.c.h.b16 %v232
      %v595 = vunpack.c.l.b16 %v233
      %v596 = vunpack.c.h.b16 %v233
      %v597 = vunpack.c.l.b16 %v234
      %v598 = vunpack.c.h.b16 %v234
      %v599 = vunpack.c.l.b16 %v235
      %v600 = vunpack.c.h.b16 %v235
      %v601 = vunpack.c.l.b16 %v236
      %v602 = vunpack.c.h.b16 %v236
      %v603 = vunpack.c.l.b16 %v237
      %v604 = vunpack.c.h.b16 %v237
      %v605 = vunpack.c.l.b16 %v238
      %v606 = vunpack.c.h.b16 %v238
      %v607 = vunpack.c.l.b16 %v239
      %v608 = vunpack.c.h.b16 %v239
      %v609 = vunpack.c.l.b16 %v240
      %v610 = vunpack.c.h.b16 %v240
      %v611 = vunpack.c.l.b16 %v241
      %v612 = vunpack.c.h.b16 %v241
      %v613 = vunpack.c.l.b16 %v242
      %v614 = vunpack.c.h.b16 %v242
      %v615 = vunpack.c.l.b16 %v243
      %v616 = vunpack.c.h.b16 %v243
      %v617 = vunpack.c.l.b16 %v244
      %v618 = vunpack.c.h.b16 %v244
      %v619 = vunpack.c.l.b16 %v245
      %v620 = vunpack.c.h.b16 %v245
      %v621 = vunpack.c.l.b16 %v246
      %v622 = vunpack.c.h.b16 %v246
      %v623 = vunpack.c.l.b16 %v247
      %v624 = vunpack.c.h.b16 %v247
      %v625 = vunpack.c.l.b16 %v248
      %v626 = vunpack.c.h.b16 %v248
      %v627 = vunpack.c.l.b16 %v249
      %v628 = vunpack.c.h.b16 %v249
      %v629 = vunpack.c.l.b16 %v250
      %v630 = vunpack.c.h.b16 %v250
      %v631 = vunpack.c.l.b16 %v251
      %v632 = vunpack.c.h.b16 %v251
      %v633 = vunpack.c.l.b16 %v252
      %v634 = vunpack.c.h.b16 %v252
      %v635 = vunpack.c.l.b16 %v253
      %v636 = vunpack.c.h.b16 %v253
      %v637 = vunpack.c.l.b16 %v254
      %v638 = vunpack.c.h.b16 %v254
      %v639 = vunpack.c.l.b16 %v255
      %v640 = vunpack.c.h.b16 %v255
      %v641 = vunpack.c.l.b16 %v256
      %v642 = vunpack.c.h.b16 %v256
      %v643 = vunpack.c.l.b16 %v257
      %v644 = vunpack.c.h.b16 %v257
      %v645 = vunpack.c.l.b16 %v258
      %v646 = vunpack.c.h.b16 %v258
      %v647 = vunpack.c.l.b16 %v259
      %v648 = vunpack.c.h.b16 %v259
      %v649 = vunpack.c.l.b16 %v260
      %v650 = vunpack.c.h.b16 %v260
      %v651 = vunpack.c.l.b16 %v261
      %v652 = vunpack.c.h.b16 %v261
      %v653 = vunpack.c.l.b16 %v262
      %v654 = vunpack.c.h.b16 %v262
      %v655 = vunpack.c.l.b16 %v263
      %v656 = vunpack.c.h.b16 %v263
      %v657 = vunpack.c.l.b16 %v264
      %v658 = vunpack.c.h.b16 %v264
      %v659 = vunpack.c.l.b16 %v265
      %v660 = vunpack.c.h.b16 %v265
      %v661 = vunpack.c.l.b16 %v266
      %v662 = vunpack.c.h.b16 %v266
      %v663 = vunpack.c.l.b16 %v267
      %v664 = vunpack.c.h.b16 %v267
      %v665 = vunpack.c.l.b16 %v268
      %v666 = vunpack.c.h.b16 %v268
      %v667 = vunpack.c.l.b16 %v269
      %v668 = vunpack.c.h.b16 %v269
      %v669 = vunpack.c.l.b16 %v270
      %v670 = vunpack.c.h.b16 %v270
      %v671 = vunpack.c.l.b16 %v271
      %v672 = vunpack.c.h.b16 %v271
      %v673 = vunpack.c.l.b16 %v272
      %v674 = vunpack.c.h.b16 %v272
      %v675 = vunpack.c.l.b16 %v273
      %v676 = vunpack.c.h.b16 %v273
      %v677 = vunpack.c.l.b16 %v274
      %v678 = vunpack.c.h.b16 %v274
      %v679 = vunpack.c.l.b16 %v275
      %v680 = vunpack.c.h.b16 %v275
      %v681 = vunpack.c.l.b16 %v276
      %v682 = vunpack.c.h.b16 %v276
      %v683 = vunpack.c.l.b16 %v277
      %v684 = vunpack.c.h.b16 %v277
      %v685 = vunpack.c.l.b16 %v278
      %v686 = vunpack.c.h.b16 %v278
      %v687 = vunpack.c.l.b16 %v279
      %v688 = vunpack.c.h.b16 %v279
      %v689 = vunpack.c.l.b16 %v280
      %v690 = vunpack.c.h.b16 %v280
      %v691 = vunpack.c.l.b16 %v281
      %v692 = vunpack.c.h.b16 %v281
      %v693 = vunpack.c.l.b16 %v282
      %v694 = vunpack.c.h.b16 %v282
      %v695 = vunpack.c.l.b16 %v283
      %v696 = vunpack.c.h.b16 %v283
      %v697 = vunpack.c.l.b16 %v284
      %v698 = vunpack.c.h.b16 %v284
      %v699 = vunpack.c.l.b16 %v285
      %v700 = vunpack.c.h.b16 %v285
      %v701 = vunpack.c.l.b16 %v286
      %v702 = vunpack.c.h.b16 %v286
      %v703 = vunpack.c.l.b16 %v287
      %v704 = vunpack.c.h.b16 %v287
      %v705 = vunpack.c.l.b16 %v288
      %v706 = vunpack.c.h.b16 %v288
      %v707 = vunpack.c.l.b16 %v289
      %v708 = vunpack.c.h.b16 %v289
      %v709 = vunpack.c.l.b16 %v290
      %v710 = vunpack.c.h.b16 %v290
      %v711 = vpack.c.b16 %v471, %v455
      %v712 = vpack.c.b16 %v472, %v456
      %v713 = vpack.c.b16 %v473, %v457
      %v714 = vpack.c.b16 %v474, %v458
      %v715 = vpack.c.b16 %v475, %v459
      %v716 = vpack.c.b16 %v476, %v460
      %v717 = vpack.c.b16 %v477, %v461
      %v718 = vpack.c.b16 %v478, %v462
      %v719 = vpack.c.b16 %v479, %v463
      %v720 = vpack.c.b16 %v480, %v464
      %v721 = vpack.c.b16 %v481, %v465
      %v722 = vpack.c.b16 %v482, %v466
      %v723 = vpack.c.b16 %v483, %v467
      %v724 = vpack.c.b16 %v484, %v468
      %v725 = vpack.c.b16 %v485, %v469
      %v726 = vpack.c.b16 %v486, %v470
      %v727 = vpack.c.b16 %v503, %v487
      %v728 = vpack.c.b16 %v504, %v488
      %v729 = vpack.c.b16 %v505, %v489
      %v730 = vpack.c.b16 %v506, %v490
      %v731 = vpack.c.b16 %v507, %v491
      %v732 = vpack.c.b16 %v508, %v492
      %v733 = vpack.c.b16 %v509, %v493
      %v734 = vpack.c.b16 %v510, %v494
      %v735 = vpack.c.b16 %v511, %v495
      %v736 = vpack.c.b16 %v512, %v496
      %v737 = vpack.c.b16 %v513, %v497
      %v738 = vpack.c.b16 %v514, %v498
      %v739 = vpack.c.b16 %v515, %v499
      %v740 = vpack.c.b16 %v516, %v500
      %v741 = vpack.c.b16 %v517, %v501
      %v742 = vpack.c.b16 %v518, %v502
      %v743 = vpack.c.b16 %v535, %v519
      %v744 = vpack.c.b16 %v536, %v520
      %v745 = vpack.c.b16 %v537, %v521
      %v746 = vpack.c.b16 %v538, %v522
      %v747 = vpack.c.b16 %v539, %v523
      %v748 = vpack.c.b16 %v540, %v524
      %v749 = vpack.c.b16 %v541, %v525
      %v750 = vpack.c.b16 %v542, %v526
      %v751 = vpack.c.b16 %v543, %v527
      %v752 = vpack.c.b16 %v544, %v528
      %v753 = vpack.c.b16 %v545, %v529
      %v754 = vpack.c.b16 %v546, %v530
      %v755 = vpack.c.b16 %v547, %v531
      %v756 = vpack.c.b16 %v548, %v532
      %v757 = vpack.c.b16 %v549, %v533
      %v758 = vpack.c.b16 %v550, %v534
      %v759 = vpack.c.b16 %v567, %v551
      %v760 = vpack.c.b16 %v568, %v552
      %v761 = vpack.c.b16 %v569, %v553
      %v762 = vpack.c.b16 %v570, %v554
      %v763 = vpack.c.b16 %v571, %v555
      %v764 = vpack.c.b16 %v572, %v556
      %v765 = vpack.c.b16 %v573, %v557
      %v766 = vpack.c.b16 %v574, %v558
      %v767 = vpack.c.b16 %v575, %v559
      %v768 = vpack.c.b16 %v576, %v560
      %v769 = vpack.c.b16 %v577, %v561
      %v770 = vpack.c.b16 %v578, %v562
      %v771 = vpack.c.b16 %v579, %v563
      %v772 = vpack.c.b16 %v580, %v564
      %v773 = vpack.c.b16 %v581, %v565
      %v774 = vpack.c.b16 %v582, %v566
      %v775 = vpack.c.b16 %v599, %v583
      %v776 = vpack.c.b16 %v600, %v584
      %v777 = vpack.c.b16 %v601, %v585
      %v778 = vpack.c.b16 %v602, %v586
      %v779 = vpack.c.b16 %v603, %v587
      %v780 = vpack.c.b16 %v604, %v588
      %v781 = vpack.c.b16 %v605, %v589
      %v782 = vpack.c.b16 %v606, %v590
      %v783 = vpack.c.b16 %v607, %v591
      %v784 = vpack.c.b16 %v608, %v592
      %v785 = vpack.c.b16 %v609, %v593
      %v786 = vpack.c.b16 %v610, %v594
      %v787 = vpack.c.b16 %v611, %v595
      %v788 = vpack.c.b16 %v612, %v596
      %v789 = vpack.c.b16 %v613, %v597
      %v790 = vpack.c.b16 %v614, %v598
      %v791 = vpack.c.b16 %v631, %v615
      %v792 = vpack.c.b16 %v632, %v616
      %v793 = vpack.c.b16 %v633, %v617
      %v794 = vpack.c.b16 %v634, %v618
      %v795 = vpack.c.b16 %v635, %v619
      %v796 = vpack.c.b16 %v636, %v620
      %v797 = vpack.c.b16 %v637, %v621
      %v798 = vpack.c.b16 %v638, %v622
      %v799 = vpack.c.b16 %v639, %v623
      %v800 = vpack.c.b16 %v640, %v624
      %v801 = vpack.c.b16 %v641, %v625
      %v802 = vpack.c.b16 %v642, %v626
      %v803 = vpack.c.b16 %v643, %v627
      %v804 = vpack.c.b16 %v644, %v628
      %v805 = vpack.c.b16 %v645, %v629
      %v806 = vpack.c.b16 %v646, %v630
      %v807 = vpack.c.b16 %v663, %v647
      %v808 = vpack.c.b16 %v664, %v648
      %v809 = vpack.c.b16 %v665, %v649
      %v810 = vpack.c.b16 %v666, %v650
      %v811 = vpack.c.b16 %v667, %v651
      %v812 = vpack.c.b16 %v668, %v652
      %v813 = vpack.c.b16 %v669, %v653
      %v814 = vpack.c.b16 %v670, %v654
      %v815 = vpack.c.b16 %v671, %v655
      %v816 = vpack.c.b16 %v672, %v656
      %v817 = vpack.c.b16 %v673, %v657
      %v818 = vpack.c.b16 %v674, %v658
      %v819 = vpack.c.b16 %v675, %v659
      %v820 = vpack.c.b16 %v676, %v660
      %v821 = vpack.c.b16 %v677, %v661
      %v822 = vpack.c.b16 %v678, %v662
      %v823 = vpack.c.b16 %v695, %v679
      %v824 = vpack.c.b16 %v696, %v680
      %v825 = vpack.c.b16 %v697, %v681
      %v826 = vpack.c.b16 %v698, %v682
      %v827 = vpack.c.b16 %v699, %v683
      %v828 = vpack.c.b16 %v700, %v684
      %v829 = vpack.c.b16 %v701, %v685
      %v830 = vpack.c.b16 %v702, %v686
      %v831 = vpack.c.b16 %v703, %v687
      %v832 = vpack.c.b16 %v704, %v688
      %v833 = vpack.c.b16 %v705, %v689
      %v834 = vpack.c.b16 %v706, %v690
      %v835 = vpack.c.b16 %v707, %v691
      %v836 = vpack.c.b16 %v708, %v692
      %v837 = vpack.c.b16 %v709, %v693
      %v838 = vpack.c.b16 %v710, %v694
      %967 = vmatpush.bf16.msra.mxu0 %v823
      %968 = vmatpush.bf16.msra.mxu0 %v807
      %969 = vmatpush.bf16.msra.mxu0 %v791
      %970 = vmatpush.bf16.msra.mxu0 %v775
      %971 = vmatpush.bf16.msra.mxu0 %v759
      %972 = vmatpush.bf16.msra.mxu0 %v743
      %973 = vmatpush.bf16.msra.mxu0 %v727
      %974 = vmatpush.bf16.msra.mxu0 %v711
      %975 = vmatmul.bf16.gmra.mxu0 %v162
      %v976 = vpop.f32.mrf.mxu0
      %v977 = vadd.f32 %v295, %v976
      %v978 = vpop.f32.mrf.mxu0
      %979 = vdwg.mxu0
      %980 = vmatpush.bf16.msra.mxu0 %v824
      %981 = vmatpush.bf16.msra.mxu0 %v808
      %982 = vmatpush.bf16.msra.mxu0 %v792
      %983 = vmatpush.bf16.msra.mxu0 %v776
      %984 = vmatpush.bf16.msra.mxu0 %v760
      %985 = vmatpush.bf16.msra.mxu0 %v744
      %986 = vmatpush.bf16.msra.mxu0 %v728
      %987 = vmatpush.bf16.msra.mxu0 %v712
      %988 = vmatmul.bf16.gmra.mxu0 %v162
      %v989 = vpop.f32.mrf.mxu0
      %v990 = vadd.f32 %v296, %v989
      %v991 = vpop.f32.mrf.mxu0
      %992 = vdwg.mxu0
      %993 = vmatpush.bf16.msra.mxu0 %v825
      %994 = vmatpush.bf16.msra.mxu0 %v809
      %995 = vmatpush.bf16.msra.mxu0 %v793
      %996 = vmatpush.bf16.msra.mxu0 %v777
      %997 = vmatpush.bf16.msra.mxu0 %v761
      %998 = vmatpush.bf16.msra.mxu0 %v745
      %999 = vmatpush.bf16.msra.mxu0 %v729
      %1000 = vmatpush.bf16.msra.mxu0 %v713
      %1001 = vmatmul.bf16.gmra.mxu0 %v162
      %v1002 = vpop.f32.mrf.mxu0
      %v1003 = vadd.f32 %v297, %v1002
      %v1004 = vpop.f32.mrf.mxu0
      %1005 = vdwg.mxu0
      %1006 = vmatpush.bf16.msra.mxu0 %v826
      %1007 = vmatpush.bf16.msra.mxu0 %v810
      %1008 = vmatpush.bf16.msra.mxu0 %v794
      %1009 = vmatpush.bf16.msra.mxu0 %v778
      %1010 = vmatpush.bf16.msra.mxu0 %v762
      %1011 = vmatpush.bf16.msra.mxu0 %v746
      %1012 = vmatpush.bf16.msra.mxu0 %v730
      %1013 = vmatpush.bf16.msra.mxu0 %v714
      %1014 = vmatmul.bf16.gmra.mxu0 %v162
      %v1015 = vpop.f32.mrf.mxu0
      %v1016 = vadd.f32 %v298, %v1015
      %v1017 = vpop.f32.mrf.mxu0
      %1018 = vdwg.mxu0
      %1019 = vmatpush.bf16.msra.mxu0 %v827
      %1020 = vmatpush.bf16.msra.mxu0 %v811
      %1021 = vmatpush.bf16.msra.mxu0 %v795
      %1022 = vmatpush.bf16.msra.mxu0 %v779
      %1023 = vmatpush.bf16.msra.mxu0 %v763
      %1024 = vmatpush.bf16.msra.mxu0 %v747
      %1025 = vmatpush.bf16.msra.mxu0 %v731
      %1026 = vmatpush.bf16.msra.mxu0 %v715
      %1027 = vmatmul.bf16.gmra.mxu0 %v162
      %v1028 = vpop.f32.mrf.mxu0
      %v1029 = vadd.f32 %v299, %v1028
      %v1030 = vpop.f32.mrf.mxu0
      %1031 = vdwg.mxu0
      %1032 = vmatpush.bf16.msra.mxu0 %v828
      %1033 = vmatpush.bf16.msra.mxu0 %v812
      %1034 = vmatpush.bf16.msra.mxu0 %v796
      %1035 = vmatpush.bf16.msra.mxu0 %v780
      %1036 = vmatpush.bf16.msra.mxu0 %v764
      %1037 = vmatpush.bf16.msra.mxu0 %v748
      %1038 = vmatpush.bf16.msra.mxu0 %v732
      %1039 = vmatpush.bf16.msra.mxu0 %v716
      %1040 = vmatmul.bf16.gmra.mxu0 %v162
      %v1041 = vpop.f32.mrf.mxu0
      %v1042 = vadd.f32 %v300, %v1041
      %v1043 = vpop.f32.mrf.mxu0
      %1044 = vdwg.mxu0
      %1045 = vmatpush.bf16.msra.mxu0 %v829
      %1046 = vmatpush.bf16.msra.mxu0 %v813
      %1047 = vmatpush.bf16.msra.mxu0 %v797
      %1048 = vmatpush.bf16.msra.mxu0 %v781
      %1049 = vmatpush.bf16.msra.mxu0 %v765
      %1050 = vmatpush.bf16.msra.mxu0 %v749
      %1051 = vmatpush.bf16.msra.mxu0 %v733
      %1052 = vmatpush.bf16.msra.mxu0 %v717
      %1053 = vmatmul.bf16.gmra.mxu0 %v162
      %v1054 = vpop.f32.mrf.mxu0
      %v1055 = vadd.f32 %v301, %v1054
      %v1056 = vpop.f32.mrf.mxu0
      %1057 = vdwg.mxu0
      %1058 = vmatpush.bf16.msra.mxu0 %v830
      %1059 = vmatpush.bf16.msra.mxu0 %v814
      %1060 = vmatpush.bf16.msra.mxu0 %v798
      %1061 = vmatpush.bf16.msra.mxu0 %v782
      %1062 = vmatpush.bf16.msra.mxu0 %v766
      %1063 = vmatpush.bf16.msra.mxu0 %v750
      %1064 = vmatpush.bf16.msra.mxu0 %v734
      %1065 = vmatpush.bf16.msra.mxu0 %v718
      %1066 = vmatmul.bf16.gmra.mxu0 %v162
      %v1067 = vpop.f32.mrf.mxu0
      %v1068 = vadd.f32 %v302, %v1067
      %v1069 = vpop.f32.mrf.mxu0
      %1070 = vdwg.mxu0
      %1071 = vmatpush.bf16.msra.mxu0 %v831
      %1072 = vmatpush.bf16.msra.mxu0 %v815
      %1073 = vmatpush.bf16.msra.mxu0 %v799
      %1074 = vmatpush.bf16.msra.mxu0 %v783
      %1075 = vmatpush.bf16.msra.mxu0 %v767
      %1076 = vmatpush.bf16.msra.mxu0 %v751
      %1077 = vmatpush.bf16.msra.mxu0 %v735
      %1078 = vmatpush.bf16.msra.mxu0 %v719
      %1079 = vmatmul.bf16.gmra.mxu0 %v162
      %v1080 = vpop.f32.mrf.mxu0
      %v1081 = vadd.f32 %v303, %v1080
      %v1082 = vpop.f32.mrf.mxu0
      %1083 = vdwg.mxu0
      %1084 = vmatpush.bf16.msra.mxu0 %v832
      %1085 = vmatpush.bf16.msra.mxu0 %v816
      %1086 = vmatpush.bf16.msra.mxu0 %v800
      %1087 = vmatpush.bf16.msra.mxu0 %v784
      %1088 = vmatpush.bf16.msra.mxu0 %v768
      %1089 = vmatpush.bf16.msra.mxu0 %v752
      %1090 = vmatpush.bf16.msra.mxu0 %v736
      %1091 = vmatpush.bf16.msra.mxu0 %v720
      %1092 = vmatmul.bf16.gmra.mxu0 %v162
      %v1093 = vpop.f32.mrf.mxu0
      %v1094 = vadd.f32 %v304, %v1093
      %v1095 = vpop.f32.mrf.mxu0
      %1096 = vdwg.mxu0
      %1097 = vmatpush.bf16.msra.mxu0 %v833
      %1098 = vmatpush.bf16.msra.mxu0 %v817
      %1099 = vmatpush.bf16.msra.mxu0 %v801
      %1100 = vmatpush.bf16.msra.mxu0 %v785
      %1101 = vmatpush.bf16.msra.mxu0 %v769
      %1102 = vmatpush.bf16.msra.mxu0 %v753
      %1103 = vmatpush.bf16.msra.mxu0 %v737
      %1104 = vmatpush.bf16.msra.mxu0 %v721
      %1105 = vmatmul.bf16.gmra.mxu0 %v162
      %v1106 = vpop.f32.mrf.mxu0
      %v1107 = vadd.f32 %v305, %v1106
      %v1108 = vpop.f32.mrf.mxu0
      %1109 = vdwg.mxu0
      %1110 = vmatpush.bf16.msra.mxu0 %v834
      %1111 = vmatpush.bf16.msra.mxu0 %v818
      %1112 = vmatpush.bf16.msra.mxu0 %v802
      %1113 = vmatpush.bf16.msra.mxu0 %v786
      %1114 = vmatpush.bf16.msra.mxu0 %v770
      %1115 = vmatpush.bf16.msra.mxu0 %v754
      %1116 = vmatpush.bf16.msra.mxu0 %v738
      %1117 = vmatpush.bf16.msra.mxu0 %v722
      %1118 = vmatmul.bf16.gmra.mxu0 %v162
      %v1119 = vpop.f32.mrf.mxu0
      %v1120 = vadd.f32 %v306, %v1119
      %v1121 = vpop.f32.mrf.mxu0
      %1122 = vdwg.mxu0
      %1123 = vmatpush.bf16.msra.mxu0 %v835
      %1124 = vmatpush.bf16.msra.mxu0 %v819
      %1125 = vmatpush.bf16.msra.mxu0 %v803
      %1126 = vmatpush.bf16.msra.mxu0 %v787
      %1127 = vmatpush.bf16.msra.mxu0 %v771
      %1128 = vmatpush.bf16.msra.mxu0 %v755
      %1129 = vmatpush.bf16.msra.mxu0 %v739
      %1130 = vmatpush.bf16.msra.mxu0 %v723
      %1131 = vmatmul.bf16.gmra.mxu0 %v162
      %v1132 = vpop.f32.mrf.mxu0
      %v1133 = vadd.f32 %v307, %v1132
      %v1134 = vpop.f32.mrf.mxu0
      %1135 = vdwg.mxu0
      %1136 = vmatpush.bf16.msra.mxu0 %v836
      %1137 = vmatpush.bf16.msra.mxu0 %v820
      %1138 = vmatpush.bf16.msra.mxu0 %v804
      %1139 = vmatpush.bf16.msra.mxu0 %v788
      %1140 = vmatpush.bf16.msra.mxu0 %v772
      %1141 = vmatpush.bf16.msra.mxu0 %v756
      %1142 = vmatpush.bf16.msra.mxu0 %v740
      %1143 = vmatpush.bf16.msra.mxu0 %v724
      %1144 = vmatmul.bf16.gmra.mxu0 %v162
      %v1145 = vpop.f32.mrf.mxu0
      %v1146 = vadd.f32 %v308, %v1145
      %v1147 = vpop.f32.mrf.mxu0
      %1148 = vdwg.mxu0
      %1149 = vmatpush.bf16.msra.mxu0 %v837
      %1150 = vmatpush.bf16.msra.mxu0 %v821
      %1151 = vmatpush.bf16.msra.mxu0 %v805
      %1152 = vmatpush.bf16.msra.mxu0 %v789
      %1153 = vmatpush.bf16.msra.mxu0 %v773
      %1154 = vmatpush.bf16.msra.mxu0 %v757
      %1155 = vmatpush.bf16.msra.mxu0 %v741
      %1156 = vmatpush.bf16.msra.mxu0 %v725
      %1157 = vmatmul.bf16.gmra.mxu0 %v162
      %v1158 = vpop.f32.mrf.mxu0
      %v1159 = vadd.f32 %v309, %v1158
      %v1160 = vpop.f32.mrf.mxu0
      %1161 = vdwg.mxu0
      %1162 = vmatpush.bf16.msra.mxu0 %v838
      %1163 = vmatpush.bf16.msra.mxu0 %v822
      %1164 = vmatpush.bf16.msra.mxu0 %v806
      %1165 = vmatpush.bf16.msra.mxu0 %v790
      %1166 = vmatpush.bf16.msra.mxu0 %v774
      %1167 = vmatpush.bf16.msra.mxu0 %v758
      %1168 = vmatpush.bf16.msra.mxu0 %v742
      %1169 = vmatpush.bf16.msra.mxu0 %v726
      %1170 = vmatmul.bf16.gmra.mxu0 %v162
      %v1171 = vpop.f32.mrf.mxu0
      %v1172 = vadd.f32 %v310, %v1171
      %v1173 = vpop.f32.mrf.mxu0
      %1174 = vdwg.mxu0
      %v1175 = vmax.f32 %v977, 0.0
      %v1176 = vmax.f32 %v990, 0.0
      %v1177 = vmax.f32 %v1003, 0.0
      %v1178 = vmax.f32 %v1016, 0.0
      %v1179 = vmax.f32 %v1029, 0.0
      %v1180 = vmax.f32 %v1042, 0.0
      %v1181 = vmax.f32 %v1055, 0.0
      %v1182 = vmax.f32 %v1068, 0.0
      %v1183 = vmax.f32 %v1081, 0.0
      %v1184 = vmax.f32 %v1094, 0.0
      %v1185 = vmax.f32 %v1107, 0.0
      %v1186 = vmax.f32 %v1120, 0.0
      %v1187 = vmax.f32 %v1133, 0.0
      %v1188 = vmax.f32 %v1146, 0.0
      %v1189 = vmax.f32 %v1159, 0.0
      %v1190 = vmax.f32 %v1172, 0.0
      %v1191 = vpack.c.bf16 %v1175, %v1175
      %v1192 = vpack.c.bf16 %v1176, %v1176
      %v1193 = vpack.c.bf16 %v1177, %v1177
      %v1194 = vpack.c.bf16 %v1178, %v1178
      %v1195 = vpack.c.bf16 %v1179, %v1179
      %v1196 = vpack.c.bf16 %v1180, %v1180
      %v1197 = vpack.c.bf16 %v1181, %v1181
      %v1198 = vpack.c.bf16 %v1182, %v1182
      %v1199 = vpack.c.bf16 %v1183, %v1183
      %v1200 = vpack.c.bf16 %v1184, %v1184
      %v1201 = vpack.c.bf16 %v1185, %v1185
      %v1202 = vpack.c.bf16 %v1186, %v1186
      %v1203 = vpack.c.bf16 %v1187, %v1187
      %v1204 = vpack.c.bf16 %v1188, %v1188
      %v1205 = vpack.c.bf16 %v1189, %v1189
      %v1206 = vpack.c.bf16 %v1190, %v1190
      %v1207 = vld [vmem:[#allocation9] sm:$0xff]
      %v1208 = vld [vmem:[#allocation9 + $0x8] sm:$0xff]
      %v1209 = vld [vmem:[#allocation9 + $0x10] sm:$0xff]
      %v1210 = vld [vmem:[#allocation9 + $0x18] sm:$0xff]
      %v1211 = vld [vmem:[#allocation9 + $0x20] sm:$0xff]
      %v1212 = vld [vmem:[#allocation9 + $0x28] sm:$0xff]
      %v1213 = vld [vmem:[#allocation9 + $0x30] sm:$0xff]
      %v1214 = vld [vmem:[#allocation9 + $0x38] sm:$0xff]
      %v1215 = vld [vmem:[#allocation9 + $0x40] sm:$0xff]
      %v1216 = vld [vmem:[#allocation9 + $0x48] sm:$0xff]
      %v1217 = vld [vmem:[#allocation9 + $0x50] sm:$0xff]
      %v1218 = vld [vmem:[#allocation9 + $0x58] sm:$0xff]
      %v1219 = vld [vmem:[#allocation9 + $0x60] sm:$0xff]
      %v1220 = vld [vmem:[#allocation9 + $0x68] sm:$0xff]
      %v1221 = vld [vmem:[#allocation9 + $0x70] sm:$0xff]
      %v1222 = vld [vmem:[#allocation9 + $0x78] sm:$0xff]
      %v1223 = vld [vmem:[#allocation9 + $0x80] sm:$0xff]
      %v1224 = vld [vmem:[#allocation9 + $0x88] sm:$0xff]
      %v1225 = vld [vmem:[#allocation9 + $0x90] sm:$0xff]
      %v1226 = vld [vmem:[#allocation9 + $0x98] sm:$0xff]
      %v1227 = vld [vmem:[#allocation9 + $0xa0] sm:$0xff]
      %v1228 = vld [vmem:[#allocation9 + $0xa8] sm:$0xff]
      %v1229 = vld [vmem:[#allocation9 + $0xb0] sm:$0xff]
      %v1230 = vld [vmem:[#allocation9 + $0xb8] sm:$0xff]
      %v1231 = vld [vmem:[#allocation9 + $0xc0] sm:$0xff]
      %v1232 = vld [vmem:[#allocation9 + $0xc8] sm:$0xff]
      %v1233 = vld [vmem:[#allocation9 + $0xd0] sm:$0xff]
      %v1234 = vld [vmem:[#allocation9 + $0xd8] sm:$0xff]
      %v1235 = vld [vmem:[#allocation9 + $0xe0] sm:$0xff]
      %v1236 = vld [vmem:[#allocation9 + $0xe8] sm:$0xff]
      %v1237 = vld [vmem:[#allocation9 + $0xf0] sm:$0xff]
      %v1238 = vld [vmem:[#allocation9 + $0xf8] sm:$0xff]
      %v1239 = vld [vmem:[#allocation9 + $0x100] sm:$0xff]
      %v1240 = vld [vmem:[#allocation9 + $0x108] sm:$0xff]
      %v1241 = vld [vmem:[#allocation9 + $0x110] sm:$0xff]
      %v1242 = vld [vmem:[#allocation9 + $0x118] sm:$0xff]
      %v1243 = vld [vmem:[#allocation9 + $0x120] sm:$0xff]
      %v1244 = vld [vmem:[#allocation9 + $0x128] sm:$0xff]
      %v1245 = vld [vmem:[#allocation9 + $0x130] sm:$0xff]
      %v1246 = vld [vmem:[#allocation9 + $0x138] sm:$0xff]
      %v1247 = vld [vmem:[#allocation9 + $0x140] sm:$0xff]
      %v1248 = vld [vmem:[#allocation9 + $0x148] sm:$0xff]
      %v1249 = vld [vmem:[#allocation9 + $0x150] sm:$0xff]
      %v1250 = vld [vmem:[#allocation9 + $0x158] sm:$0xff]
      %v1251 = vld [vmem:[#allocation9 + $0x160] sm:$0xff]
      %v1252 = vld [vmem:[#allocation9 + $0x168] sm:$0xff]
      %v1253 = vld [vmem:[#allocation9 + $0x170] sm:$0xff]
      %v1254 = vld [vmem:[#allocation9 + $0x178] sm:$0xff]
      %v1255 = vld [vmem:[#allocation9 + $0x180] sm:$0xff]
      %v1256 = vld [vmem:[#allocation9 + $0x188] sm:$0xff]
      %v1257 = vld [vmem:[#allocation9 + $0x190] sm:$0xff]
      %v1258 = vld [vmem:[#allocation9 + $0x198] sm:$0xff]
      %v1259 = vld [vmem:[#allocation9 + $0x1a0] sm:$0xff]
      %v1260 = vld [vmem:[#allocation9 + $0x1a8] sm:$0xff]
      %v1261 = vld [vmem:[#allocation9 + $0x1b0] sm:$0xff]
      %v1262 = vld [vmem:[#allocation9 + $0x1b8] sm:$0xff]
      %v1263 = vld [vmem:[#allocation9 + $0x1c0] sm:$0xff]
      %v1264 = vld [vmem:[#allocation9 + $0x1c8] sm:$0xff]
      %v1265 = vld [vmem:[#allocation9 + $0x1d0] sm:$0xff]
      %v1266 = vld [vmem:[#allocation9 + $0x1d8] sm:$0xff]
      %v1267 = vld [vmem:[#allocation9 + $0x1e0] sm:$0xff]
      %v1268 = vld [vmem:[#allocation9 + $0x1e8] sm:$0xff]
      %v1269 = vld [vmem:[#allocation9 + $0x1f0] sm:$0xff]
      %v1270 = vld [vmem:[#allocation9 + $0x1f8] sm:$0xff]
      %v1271 = vld [vmem:[#allocation9 + $0x200] sm:$0xff]
      %v1272 = vld [vmem:[#allocation9 + $0x208] sm:$0xff]
      %v1273 = vld [vmem:[#allocation9 + $0x210] sm:$0xff]
      %v1274 = vld [vmem:[#allocation9 + $0x218] sm:$0xff]
      %v1275 = vld [vmem:[#allocation9 + $0x220] sm:$0xff]
      %v1276 = vld [vmem:[#allocation9 + $0x228] sm:$0xff]
      %v1277 = vld [vmem:[#allocation9 + $0x230] sm:$0xff]
      %v1278 = vld [vmem:[#allocation9 + $0x238] sm:$0xff]
      %v1279 = vld [vmem:[#allocation9 + $0x240] sm:$0xff]
      %v1280 = vld [vmem:[#allocation9 + $0x248] sm:$0xff]
      %v1281 = vld [vmem:[#allocation9 + $0x250] sm:$0xff]
      %v1282 = vld [vmem:[#allocation9 + $0x258] sm:$0xff]
      %v1283 = vld [vmem:[#allocation9 + $0x260] sm:$0xff]
      %v1284 = vld [vmem:[#allocation9 + $0x268] sm:$0xff]
      %v1285 = vld [vmem:[#allocation9 + $0x270] sm:$0xff]
      %v1286 = vld [vmem:[#allocation9 + $0x278] sm:$0xff]
      %v1287 = vld [vmem:[#allocation9 + $0x280] sm:$0xff]
      %v1288 = vld [vmem:[#allocation9 + $0x288] sm:$0xff]
      %v1289 = vld [vmem:[#allocation9 + $0x290] sm:$0xff]
      %v1290 = vld [vmem:[#allocation9 + $0x298] sm:$0xff]
      %v1291 = vld [vmem:[#allocation9 + $0x2a0] sm:$0xff]
      %v1292 = vld [vmem:[#allocation9 + $0x2a8] sm:$0xff]
      %v1293 = vld [vmem:[#allocation9 + $0x2b0] sm:$0xff]
      %v1294 = vld [vmem:[#allocation9 + $0x2b8] sm:$0xff]
      %v1295 = vld [vmem:[#allocation9 + $0x2c0] sm:$0xff]
      %v1296 = vld [vmem:[#allocation9 + $0x2c8] sm:$0xff]
      %v1297 = vld [vmem:[#allocation9 + $0x2d0] sm:$0xff]
      %v1298 = vld [vmem:[#allocation9 + $0x2d8] sm:$0xff]
      %v1299 = vld [vmem:[#allocation9 + $0x2e0] sm:$0xff]
      %v1300 = vld [vmem:[#allocation9 + $0x2e8] sm:$0xff]
      %v1301 = vld [vmem:[#allocation9 + $0x2f0] sm:$0xff]
      %v1302 = vld [vmem:[#allocation9 + $0x2f8] sm:$0xff]
      %v1303 = vld [vmem:[#allocation9 + $0x300] sm:$0xff]
      %v1304 = vld [vmem:[#allocation9 + $0x308] sm:$0xff]
      %v1305 = vld [vmem:[#allocation9 + $0x310] sm:$0xff]
      %v1306 = vld [vmem:[#allocation9 + $0x318] sm:$0xff]
      %v1307 = vld [vmem:[#allocation9 + $0x320] sm:$0xff]
      %v1308 = vld [vmem:[#allocation9 + $0x328] sm:$0xff]
      %v1309 = vld [vmem:[#allocation9 + $0x330] sm:$0xff]
      %v1310 = vld [vmem:[#allocation9 + $0x338] sm:$0xff]
      %v1311 = vld [vmem:[#allocation9 + $0x340] sm:$0xff]
      %v1312 = vld [vmem:[#allocation9 + $0x348] sm:$0xff]
      %v1313 = vld [vmem:[#allocation9 + $0x350] sm:$0xff]
      %v1314 = vld [vmem:[#allocation9 + $0x358] sm:$0xff]
      %v1315 = vld [vmem:[#allocation9 + $0x360] sm:$0xff]
      %v1316 = vld [vmem:[#allocation9 + $0x368] sm:$0xff]
      %v1317 = vld [vmem:[#allocation9 + $0x370] sm:$0xff]
      %v1318 = vld [vmem:[#allocation9 + $0x378] sm:$0xff]
      %v1319 = vld [vmem:[#allocation9 + $0x380] sm:$0xff]
      %v1320 = vld [vmem:[#allocation9 + $0x388] sm:$0xff]
      %v1321 = vld [vmem:[#allocation9 + $0x390] sm:$0xff]
      %v1322 = vld [vmem:[#allocation9 + $0x398] sm:$0xff]
      %v1323 = vld [vmem:[#allocation9 + $0x3a0] sm:$0xff]
      %v1324 = vld [vmem:[#allocation9 + $0x3a8] sm:$0xff]
      %v1325 = vld [vmem:[#allocation9 + $0x3b0] sm:$0xff]
      %v1326 = vld [vmem:[#allocation9 + $0x3b8] sm:$0xff]
      %v1327 = vld [vmem:[#allocation9 + $0x3c0] sm:$0xff]
      %v1328 = vld [vmem:[#allocation9 + $0x3c8] sm:$0xff]
      %v1329 = vld [vmem:[#allocation9 + $0x3d0] sm:$0xff]
      %v1330 = vld [vmem:[#allocation9 + $0x3d8] sm:$0xff]
      %v1331 = vld [vmem:[#allocation9 + $0x3e0] sm:$0xff]
      %v1332 = vld [vmem:[#allocation9 + $0x3e8] sm:$0xff]
      %v1333 = vld [vmem:[#allocation9 + $0x3f0] sm:$0xff]
      %v1334 = vld [vmem:[#allocation9 + $0x3f8] sm:$0xff]
      %v1335 = vld [vmem:[#allocation9 + $0x400] sm:$0xff]
      %v1336 = vld [vmem:[#allocation9 + $0x408] sm:$0xff]
      %v1337 = vld [vmem:[#allocation9 + $0x410] sm:$0xff]
      %v1338 = vld [vmem:[#allocation9 + $0x418] sm:$0xff]
      %v1339 = vld [vmem:[#allocation9 + $0x420] sm:$0xff]
      %v1340 = vld [vmem:[#allocation9 + $0x428] sm:$0xff]
      %v1341 = vld [vmem:[#allocation9 + $0x430] sm:$0xff]
      %v1342 = vld [vmem:[#allocation9 + $0x438] sm:$0xff]
      %v1343 = vld [vmem:[#allocation9 + $0x440] sm:$0xff]
      %v1344 = vld [vmem:[#allocation9 + $0x448] sm:$0xff]
      %v1345 = vld [vmem:[#allocation9 + $0x450] sm:$0xff]
      %v1346 = vld [vmem:[#allocation9 + $0x458] sm:$0xff]
      %v1347 = vld [vmem:[#allocation9 + $0x460] sm:$0xff]
      %v1348 = vld [vmem:[#allocation9 + $0x468] sm:$0xff]
      %v1349 = vld [vmem:[#allocation9 + $0x470] sm:$0xff]
      %v1350 = vld [vmem:[#allocation9 + $0x478] sm:$0xff]
      %v1351 = vld [vmem:[#allocation9 + $0x480] sm:$0xff]
      %v1352 = vld [vmem:[#allocation9 + $0x488] sm:$0xff]
      %v1353 = vld [vmem:[#allocation9 + $0x490] sm:$0xff]
      %v1354 = vld [vmem:[#allocation9 + $0x498] sm:$0xff]
      %v1355 = vld [vmem:[#allocation9 + $0x4a0] sm:$0xff]
      %v1356 = vld [vmem:[#allocation9 + $0x4a8] sm:$0xff]
      %v1357 = vld [vmem:[#allocation9 + $0x4b0] sm:$0xff]
      %v1358 = vld [vmem:[#allocation9 + $0x4b8] sm:$0xff]
      %v1359 = vld [vmem:[#allocation9 + $0x4c0] sm:$0xff]
      %v1360 = vld [vmem:[#allocation9 + $0x4c8] sm:$0xff]
      %v1361 = vld [vmem:[#allocation9 + $0x4d0] sm:$0xff]
      %v1362 = vld [vmem:[#allocation9 + $0x4d8] sm:$0xff]
      %v1363 = vld [vmem:[#allocation9 + $0x4e0] sm:$0xff]
      %v1364 = vld [vmem:[#allocation9 + $0x4e8] sm:$0xff]
      %v1365 = vld [vmem:[#allocation9 + $0x4f0] sm:$0xff]
      %v1366 = vld [vmem:[#allocation9 + $0x4f8] sm:$0xff]
      %v1367 = vld [vmem:[#allocation9 + $0x500] sm:$0xff]
      %v1368 = vld [vmem:[#allocation9 + $0x508] sm:$0xff]
      %v1369 = vld [vmem:[#allocation9 + $0x510] sm:$0xff]
      %v1370 = vld [vmem:[#allocation9 + $0x518] sm:$0xff]
      %v1371 = vld [vmem:[#allocation9 + $0x520] sm:$0xff]
      %v1372 = vld [vmem:[#allocation9 + $0x528] sm:$0xff]
      %v1373 = vld [vmem:[#allocation9 + $0x530] sm:$0xff]
      %v1374 = vld [vmem:[#allocation9 + $0x538] sm:$0xff]
      %v1375 = vld [vmem:[#allocation9 + $0x540] sm:$0xff]
      %v1376 = vld [vmem:[#allocation9 + $0x548] sm:$0xff]
      %v1377 = vld [vmem:[#allocation9 + $0x550] sm:$0xff]
      %v1378 = vld [vmem:[#allocation9 + $0x558] sm:$0xff]
      %v1379 = vld [vmem:[#allocation9 + $0x560] sm:$0xff]
      %v1380 = vld [vmem:[#allocation9 + $0x568] sm:$0xff]
      %v1381 = vld [vmem:[#allocation9 + $0x570] sm:$0xff]
      %v1382 = vld [vmem:[#allocation9 + $0x578] sm:$0xff]
      %v1383 = vld [vmem:[#allocation9 + $0x580] sm:$0xff]
      %v1384 = vld [vmem:[#allocation9 + $0x588] sm:$0xff]
      %v1385 = vld [vmem:[#allocation9 + $0x590] sm:$0xff]
      %v1386 = vld [vmem:[#allocation9 + $0x598] sm:$0xff]
      %v1387 = vld [vmem:[#allocation9 + $0x5a0] sm:$0xff]
      %v1388 = vld [vmem:[#allocation9 + $0x5a8] sm:$0xff]
      %v1389 = vld [vmem:[#allocation9 + $0x5b0] sm:$0xff]
      %v1390 = vld [vmem:[#allocation9 + $0x5b8] sm:$0xff]
      %v1391 = vld [vmem:[#allocation9 + $0x5c0] sm:$0xff]
      %v1392 = vld [vmem:[#allocation9 + $0x5c8] sm:$0xff]
      %v1393 = vld [vmem:[#allocation9 + $0x5d0] sm:$0xff]
      %v1394 = vld [vmem:[#allocation9 + $0x5d8] sm:$0xff]
      %v1395 = vld [vmem:[#allocation9 + $0x5e0] sm:$0xff]
      %v1396 = vld [vmem:[#allocation9 + $0x5e8] sm:$0xff]
      %v1397 = vld [vmem:[#allocation9 + $0x5f0] sm:$0xff]
      %v1398 = vld [vmem:[#allocation9 + $0x5f8] sm:$0xff]
      %v1399 = vld [vmem:[#allocation9 + $0x600] sm:$0xff]
      %v1400 = vld [vmem:[#allocation9 + $0x608] sm:$0xff]
      %v1401 = vld [vmem:[#allocation9 + $0x610] sm:$0xff]
      %v1402 = vld [vmem:[#allocation9 + $0x618] sm:$0xff]
      %v1403 = vld [vmem:[#allocation9 + $0x620] sm:$0xff]
      %v1404 = vld [vmem:[#allocation9 + $0x628] sm:$0xff]
      %v1405 = vld [vmem:[#allocation9 + $0x630] sm:$0xff]
      %v1406 = vld [vmem:[#allocation9 + $0x638] sm:$0xff]
      %v1407 = vld [vmem:[#allocation9 + $0x640] sm:$0xff]
      %v1408 = vld [vmem:[#allocation9 + $0x648] sm:$0xff]
      %v1409 = vld [vmem:[#allocation9 + $0x650] sm:$0xff]
      %v1410 = vld [vmem:[#allocation9 + $0x658] sm:$0xff]
      %v1411 = vld [vmem:[#allocation9 + $0x660] sm:$0xff]
      %v1412 = vld [vmem:[#allocation9 + $0x668] sm:$0xff]
      %v1413 = vld [vmem:[#allocation9 + $0x670] sm:$0xff]
      %v1414 = vld [vmem:[#allocation9 + $0x678] sm:$0xff]
      %v1415 = vld [vmem:[#allocation9 + $0x680] sm:$0xff]
      %v1416 = vld [vmem:[#allocation9 + $0x688] sm:$0xff]
      %v1417 = vld [vmem:[#allocation9 + $0x690] sm:$0xff]
      %v1418 = vld [vmem:[#allocation9 + $0x698] sm:$0xff]
      %v1419 = vld [vmem:[#allocation9 + $0x6a0] sm:$0xff]
      %v1420 = vld [vmem:[#allocation9 + $0x6a8] sm:$0xff]
      %v1421 = vld [vmem:[#allocation9 + $0x6b0] sm:$0xff]
      %v1422 = vld [vmem:[#allocation9 + $0x6b8] sm:$0xff]
      %v1423 = vld [vmem:[#allocation9 + $0x6c0] sm:$0xff]
      %v1424 = vld [vmem:[#allocation9 + $0x6c8] sm:$0xff]
      %v1425 = vld [vmem:[#allocation9 + $0x6d0] sm:$0xff]
      %v1426 = vld [vmem:[#allocation9 + $0x6d8] sm:$0xff]
      %v1427 = vld [vmem:[#allocation9 + $0x6e0] sm:$0xff]
      %v1428 = vld [vmem:[#allocation9 + $0x6e8] sm:$0xff]
      %v1429 = vld [vmem:[#allocation9 + $0x6f0] sm:$0xff]
      %v1430 = vld [vmem:[#allocation9 + $0x6f8] sm:$0xff]
      %v1431 = vld [vmem:[#allocation9 + $0x700] sm:$0xff]
      %v1432 = vld [vmem:[#allocation9 + $0x708] sm:$0xff]
      %v1433 = vld [vmem:[#allocation9 + $0x710] sm:$0xff]
      %v1434 = vld [vmem:[#allocation9 + $0x718] sm:$0xff]
      %v1435 = vld [vmem:[#allocation9 + $0x720] sm:$0xff]
      %v1436 = vld [vmem:[#allocation9 + $0x728] sm:$0xff]
      %v1437 = vld [vmem:[#allocation9 + $0x730] sm:$0xff]
      %v1438 = vld [vmem:[#allocation9 + $0x738] sm:$0xff]
      %v1439 = vld [vmem:[#allocation9 + $0x740] sm:$0xff]
      %v1440 = vld [vmem:[#allocation9 + $0x748] sm:$0xff]
      %v1441 = vld [vmem:[#allocation9 + $0x750] sm:$0xff]
      %v1442 = vld [vmem:[#allocation9 + $0x758] sm:$0xff]
      %v1443 = vld [vmem:[#allocation9 + $0x760] sm:$0xff]
      %v1444 = vld [vmem:[#allocation9 + $0x768] sm:$0xff]
      %v1445 = vld [vmem:[#allocation9 + $0x770] sm:$0xff]
      %v1446 = vld [vmem:[#allocation9 + $0x778] sm:$0xff]
      %v1447 = vld [vmem:[#allocation9 + $0x780] sm:$0xff]
      %v1448 = vld [vmem:[#allocation9 + $0x788] sm:$0xff]
      %v1449 = vld [vmem:[#allocation9 + $0x790] sm:$0xff]
      %v1450 = vld [vmem:[#allocation9 + $0x798] sm:$0xff]
      %v1451 = vld [vmem:[#allocation9 + $0x7a0] sm:$0xff]
      %v1452 = vld [vmem:[#allocation9 + $0x7a8] sm:$0xff]
      %v1453 = vld [vmem:[#allocation9 + $0x7b0] sm:$0xff]
      %v1454 = vld [vmem:[#allocation9 + $0x7b8] sm:$0xff]
      %v1455 = vld [vmem:[#allocation9 + $0x7c0] sm:$0xff]
      %v1456 = vld [vmem:[#allocation9 + $0x7c8] sm:$0xff]
      %v1457 = vld [vmem:[#allocation9 + $0x7d0] sm:$0xff]
      %v1458 = vld [vmem:[#allocation9 + $0x7d8] sm:$0xff]
      %v1459 = vld [vmem:[#allocation9 + $0x7e0] sm:$0xff]
      %v1460 = vld [vmem:[#allocation9 + $0x7e8] sm:$0xff]
      %v1461 = vld [vmem:[#allocation9 + $0x7f0] sm:$0xff]
      %v1462 = vld [vmem:[#allocation9 + $0x7f8] sm:$0xff]
      %v1463 = vld [vmem:[#allocation9 + $0x800] sm:$0xff]
      %v1464 = vld [vmem:[#allocation9 + $0x808] sm:$0xff]
      %v1465 = vld [vmem:[#allocation9 + $0x810] sm:$0xff]
      %v1466 = vld [vmem:[#allocation9 + $0x818] sm:$0xff]
      %v1467 = vld [vmem:[#allocation9 + $0x820] sm:$0xff]
      %v1468 = vld [vmem:[#allocation9 + $0x828] sm:$0xff]
      %v1469 = vld [vmem:[#allocation9 + $0x830] sm:$0xff]
      %v1470 = vld [vmem:[#allocation9 + $0x838] sm:$0xff]
      %v1471 = vld [vmem:[#allocation9 + $0x840] sm:$0xff]
      %v1472 = vld [vmem:[#allocation9 + $0x848] sm:$0xff]
      %v1473 = vld [vmem:[#allocation9 + $0x850] sm:$0xff]
      %v1474 = vld [vmem:[#allocation9 + $0x858] sm:$0xff]
      %v1475 = vld [vmem:[#allocation9 + $0x860] sm:$0xff]
      %v1476 = vld [vmem:[#allocation9 + $0x868] sm:$0xff]
      %v1477 = vld [vmem:[#allocation9 + $0x870] sm:$0xff]
      %v1478 = vld [vmem:[#allocation9 + $0x878] sm:$0xff]
      %v1479 = vld [vmem:[#allocation9 + $0x880] sm:$0xff]
      %v1480 = vld [vmem:[#allocation9 + $0x888] sm:$0xff]
      %v1481 = vld [vmem:[#allocation9 + $0x890] sm:$0xff]
      %v1482 = vld [vmem:[#allocation9 + $0x898] sm:$0xff]
      %v1483 = vld [vmem:[#allocation9 + $0x8a0] sm:$0xff]
      %v1484 = vld [vmem:[#allocation9 + $0x8a8] sm:$0xff]
      %v1485 = vld [vmem:[#allocation9 + $0x8b0] sm:$0xff]
      %v1486 = vld [vmem:[#allocation9 + $0x8b8] sm:$0xff]
      %v1487 = vld [vmem:[#allocation9 + $0x8c0] sm:$0xff]
      %v1488 = vld [vmem:[#allocation9 + $0x8c8] sm:$0xff]
      %v1489 = vld [vmem:[#allocation9 + $0x8d0] sm:$0xff]
      %v1490 = vld [vmem:[#allocation9 + $0x8d8] sm:$0xff]
      %v1491 = vld [vmem:[#allocation9 + $0x8e0] sm:$0xff]
      %v1492 = vld [vmem:[#allocation9 + $0x8e8] sm:$0xff]
      %v1493 = vld [vmem:[#allocation9 + $0x8f0] sm:$0xff]
      %v1494 = vld [vmem:[#allocation9 + $0x8f8] sm:$0xff]
      %v1495 = vld [vmem:[#allocation9 + $0x900] sm:$0xff]
      %v1496 = vld [vmem:[#allocation9 + $0x908] sm:$0xff]
      %v1497 = vld [vmem:[#allocation9 + $0x910] sm:$0xff]
      %v1498 = vld [vmem:[#allocation9 + $0x918] sm:$0xff]
      %v1499 = vld [vmem:[#allocation9 + $0x920] sm:$0xff]
      %v1500 = vld [vmem:[#allocation9 + $0x928] sm:$0xff]
      %v1501 = vld [vmem:[#allocation9 + $0x930] sm:$0xff]
      %v1502 = vld [vmem:[#allocation9 + $0x938] sm:$0xff]
      %v1503 = vld [vmem:[#allocation9 + $0x940] sm:$0xff]
      %v1504 = vld [vmem:[#allocation9 + $0x948] sm:$0xff]
      %v1505 = vld [vmem:[#allocation9 + $0x950] sm:$0xff]
      %v1506 = vld [vmem:[#allocation9 + $0x958] sm:$0xff]
      %v1507 = vld [vmem:[#allocation9 + $0x960] sm:$0xff]
      %v1508 = vld [vmem:[#allocation9 + $0x968] sm:$0xff]
      %v1509 = vld [vmem:[#allocation9 + $0x970] sm:$0xff]
      %v1510 = vld [vmem:[#allocation9 + $0x978] sm:$0xff]
      %v1511 = vld [vmem:[#allocation9 + $0x980] sm:$0xff]
      %v1512 = vld [vmem:[#allocation9 + $0x988] sm:$0xff]
      %v1513 = vld [vmem:[#allocation9 + $0x990] sm:$0xff]
      %v1514 = vld [vmem:[#allocation9 + $0x998] sm:$0xff]
      %v1515 = vld [vmem:[#allocation9 + $0x9a0] sm:$0xff]
      %v1516 = vld [vmem:[#allocation9 + $0x9a8] sm:$0xff]
      %v1517 = vld [vmem:[#allocation9 + $0x9b0] sm:$0xff]
      %v1518 = vld [vmem:[#allocation9 + $0x9b8] sm:$0xff]
      %v1519 = vld [vmem:[#allocation9 + $0x9c0] sm:$0xff]
      %v1520 = vld [vmem:[#allocation9 + $0x9c8] sm:$0xff]
      %v1521 = vld [vmem:[#allocation9 + $0x9d0] sm:$0xff]
      %v1522 = vld [vmem:[#allocation9 + $0x9d8] sm:$0xff]
      %v1523 = vld [vmem:[#allocation9 + $0x9e0] sm:$0xff]
      %v1524 = vld [vmem:[#allocation9 + $0x9e8] sm:$0xff]
      %v1525 = vld [vmem:[#allocation9 + $0x9f0] sm:$0xff]
      %v1526 = vld [vmem:[#allocation9 + $0x9f8] sm:$0xff]
      %v1527 = vld [vmem:[#allocation9 + $0xa00] sm:$0xff]
      %v1528 = vld [vmem:[#allocation9 + $0xa08] sm:$0xff]
      %v1529 = vld [vmem:[#allocation9 + $0xa10] sm:$0xff]
      %v1530 = vld [vmem:[#allocation9 + $0xa18] sm:$0xff]
      %v1531 = vld [vmem:[#allocation9 + $0xa20] sm:$0xff]
      %v1532 = vld [vmem:[#allocation9 + $0xa28] sm:$0xff]
      %v1533 = vld [vmem:[#allocation9 + $0xa30] sm:$0xff]
      %v1534 = vld [vmem:[#allocation9 + $0xa38] sm:$0xff]
      %v1535 = vld [vmem:[#allocation9 + $0xa40] sm:$0xff]
      %v1536 = vld [vmem:[#allocation9 + $0xa48] sm:$0xff]
      %v1537 = vld [vmem:[#allocation9 + $0xa50] sm:$0xff]
      %v1538 = vld [vmem:[#allocation9 + $0xa58] sm:$0xff]
      %v1539 = vld [vmem:[#allocation9 + $0xa60] sm:$0xff]
      %v1540 = vld [vmem:[#allocation9 + $0xa68] sm:$0xff]
      %v1541 = vld [vmem:[#allocation9 + $0xa70] sm:$0xff]
      %v1542 = vld [vmem:[#allocation9 + $0xa78] sm:$0xff]
      %v1543 = vld [vmem:[#allocation9 + $0xa80] sm:$0xff]
      %v1544 = vld [vmem:[#allocation9 + $0xa88] sm:$0xff]
      %v1545 = vld [vmem:[#allocation9 + $0xa90] sm:$0xff]
      %v1546 = vld [vmem:[#allocation9 + $0xa98] sm:$0xff]
      %v1547 = vld [vmem:[#allocation9 + $0xaa0] sm:$0xff]
      %v1548 = vld [vmem:[#allocation9 + $0xaa8] sm:$0xff]
      %v1549 = vld [vmem:[#allocation9 + $0xab0] sm:$0xff]
      %v1550 = vld [vmem:[#allocation9 + $0xab8] sm:$0xff]
      %v1551 = vld [vmem:[#allocation9 + $0xac0] sm:$0xff]
      %v1552 = vld [vmem:[#allocation9 + $0xac8] sm:$0xff]
      %v1553 = vld [vmem:[#allocation9 + $0xad0] sm:$0xff]
      %v1554 = vld [vmem:[#allocation9 + $0xad8] sm:$0xff]
      %v1555 = vld [vmem:[#allocation9 + $0xae0] sm:$0xff]
      %v1556 = vld [vmem:[#allocation9 + $0xae8] sm:$0xff]
      %v1557 = vld [vmem:[#allocation9 + $0xaf0] sm:$0xff]
      %v1558 = vld [vmem:[#allocation9 + $0xaf8] sm:$0xff]
      %v1559 = vld [vmem:[#allocation9 + $0xb00] sm:$0xff]
      %v1560 = vld [vmem:[#allocation9 + $0xb08] sm:$0xff]
      %v1561 = vld [vmem:[#allocation9 + $0xb10] sm:$0xff]
      %v1562 = vld [vmem:[#allocation9 + $0xb18] sm:$0xff]
      %v1563 = vld [vmem:[#allocation9 + $0xb20] sm:$0xff]
      %v1564 = vld [vmem:[#allocation9 + $0xb28] sm:$0xff]
      %v1565 = vld [vmem:[#allocation9 + $0xb30] sm:$0xff]
      %v1566 = vld [vmem:[#allocation9 + $0xb38] sm:$0xff]
      %v1567 = vld [vmem:[#allocation9 + $0xb40] sm:$0xff]
      %v1568 = vld [vmem:[#allocation9 + $0xb48] sm:$0xff]
      %v1569 = vld [vmem:[#allocation9 + $0xb50] sm:$0xff]
      %v1570 = vld [vmem:[#allocation9 + $0xb58] sm:$0xff]
      %v1571 = vld [vmem:[#allocation9 + $0xb60] sm:$0xff]
      %v1572 = vld [vmem:[#allocation9 + $0xb68] sm:$0xff]
      %v1573 = vld [vmem:[#allocation9 + $0xb70] sm:$0xff]
      %v1574 = vld [vmem:[#allocation9 + $0xb78] sm:$0xff]
      %v1575 = vld [vmem:[#allocation9 + $0xb80] sm:$0xff]
      %v1576 = vld [vmem:[#allocation9 + $0xb88] sm:$0xff]
      %v1577 = vld [vmem:[#allocation9 + $0xb90] sm:$0xff]
      %v1578 = vld [vmem:[#allocation9 + $0xb98] sm:$0xff]
      %v1579 = vld [vmem:[#allocation9 + $0xba0] sm:$0xff]
      %v1580 = vld [vmem:[#allocation9 + $0xba8] sm:$0xff]
      %v1581 = vld [vmem:[#allocation9 + $0xbb0] sm:$0xff]
      %v1582 = vld [vmem:[#allocation9 + $0xbb8] sm:$0xff]
      %v1583 = vld [vmem:[#allocation9 + $0xbc0] sm:$0xff]
      %v1584 = vld [vmem:[#allocation9 + $0xbc8] sm:$0xff]
      %v1585 = vld [vmem:[#allocation9 + $0xbd0] sm:$0xff]
      %v1586 = vld [vmem:[#allocation9 + $0xbd8] sm:$0xff]
      %v1587 = vld [vmem:[#allocation9 + $0xbe0] sm:$0xff]
      %v1588 = vld [vmem:[#allocation9 + $0xbe8] sm:$0xff]
      %v1589 = vld [vmem:[#allocation9 + $0xbf0] sm:$0xff]
      %v1590 = vld [vmem:[#allocation9 + $0xbf8] sm:$0xff]
      %v1591 = vld [vmem:[#allocation9 + $0xc00] sm:$0xff]
      %v1592 = vld [vmem:[#allocation9 + $0xc08] sm:$0xff]
      %v1593 = vld [vmem:[#allocation9 + $0xc10] sm:$0xff]
      %v1594 = vld [vmem:[#allocation9 + $0xc18] sm:$0xff]
      %v1595 = vld [vmem:[#allocation9 + $0xc20] sm:$0xff]
      %v1596 = vld [vmem:[#allocation9 + $0xc28] sm:$0xff]
      %v1597 = vld [vmem:[#allocation9 + $0xc30] sm:$0xff]
      %v1598 = vld [vmem:[#allocation9 + $0xc38] sm:$0xff]
      %v1599 = vld [vmem:[#allocation9 + $0xc40] sm:$0xff]
      %v1600 = vld [vmem:[#allocation9 + $0xc48] sm:$0xff]
      %v1601 = vld [vmem:[#allocation9 + $0xc50] sm:$0xff]
      %v1602 = vld [vmem:[#allocation9 + $0xc58] sm:$0xff]
      %v1603 = vld [vmem:[#allocation9 + $0xc60] sm:$0xff]
      %v1604 = vld [vmem:[#allocation9 + $0xc68] sm:$0xff]
      %v1605 = vld [vmem:[#allocation9 + $0xc70] sm:$0xff]
      %v1606 = vld [vmem:[#allocation9 + $0xc78] sm:$0xff]
      %v1607 = vld [vmem:[#allocation9 + $0xc80] sm:$0xff]
      %v1608 = vld [vmem:[#allocation9 + $0xc88] sm:$0xff]
      %v1609 = vld [vmem:[#allocation9 + $0xc90] sm:$0xff]
      %v1610 = vld [vmem:[#allocation9 + $0xc98] sm:$0xff]
      %v1611 = vld [vmem:[#allocation9 + $0xca0] sm:$0xff]
      %v1612 = vld [vmem:[#allocation9 + $0xca8] sm:$0xff]
      %v1613 = vld [vmem:[#allocation9 + $0xcb0] sm:$0xff]
      %v1614 = vld [vmem:[#allocation9 + $0xcb8] sm:$0xff]
      %v1615 = vld [vmem:[#allocation9 + $0xcc0] sm:$0xff]
      %v1616 = vld [vmem:[#allocation9 + $0xcc8] sm:$0xff]
      %v1617 = vld [vmem:[#allocation9 + $0xcd0] sm:$0xff]
      %v1618 = vld [vmem:[#allocation9 + $0xcd8] sm:$0xff]
      %v1619 = vld [vmem:[#allocation9 + $0xce0] sm:$0xff]
      %v1620 = vld [vmem:[#allocation9 + $0xce8] sm:$0xff]
      %v1621 = vld [vmem:[#allocation9 + $0xcf0] sm:$0xff]
      %v1622 = vld [vmem:[#allocation9 + $0xcf8] sm:$0xff]
      %v1623 = vld [vmem:[#allocation9 + $0xd00] sm:$0xff]
      %v1624 = vld [vmem:[#allocation9 + $0xd08] sm:$0xff]
      %v1625 = vld [vmem:[#allocation9 + $0xd10] sm:$0xff]
      %v1626 = vld [vmem:[#allocation9 + $0xd18] sm:$0xff]
      %v1627 = vld [vmem:[#allocation9 + $0xd20] sm:$0xff]
      %v1628 = vld [vmem:[#allocation9 + $0xd28] sm:$0xff]
      %v1629 = vld [vmem:[#allocation9 + $0xd30] sm:$0xff]
      %v1630 = vld [vmem:[#allocation9 + $0xd38] sm:$0xff]
      %v1631 = vld [vmem:[#allocation9 + $0xd40] sm:$0xff]
      %v1632 = vld [vmem:[#allocation9 + $0xd48] sm:$0xff]
      %v1633 = vld [vmem:[#allocation9 + $0xd50] sm:$0xff]
      %v1634 = vld [vmem:[#allocation9 + $0xd58] sm:$0xff]
      %v1635 = vld [vmem:[#allocation9 + $0xd60] sm:$0xff]
      %v1636 = vld [vmem:[#allocation9 + $0xd68] sm:$0xff]
      %v1637 = vld [vmem:[#allocation9 + $0xd70] sm:$0xff]
      %v1638 = vld [vmem:[#allocation9 + $0xd78] sm:$0xff]
      %v1639 = vld [vmem:[#allocation9 + $0xd80] sm:$0xff]
      %v1640 = vld [vmem:[#allocation9 + $0xd88] sm:$0xff]
      %v1641 = vld [vmem:[#allocation9 + $0xd90] sm:$0xff]
      %v1642 = vld [vmem:[#allocation9 + $0xd98] sm:$0xff]
      %v1643 = vld [vmem:[#allocation9 + $0xda0] sm:$0xff]
      %v1644 = vld [vmem:[#allocation9 + $0xda8] sm:$0xff]
      %v1645 = vld [vmem:[#allocation9 + $0xdb0] sm:$0xff]
      %v1646 = vld [vmem:[#allocation9 + $0xdb8] sm:$0xff]
      %v1647 = vld [vmem:[#allocation9 + $0xdc0] sm:$0xff]
      %v1648 = vld [vmem:[#allocation9 + $0xdc8] sm:$0xff]
      %v1649 = vld [vmem:[#allocation9 + $0xdd0] sm:$0xff]
      %v1650 = vld [vmem:[#allocation9 + $0xdd8] sm:$0xff]
      %v1651 = vld [vmem:[#allocation9 + $0xde0] sm:$0xff]
      %v1652 = vld [vmem:[#allocation9 + $0xde8] sm:$0xff]
      %v1653 = vld [vmem:[#allocation9 + $0xdf0] sm:$0xff]
      %v1654 = vld [vmem:[#allocation9 + $0xdf8] sm:$0xff]
      %v1655 = vld [vmem:[#allocation9 + $0xe00] sm:$0xff]
      %v1656 = vld [vmem:[#allocation9 + $0xe08] sm:$0xff]
      %v1657 = vld [vmem:[#allocation9 + $0xe10] sm:$0xff]
      %v1658 = vld [vmem:[#allocation9 + $0xe18] sm:$0xff]
      %v1659 = vld [vmem:[#allocation9 + $0xe20] sm:$0xff]
      %v1660 = vld [vmem:[#allocation9 + $0xe28] sm:$0xff]
      %v1661 = vld [vmem:[#allocation9 + $0xe30] sm:$0xff]
      %v1662 = vld [vmem:[#allocation9 + $0xe38] sm:$0xff]
      %v1663 = vld [vmem:[#allocation9 + $0xe40] sm:$0xff]
      %v1664 = vld [vmem:[#allocation9 + $0xe48] sm:$0xff]
      %v1665 = vld [vmem:[#allocation9 + $0xe50] sm:$0xff]
      %v1666 = vld [vmem:[#allocation9 + $0xe58] sm:$0xff]
      %v1667 = vld [vmem:[#allocation9 + $0xe60] sm:$0xff]
      %v1668 = vld [vmem:[#allocation9 + $0xe68] sm:$0xff]
      %v1669 = vld [vmem:[#allocation9 + $0xe70] sm:$0xff]
      %v1670 = vld [vmem:[#allocation9 + $0xe78] sm:$0xff]
      %v1671 = vld [vmem:[#allocation9 + $0xe80] sm:$0xff]
      %v1672 = vld [vmem:[#allocation9 + $0xe88] sm:$0xff]
      %v1673 = vld [vmem:[#allocation9 + $0xe90] sm:$0xff]
      %v1674 = vld [vmem:[#allocation9 + $0xe98] sm:$0xff]
      %v1675 = vld [vmem:[#allocation9 + $0xea0] sm:$0xff]
      %v1676 = vld [vmem:[#allocation9 + $0xea8] sm:$0xff]
      %v1677 = vld [vmem:[#allocation9 + $0xeb0] sm:$0xff]
      %v1678 = vld [vmem:[#allocation9 + $0xeb8] sm:$0xff]
      %v1679 = vld [vmem:[#allocation9 + $0xec0] sm:$0xff]
      %v1680 = vld [vmem:[#allocation9 + $0xec8] sm:$0xff]
      %v1681 = vld [vmem:[#allocation9 + $0xed0] sm:$0xff]
      %v1682 = vld [vmem:[#allocation9 + $0xed8] sm:$0xff]
      %v1683 = vld [vmem:[#allocation9 + $0xee0] sm:$0xff]
      %v1684 = vld [vmem:[#allocation9 + $0xee8] sm:$0xff]
      %v1685 = vld [vmem:[#allocation9 + $0xef0] sm:$0xff]
      %v1686 = vld [vmem:[#allocation9 + $0xef8] sm:$0xff]
      %v1687 = vld [vmem:[#allocation9 + $0xf00] sm:$0xff]
      %v1688 = vld [vmem:[#allocation9 + $0xf08] sm:$0xff]
      %v1689 = vld [vmem:[#allocation9 + $0xf10] sm:$0xff]
      %v1690 = vld [vmem:[#allocation9 + $0xf18] sm:$0xff]
      %v1691 = vld [vmem:[#allocation9 + $0xf20] sm:$0xff]
      %v1692 = vld [vmem:[#allocation9 + $0xf28] sm:$0xff]
      %v1693 = vld [vmem:[#allocation9 + $0xf30] sm:$0xff]
      %v1694 = vld [vmem:[#allocation9 + $0xf38] sm:$0xff]
      %v1695 = vld [vmem:[#allocation9 + $0xf40] sm:$0xff]
      %v1696 = vld [vmem:[#allocation9 + $0xf48] sm:$0xff]
      %v1697 = vld [vmem:[#allocation9 + $0xf50] sm:$0xff]
      %v1698 = vld [vmem:[#allocation9 + $0xf58] sm:$0xff]
      %v1699 = vld [vmem:[#allocation9 + $0xf60] sm:$0xff]
      %v1700 = vld [vmem:[#allocation9 + $0xf68] sm:$0xff]
      %v1701 = vld [vmem:[#allocation9 + $0xf70] sm:$0xff]
      %v1702 = vld [vmem:[#allocation9 + $0xf78] sm:$0xff]
      %v1703 = vld [vmem:[#allocation9 + $0xf80] sm:$0xff]
      %v1704 = vld [vmem:[#allocation9 + $0xf88] sm:$0xff]
      %v1705 = vld [vmem:[#allocation9 + $0xf90] sm:$0xff]
      %v1706 = vld [vmem:[#allocation9 + $0xf98] sm:$0xff]
      %v1707 = vld [vmem:[#allocation9 + $0xfa0] sm:$0xff]
      %v1708 = vld [vmem:[#allocation9 + $0xfa8] sm:$0xff]
      %v1709 = vld [vmem:[#allocation9 + $0xfb0] sm:$0xff]
      %v1710 = vld [vmem:[#allocation9 + $0xfb8] sm:$0xff]
      %v1711 = vld [vmem:[#allocation9 + $0xfc0] sm:$0xff]
      %v1712 = vld [vmem:[#allocation9 + $0xfc8] sm:$0xff]
      %v1713 = vld [vmem:[#allocation9 + $0xfd0] sm:$0xff]
      %v1714 = vld [vmem:[#allocation9 + $0xfd8] sm:$0xff]
      %v1715 = vld [vmem:[#allocation9 + $0xfe0] sm:$0xff]
      %v1716 = vld [vmem:[#allocation9 + $0xfe8] sm:$0xff]
      %v1717 = vld [vmem:[#allocation9 + $0xff0] sm:$0xff]
      %v1718 = vld [vmem:[#allocation9 + $0xff8] sm:$0xff]
      %v1719 = vld [vmem:[#allocation9 + $0x1000] sm:$0xff]
      %v1720 = vld [vmem:[#allocation9 + $0x1008] sm:$0xff]
      %v1721 = vld [vmem:[#allocation9 + $0x1010] sm:$0xff]
      %v1722 = vld [vmem:[#allocation9 + $0x1018] sm:$0xff]
      %v1723 = vld [vmem:[#allocation9 + $0x1020] sm:$0xff]
      %v1724 = vld [vmem:[#allocation9 + $0x1028] sm:$0xff]
      %v1725 = vld [vmem:[#allocation9 + $0x1030] sm:$0xff]
      %v1726 = vld [vmem:[#allocation9 + $0x1038] sm:$0xff]
      %v1727 = vld [vmem:[#allocation9 + $0x1040] sm:$0xff]
      %v1728 = vld [vmem:[#allocation9 + $0x1048] sm:$0xff]
      %v1729 = vld [vmem:[#allocation9 + $0x1050] sm:$0xff]
      %v1730 = vld [vmem:[#allocation9 + $0x1058] sm:$0xff]
      %v1731 = vld [vmem:[#allocation9 + $0x1060] sm:$0xff]
      %v1732 = vld [vmem:[#allocation9 + $0x1068] sm:$0xff]
      %v1733 = vld [vmem:[#allocation9 + $0x1070] sm:$0xff]
      %v1734 = vld [vmem:[#allocation9 + $0x1078] sm:$0xff]
      %v1735 = vld [vmem:[#allocation9 + $0x1080] sm:$0xff]
      %v1736 = vld [vmem:[#allocation9 + $0x1088] sm:$0xff]
      %v1737 = vld [vmem:[#allocation9 + $0x1090] sm:$0xff]
      %v1738 = vld [vmem:[#allocation9 + $0x1098] sm:$0xff]
      %v1739 = vld [vmem:[#allocation9 + $0x10a0] sm:$0xff]
      %v1740 = vld [vmem:[#allocation9 + $0x10a8] sm:$0xff]
      %v1741 = vld [vmem:[#allocation9 + $0x10b0] sm:$0xff]
      %v1742 = vld [vmem:[#allocation9 + $0x10b8] sm:$0xff]
      %v1743 = vld [vmem:[#allocation9 + $0x10c0] sm:$0xff]
      %v1744 = vld [vmem:[#allocation9 + $0x10c8] sm:$0xff]
      %v1745 = vld [vmem:[#allocation9 + $0x10d0] sm:$0xff]
      %v1746 = vld [vmem:[#allocation9 + $0x10d8] sm:$0xff]
      %v1747 = vld [vmem:[#allocation9 + $0x10e0] sm:$0xff]
      %v1748 = vld [vmem:[#allocation9 + $0x10e8] sm:$0xff]
      %v1749 = vld [vmem:[#allocation9 + $0x10f0] sm:$0xff]
      %v1750 = vld [vmem:[#allocation9 + $0x10f8] sm:$0xff]
      %v1751 = vld [vmem:[#allocation9 + $0x1100] sm:$0xff]
      %v1752 = vld [vmem:[#allocation9 + $0x1108] sm:$0xff]
      %v1753 = vld [vmem:[#allocation9 + $0x1110] sm:$0xff]
      %v1754 = vld [vmem:[#allocation9 + $0x1118] sm:$0xff]
      %v1755 = vld [vmem:[#allocation9 + $0x1120] sm:$0xff]
      %v1756 = vld [vmem:[#allocation9 + $0x1128] sm:$0xff]
      %v1757 = vld [vmem:[#allocation9 + $0x1130] sm:$0xff]
      %v1758 = vld [vmem:[#allocation9 + $0x1138] sm:$0xff]
      %v1759 = vld [vmem:[#allocation9 + $0x1140] sm:$0xff]
      %v1760 = vld [vmem:[#allocation9 + $0x1148] sm:$0xff]
      %v1761 = vld [vmem:[#allocation9 + $0x1150] sm:$0xff]
      %v1762 = vld [vmem:[#allocation9 + $0x1158] sm:$0xff]
      %v1763 = vld [vmem:[#allocation9 + $0x1160] sm:$0xff]
      %v1764 = vld [vmem:[#allocation9 + $0x1168] sm:$0xff]
      %v1765 = vld [vmem:[#allocation9 + $0x1170] sm:$0xff]
      %v1766 = vld [vmem:[#allocation9 + $0x1178] sm:$0xff]
      %v1767 = vld [vmem:[#allocation9 + $0x1180] sm:$0xff]
      %v1768 = vld [vmem:[#allocation9 + $0x1188] sm:$0xff]
      %v1769 = vld [vmem:[#allocation9 + $0x1190] sm:$0xff]
      %v1770 = vld [vmem:[#allocation9 + $0x1198] sm:$0xff]
      %v1771 = vld [vmem:[#allocation9 + $0x11a0] sm:$0xff]
      %v1772 = vld [vmem:[#allocation9 + $0x11a8] sm:$0xff]
      %v1773 = vld [vmem:[#allocation9 + $0x11b0] sm:$0xff]
      %v1774 = vld [vmem:[#allocation9 + $0x11b8] sm:$0xff]
      %v1775 = vld [vmem:[#allocation9 + $0x11c0] sm:$0xff]
      %v1776 = vld [vmem:[#allocation9 + $0x11c8] sm:$0xff]
      %v1777 = vld [vmem:[#allocation9 + $0x11d0] sm:$0xff]
      %v1778 = vld [vmem:[#allocation9 + $0x11d8] sm:$0xff]
      %v1779 = vld [vmem:[#allocation9 + $0x11e0] sm:$0xff]
      %v1780 = vld [vmem:[#allocation9 + $0x11e8] sm:$0xff]
      %v1781 = vld [vmem:[#allocation9 + $0x11f0] sm:$0xff]
      %v1782 = vld [vmem:[#allocation9 + $0x11f8] sm:$0xff]
      %v1783 = vld [vmem:[#allocation9 + $0x1200] sm:$0xff]
      %v1784 = vld [vmem:[#allocation9 + $0x1208] sm:$0xff]
      %v1785 = vld [vmem:[#allocation9 + $0x1210] sm:$0xff]
      %v1786 = vld [vmem:[#allocation9 + $0x1218] sm:$0xff]
      %v1787 = vld [vmem:[#allocation9 + $0x1220] sm:$0xff]
      %v1788 = vld [vmem:[#allocation9 + $0x1228] sm:$0xff]
      %v1789 = vld [vmem:[#allocation9 + $0x1230] sm:$0xff]
      %v1790 = vld [vmem:[#allocation9 + $0x1238] sm:$0xff]
      %v1791 = vld [vmem:[#allocation9 + $0x1240] sm:$0xff]
      %v1792 = vld [vmem:[#allocation9 + $0x1248] sm:$0xff]
      %v1793 = vld [vmem:[#allocation9 + $0x1250] sm:$0xff]
      %v1794 = vld [vmem:[#allocation9 + $0x1258] sm:$0xff]
      %v1795 = vld [vmem:[#allocation9 + $0x1260] sm:$0xff]
      %v1796 = vld [vmem:[#allocation9 + $0x1268] sm:$0xff]
      %v1797 = vld [vmem:[#allocation9 + $0x1270] sm:$0xff]
      %v1798 = vld [vmem:[#allocation9 + $0x1278] sm:$0xff]
      %v1799 = vld [vmem:[#allocation9 + $0x1280] sm:$0xff]
      %v1800 = vld [vmem:[#allocation9 + $0x1288] sm:$0xff]
      %v1801 = vld [vmem:[#allocation9 + $0x1290] sm:$0xff]
      %v1802 = vld [vmem:[#allocation9 + $0x1298] sm:$0xff]
      %v1803 = vld [vmem:[#allocation9 + $0x12a0] sm:$0xff]
      %v1804 = vld [vmem:[#allocation9 + $0x12a8] sm:$0xff]
      %v1805 = vld [vmem:[#allocation9 + $0x12b0] sm:$0xff]
      %v1806 = vld [vmem:[#allocation9 + $0x12b8] sm:$0xff]
      %v1807 = vld [vmem:[#allocation9 + $0x12c0] sm:$0xff]
      %v1808 = vld [vmem:[#allocation9 + $0x12c8] sm:$0xff]
      %v1809 = vld [vmem:[#allocation9 + $0x12d0] sm:$0xff]
      %v1810 = vld [vmem:[#allocation9 + $0x12d8] sm:$0xff]
      %v1811 = vld [vmem:[#allocation9 + $0x12e0] sm:$0xff]
      %v1812 = vld [vmem:[#allocation9 + $0x12e8] sm:$0xff]
      %v1813 = vld [vmem:[#allocation9 + $0x12f0] sm:$0xff]
      %v1814 = vld [vmem:[#allocation9 + $0x12f8] sm:$0xff]
      %v1815 = vld [vmem:[#allocation9 + $0x1300] sm:$0xff]
      %v1816 = vld [vmem:[#allocation9 + $0x1308] sm:$0xff]
      %v1817 = vld [vmem:[#allocation9 + $0x1310] sm:$0xff]
      %v1818 = vld [vmem:[#allocation9 + $0x1318] sm:$0xff]
      %v1819 = vld [vmem:[#allocation9 + $0x1320] sm:$0xff]
      %v1820 = vld [vmem:[#allocation9 + $0x1328] sm:$0xff]
      %v1821 = vld [vmem:[#allocation9 + $0x1330] sm:$0xff]
      %v1822 = vld [vmem:[#allocation9 + $0x1338] sm:$0xff]
      %v1823 = vld [vmem:[#allocation9 + $0x1340] sm:$0xff]
      %v1824 = vld [vmem:[#allocation9 + $0x1348] sm:$0xff]
      %v1825 = vld [vmem:[#allocation9 + $0x1350] sm:$0xff]
      %v1826 = vld [vmem:[#allocation9 + $0x1358] sm:$0xff]
      %v1827 = vld [vmem:[#allocation9 + $0x1360] sm:$0xff]
      %v1828 = vld [vmem:[#allocation9 + $0x1368] sm:$0xff]
      %v1829 = vld [vmem:[#allocation9 + $0x1370] sm:$0xff]
      %v1830 = vld [vmem:[#allocation9 + $0x1378] sm:$0xff]
      %v1831 = vld [vmem:[#allocation9 + $0x1380] sm:$0xff]
      %v1832 = vld [vmem:[#allocation9 + $0x1388] sm:$0xff]
      %v1833 = vld [vmem:[#allocation9 + $0x1390] sm:$0xff]
      %v1834 = vld [vmem:[#allocation9 + $0x1398] sm:$0xff]
      %v1835 = vld [vmem:[#allocation9 + $0x13a0] sm:$0xff]
      %v1836 = vld [vmem:[#allocation9 + $0x13a8] sm:$0xff]
      %v1837 = vld [vmem:[#allocation9 + $0x13b0] sm:$0xff]
      %v1838 = vld [vmem:[#allocation9 + $0x13b8] sm:$0xff]
      %v1839 = vld [vmem:[#allocation9 + $0x13c0] sm:$0xff]
      %v1840 = vld [vmem:[#allocation9 + $0x13c8] sm:$0xff]
      %v1841 = vld [vmem:[#allocation9 + $0x13d0] sm:$0xff]
      %v1842 = vld [vmem:[#allocation9 + $0x13d8] sm:$0xff]
      %v1843 = vld [vmem:[#allocation9 + $0x13e0] sm:$0xff]
      %v1844 = vld [vmem:[#allocation9 + $0x13e8] sm:$0xff]
      %v1845 = vld [vmem:[#allocation9 + $0x13f0] sm:$0xff]
      %v1846 = vld [vmem:[#allocation9 + $0x13f8] sm:$0xff]
      %v1847 = vld [vmem:[#allocation9 + $0x1400] sm:$0xff]
      %v1848 = vld [vmem:[#allocation9 + $0x1408] sm:$0xff]
      %v1849 = vld [vmem:[#allocation9 + $0x1410] sm:$0xff]
      %v1850 = vld [vmem:[#allocation9 + $0x1418] sm:$0xff]
      %v1851 = vld [vmem:[#allocation9 + $0x1420] sm:$0xff]
      %v1852 = vld [vmem:[#allocation9 + $0x1428] sm:$0xff]
      %v1853 = vld [vmem:[#allocation9 + $0x1430] sm:$0xff]
      %v1854 = vld [vmem:[#allocation9 + $0x1438] sm:$0xff]
      %v1855 = vld [vmem:[#allocation9 + $0x1440] sm:$0xff]
      %v1856 = vld [vmem:[#allocation9 + $0x1448] sm:$0xff]
      %v1857 = vld [vmem:[#allocation9 + $0x1450] sm:$0xff]
      %v1858 = vld [vmem:[#allocation9 + $0x1458] sm:$0xff]
      %v1859 = vld [vmem:[#allocation9 + $0x1460] sm:$0xff]
      %v1860 = vld [vmem:[#allocation9 + $0x1468] sm:$0xff]
      %v1861 = vld [vmem:[#allocation9 + $0x1470] sm:$0xff]
      %v1862 = vld [vmem:[#allocation9 + $0x1478] sm:$0xff]
      %v1863 = vld [vmem:[#allocation9 + $0x1480] sm:$0xff]
      %v1864 = vld [vmem:[#allocation9 + $0x1488] sm:$0xff]
      %v1865 = vld [vmem:[#allocation9 + $0x1490] sm:$0xff]
      %v1866 = vld [vmem:[#allocation9 + $0x1498] sm:$0xff]
      %v1867 = vld [vmem:[#allocation9 + $0x14a0] sm:$0xff]
      %v1868 = vld [vmem:[#allocation9 + $0x14a8] sm:$0xff]
      %v1869 = vld [vmem:[#allocation9 + $0x14b0] sm:$0xff]
      %v1870 = vld [vmem:[#allocation9 + $0x14b8] sm:$0xff]
      %v1871 = vld [vmem:[#allocation9 + $0x14c0] sm:$0xff]
      %v1872 = vld [vmem:[#allocation9 + $0x14c8] sm:$0xff]
      %v1873 = vld [vmem:[#allocation9 + $0x14d0] sm:$0xff]
      %v1874 = vld [vmem:[#allocation9 + $0x14d8] sm:$0xff]
      %v1875 = vld [vmem:[#allocation9 + $0x14e0] sm:$0xff]
      %v1876 = vld [vmem:[#allocation9 + $0x14e8] sm:$0xff]
      %v1877 = vld [vmem:[#allocation9 + $0x14f0] sm:$0xff]
      %v1878 = vld [vmem:[#allocation9 + $0x14f8] sm:$0xff]
      %v1879 = vld [vmem:[#allocation9 + $0x1500] sm:$0xff]
      %v1880 = vld [vmem:[#allocation9 + $0x1508] sm:$0xff]
      %v1881 = vld [vmem:[#allocation9 + $0x1510] sm:$0xff]
      %v1882 = vld [vmem:[#allocation9 + $0x1518] sm:$0xff]
      %v1883 = vld [vmem:[#allocation9 + $0x1520] sm:$0xff]
      %v1884 = vld [vmem:[#allocation9 + $0x1528] sm:$0xff]
      %v1885 = vld [vmem:[#allocation9 + $0x1530] sm:$0xff]
      %v1886 = vld [vmem:[#allocation9 + $0x1538] sm:$0xff]
      %v1887 = vld [vmem:[#allocation9 + $0x1540] sm:$0xff]
      %v1888 = vld [vmem:[#allocation9 + $0x1548] sm:$0xff]
      %v1889 = vld [vmem:[#allocation9 + $0x1550] sm:$0xff]
      %v1890 = vld [vmem:[#allocation9 + $0x1558] sm:$0xff]
      %v1891 = vld [vmem:[#allocation9 + $0x1560] sm:$0xff]
      %v1892 = vld [vmem:[#allocation9 + $0x1568] sm:$0xff]
      %v1893 = vld [vmem:[#allocation9 + $0x1570] sm:$0xff]
      %v1894 = vld [vmem:[#allocation9 + $0x1578] sm:$0xff]
      %v1895 = vld [vmem:[#allocation9 + $0x1580] sm:$0xff]
      %v1896 = vld [vmem:[#allocation9 + $0x1588] sm:$0xff]
      %v1897 = vld [vmem:[#allocation9 + $0x1590] sm:$0xff]
      %v1898 = vld [vmem:[#allocation9 + $0x1598] sm:$0xff]
      %v1899 = vld [vmem:[#allocation9 + $0x15a0] sm:$0xff]
      %v1900 = vld [vmem:[#allocation9 + $0x15a8] sm:$0xff]
      %v1901 = vld [vmem:[#allocation9 + $0x15b0] sm:$0xff]
      %v1902 = vld [vmem:[#allocation9 + $0x15b8] sm:$0xff]
      %v1903 = vld [vmem:[#allocation9 + $0x15c0] sm:$0xff]
      %v1904 = vld [vmem:[#allocation9 + $0x15c8] sm:$0xff]
      %v1905 = vld [vmem:[#allocation9 + $0x15d0] sm:$0xff]
      %v1906 = vld [vmem:[#allocation9 + $0x15d8] sm:$0xff]
      %v1907 = vld [vmem:[#allocation9 + $0x15e0] sm:$0xff]
      %v1908 = vld [vmem:[#allocation9 + $0x15e8] sm:$0xff]
      %v1909 = vld [vmem:[#allocation9 + $0x15f0] sm:$0xff]
      %v1910 = vld [vmem:[#allocation9 + $0x15f8] sm:$0xff]
      %v1911 = vld [vmem:[#allocation9 + $0x1600] sm:$0xff]
      %v1912 = vld [vmem:[#allocation9 + $0x1608] sm:$0xff]
      %v1913 = vld [vmem:[#allocation9 + $0x1610] sm:$0xff]
      %v1914 = vld [vmem:[#allocation9 + $0x1618] sm:$0xff]
      %v1915 = vld [vmem:[#allocation9 + $0x1620] sm:$0xff]
      %v1916 = vld [vmem:[#allocation9 + $0x1628] sm:$0xff]
      %v1917 = vld [vmem:[#allocation9 + $0x1630] sm:$0xff]
      %v1918 = vld [vmem:[#allocation9 + $0x1638] sm:$0xff]
      %v1919 = vld [vmem:[#allocation9 + $0x1640] sm:$0xff]
      %v1920 = vld [vmem:[#allocation9 + $0x1648] sm:$0xff]
      %v1921 = vld [vmem:[#allocation9 + $0x1650] sm:$0xff]
      %v1922 = vld [vmem:[#allocation9 + $0x1658] sm:$0xff]
      %v1923 = vld [vmem:[#allocation9 + $0x1660] sm:$0xff]
      %v1924 = vld [vmem:[#allocation9 + $0x1668] sm:$0xff]
      %v1925 = vld [vmem:[#allocation9 + $0x1670] sm:$0xff]
      %v1926 = vld [vmem:[#allocation9 + $0x1678] sm:$0xff]
      %v1927 = vld [vmem:[#allocation9 + $0x1680] sm:$0xff]
      %v1928 = vld [vmem:[#allocation9 + $0x1688] sm:$0xff]
      %v1929 = vld [vmem:[#allocation9 + $0x1690] sm:$0xff]
      %v1930 = vld [vmem:[#allocation9 + $0x1698] sm:$0xff]
      %v1931 = vld [vmem:[#allocation9 + $0x16a0] sm:$0xff]
      %v1932 = vld [vmem:[#allocation9 + $0x16a8] sm:$0xff]
      %v1933 = vld [vmem:[#allocation9 + $0x16b0] sm:$0xff]
      %v1934 = vld [vmem:[#allocation9 + $0x16b8] sm:$0xff]
      %v1935 = vld [vmem:[#allocation9 + $0x16c0] sm:$0xff]
      %v1936 = vld [vmem:[#allocation9 + $0x16c8] sm:$0xff]
      %v1937 = vld [vmem:[#allocation9 + $0x16d0] sm:$0xff]
      %v1938 = vld [vmem:[#allocation9 + $0x16d8] sm:$0xff]
      %v1939 = vld [vmem:[#allocation9 + $0x16e0] sm:$0xff]
      %v1940 = vld [vmem:[#allocation9 + $0x16e8] sm:$0xff]
      %v1941 = vld [vmem:[#allocation9 + $0x16f0] sm:$0xff]
      %v1942 = vld [vmem:[#allocation9 + $0x16f8] sm:$0xff]
      %v1943 = vld [vmem:[#allocation9 + $0x1700] sm:$0xff]
      %v1944 = vld [vmem:[#allocation9 + $0x1708] sm:$0xff]
      %v1945 = vld [vmem:[#allocation9 + $0x1710] sm:$0xff]
      %v1946 = vld [vmem:[#allocation9 + $0x1718] sm:$0xff]
      %v1947 = vld [vmem:[#allocation9 + $0x1720] sm:$0xff]
      %v1948 = vld [vmem:[#allocation9 + $0x1728] sm:$0xff]
      %v1949 = vld [vmem:[#allocation9 + $0x1730] sm:$0xff]
      %v1950 = vld [vmem:[#allocation9 + $0x1738] sm:$0xff]
      %v1951 = vld [vmem:[#allocation9 + $0x1740] sm:$0xff]
      %v1952 = vld [vmem:[#allocation9 + $0x1748] sm:$0xff]
      %v1953 = vld [vmem:[#allocation9 + $0x1750] sm:$0xff]
      %v1954 = vld [vmem:[#allocation9 + $0x1758] sm:$0xff]
      %v1955 = vld [vmem:[#allocation9 + $0x1760] sm:$0xff]
      %v1956 = vld [vmem:[#allocation9 + $0x1768] sm:$0xff]
      %v1957 = vld [vmem:[#allocation9 + $0x1770] sm:$0xff]
      %v1958 = vld [vmem:[#allocation9 + $0x1778] sm:$0xff]
      %v1959 = vld [vmem:[#allocation9 + $0x1780] sm:$0xff]
      %v1960 = vld [vmem:[#allocation9 + $0x1788] sm:$0xff]
      %v1961 = vld [vmem:[#allocation9 + $0x1790] sm:$0xff]
      %v1962 = vld [vmem:[#allocation9 + $0x1798] sm:$0xff]
      %v1963 = vld [vmem:[#allocation9 + $0x17a0] sm:$0xff]
      %v1964 = vld [vmem:[#allocation9 + $0x17a8] sm:$0xff]
      %v1965 = vld [vmem:[#allocation9 + $0x17b0] sm:$0xff]
      %v1966 = vld [vmem:[#allocation9 + $0x17b8] sm:$0xff]
      %v1967 = vld [vmem:[#allocation9 + $0x17c0] sm:$0xff]
      %v1968 = vld [vmem:[#allocation9 + $0x17c8] sm:$0xff]
      %v1969 = vld [vmem:[#allocation9 + $0x17d0] sm:$0xff]
      %v1970 = vld [vmem:[#allocation9 + $0x17d8] sm:$0xff]
      %v1971 = vld [vmem:[#allocation9 + $0x17e0] sm:$0xff]
      %v1972 = vld [vmem:[#allocation9 + $0x17e8] sm:$0xff]
      %v1973 = vld [vmem:[#allocation9 + $0x17f0] sm:$0xff]
      %v1974 = vld [vmem:[#allocation9 + $0x17f8] sm:$0xff]
      %v1975 = vld [vmem:[#allocation9 + $0x1800] sm:$0xff]
      %v1976 = vld [vmem:[#allocation9 + $0x1808] sm:$0xff]
      %v1977 = vld [vmem:[#allocation9 + $0x1810] sm:$0xff]
      %v1978 = vld [vmem:[#allocation9 + $0x1818] sm:$0xff]
      %v1979 = vld [vmem:[#allocation9 + $0x1820] sm:$0xff]
      %v1980 = vld [vmem:[#allocation9 + $0x1828] sm:$0xff]
      %v1981 = vld [vmem:[#allocation9 + $0x1830] sm:$0xff]
      %v1982 = vld [vmem:[#allocation9 + $0x1838] sm:$0xff]
      %v1983 = vld [vmem:[#allocation9 + $0x1840] sm:$0xff]
      %v1984 = vld [vmem:[#allocation9 + $0x1848] sm:$0xff]
      %v1985 = vld [vmem:[#allocation9 + $0x1850] sm:$0xff]
      %v1986 = vld [vmem:[#allocation9 + $0x1858] sm:$0xff]
      %v1987 = vld [vmem:[#allocation9 + $0x1860] sm:$0xff]
      %v1988 = vld [vmem:[#allocation9 + $0x1868] sm:$0xff]
      %v1989 = vld [vmem:[#allocation9 + $0x1870] sm:$0xff]
      %v1990 = vld [vmem:[#allocation9 + $0x1878] sm:$0xff]
      %v1991 = vld [vmem:[#allocation9 + $0x1880] sm:$0xff]
      %v1992 = vld [vmem:[#allocation9 + $0x1888] sm:$0xff]
      %v1993 = vld [vmem:[#allocation9 + $0x1890] sm:$0xff]
      %v1994 = vld [vmem:[#allocation9 + $0x1898] sm:$0xff]
      %v1995 = vld [vmem:[#allocation9 + $0x18a0] sm:$0xff]
      %v1996 = vld [vmem:[#allocation9 + $0x18a8] sm:$0xff]
      %v1997 = vld [vmem:[#allocation9 + $0x18b0] sm:$0xff]
      %v1998 = vld [vmem:[#allocation9 + $0x18b8] sm:$0xff]
      %v1999 = vld [vmem:[#allocation9 + $0x18c0] sm:$0xff]
      %v2000 = vld [vmem:[#allocation9 + $0x18c8] sm:$0xff]
      %v2001 = vld [vmem:[#allocation9 + $0x18d0] sm:$0xff]
      %v2002 = vld [vmem:[#allocation9 + $0x18d8] sm:$0xff]
      %v2003 = vld [vmem:[#allocation9 + $0x18e0] sm:$0xff]
      %v2004 = vld [vmem:[#allocation9 + $0x18e8] sm:$0xff]
      %v2005 = vld [vmem:[#allocation9 + $0x18f0] sm:$0xff]
      %v2006 = vld [vmem:[#allocation9 + $0x18f8] sm:$0xff]
      %v2007 = vld [vmem:[#allocation9 + $0x1900] sm:$0xff]
      %v2008 = vld [vmem:[#allocation9 + $0x1908] sm:$0xff]
      %v2009 = vld [vmem:[#allocation9 + $0x1910] sm:$0xff]
      %v2010 = vld [vmem:[#allocation9 + $0x1918] sm:$0xff]
      %v2011 = vld [vmem:[#allocation9 + $0x1920] sm:$0xff]
      %v2012 = vld [vmem:[#allocation9 + $0x1928] sm:$0xff]
      %v2013 = vld [vmem:[#allocation9 + $0x1930] sm:$0xff]
      %v2014 = vld [vmem:[#allocation9 + $0x1938] sm:$0xff]
      %v2015 = vld [vmem:[#allocation9 + $0x1940] sm:$0xff]
      %v2016 = vld [vmem:[#allocation9 + $0x1948] sm:$0xff]
      %v2017 = vld [vmem:[#allocation9 + $0x1950] sm:$0xff]
      %v2018 = vld [vmem:[#allocation9 + $0x1958] sm:$0xff]
      %v2019 = vld [vmem:[#allocation9 + $0x1960] sm:$0xff]
      %v2020 = vld [vmem:[#allocation9 + $0x1968] sm:$0xff]
      %v2021 = vld [vmem:[#allocation9 + $0x1970] sm:$0xff]
      %v2022 = vld [vmem:[#allocation9 + $0x1978] sm:$0xff]
      %v2023 = vld [vmem:[#allocation9 + $0x1980] sm:$0xff]
      %v2024 = vld [vmem:[#allocation9 + $0x1988] sm:$0xff]
      %v2025 = vld [vmem:[#allocation9 + $0x1990] sm:$0xff]
      %v2026 = vld [vmem:[#allocation9 + $0x1998] sm:$0xff]
      %v2027 = vld [vmem:[#allocation9 + $0x19a0] sm:$0xff]
      %v2028 = vld [vmem:[#allocation9 + $0x19a8] sm:$0xff]
      %v2029 = vld [vmem:[#allocation9 + $0x19b0] sm:$0xff]
      %v2030 = vld [vmem:[#allocation9 + $0x19b8] sm:$0xff]
      %v2031 = vld [vmem:[#allocation9 + $0x19c0] sm:$0xff]
      %v2032 = vld [vmem:[#allocation9 + $0x19c8] sm:$0xff]
      %v2033 = vld [vmem:[#allocation9 + $0x19d0] sm:$0xff]
      %v2034 = vld [vmem:[#allocation9 + $0x19d8] sm:$0xff]
      %v2035 = vld [vmem:[#allocation9 + $0x19e0] sm:$0xff]
      %v2036 = vld [vmem:[#allocation9 + $0x19e8] sm:$0xff]
      %v2037 = vld [vmem:[#allocation9 + $0x19f0] sm:$0xff]
      %v2038 = vld [vmem:[#allocation9 + $0x19f8] sm:$0xff]
      %v2039 = vld [vmem:[#allocation9 + $0x1a00] sm:$0xff]
      %v2040 = vld [vmem:[#allocation9 + $0x1a08] sm:$0xff]
      %v2041 = vld [vmem:[#allocation9 + $0x1a10] sm:$0xff]
      %v2042 = vld [vmem:[#allocation9 + $0x1a18] sm:$0xff]
      %v2043 = vld [vmem:[#allocation9 + $0x1a20] sm:$0xff]
      %v2044 = vld [vmem:[#allocation9 + $0x1a28] sm:$0xff]
      %v2045 = vld [vmem:[#allocation9 + $0x1a30] sm:$0xff]
      %v2046 = vld [vmem:[#allocation9 + $0x1a38] sm:$0xff]
      %v2047 = vld [vmem:[#allocation9 + $0x1a40] sm:$0xff]
      %v2048 = vld [vmem:[#allocation9 + $0x1a48] sm:$0xff]
      %v2049 = vld [vmem:[#allocation9 + $0x1a50] sm:$0xff]
      %v2050 = vld [vmem:[#allocation9 + $0x1a58] sm:$0xff]
      %v2051 = vld [vmem:[#allocation9 + $0x1a60] sm:$0xff]
      %v2052 = vld [vmem:[#allocation9 + $0x1a68] sm:$0xff]
      %v2053 = vld [vmem:[#allocation9 + $0x1a70] sm:$0xff]
      %v2054 = vld [vmem:[#allocation9 + $0x1a78] sm:$0xff]
      %v2055 = vld [vmem:[#allocation9 + $0x1a80] sm:$0xff]
      %v2056 = vld [vmem:[#allocation9 + $0x1a88] sm:$0xff]
      %v2057 = vld [vmem:[#allocation9 + $0x1a90] sm:$0xff]
      %v2058 = vld [vmem:[#allocation9 + $0x1a98] sm:$0xff]
      %v2059 = vld [vmem:[#allocation9 + $0x1aa0] sm:$0xff]
      %v2060 = vld [vmem:[#allocation9 + $0x1aa8] sm:$0xff]
      %v2061 = vld [vmem:[#allocation9 + $0x1ab0] sm:$0xff]
      %v2062 = vld [vmem:[#allocation9 + $0x1ab8] sm:$0xff]
      %v2063 = vld [vmem:[#allocation9 + $0x1ac0] sm:$0xff]
      %v2064 = vld [vmem:[#allocation9 + $0x1ac8] sm:$0xff]
      %v2065 = vld [vmem:[#allocation9 + $0x1ad0] sm:$0xff]
      %v2066 = vld [vmem:[#allocation9 + $0x1ad8] sm:$0xff]
      %v2067 = vld [vmem:[#allocation9 + $0x1ae0] sm:$0xff]
      %v2068 = vld [vmem:[#allocation9 + $0x1ae8] sm:$0xff]
      %v2069 = vld [vmem:[#allocation9 + $0x1af0] sm:$0xff]
      %v2070 = vld [vmem:[#allocation9 + $0x1af8] sm:$0xff]
      %v2071 = vld [vmem:[#allocation9 + $0x1b00] sm:$0xff]
      %v2072 = vld [vmem:[#allocation9 + $0x1b08] sm:$0xff]
      %v2073 = vld [vmem:[#allocation9 + $0x1b10] sm:$0xff]
      %v2074 = vld [vmem:[#allocation9 + $0x1b18] sm:$0xff]
      %v2075 = vld [vmem:[#allocation9 + $0x1b20] sm:$0xff]
      %v2076 = vld [vmem:[#allocation9 + $0x1b28] sm:$0xff]
      %v2077 = vld [vmem:[#allocation9 + $0x1b30] sm:$0xff]
      %v2078 = vld [vmem:[#allocation9 + $0x1b38] sm:$0xff]
      %v2079 = vld [vmem:[#allocation9 + $0x1b40] sm:$0xff]
      %v2080 = vld [vmem:[#allocation9 + $0x1b48] sm:$0xff]
      %v2081 = vld [vmem:[#allocation9 + $0x1b50] sm:$0xff]
      %v2082 = vld [vmem:[#allocation9 + $0x1b58] sm:$0xff]
      %v2083 = vld [vmem:[#allocation9 + $0x1b60] sm:$0xff]
      %v2084 = vld [vmem:[#allocation9 + $0x1b68] sm:$0xff]
      %v2085 = vld [vmem:[#allocation9 + $0x1b70] sm:$0xff]
      %v2086 = vld [vmem:[#allocation9 + $0x1b78] sm:$0xff]
      %v2087 = vld [vmem:[#allocation9 + $0x1b80] sm:$0xff]
      %v2088 = vld [vmem:[#allocation9 + $0x1b88] sm:$0xff]
      %v2089 = vld [vmem:[#allocation9 + $0x1b90] sm:$0xff]
      %v2090 = vld [vmem:[#allocation9 + $0x1b98] sm:$0xff]
      %v2091 = vld [vmem:[#allocation9 + $0x1ba0] sm:$0xff]
      %v2092 = vld [vmem:[#allocation9 + $0x1ba8] sm:$0xff]
      %v2093 = vld [vmem:[#allocation9 + $0x1bb0] sm:$0xff]
      %v2094 = vld [vmem:[#allocation9 + $0x1bb8] sm:$0xff]
      %v2095 = vld [vmem:[#allocation9 + $0x1bc0] sm:$0xff]
      %v2096 = vld [vmem:[#allocation9 + $0x1bc8] sm:$0xff]
      %v2097 = vld [vmem:[#allocation9 + $0x1bd0] sm:$0xff]
      %v2098 = vld [vmem:[#allocation9 + $0x1bd8] sm:$0xff]
      %v2099 = vld [vmem:[#allocation9 + $0x1be0] sm:$0xff]
      %v2100 = vld [vmem:[#allocation9 + $0x1be8] sm:$0xff]
      %v2101 = vld [vmem:[#allocation9 + $0x1bf0] sm:$0xff]
      %v2102 = vld [vmem:[#allocation9 + $0x1bf8] sm:$0xff]
      %v2103 = vld [vmem:[#allocation9 + $0x1c00] sm:$0xff]
      %v2104 = vld [vmem:[#allocation9 + $0x1c08] sm:$0xff]
      %v2105 = vld [vmem:[#allocation9 + $0x1c10] sm:$0xff]
      %v2106 = vld [vmem:[#allocation9 + $0x1c18] sm:$0xff]
      %v2107 = vld [vmem:[#allocation9 + $0x1c20] sm:$0xff]
      %v2108 = vld [vmem:[#allocation9 + $0x1c28] sm:$0xff]
      %v2109 = vld [vmem:[#allocation9 + $0x1c30] sm:$0xff]
      %v2110 = vld [vmem:[#allocation9 + $0x1c38] sm:$0xff]
      %v2111 = vld [vmem:[#allocation9 + $0x1c40] sm:$0xff]
      %v2112 = vld [vmem:[#allocation9 + $0x1c48] sm:$0xff]
      %v2113 = vld [vmem:[#allocation9 + $0x1c50] sm:$0xff]
      %v2114 = vld [vmem:[#allocation9 + $0x1c58] sm:$0xff]
      %v2115 = vld [vmem:[#allocation9 + $0x1c60] sm:$0xff]
      %v2116 = vld [vmem:[#allocation9 + $0x1c68] sm:$0xff]
      %v2117 = vld [vmem:[#allocation9 + $0x1c70] sm:$0xff]
      %v2118 = vld [vmem:[#allocation9 + $0x1c78] sm:$0xff]
      %v2119 = vld [vmem:[#allocation9 + $0x1c80] sm:$0xff]
      %v2120 = vld [vmem:[#allocation9 + $0x1c88] sm:$0xff]
      %v2121 = vld [vmem:[#allocation9 + $0x1c90] sm:$0xff]
      %v2122 = vld [vmem:[#allocation9 + $0x1c98] sm:$0xff]
      %v2123 = vld [vmem:[#allocation9 + $0x1ca0] sm:$0xff]
      %v2124 = vld [vmem:[#allocation9 + $0x1ca8] sm:$0xff]
      %v2125 = vld [vmem:[#allocation9 + $0x1cb0] sm:$0xff]
      %v2126 = vld [vmem:[#allocation9 + $0x1cb8] sm:$0xff]
      %v2127 = vld [vmem:[#allocation9 + $0x1cc0] sm:$0xff]
      %v2128 = vld [vmem:[#allocation9 + $0x1cc8] sm:$0xff]
      %v2129 = vld [vmem:[#allocation9 + $0x1cd0] sm:$0xff]
      %v2130 = vld [vmem:[#allocation9 + $0x1cd8] sm:$0xff]
      %v2131 = vld [vmem:[#allocation9 + $0x1ce0] sm:$0xff]
      %v2132 = vld [vmem:[#allocation9 + $0x1ce8] sm:$0xff]
      %v2133 = vld [vmem:[#allocation9 + $0x1cf0] sm:$0xff]
      %v2134 = vld [vmem:[#allocation9 + $0x1cf8] sm:$0xff]
      %v2135 = vld [vmem:[#allocation9 + $0x1d00] sm:$0xff]
      %v2136 = vld [vmem:[#allocation9 + $0x1d08] sm:$0xff]
      %v2137 = vld [vmem:[#allocation9 + $0x1d10] sm:$0xff]
      %v2138 = vld [vmem:[#allocation9 + $0x1d18] sm:$0xff]
      %v2139 = vld [vmem:[#allocation9 + $0x1d20] sm:$0xff]
      %v2140 = vld [vmem:[#allocation9 + $0x1d28] sm:$0xff]
      %v2141 = vld [vmem:[#allocation9 + $0x1d30] sm:$0xff]
      %v2142 = vld [vmem:[#allocation9 + $0x1d38] sm:$0xff]
      %v2143 = vld [vmem:[#allocation9 + $0x1d40] sm:$0xff]
      %v2144 = vld [vmem:[#allocation9 + $0x1d48] sm:$0xff]
      %v2145 = vld [vmem:[#allocation9 + $0x1d50] sm:$0xff]
      %v2146 = vld [vmem:[#allocation9 + $0x1d58] sm:$0xff]
      %v2147 = vld [vmem:[#allocation9 + $0x1d60] sm:$0xff]
      %v2148 = vld [vmem:[#allocation9 + $0x1d68] sm:$0xff]
      %v2149 = vld [vmem:[#allocation9 + $0x1d70] sm:$0xff]
      %v2150 = vld [vmem:[#allocation9 + $0x1d78] sm:$0xff]
      %v2151 = vld [vmem:[#allocation9 + $0x1d80] sm:$0xff]
      %v2152 = vld [vmem:[#allocation9 + $0x1d88] sm:$0xff]
      %v2153 = vld [vmem:[#allocation9 + $0x1d90] sm:$0xff]
      %v2154 = vld [vmem:[#allocation9 + $0x1d98] sm:$0xff]
      %v2155 = vld [vmem:[#allocation9 + $0x1da0] sm:$0xff]
      %v2156 = vld [vmem:[#allocation9 + $0x1da8] sm:$0xff]
      %v2157 = vld [vmem:[#allocation9 + $0x1db0] sm:$0xff]
      %v2158 = vld [vmem:[#allocation9 + $0x1db8] sm:$0xff]
      %v2159 = vld [vmem:[#allocation9 + $0x1dc0] sm:$0xff]
      %v2160 = vld [vmem:[#allocation9 + $0x1dc8] sm:$0xff]
      %v2161 = vld [vmem:[#allocation9 + $0x1dd0] sm:$0xff]
      %v2162 = vld [vmem:[#allocation9 + $0x1dd8] sm:$0xff]
      %v2163 = vld [vmem:[#allocation9 + $0x1de0] sm:$0xff]
      %v2164 = vld [vmem:[#allocation9 + $0x1de8] sm:$0xff]
      %v2165 = vld [vmem:[#allocation9 + $0x1df0] sm:$0xff]
      %v2166 = vld [vmem:[#allocation9 + $0x1df8] sm:$0xff]
      %v2167 = vld [vmem:[#allocation9 + $0x1e00] sm:$0xff]
      %v2168 = vld [vmem:[#allocation9 + $0x1e08] sm:$0xff]
      %v2169 = vld [vmem:[#allocation9 + $0x1e10] sm:$0xff]
      %v2170 = vld [vmem:[#allocation9 + $0x1e18] sm:$0xff]
      %v2171 = vld [vmem:[#allocation9 + $0x1e20] sm:$0xff]
      %v2172 = vld [vmem:[#allocation9 + $0x1e28] sm:$0xff]
      %v2173 = vld [vmem:[#allocation9 + $0x1e30] sm:$0xff]
      %v2174 = vld [vmem:[#allocation9 + $0x1e38] sm:$0xff]
      %v2175 = vld [vmem:[#allocation9 + $0x1e40] sm:$0xff]
      %v2176 = vld [vmem:[#allocation9 + $0x1e48] sm:$0xff]
      %v2177 = vld [vmem:[#allocation9 + $0x1e50] sm:$0xff]
      %v2178 = vld [vmem:[#allocation9 + $0x1e58] sm:$0xff]
      %v2179 = vld [vmem:[#allocation9 + $0x1e60] sm:$0xff]
      %v2180 = vld [vmem:[#allocation9 + $0x1e68] sm:$0xff]
      %v2181 = vld [vmem:[#allocation9 + $0x1e70] sm:$0xff]
      %v2182 = vld [vmem:[#allocation9 + $0x1e78] sm:$0xff]
      %v2183 = vld [vmem:[#allocation9 + $0x1e80] sm:$0xff]
      %v2184 = vld [vmem:[#allocation9 + $0x1e88] sm:$0xff]
      %v2185 = vld [vmem:[#allocation9 + $0x1e90] sm:$0xff]
      %v2186 = vld [vmem:[#allocation9 + $0x1e98] sm:$0xff]
      %v2187 = vld [vmem:[#allocation9 + $0x1ea0] sm:$0xff]
      %v2188 = vld [vmem:[#allocation9 + $0x1ea8] sm:$0xff]
      %v2189 = vld [vmem:[#allocation9 + $0x1eb0] sm:$0xff]
      %v2190 = vld [vmem:[#allocation9 + $0x1eb8] sm:$0xff]
      %v2191 = vld [vmem:[#allocation9 + $0x1ec0] sm:$0xff]
      %v2192 = vld [vmem:[#allocation9 + $0x1ec8] sm:$0xff]
      %v2193 = vld [vmem:[#allocation9 + $0x1ed0] sm:$0xff]
      %v2194 = vld [vmem:[#allocation9 + $0x1ed8] sm:$0xff]
      %v2195 = vld [vmem:[#allocation9 + $0x1ee0] sm:$0xff]
      %v2196 = vld [vmem:[#allocation9 + $0x1ee8] sm:$0xff]
      %v2197 = vld [vmem:[#allocation9 + $0x1ef0] sm:$0xff]
      %v2198 = vld [vmem:[#allocation9 + $0x1ef8] sm:$0xff]
      %v2199 = vld [vmem:[#allocation9 + $0x1f00] sm:$0xff]
      %v2200 = vld [vmem:[#allocation9 + $0x1f08] sm:$0xff]
      %v2201 = vld [vmem:[#allocation9 + $0x1f10] sm:$0xff]
      %v2202 = vld [vmem:[#allocation9 + $0x1f18] sm:$0xff]
      %v2203 = vld [vmem:[#allocation9 + $0x1f20] sm:$0xff]
      %v2204 = vld [vmem:[#allocation9 + $0x1f28] sm:$0xff]
      %v2205 = vld [vmem:[#allocation9 + $0x1f30] sm:$0xff]
      %v2206 = vld [vmem:[#allocation9 + $0x1f38] sm:$0xff]
      %v2207 = vld [vmem:[#allocation9 + $0x1f40] sm:$0xff]
      %v2208 = vld [vmem:[#allocation9 + $0x1f48] sm:$0xff]
      %v2209 = vld [vmem:[#allocation9 + $0x1f50] sm:$0xff]
      %v2210 = vld [vmem:[#allocation9 + $0x1f58] sm:$0xff]
      %v2211 = vld [vmem:[#allocation9 + $0x1f60] sm:$0xff]
      %v2212 = vld [vmem:[#allocation9 + $0x1f68] sm:$0xff]
      %v2213 = vld [vmem:[#allocation9 + $0x1f70] sm:$0xff]
      %v2214 = vld [vmem:[#allocation9 + $0x1f78] sm:$0xff]
      %v2215 = vld [vmem:[#allocation9 + $0x1f80] sm:$0xff]
      %v2216 = vld [vmem:[#allocation9 + $0x1f88] sm:$0xff]
      %v2217 = vld [vmem:[#allocation9 + $0x1f90] sm:$0xff]
      %v2218 = vld [vmem:[#allocation9 + $0x1f98] sm:$0xff]
      %v2219 = vld [vmem:[#allocation9 + $0x1fa0] sm:$0xff]
      %v2220 = vld [vmem:[#allocation9 + $0x1fa8] sm:$0xff]
      %v2221 = vld [vmem:[#allocation9 + $0x1fb0] sm:$0xff]
      %v2222 = vld [vmem:[#allocation9 + $0x1fb8] sm:$0xff]
      %v2223 = vld [vmem:[#allocation9 + $0x1fc0] sm:$0xff]
      %v2224 = vld [vmem:[#allocation9 + $0x1fc8] sm:$0xff]
      %v2225 = vld [vmem:[#allocation9 + $0x1fd0] sm:$0xff]
      %v2226 = vld [vmem:[#allocation9 + $0x1fd8] sm:$0xff]
      %v2227 = vld [vmem:[#allocation9 + $0x1fe0] sm:$0xff]
      %v2228 = vld [vmem:[#allocation9 + $0x1fe8] sm:$0xff]
      %v2229 = vld [vmem:[#allocation9 + $0x1ff0] sm:$0xff]
      %v2230 = vld [vmem:[#allocation9 + $0x1ff8] sm:$0xff]
      %v2231 = vld [vmem:[#allocation11] sm:$0xff]
      %v2233 = vperm.slane %v2231, 0
      %v2234 = vperm.slane %v2231, 1
      %v2235 = vperm.slane %v2231, 2
      %v2236 = vperm.slane %v2231, 3
      %v2237 = vperm.slane %v2231, 4
      %v2238 = vperm.slane %v2231, 5
      %v2239 = vperm.slane %v2231, 6
      %v2240 = vperm.slane %v2231, 7
      %v3273 = vunpack.c.l.b16 %v1207
      %v3274 = vunpack.c.h.b16 %v1207
      %v3275 = vunpack.c.l.b16 %v1208
      %v3276 = vunpack.c.h.b16 %v1208
      %v3277 = vunpack.c.l.b16 %v1209
      %v3278 = vunpack.c.h.b16 %v1209
      %v3279 = vunpack.c.l.b16 %v1210
      %v3280 = vunpack.c.h.b16 %v1210
      %v3281 = vunpack.c.l.b16 %v1211
      %v3282 = vunpack.c.h.b16 %v1211
      %v3283 = vunpack.c.l.b16 %v1212
      %v3284 = vunpack.c.h.b16 %v1212
      %v3285 = vunpack.c.l.b16 %v1213
      %v3286 = vunpack.c.h.b16 %v1213
      %v3287 = vunpack.c.l.b16 %v1214
      %v3288 = vunpack.c.h.b16 %v1214
      %v3289 = vunpack.c.l.b16 %v1215
      %v3290 = vunpack.c.h.b16 %v1215
      %v3291 = vunpack.c.l.b16 %v1216
      %v3292 = vunpack.c.h.b16 %v1216
      %v3293 = vunpack.c.l.b16 %v1217
      %v3294 = vunpack.c.h.b16 %v1217
      %v3295 = vunpack.c.l.b16 %v1218
      %v3296 = vunpack.c.h.b16 %v1218
      %v3297 = vunpack.c.l.b16 %v1219
      %v3298 = vunpack.c.h.b16 %v1219
      %v3299 = vunpack.c.l.b16 %v1220
      %v3300 = vunpack.c.h.b16 %v1220
      %v3301 = vunpack.c.l.b16 %v1221
      %v3302 = vunpack.c.h.b16 %v1221
      %v3303 = vunpack.c.l.b16 %v1222
      %v3304 = vunpack.c.h.b16 %v1222
      %v3305 = vunpack.c.l.b16 %v1223
      %v3306 = vunpack.c.h.b16 %v1223
      %v3307 = vunpack.c.l.b16 %v1224
      %v3308 = vunpack.c.h.b16 %v1224
      %v3309 = vunpack.c.l.b16 %v1225
      %v3310 = vunpack.c.h.b16 %v1225
      %v3311 = vunpack.c.l.b16 %v1226
      %v3312 = vunpack.c.h.b16 %v1226
      %v3313 = vunpack.c.l.b16 %v1227
      %v3314 = vunpack.c.h.b16 %v1227
      %v3315 = vunpack.c.l.b16 %v1228
      %v3316 = vunpack.c.h.b16 %v1228
      %v3317 = vunpack.c.l.b16 %v1229
      %v3318 = vunpack.c.h.b16 %v1229
      %v3319 = vunpack.c.l.b16 %v1230
      %v3320 = vunpack.c.h.b16 %v1230
      %v3321 = vunpack.c.l.b16 %v1231
      %v3322 = vunpack.c.h.b16 %v1231
      %v3323 = vunpack.c.l.b16 %v1232
      %v3324 = vunpack.c.h.b16 %v1232
      %v3325 = vunpack.c.l.b16 %v1233
      %v3326 = vunpack.c.h.b16 %v1233
      %v3327 = vunpack.c.l.b16 %v1234
      %v3328 = vunpack.c.h.b16 %v1234
      %v3329 = vunpack.c.l.b16 %v1235
      %v3330 = vunpack.c.h.b16 %v1235
      %v3331 = vunpack.c.l.b16 %v1236
      %v3332 = vunpack.c.h.b16 %v1236
      %v3333 = vunpack.c.l.b16 %v1237
      %v3334 = vunpack.c.h.b16 %v1237
      %v3335 = vunpack.c.l.b16 %v1238
      %v3336 = vunpack.c.h.b16 %v1238
      %v3337 = vunpack.c.l.b16 %v1239
      %v3338 = vunpack.c.h.b16 %v1239
      %v3339 = vunpack.c.l.b16 %v1240
      %v3340 = vunpack.c.h.b16 %v1240
      %v3341 = vunpack.c.l.b16 %v1241
      %v3342 = vunpack.c.h.b16 %v1241
      %v3343 = vunpack.c.l.b16 %v1242
      %v3344 = vunpack.c.h.b16 %v1242
      %v3345 = vunpack.c.l.b16 %v1243
      %v3346 = vunpack.c.h.b16 %v1243
      %v3347 = vunpack.c.l.b16 %v1244
      %v3348 = vunpack.c.h.b16 %v1244
      %v3349 = vunpack.c.l.b16 %v1245
      %v3350 = vunpack.c.h.b16 %v1245
      %v3351 = vunpack.c.l.b16 %v1246
      %v3352 = vunpack.c.h.b16 %v1246
      %v3353 = vunpack.c.l.b16 %v1247
      %v3354 = vunpack.c.h.b16 %v1247
      %v3355 = vunpack.c.l.b16 %v1248
      %v3356 = vunpack.c.h.b16 %v1248
      %v3357 = vunpack.c.l.b16 %v1249
      %v3358 = vunpack.c.h.b16 %v1249
      %v3359 = vunpack.c.l.b16 %v1250
      %v3360 = vunpack.c.h.b16 %v1250
      %v3361 = vunpack.c.l.b16 %v1251
      %v3362 = vunpack.c.h.b16 %v1251
      %v3363 = vunpack.c.l.b16 %v1252
      %v3364 = vunpack.c.h.b16 %v1252
      %v3365 = vunpack.c.l.b16 %v1253
      %v3366 = vunpack.c.h.b16 %v1253
      %v3367 = vunpack.c.l.b16 %v1254
      %v3368 = vunpack.c.h.b16 %v1254
      %v3369 = vunpack.c.l.b16 %v1255
      %v3370 = vunpack.c.h.b16 %v1255
      %v3371 = vunpack.c.l.b16 %v1256
      %v3372 = vunpack.c.h.b16 %v1256
      %v3373 = vunpack.c.l.b16 %v1257
      %v3374 = vunpack.c.h.b16 %v1257
      %v3375 = vunpack.c.l.b16 %v1258
      %v3376 = vunpack.c.h.b16 %v1258
      %v3377 = vunpack.c.l.b16 %v1259
      %v3378 = vunpack.c.h.b16 %v1259
      %v3379 = vunpack.c.l.b16 %v1260
      %v3380 = vunpack.c.h.b16 %v1260
      %v3381 = vunpack.c.l.b16 %v1261
      %v3382 = vunpack.c.h.b16 %v1261
      %v3383 = vunpack.c.l.b16 %v1262
      %v3384 = vunpack.c.h.b16 %v1262
      %v3385 = vunpack.c.l.b16 %v1263
      %v3386 = vunpack.c.h.b16 %v1263
      %v3387 = vunpack.c.l.b16 %v1264
      %v3388 = vunpack.c.h.b16 %v1264
      %v3389 = vunpack.c.l.b16 %v1265
      %v3390 = vunpack.c.h.b16 %v1265
      %v3391 = vunpack.c.l.b16 %v1266
      %v3392 = vunpack.c.h.b16 %v1266
      %v3393 = vunpack.c.l.b16 %v1267
      %v3394 = vunpack.c.h.b16 %v1267
      %v3395 = vunpack.c.l.b16 %v1268
      %v3396 = vunpack.c.h.b16 %v1268
      %v3397 = vunpack.c.l.b16 %v1269
      %v3398 = vunpack.c.h.b16 %v1269
      %v3399 = vunpack.c.l.b16 %v1270
      %v3400 = vunpack.c.h.b16 %v1270
      %v3401 = vunpack.c.l.b16 %v1271
      %v3402 = vunpack.c.h.b16 %v1271
      %v3403 = vunpack.c.l.b16 %v1272
      %v3404 = vunpack.c.h.b16 %v1272
      %v3405 = vunpack.c.l.b16 %v1273
      %v3406 = vunpack.c.h.b16 %v1273
      %v3407 = vunpack.c.l.b16 %v1274
      %v3408 = vunpack.c.h.b16 %v1274
      %v3409 = vunpack.c.l.b16 %v1275
      %v3410 = vunpack.c.h.b16 %v1275
      %v3411 = vunpack.c.l.b16 %v1276
      %v3412 = vunpack.c.h.b16 %v1276
      %v3413 = vunpack.c.l.b16 %v1277
      %v3414 = vunpack.c.h.b16 %v1277
      %v3415 = vunpack.c.l.b16 %v1278
      %v3416 = vunpack.c.h.b16 %v1278
      %v3417 = vunpack.c.l.b16 %v1279
      %v3418 = vunpack.c.h.b16 %v1279
      %v3419 = vunpack.c.l.b16 %v1280
      %v3420 = vunpack.c.h.b16 %v1280
      %v3421 = vunpack.c.l.b16 %v1281
      %v3422 = vunpack.c.h.b16 %v1281
      %v3423 = vunpack.c.l.b16 %v1282
      %v3424 = vunpack.c.h.b16 %v1282
      %v3425 = vunpack.c.l.b16 %v1283
      %v3426 = vunpack.c.h.b16 %v1283
      %v3427 = vunpack.c.l.b16 %v1284
      %v3428 = vunpack.c.h.b16 %v1284
      %v3429 = vunpack.c.l.b16 %v1285
      %v3430 = vunpack.c.h.b16 %v1285
      %v3431 = vunpack.c.l.b16 %v1286
      %v3432 = vunpack.c.h.b16 %v1286
      %v3433 = vunpack.c.l.b16 %v1287
      %v3434 = vunpack.c.h.b16 %v1287
      %v3435 = vunpack.c.l.b16 %v1288
      %v3436 = vunpack.c.h.b16 %v1288
      %v3437 = vunpack.c.l.b16 %v1289
      %v3438 = vunpack.c.h.b16 %v1289
      %v3439 = vunpack.c.l.b16 %v1290
      %v3440 = vunpack.c.h.b16 %v1290
      %v3441 = vunpack.c.l.b16 %v1291
      %v3442 = vunpack.c.h.b16 %v1291
      %v3443 = vunpack.c.l.b16 %v1292
      %v3444 = vunpack.c.h.b16 %v1292
      %v3445 = vunpack.c.l.b16 %v1293
      %v3446 = vunpack.c.h.b16 %v1293
      %v3447 = vunpack.c.l.b16 %v1294
      %v3448 = vunpack.c.h.b16 %v1294
      %v3449 = vunpack.c.l.b16 %v1295
      %v3450 = vunpack.c.h.b16 %v1295
      %v3451 = vunpack.c.l.b16 %v1296
      %v3452 = vunpack.c.h.b16 %v1296
      %v3453 = vunpack.c.l.b16 %v1297
      %v3454 = vunpack.c.h.b16 %v1297
      %v3455 = vunpack.c.l.b16 %v1298
      %v3456 = vunpack.c.h.b16 %v1298
      %v3457 = vunpack.c.l.b16 %v1299
      %v3458 = vunpack.c.h.b16 %v1299
      %v3459 = vunpack.c.l.b16 %v1300
      %v3460 = vunpack.c.h.b16 %v1300
      %v3461 = vunpack.c.l.b16 %v1301
      %v3462 = vunpack.c.h.b16 %v1301
      %v3463 = vunpack.c.l.b16 %v1302
      %v3464 = vunpack.c.h.b16 %v1302
      %v3465 = vunpack.c.l.b16 %v1303
      %v3466 = vunpack.c.h.b16 %v1303
      %v3467 = vunpack.c.l.b16 %v1304
      %v3468 = vunpack.c.h.b16 %v1304
      %v3469 = vunpack.c.l.b16 %v1305
      %v3470 = vunpack.c.h.b16 %v1305
      %v3471 = vunpack.c.l.b16 %v1306
      %v3472 = vunpack.c.h.b16 %v1306
      %v3473 = vunpack.c.l.b16 %v1307
      %v3474 = vunpack.c.h.b16 %v1307
      %v3475 = vunpack.c.l.b16 %v1308
      %v3476 = vunpack.c.h.b16 %v1308
      %v3477 = vunpack.c.l.b16 %v1309
      %v3478 = vunpack.c.h.b16 %v1309
      %v3479 = vunpack.c.l.b16 %v1310
      %v3480 = vunpack.c.h.b16 %v1310
      %v3481 = vunpack.c.l.b16 %v1311
      %v3482 = vunpack.c.h.b16 %v1311
      %v3483 = vunpack.c.l.b16 %v1312
      %v3484 = vunpack.c.h.b16 %v1312
      %v3485 = vunpack.c.l.b16 %v1313
      %v3486 = vunpack.c.h.b16 %v1313
      %v3487 = vunpack.c.l.b16 %v1314
      %v3488 = vunpack.c.h.b16 %v1314
      %v3489 = vunpack.c.l.b16 %v1315
      %v3490 = vunpack.c.h.b16 %v1315
      %v3491 = vunpack.c.l.b16 %v1316
      %v3492 = vunpack.c.h.b16 %v1316
      %v3493 = vunpack.c.l.b16 %v1317
      %v3494 = vunpack.c.h.b16 %v1317
      %v3495 = vunpack.c.l.b16 %v1318
      %v3496 = vunpack.c.h.b16 %v1318
      %v3497 = vunpack.c.l.b16 %v1319
      %v3498 = vunpack.c.h.b16 %v1319
      %v3499 = vunpack.c.l.b16 %v1320
      %v3500 = vunpack.c.h.b16 %v1320
      %v3501 = vunpack.c.l.b16 %v1321
      %v3502 = vunpack.c.h.b16 %v1321
      %v3503 = vunpack.c.l.b16 %v1322
      %v3504 = vunpack.c.h.b16 %v1322
      %v3505 = vunpack.c.l.b16 %v1323
      %v3506 = vunpack.c.h.b16 %v1323
      %v3507 = vunpack.c.l.b16 %v1324
      %v3508 = vunpack.c.h.b16 %v1324
      %v3509 = vunpack.c.l.b16 %v1325
      %v3510 = vunpack.c.h.b16 %v1325
      %v3511 = vunpack.c.l.b16 %v1326
      %v3512 = vunpack.c.h.b16 %v1326
      %v3513 = vunpack.c.l.b16 %v1327
      %v3514 = vunpack.c.h.b16 %v1327
      %v3515 = vunpack.c.l.b16 %v1328
      %v3516 = vunpack.c.h.b16 %v1328
      %v3517 = vunpack.c.l.b16 %v1329
      %v3518 = vunpack.c.h.b16 %v1329
      %v3519 = vunpack.c.l.b16 %v1330
      %v3520 = vunpack.c.h.b16 %v1330
      %v3521 = vunpack.c.l.b16 %v1331
      %v3522 = vunpack.c.h.b16 %v1331
      %v3523 = vunpack.c.l.b16 %v1332
      %v3524 = vunpack.c.h.b16 %v1332
      %v3525 = vunpack.c.l.b16 %v1333
      %v3526 = vunpack.c.h.b16 %v1333
      %v3527 = vunpack.c.l.b16 %v1334
      %v3528 = vunpack.c.h.b16 %v1334
      %v3529 = vunpack.c.l.b16 %v1335
      %v3530 = vunpack.c.h.b16 %v1335
      %v3531 = vunpack.c.l.b16 %v1336
      %v3532 = vunpack.c.h.b16 %v1336
      %v3533 = vunpack.c.l.b16 %v1337
      %v3534 = vunpack.c.h.b16 %v1337
      %v3535 = vunpack.c.l.b16 %v1338
      %v3536 = vunpack.c.h.b16 %v1338
      %v3537 = vunpack.c.l.b16 %v1339
      %v3538 = vunpack.c.h.b16 %v1339
      %v3539 = vunpack.c.l.b16 %v1340
      %v3540 = vunpack.c.h.b16 %v1340
      %v3541 = vunpack.c.l.b16 %v1341
      %v3542 = vunpack.c.h.b16 %v1341
      %v3543 = vunpack.c.l.b16 %v1342
      %v3544 = vunpack.c.h.b16 %v1342
      %v3545 = vunpack.c.l.b16 %v1343
      %v3546 = vunpack.c.h.b16 %v1343
      %v3547 = vunpack.c.l.b16 %v1344
      %v3548 = vunpack.c.h.b16 %v1344
      %v3549 = vunpack.c.l.b16 %v1345
      %v3550 = vunpack.c.h.b16 %v1345
      %v3551 = vunpack.c.l.b16 %v1346
      %v3552 = vunpack.c.h.b16 %v1346
      %v3553 = vunpack.c.l.b16 %v1347
      %v3554 = vunpack.c.h.b16 %v1347
      %v3555 = vunpack.c.l.b16 %v1348
      %v3556 = vunpack.c.h.b16 %v1348
      %v3557 = vunpack.c.l.b16 %v1349
      %v3558 = vunpack.c.h.b16 %v1349
      %v3559 = vunpack.c.l.b16 %v1350
      %v3560 = vunpack.c.h.b16 %v1350
      %v3561 = vunpack.c.l.b16 %v1351
      %v3562 = vunpack.c.h.b16 %v1351
      %v3563 = vunpack.c.l.b16 %v1352
      %v3564 = vunpack.c.h.b16 %v1352
      %v3565 = vunpack.c.l.b16 %v1353
      %v3566 = vunpack.c.h.b16 %v1353
      %v3567 = vunpack.c.l.b16 %v1354
      %v3568 = vunpack.c.h.b16 %v1354
      %v3569 = vunpack.c.l.b16 %v1355
      %v3570 = vunpack.c.h.b16 %v1355
      %v3571 = vunpack.c.l.b16 %v1356
      %v3572 = vunpack.c.h.b16 %v1356
      %v3573 = vunpack.c.l.b16 %v1357
      %v3574 = vunpack.c.h.b16 %v1357
      %v3575 = vunpack.c.l.b16 %v1358
      %v3576 = vunpack.c.h.b16 %v1358
      %v3577 = vunpack.c.l.b16 %v1359
      %v3578 = vunpack.c.h.b16 %v1359
      %v3579 = vunpack.c.l.b16 %v1360
      %v3580 = vunpack.c.h.b16 %v1360
      %v3581 = vunpack.c.l.b16 %v1361
      %v3582 = vunpack.c.h.b16 %v1361
      %v3583 = vunpack.c.l.b16 %v1362
      %v3584 = vunpack.c.h.b16 %v1362
      %v3585 = vunpack.c.l.b16 %v1363
      %v3586 = vunpack.c.h.b16 %v1363
      %v3587 = vunpack.c.l.b16 %v1364
      %v3588 = vunpack.c.h.b16 %v1364
      %v3589 = vunpack.c.l.b16 %v1365
      %v3590 = vunpack.c.h.b16 %v1365
      %v3591 = vunpack.c.l.b16 %v1366
      %v3592 = vunpack.c.h.b16 %v1366
      %v3593 = vunpack.c.l.b16 %v1367
      %v3594 = vunpack.c.h.b16 %v1367
      %v3595 = vunpack.c.l.b16 %v1368
      %v3596 = vunpack.c.h.b16 %v1368
      %v3597 = vunpack.c.l.b16 %v1369
      %v3598 = vunpack.c.h.b16 %v1369
      %v3599 = vunpack.c.l.b16 %v1370
      %v3600 = vunpack.c.h.b16 %v1370
      %v3601 = vunpack.c.l.b16 %v1371
      %v3602 = vunpack.c.h.b16 %v1371
      %v3603 = vunpack.c.l.b16 %v1372
      %v3604 = vunpack.c.h.b16 %v1372
      %v3605 = vunpack.c.l.b16 %v1373
      %v3606 = vunpack.c.h.b16 %v1373
      %v3607 = vunpack.c.l.b16 %v1374
      %v3608 = vunpack.c.h.b16 %v1374
      %v3609 = vunpack.c.l.b16 %v1375
      %v3610 = vunpack.c.h.b16 %v1375
      %v3611 = vunpack.c.l.b16 %v1376
      %v3612 = vunpack.c.h.b16 %v1376
      %v3613 = vunpack.c.l.b16 %v1377
      %v3614 = vunpack.c.h.b16 %v1377
      %v3615 = vunpack.c.l.b16 %v1378
      %v3616 = vunpack.c.h.b16 %v1378
      %v3617 = vunpack.c.l.b16 %v1379
      %v3618 = vunpack.c.h.b16 %v1379
      %v3619 = vunpack.c.l.b16 %v1380
      %v3620 = vunpack.c.h.b16 %v1380
      %v3621 = vunpack.c.l.b16 %v1381
      %v3622 = vunpack.c.h.b16 %v1381
      %v3623 = vunpack.c.l.b16 %v1382
      %v3624 = vunpack.c.h.b16 %v1382
      %v3625 = vunpack.c.l.b16 %v1383
      %v3626 = vunpack.c.h.b16 %v1383
      %v3627 = vunpack.c.l.b16 %v1384
      %v3628 = vunpack.c.h.b16 %v1384
      %v3629 = vunpack.c.l.b16 %v1385
      %v3630 = vunpack.c.h.b16 %v1385
      %v3631 = vunpack.c.l.b16 %v1386
      %v3632 = vunpack.c.h.b16 %v1386
      %v3633 = vunpack.c.l.b16 %v1387
      %v3634 = vunpack.c.h.b16 %v1387
      %v3635 = vunpack.c.l.b16 %v1388
      %v3636 = vunpack.c.h.b16 %v1388
      %v3637 = vunpack.c.l.b16 %v1389
      %v3638 = vunpack.c.h.b16 %v1389
      %v3639 = vunpack.c.l.b16 %v1390
      %v3640 = vunpack.c.h.b16 %v1390
      %v3641 = vunpack.c.l.b16 %v1391
      %v3642 = vunpack.c.h.b16 %v1391
      %v3643 = vunpack.c.l.b16 %v1392
      %v3644 = vunpack.c.h.b16 %v1392
      %v3645 = vunpack.c.l.b16 %v1393
      %v3646 = vunpack.c.h.b16 %v1393
      %v3647 = vunpack.c.l.b16 %v1394
      %v3648 = vunpack.c.h.b16 %v1394
      %v3649 = vunpack.c.l.b16 %v1395
      %v3650 = vunpack.c.h.b16 %v1395
      %v3651 = vunpack.c.l.b16 %v1396
      %v3652 = vunpack.c.h.b16 %v1396
      %v3653 = vunpack.c.l.b16 %v1397
      %v3654 = vunpack.c.h.b16 %v1397
      %v3655 = vunpack.c.l.b16 %v1398
      %v3656 = vunpack.c.h.b16 %v1398
      %v3657 = vunpack.c.l.b16 %v1399
      %v3658 = vunpack.c.h.b16 %v1399
      %v3659 = vunpack.c.l.b16 %v1400
      %v3660 = vunpack.c.h.b16 %v1400
      %v3661 = vunpack.c.l.b16 %v1401
      %v3662 = vunpack.c.h.b16 %v1401
      %v3663 = vunpack.c.l.b16 %v1402
      %v3664 = vunpack.c.h.b16 %v1402
      %v3665 = vunpack.c.l.b16 %v1403
      %v3666 = vunpack.c.h.b16 %v1403
      %v3667 = vunpack.c.l.b16 %v1404
      %v3668 = vunpack.c.h.b16 %v1404
      %v3669 = vunpack.c.l.b16 %v1405
      %v3670 = vunpack.c.h.b16 %v1405
      %v3671 = vunpack.c.l.b16 %v1406
      %v3672 = vunpack.c.h.b16 %v1406
      %v3673 = vunpack.c.l.b16 %v1407
      %v3674 = vunpack.c.h.b16 %v1407
      %v3675 = vunpack.c.l.b16 %v1408
      %v3676 = vunpack.c.h.b16 %v1408
      %v3677 = vunpack.c.l.b16 %v1409
      %v3678 = vunpack.c.h.b16 %v1409
      %v3679 = vunpack.c.l.b16 %v1410
      %v3680 = vunpack.c.h.b16 %v1410
      %v3681 = vunpack.c.l.b16 %v1411
      %v3682 = vunpack.c.h.b16 %v1411
      %v3683 = vunpack.c.l.b16 %v1412
      %v3684 = vunpack.c.h.b16 %v1412
      %v3685 = vunpack.c.l.b16 %v1413
      %v3686 = vunpack.c.h.b16 %v1413
      %v3687 = vunpack.c.l.b16 %v1414
      %v3688 = vunpack.c.h.b16 %v1414
      %v3689 = vunpack.c.l.b16 %v1415
      %v3690 = vunpack.c.h.b16 %v1415
      %v3691 = vunpack.c.l.b16 %v1416
      %v3692 = vunpack.c.h.b16 %v1416
      %v3693 = vunpack.c.l.b16 %v1417
      %v3694 = vunpack.c.h.b16 %v1417
      %v3695 = vunpack.c.l.b16 %v1418
      %v3696 = vunpack.c.h.b16 %v1418
      %v3697 = vunpack.c.l.b16 %v1419
      %v3698 = vunpack.c.h.b16 %v1419
      %v3699 = vunpack.c.l.b16 %v1420
      %v3700 = vunpack.c.h.b16 %v1420
      %v3701 = vunpack.c.l.b16 %v1421
      %v3702 = vunpack.c.h.b16 %v1421
      %v3703 = vunpack.c.l.b16 %v1422
      %v3704 = vunpack.c.h.b16 %v1422
      %v3705 = vunpack.c.l.b16 %v1423
      %v3706 = vunpack.c.h.b16 %v1423
      %v3707 = vunpack.c.l.b16 %v1424
      %v3708 = vunpack.c.h.b16 %v1424
      %v3709 = vunpack.c.l.b16 %v1425
      %v3710 = vunpack.c.h.b16 %v1425
      %v3711 = vunpack.c.l.b16 %v1426
      %v3712 = vunpack.c.h.b16 %v1426
      %v3713 = vunpack.c.l.b16 %v1427
      %v3714 = vunpack.c.h.b16 %v1427
      %v3715 = vunpack.c.l.b16 %v1428
      %v3716 = vunpack.c.h.b16 %v1428
      %v3717 = vunpack.c.l.b16 %v1429
      %v3718 = vunpack.c.h.b16 %v1429
      %v3719 = vunpack.c.l.b16 %v1430
      %v3720 = vunpack.c.h.b16 %v1430
      %v3721 = vunpack.c.l.b16 %v1431
      %v3722 = vunpack.c.h.b16 %v1431
      %v3723 = vunpack.c.l.b16 %v1432
      %v3724 = vunpack.c.h.b16 %v1432
      %v3725 = vunpack.c.l.b16 %v1433
      %v3726 = vunpack.c.h.b16 %v1433
      %v3727 = vunpack.c.l.b16 %v1434
      %v3728 = vunpack.c.h.b16 %v1434
      %v3729 = vunpack.c.l.b16 %v1435
      %v3730 = vunpack.c.h.b16 %v1435
      %v3731 = vunpack.c.l.b16 %v1436
      %v3732 = vunpack.c.h.b16 %v1436
      %v3733 = vunpack.c.l.b16 %v1437
      %v3734 = vunpack.c.h.b16 %v1437
      %v3735 = vunpack.c.l.b16 %v1438
      %v3736 = vunpack.c.h.b16 %v1438
      %v3737 = vunpack.c.l.b16 %v1439
      %v3738 = vunpack.c.h.b16 %v1439
      %v3739 = vunpack.c.l.b16 %v1440
      %v3740 = vunpack.c.h.b16 %v1440
      %v3741 = vunpack.c.l.b16 %v1441
      %v3742 = vunpack.c.h.b16 %v1441
      %v3743 = vunpack.c.l.b16 %v1442
      %v3744 = vunpack.c.h.b16 %v1442
      %v3745 = vunpack.c.l.b16 %v1443
      %v3746 = vunpack.c.h.b16 %v1443
      %v3747 = vunpack.c.l.b16 %v1444
      %v3748 = vunpack.c.h.b16 %v1444
      %v3749 = vunpack.c.l.b16 %v1445
      %v3750 = vunpack.c.h.b16 %v1445
      %v3751 = vunpack.c.l.b16 %v1446
      %v3752 = vunpack.c.h.b16 %v1446
      %v3753 = vunpack.c.l.b16 %v1447
      %v3754 = vunpack.c.h.b16 %v1447
      %v3755 = vunpack.c.l.b16 %v1448
      %v3756 = vunpack.c.h.b16 %v1448
      %v3757 = vunpack.c.l.b16 %v1449
      %v3758 = vunpack.c.h.b16 %v1449
      %v3759 = vunpack.c.l.b16 %v1450
      %v3760 = vunpack.c.h.b16 %v1450
      %v3761 = vunpack.c.l.b16 %v1451
      %v3762 = vunpack.c.h.b16 %v1451
      %v3763 = vunpack.c.l.b16 %v1452
      %v3764 = vunpack.c.h.b16 %v1452
      %v3765 = vunpack.c.l.b16 %v1453
      %v3766 = vunpack.c.h.b16 %v1453
      %v3767 = vunpack.c.l.b16 %v1454
      %v3768 = vunpack.c.h.b16 %v1454
      %v3769 = vunpack.c.l.b16 %v1455
      %v3770 = vunpack.c.h.b16 %v1455
      %v3771 = vunpack.c.l.b16 %v1456
      %v3772 = vunpack.c.h.b16 %v1456
      %v3773 = vunpack.c.l.b16 %v1457
      %v3774 = vunpack.c.h.b16 %v1457
      %v3775 = vunpack.c.l.b16 %v1458
      %v3776 = vunpack.c.h.b16 %v1458
      %v3777 = vunpack.c.l.b16 %v1459
      %v3778 = vunpack.c.h.b16 %v1459
      %v3779 = vunpack.c.l.b16 %v1460
      %v3780 = vunpack.c.h.b16 %v1460
      %v3781 = vunpack.c.l.b16 %v1461
      %v3782 = vunpack.c.h.b16 %v1461
      %v3783 = vunpack.c.l.b16 %v1462
      %v3784 = vunpack.c.h.b16 %v1462
      %v3785 = vunpack.c.l.b16 %v1463
      %v3786 = vunpack.c.h.b16 %v1463
      %v3787 = vunpack.c.l.b16 %v1464
      %v3788 = vunpack.c.h.b16 %v1464
      %v3789 = vunpack.c.l.b16 %v1465
      %v3790 = vunpack.c.h.b16 %v1465
      %v3791 = vunpack.c.l.b16 %v1466
      %v3792 = vunpack.c.h.b16 %v1466
      %v3793 = vunpack.c.l.b16 %v1467
      %v3794 = vunpack.c.h.b16 %v1467
      %v3795 = vunpack.c.l.b16 %v1468
      %v3796 = vunpack.c.h.b16 %v1468
      %v3797 = vunpack.c.l.b16 %v1469
      %v3798 = vunpack.c.h.b16 %v1469
      %v3799 = vunpack.c.l.b16 %v1470
      %v3800 = vunpack.c.h.b16 %v1470
      %v3801 = vunpack.c.l.b16 %v1471
      %v3802 = vunpack.c.h.b16 %v1471
      %v3803 = vunpack.c.l.b16 %v1472
      %v3804 = vunpack.c.h.b16 %v1472
      %v3805 = vunpack.c.l.b16 %v1473
      %v3806 = vunpack.c.h.b16 %v1473
      %v3807 = vunpack.c.l.b16 %v1474
      %v3808 = vunpack.c.h.b16 %v1474
      %v3809 = vunpack.c.l.b16 %v1475
      %v3810 = vunpack.c.h.b16 %v1475
      %v3811 = vunpack.c.l.b16 %v1476
      %v3812 = vunpack.c.h.b16 %v1476
      %v3813 = vunpack.c.l.b16 %v1477
      %v3814 = vunpack.c.h.b16 %v1477
      %v3815 = vunpack.c.l.b16 %v1478
      %v3816 = vunpack.c.h.b16 %v1478
      %v3817 = vunpack.c.l.b16 %v1479
      %v3818 = vunpack.c.h.b16 %v1479
      %v3819 = vunpack.c.l.b16 %v1480
      %v3820 = vunpack.c.h.b16 %v1480
      %v3821 = vunpack.c.l.b16 %v1481
      %v3822 = vunpack.c.h.b16 %v1481
      %v3823 = vunpack.c.l.b16 %v1482
      %v3824 = vunpack.c.h.b16 %v1482
      %v3825 = vunpack.c.l.b16 %v1483
      %v3826 = vunpack.c.h.b16 %v1483
      %v3827 = vunpack.c.l.b16 %v1484
      %v3828 = vunpack.c.h.b16 %v1484
      %v3829 = vunpack.c.l.b16 %v1485
      %v3830 = vunpack.c.h.b16 %v1485
      %v3831 = vunpack.c.l.b16 %v1486
      %v3832 = vunpack.c.h.b16 %v1486
      %v3833 = vunpack.c.l.b16 %v1487
      %v3834 = vunpack.c.h.b16 %v1487
      %v3835 = vunpack.c.l.b16 %v1488
      %v3836 = vunpack.c.h.b16 %v1488
      %v3837 = vunpack.c.l.b16 %v1489
      %v3838 = vunpack.c.h.b16 %v1489
      %v3839 = vunpack.c.l.b16 %v1490
      %v3840 = vunpack.c.h.b16 %v1490
      %v3841 = vunpack.c.l.b16 %v1491
      %v3842 = vunpack.c.h.b16 %v1491
      %v3843 = vunpack.c.l.b16 %v1492
      %v3844 = vunpack.c.h.b16 %v1492
      %v3845 = vunpack.c.l.b16 %v1493
      %v3846 = vunpack.c.h.b16 %v1493
      %v3847 = vunpack.c.l.b16 %v1494
      %v3848 = vunpack.c.h.b16 %v1494
      %v3849 = vunpack.c.l.b16 %v1495
      %v3850 = vunpack.c.h.b16 %v1495
      %v3851 = vunpack.c.l.b16 %v1496
      %v3852 = vunpack.c.h.b16 %v1496
      %v3853 = vunpack.c.l.b16 %v1497
      %v3854 = vunpack.c.h.b16 %v1497
      %v3855 = vunpack.c.l.b16 %v1498
      %v3856 = vunpack.c.h.b16 %v1498
      %v3857 = vunpack.c.l.b16 %v1499
      %v3858 = vunpack.c.h.b16 %v1499
      %v3859 = vunpack.c.l.b16 %v1500
      %v3860 = vunpack.c.h.b16 %v1500
      %v3861 = vunpack.c.l.b16 %v1501
      %v3862 = vunpack.c.h.b16 %v1501
      %v3863 = vunpack.c.l.b16 %v1502
      %v3864 = vunpack.c.h.b16 %v1502
      %v3865 = vunpack.c.l.b16 %v1503
      %v3866 = vunpack.c.h.b16 %v1503
      %v3867 = vunpack.c.l.b16 %v1504
      %v3868 = vunpack.c.h.b16 %v1504
      %v3869 = vunpack.c.l.b16 %v1505
      %v3870 = vunpack.c.h.b16 %v1505
      %v3871 = vunpack.c.l.b16 %v1506
      %v3872 = vunpack.c.h.b16 %v1506
      %v3873 = vunpack.c.l.b16 %v1507
      %v3874 = vunpack.c.h.b16 %v1507
      %v3875 = vunpack.c.l.b16 %v1508
      %v3876 = vunpack.c.h.b16 %v1508
      %v3877 = vunpack.c.l.b16 %v1509
      %v3878 = vunpack.c.h.b16 %v1509
      %v3879 = vunpack.c.l.b16 %v1510
      %v3880 = vunpack.c.h.b16 %v1510
      %v3881 = vunpack.c.l.b16 %v1511
      %v3882 = vunpack.c.h.b16 %v1511
      %v3883 = vunpack.c.l.b16 %v1512
      %v3884 = vunpack.c.h.b16 %v1512
      %v3885 = vunpack.c.l.b16 %v1513
      %v3886 = vunpack.c.h.b16 %v1513
      %v3887 = vunpack.c.l.b16 %v1514
      %v3888 = vunpack.c.h.b16 %v1514
      %v3889 = vunpack.c.l.b16 %v1515
      %v3890 = vunpack.c.h.b16 %v1515
      %v3891 = vunpack.c.l.b16 %v1516
      %v3892 = vunpack.c.h.b16 %v1516
      %v3893 = vunpack.c.l.b16 %v1517
      %v3894 = vunpack.c.h.b16 %v1517
      %v3895 = vunpack.c.l.b16 %v1518
      %v3896 = vunpack.c.h.b16 %v1518
      %v3897 = vunpack.c.l.b16 %v1519
      %v3898 = vunpack.c.h.b16 %v1519
      %v3899 = vunpack.c.l.b16 %v1520
      %v3900 = vunpack.c.h.b16 %v1520
      %v3901 = vunpack.c.l.b16 %v1521
      %v3902 = vunpack.c.h.b16 %v1521
      %v3903 = vunpack.c.l.b16 %v1522
      %v3904 = vunpack.c.h.b16 %v1522
      %v3905 = vunpack.c.l.b16 %v1523
      %v3906 = vunpack.c.h.b16 %v1523
      %v3907 = vunpack.c.l.b16 %v1524
      %v3908 = vunpack.c.h.b16 %v1524
      %v3909 = vunpack.c.l.b16 %v1525
      %v3910 = vunpack.c.h.b16 %v1525
      %v3911 = vunpack.c.l.b16 %v1526
      %v3912 = vunpack.c.h.b16 %v1526
      %v3913 = vunpack.c.l.b16 %v1527
      %v3914 = vunpack.c.h.b16 %v1527
      %v3915 = vunpack.c.l.b16 %v1528
      %v3916 = vunpack.c.h.b16 %v1528
      %v3917 = vunpack.c.l.b16 %v1529
      %v3918 = vunpack.c.h.b16 %v1529
      %v3919 = vunpack.c.l.b16 %v1530
      %v3920 = vunpack.c.h.b16 %v1530
      %v3921 = vunpack.c.l.b16 %v1531
      %v3922 = vunpack.c.h.b16 %v1531
      %v3923 = vunpack.c.l.b16 %v1532
      %v3924 = vunpack.c.h.b16 %v1532
      %v3925 = vunpack.c.l.b16 %v1533
      %v3926 = vunpack.c.h.b16 %v1533
      %v3927 = vunpack.c.l.b16 %v1534
      %v3928 = vunpack.c.h.b16 %v1534
      %v3929 = vunpack.c.l.b16 %v1535
      %v3930 = vunpack.c.h.b16 %v1535
      %v3931 = vunpack.c.l.b16 %v1536
      %v3932 = vunpack.c.h.b16 %v1536
      %v3933 = vunpack.c.l.b16 %v1537
      %v3934 = vunpack.c.h.b16 %v1537
      %v3935 = vunpack.c.l.b16 %v1538
      %v3936 = vunpack.c.h.b16 %v1538
      %v3937 = vunpack.c.l.b16 %v1539
      %v3938 = vunpack.c.h.b16 %v1539
      %v3939 = vunpack.c.l.b16 %v1540
      %v3940 = vunpack.c.h.b16 %v1540
      %v3941 = vunpack.c.l.b16 %v1541
      %v3942 = vunpack.c.h.b16 %v1541
      %v3943 = vunpack.c.l.b16 %v1542
      %v3944 = vunpack.c.h.b16 %v1542
      %v3945 = vunpack.c.l.b16 %v1543
      %v3946 = vunpack.c.h.b16 %v1543
      %v3947 = vunpack.c.l.b16 %v1544
      %v3948 = vunpack.c.h.b16 %v1544
      %v3949 = vunpack.c.l.b16 %v1545
      %v3950 = vunpack.c.h.b16 %v1545
      %v3951 = vunpack.c.l.b16 %v1546
      %v3952 = vunpack.c.h.b16 %v1546
      %v3953 = vunpack.c.l.b16 %v1547
      %v3954 = vunpack.c.h.b16 %v1547
      %v3955 = vunpack.c.l.b16 %v1548
      %v3956 = vunpack.c.h.b16 %v1548
      %v3957 = vunpack.c.l.b16 %v1549
      %v3958 = vunpack.c.h.b16 %v1549
      %v3959 = vunpack.c.l.b16 %v1550
      %v3960 = vunpack.c.h.b16 %v1550
      %v3961 = vunpack.c.l.b16 %v1551
      %v3962 = vunpack.c.h.b16 %v1551
      %v3963 = vunpack.c.l.b16 %v1552
      %v3964 = vunpack.c.h.b16 %v1552
      %v3965 = vunpack.c.l.b16 %v1553
      %v3966 = vunpack.c.h.b16 %v1553
      %v3967 = vunpack.c.l.b16 %v1554
      %v3968 = vunpack.c.h.b16 %v1554
      %v3969 = vunpack.c.l.b16 %v1555
      %v3970 = vunpack.c.h.b16 %v1555
      %v3971 = vunpack.c.l.b16 %v1556
      %v3972 = vunpack.c.h.b16 %v1556
      %v3973 = vunpack.c.l.b16 %v1557
      %v3974 = vunpack.c.h.b16 %v1557
      %v3975 = vunpack.c.l.b16 %v1558
      %v3976 = vunpack.c.h.b16 %v1558
      %v3977 = vunpack.c.l.b16 %v1559
      %v3978 = vunpack.c.h.b16 %v1559
      %v3979 = vunpack.c.l.b16 %v1560
      %v3980 = vunpack.c.h.b16 %v1560
      %v3981 = vunpack.c.l.b16 %v1561
      %v3982 = vunpack.c.h.b16 %v1561
      %v3983 = vunpack.c.l.b16 %v1562
      %v3984 = vunpack.c.h.b16 %v1562
      %v3985 = vunpack.c.l.b16 %v1563
      %v3986 = vunpack.c.h.b16 %v1563
      %v3987 = vunpack.c.l.b16 %v1564
      %v3988 = vunpack.c.h.b16 %v1564
      %v3989 = vunpack.c.l.b16 %v1565
      %v3990 = vunpack.c.h.b16 %v1565
      %v3991 = vunpack.c.l.b16 %v1566
      %v3992 = vunpack.c.h.b16 %v1566
      %v3993 = vunpack.c.l.b16 %v1567
      %v3994 = vunpack.c.h.b16 %v1567
      %v3995 = vunpack.c.l.b16 %v1568
      %v3996 = vunpack.c.h.b16 %v1568
      %v3997 = vunpack.c.l.b16 %v1569
      %v3998 = vunpack.c.h.b16 %v1569
      %v3999 = vunpack.c.l.b16 %v1570
      %v4000 = vunpack.c.h.b16 %v1570
      %v4001 = vunpack.c.l.b16 %v1571
      %v4002 = vunpack.c.h.b16 %v1571
      %v4003 = vunpack.c.l.b16 %v1572
      %v4004 = vunpack.c.h.b16 %v1572
      %v4005 = vunpack.c.l.b16 %v1573
      %v4006 = vunpack.c.h.b16 %v1573
      %v4007 = vunpack.c.l.b16 %v1574
      %v4008 = vunpack.c.h.b16 %v1574
      %v4009 = vunpack.c.l.b16 %v1575
      %v4010 = vunpack.c.h.b16 %v1575
      %v4011 = vunpack.c.l.b16 %v1576
      %v4012 = vunpack.c.h.b16 %v1576
      %v4013 = vunpack.c.l.b16 %v1577
      %v4014 = vunpack.c.h.b16 %v1577
      %v4015 = vunpack.c.l.b16 %v1578
      %v4016 = vunpack.c.h.b16 %v1578
      %v4017 = vunpack.c.l.b16 %v1579
      %v4018 = vunpack.c.h.b16 %v1579
      %v4019 = vunpack.c.l.b16 %v1580
      %v4020 = vunpack.c.h.b16 %v1580
      %v4021 = vunpack.c.l.b16 %v1581
      %v4022 = vunpack.c.h.b16 %v1581
      %v4023 = vunpack.c.l.b16 %v1582
      %v4024 = vunpack.c.h.b16 %v1582
      %v4025 = vunpack.c.l.b16 %v1583
      %v4026 = vunpack.c.h.b16 %v1583
      %v4027 = vunpack.c.l.b16 %v1584
      %v4028 = vunpack.c.h.b16 %v1584
      %v4029 = vunpack.c.l.b16 %v1585
      %v4030 = vunpack.c.h.b16 %v1585
      %v4031 = vunpack.c.l.b16 %v1586
      %v4032 = vunpack.c.h.b16 %v1586
      %v4033 = vunpack.c.l.b16 %v1587
      %v4034 = vunpack.c.h.b16 %v1587
      %v4035 = vunpack.c.l.b16 %v1588
      %v4036 = vunpack.c.h.b16 %v1588
      %v4037 = vunpack.c.l.b16 %v1589
      %v4038 = vunpack.c.h.b16 %v1589
      %v4039 = vunpack.c.l.b16 %v1590
      %v4040 = vunpack.c.h.b16 %v1590
      %v4041 = vunpack.c.l.b16 %v1591
      %v4042 = vunpack.c.h.b16 %v1591
      %v4043 = vunpack.c.l.b16 %v1592
      %v4044 = vunpack.c.h.b16 %v1592
      %v4045 = vunpack.c.l.b16 %v1593
      %v4046 = vunpack.c.h.b16 %v1593
      %v4047 = vunpack.c.l.b16 %v1594
      %v4048 = vunpack.c.h.b16 %v1594
      %v4049 = vunpack.c.l.b16 %v1595
      %v4050 = vunpack.c.h.b16 %v1595
      %v4051 = vunpack.c.l.b16 %v1596
      %v4052 = vunpack.c.h.b16 %v1596
      %v4053 = vunpack.c.l.b16 %v1597
      %v4054 = vunpack.c.h.b16 %v1597
      %v4055 = vunpack.c.l.b16 %v1598
      %v4056 = vunpack.c.h.b16 %v1598
      %v4057 = vunpack.c.l.b16 %v1599
      %v4058 = vunpack.c.h.b16 %v1599
      %v4059 = vunpack.c.l.b16 %v1600
      %v4060 = vunpack.c.h.b16 %v1600
      %v4061 = vunpack.c.l.b16 %v1601
      %v4062 = vunpack.c.h.b16 %v1601
      %v4063 = vunpack.c.l.b16 %v1602
      %v4064 = vunpack.c.h.b16 %v1602
      %v4065 = vunpack.c.l.b16 %v1603
      %v4066 = vunpack.c.h.b16 %v1603
      %v4067 = vunpack.c.l.b16 %v1604
      %v4068 = vunpack.c.h.b16 %v1604
      %v4069 = vunpack.c.l.b16 %v1605
      %v4070 = vunpack.c.h.b16 %v1605
      %v4071 = vunpack.c.l.b16 %v1606
      %v4072 = vunpack.c.h.b16 %v1606
      %v4073 = vunpack.c.l.b16 %v1607
      %v4074 = vunpack.c.h.b16 %v1607
      %v4075 = vunpack.c.l.b16 %v1608
      %v4076 = vunpack.c.h.b16 %v1608
      %v4077 = vunpack.c.l.b16 %v1609
      %v4078 = vunpack.c.h.b16 %v1609
      %v4079 = vunpack.c.l.b16 %v1610
      %v4080 = vunpack.c.h.b16 %v1610
      %v4081 = vunpack.c.l.b16 %v1611
      %v4082 = vunpack.c.h.b16 %v1611
      %v4083 = vunpack.c.l.b16 %v1612
      %v4084 = vunpack.c.h.b16 %v1612
      %v4085 = vunpack.c.l.b16 %v1613
      %v4086 = vunpack.c.h.b16 %v1613
      %v4087 = vunpack.c.l.b16 %v1614
      %v4088 = vunpack.c.h.b16 %v1614
      %v4089 = vunpack.c.l.b16 %v1615
      %v4090 = vunpack.c.h.b16 %v1615
      %v4091 = vunpack.c.l.b16 %v1616
      %v4092 = vunpack.c.h.b16 %v1616
      %v4093 = vunpack.c.l.b16 %v1617
      %v4094 = vunpack.c.h.b16 %v1617
      %v4095 = vunpack.c.l.b16 %v1618
      %v4096 = vunpack.c.h.b16 %v1618
      %v4097 = vunpack.c.l.b16 %v1619
      %v4098 = vunpack.c.h.b16 %v1619
      %v4099 = vunpack.c.l.b16 %v1620
      %v4100 = vunpack.c.h.b16 %v1620
      %v4101 = vunpack.c.l.b16 %v1621
      %v4102 = vunpack.c.h.b16 %v1621
      %v4103 = vunpack.c.l.b16 %v1622
      %v4104 = vunpack.c.h.b16 %v1622
      %v4105 = vunpack.c.l.b16 %v1623
      %v4106 = vunpack.c.h.b16 %v1623
      %v4107 = vunpack.c.l.b16 %v1624
      %v4108 = vunpack.c.h.b16 %v1624
      %v4109 = vunpack.c.l.b16 %v1625
      %v4110 = vunpack.c.h.b16 %v1625
      %v4111 = vunpack.c.l.b16 %v1626
      %v4112 = vunpack.c.h.b16 %v1626
      %v4113 = vunpack.c.l.b16 %v1627
      %v4114 = vunpack.c.h.b16 %v1627
      %v4115 = vunpack.c.l.b16 %v1628
      %v4116 = vunpack.c.h.b16 %v1628
      %v4117 = vunpack.c.l.b16 %v1629
      %v4118 = vunpack.c.h.b16 %v1629
      %v4119 = vunpack.c.l.b16 %v1630
      %v4120 = vunpack.c.h.b16 %v1630
      %v4121 = vunpack.c.l.b16 %v1631
      %v4122 = vunpack.c.h.b16 %v1631
      %v4123 = vunpack.c.l.b16 %v1632
      %v4124 = vunpack.c.h.b16 %v1632
      %v4125 = vunpack.c.l.b16 %v1633
      %v4126 = vunpack.c.h.b16 %v1633
      %v4127 = vunpack.c.l.b16 %v1634
      %v4128 = vunpack.c.h.b16 %v1634
      %v4129 = vunpack.c.l.b16 %v1635
      %v4130 = vunpack.c.h.b16 %v1635
      %v4131 = vunpack.c.l.b16 %v1636
      %v4132 = vunpack.c.h.b16 %v1636
      %v4133 = vunpack.c.l.b16 %v1637
      %v4134 = vunpack.c.h.b16 %v1637
      %v4135 = vunpack.c.l.b16 %v1638
      %v4136 = vunpack.c.h.b16 %v1638
      %v4137 = vunpack.c.l.b16 %v1639
      %v4138 = vunpack.c.h.b16 %v1639
      %v4139 = vunpack.c.l.b16 %v1640
      %v4140 = vunpack.c.h.b16 %v1640
      %v4141 = vunpack.c.l.b16 %v1641
      %v4142 = vunpack.c.h.b16 %v1641
      %v4143 = vunpack.c.l.b16 %v1642
      %v4144 = vunpack.c.h.b16 %v1642
      %v4145 = vunpack.c.l.b16 %v1643
      %v4146 = vunpack.c.h.b16 %v1643
      %v4147 = vunpack.c.l.b16 %v1644
      %v4148 = vunpack.c.h.b16 %v1644
      %v4149 = vunpack.c.l.b16 %v1645
      %v4150 = vunpack.c.h.b16 %v1645
      %v4151 = vunpack.c.l.b16 %v1646
      %v4152 = vunpack.c.h.b16 %v1646
      %v4153 = vunpack.c.l.b16 %v1647
      %v4154 = vunpack.c.h.b16 %v1647
      %v4155 = vunpack.c.l.b16 %v1648
      %v4156 = vunpack.c.h.b16 %v1648
      %v4157 = vunpack.c.l.b16 %v1649
      %v4158 = vunpack.c.h.b16 %v1649
      %v4159 = vunpack.c.l.b16 %v1650
      %v4160 = vunpack.c.h.b16 %v1650
      %v4161 = vunpack.c.l.b16 %v1651
      %v4162 = vunpack.c.h.b16 %v1651
      %v4163 = vunpack.c.l.b16 %v1652
      %v4164 = vunpack.c.h.b16 %v1652
      %v4165 = vunpack.c.l.b16 %v1653
      %v4166 = vunpack.c.h.b16 %v1653
      %v4167 = vunpack.c.l.b16 %v1654
      %v4168 = vunpack.c.h.b16 %v1654
      %v4169 = vunpack.c.l.b16 %v1655
      %v4170 = vunpack.c.h.b16 %v1655
      %v4171 = vunpack.c.l.b16 %v1656
      %v4172 = vunpack.c.h.b16 %v1656
      %v4173 = vunpack.c.l.b16 %v1657
      %v4174 = vunpack.c.h.b16 %v1657
      %v4175 = vunpack.c.l.b16 %v1658
      %v4176 = vunpack.c.h.b16 %v1658
      %v4177 = vunpack.c.l.b16 %v1659
      %v4178 = vunpack.c.h.b16 %v1659
      %v4179 = vunpack.c.l.b16 %v1660
      %v4180 = vunpack.c.h.b16 %v1660
      %v4181 = vunpack.c.l.b16 %v1661
      %v4182 = vunpack.c.h.b16 %v1661
      %v4183 = vunpack.c.l.b16 %v1662
      %v4184 = vunpack.c.h.b16 %v1662
      %v4185 = vunpack.c.l.b16 %v1663
      %v4186 = vunpack.c.h.b16 %v1663
      %v4187 = vunpack.c.l.b16 %v1664
      %v4188 = vunpack.c.h.b16 %v1664
      %v4189 = vunpack.c.l.b16 %v1665
      %v4190 = vunpack.c.h.b16 %v1665
      %v4191 = vunpack.c.l.b16 %v1666
      %v4192 = vunpack.c.h.b16 %v1666
      %v4193 = vunpack.c.l.b16 %v1667
      %v4194 = vunpack.c.h.b16 %v1667
      %v4195 = vunpack.c.l.b16 %v1668
      %v4196 = vunpack.c.h.b16 %v1668
      %v4197 = vunpack.c.l.b16 %v1669
      %v4198 = vunpack.c.h.b16 %v1669
      %v4199 = vunpack.c.l.b16 %v1670
      %v4200 = vunpack.c.h.b16 %v1670
      %v4201 = vunpack.c.l.b16 %v1671
      %v4202 = vunpack.c.h.b16 %v1671
      %v4203 = vunpack.c.l.b16 %v1672
      %v4204 = vunpack.c.h.b16 %v1672
      %v4205 = vunpack.c.l.b16 %v1673
      %v4206 = vunpack.c.h.b16 %v1673
      %v4207 = vunpack.c.l.b16 %v1674
      %v4208 = vunpack.c.h.b16 %v1674
      %v4209 = vunpack.c.l.b16 %v1675
      %v4210 = vunpack.c.h.b16 %v1675
      %v4211 = vunpack.c.l.b16 %v1676
      %v4212 = vunpack.c.h.b16 %v1676
      %v4213 = vunpack.c.l.b16 %v1677
      %v4214 = vunpack.c.h.b16 %v1677
      %v4215 = vunpack.c.l.b16 %v1678
      %v4216 = vunpack.c.h.b16 %v1678
      %v4217 = vunpack.c.l.b16 %v1679
      %v4218 = vunpack.c.h.b16 %v1679
      %v4219 = vunpack.c.l.b16 %v1680
      %v4220 = vunpack.c.h.b16 %v1680
      %v4221 = vunpack.c.l.b16 %v1681
      %v4222 = vunpack.c.h.b16 %v1681
      %v4223 = vunpack.c.l.b16 %v1682
      %v4224 = vunpack.c.h.b16 %v1682
      %v4225 = vunpack.c.l.b16 %v1683
      %v4226 = vunpack.c.h.b16 %v1683
      %v4227 = vunpack.c.l.b16 %v1684
      %v4228 = vunpack.c.h.b16 %v1684
      %v4229 = vunpack.c.l.b16 %v1685
      %v4230 = vunpack.c.h.b16 %v1685
      %v4231 = vunpack.c.l.b16 %v1686
      %v4232 = vunpack.c.h.b16 %v1686
      %v4233 = vunpack.c.l.b16 %v1687
      %v4234 = vunpack.c.h.b16 %v1687
      %v4235 = vunpack.c.l.b16 %v1688
      %v4236 = vunpack.c.h.b16 %v1688
      %v4237 = vunpack.c.l.b16 %v1689
      %v4238 = vunpack.c.h.b16 %v1689
      %v4239 = vunpack.c.l.b16 %v1690
      %v4240 = vunpack.c.h.b16 %v1690
      %v4241 = vunpack.c.l.b16 %v1691
      %v4242 = vunpack.c.h.b16 %v1691
      %v4243 = vunpack.c.l.b16 %v1692
      %v4244 = vunpack.c.h.b16 %v1692
      %v4245 = vunpack.c.l.b16 %v1693
      %v4246 = vunpack.c.h.b16 %v1693
      %v4247 = vunpack.c.l.b16 %v1694
      %v4248 = vunpack.c.h.b16 %v1694
      %v4249 = vunpack.c.l.b16 %v1695
      %v4250 = vunpack.c.h.b16 %v1695
      %v4251 = vunpack.c.l.b16 %v1696
      %v4252 = vunpack.c.h.b16 %v1696
      %v4253 = vunpack.c.l.b16 %v1697
      %v4254 = vunpack.c.h.b16 %v1697
      %v4255 = vunpack.c.l.b16 %v1698
      %v4256 = vunpack.c.h.b16 %v1698
      %v4257 = vunpack.c.l.b16 %v1699
      %v4258 = vunpack.c.h.b16 %v1699
      %v4259 = vunpack.c.l.b16 %v1700
      %v4260 = vunpack.c.h.b16 %v1700
      %v4261 = vunpack.c.l.b16 %v1701
      %v4262 = vunpack.c.h.b16 %v1701
      %v4263 = vunpack.c.l.b16 %v1702
      %v4264 = vunpack.c.h.b16 %v1702
      %v4265 = vunpack.c.l.b16 %v1703
      %v4266 = vunpack.c.h.b16 %v1703
      %v4267 = vunpack.c.l.b16 %v1704
      %v4268 = vunpack.c.h.b16 %v1704
      %v4269 = vunpack.c.l.b16 %v1705
      %v4270 = vunpack.c.h.b16 %v1705
      %v4271 = vunpack.c.l.b16 %v1706
      %v4272 = vunpack.c.h.b16 %v1706
      %v4273 = vunpack.c.l.b16 %v1707
      %v4274 = vunpack.c.h.b16 %v1707
      %v4275 = vunpack.c.l.b16 %v1708
      %v4276 = vunpack.c.h.b16 %v1708
      %v4277 = vunpack.c.l.b16 %v1709
      %v4278 = vunpack.c.h.b16 %v1709
      %v4279 = vunpack.c.l.b16 %v1710
      %v4280 = vunpack.c.h.b16 %v1710
      %v4281 = vunpack.c.l.b16 %v1711
      %v4282 = vunpack.c.h.b16 %v1711
      %v4283 = vunpack.c.l.b16 %v1712
      %v4284 = vunpack.c.h.b16 %v1712
      %v4285 = vunpack.c.l.b16 %v1713
      %v4286 = vunpack.c.h.b16 %v1713
      %v4287 = vunpack.c.l.b16 %v1714
      %v4288 = vunpack.c.h.b16 %v1714
      %v4289 = vunpack.c.l.b16 %v1715
      %v4290 = vunpack.c.h.b16 %v1715
      %v4291 = vunpack.c.l.b16 %v1716
      %v4292 = vunpack.c.h.b16 %v1716
      %v4293 = vunpack.c.l.b16 %v1717
      %v4294 = vunpack.c.h.b16 %v1717
      %v4295 = vunpack.c.l.b16 %v1718
      %v4296 = vunpack.c.h.b16 %v1718
      %v4297 = vunpack.c.l.b16 %v1719
      %v4298 = vunpack.c.h.b16 %v1719
      %v4299 = vunpack.c.l.b16 %v1720
      %v4300 = vunpack.c.h.b16 %v1720
      %v4301 = vunpack.c.l.b16 %v1721
      %v4302 = vunpack.c.h.b16 %v1721
      %v4303 = vunpack.c.l.b16 %v1722
      %v4304 = vunpack.c.h.b16 %v1722
      %v4305 = vunpack.c.l.b16 %v1723
      %v4306 = vunpack.c.h.b16 %v1723
      %v4307 = vunpack.c.l.b16 %v1724
      %v4308 = vunpack.c.h.b16 %v1724
      %v4309 = vunpack.c.l.b16 %v1725
      %v4310 = vunpack.c.h.b16 %v1725
      %v4311 = vunpack.c.l.b16 %v1726
      %v4312 = vunpack.c.h.b16 %v1726
      %v4313 = vunpack.c.l.b16 %v1727
      %v4314 = vunpack.c.h.b16 %v1727
      %v4315 = vunpack.c.l.b16 %v1728
      %v4316 = vunpack.c.h.b16 %v1728
      %v4317 = vunpack.c.l.b16 %v1729
      %v4318 = vunpack.c.h.b16 %v1729
      %v4319 = vunpack.c.l.b16 %v1730
      %v4320 = vunpack.c.h.b16 %v1730
      %v4321 = vunpack.c.l.b16 %v1731
      %v4322 = vunpack.c.h.b16 %v1731
      %v4323 = vunpack.c.l.b16 %v1732
      %v4324 = vunpack.c.h.b16 %v1732
      %v4325 = vunpack.c.l.b16 %v1733
      %v4326 = vunpack.c.h.b16 %v1733
      %v4327 = vunpack.c.l.b16 %v1734
      %v4328 = vunpack.c.h.b16 %v1734
      %v4329 = vunpack.c.l.b16 %v1735
      %v4330 = vunpack.c.h.b16 %v1735
      %v4331 = vunpack.c.l.b16 %v1736
      %v4332 = vunpack.c.h.b16 %v1736
      %v4333 = vunpack.c.l.b16 %v1737
      %v4334 = vunpack.c.h.b16 %v1737
      %v4335 = vunpack.c.l.b16 %v1738
      %v4336 = vunpack.c.h.b16 %v1738
      %v4337 = vunpack.c.l.b16 %v1739
      %v4338 = vunpack.c.h.b16 %v1739
      %v4339 = vunpack.c.l.b16 %v1740
      %v4340 = vunpack.c.h.b16 %v1740
      %v4341 = vunpack.c.l.b16 %v1741
      %v4342 = vunpack.c.h.b16 %v1741
      %v4343 = vunpack.c.l.b16 %v1742
      %v4344 = vunpack.c.h.b16 %v1742
      %v4345 = vunpack.c.l.b16 %v1743
      %v4346 = vunpack.c.h.b16 %v1743
      %v4347 = vunpack.c.l.b16 %v1744
      %v4348 = vunpack.c.h.b16 %v1744
      %v4349 = vunpack.c.l.b16 %v1745
      %v4350 = vunpack.c.h.b16 %v1745
      %v4351 = vunpack.c.l.b16 %v1746
      %v4352 = vunpack.c.h.b16 %v1746
      %v4353 = vunpack.c.l.b16 %v1747
      %v4354 = vunpack.c.h.b16 %v1747
      %v4355 = vunpack.c.l.b16 %v1748
      %v4356 = vunpack.c.h.b16 %v1748
      %v4357 = vunpack.c.l.b16 %v1749
      %v4358 = vunpack.c.h.b16 %v1749
      %v4359 = vunpack.c.l.b16 %v1750
      %v4360 = vunpack.c.h.b16 %v1750
      %v4361 = vunpack.c.l.b16 %v1751
      %v4362 = vunpack.c.h.b16 %v1751
      %v4363 = vunpack.c.l.b16 %v1752
      %v4364 = vunpack.c.h.b16 %v1752
      %v4365 = vunpack.c.l.b16 %v1753
      %v4366 = vunpack.c.h.b16 %v1753
      %v4367 = vunpack.c.l.b16 %v1754
      %v4368 = vunpack.c.h.b16 %v1754
      %v4369 = vunpack.c.l.b16 %v1755
      %v4370 = vunpack.c.h.b16 %v1755
      %v4371 = vunpack.c.l.b16 %v1756
      %v4372 = vunpack.c.h.b16 %v1756
      %v4373 = vunpack.c.l.b16 %v1757
      %v4374 = vunpack.c.h.b16 %v1757
      %v4375 = vunpack.c.l.b16 %v1758
      %v4376 = vunpack.c.h.b16 %v1758
      %v4377 = vunpack.c.l.b16 %v1759
      %v4378 = vunpack.c.h.b16 %v1759
      %v4379 = vunpack.c.l.b16 %v1760
      %v4380 = vunpack.c.h.b16 %v1760
      %v4381 = vunpack.c.l.b16 %v1761
      %v4382 = vunpack.c.h.b16 %v1761
      %v4383 = vunpack.c.l.b16 %v1762
      %v4384 = vunpack.c.h.b16 %v1762
      %v4385 = vunpack.c.l.b16 %v1763
      %v4386 = vunpack.c.h.b16 %v1763
      %v4387 = vunpack.c.l.b16 %v1764
      %v4388 = vunpack.c.h.b16 %v1764
      %v4389 = vunpack.c.l.b16 %v1765
      %v4390 = vunpack.c.h.b16 %v1765
      %v4391 = vunpack.c.l.b16 %v1766
      %v4392 = vunpack.c.h.b16 %v1766
      %v4393 = vunpack.c.l.b16 %v1767
      %v4394 = vunpack.c.h.b16 %v1767
      %v4395 = vunpack.c.l.b16 %v1768
      %v4396 = vunpack.c.h.b16 %v1768
      %v4397 = vunpack.c.l.b16 %v1769
      %v4398 = vunpack.c.h.b16 %v1769
      %v4399 = vunpack.c.l.b16 %v1770
      %v4400 = vunpack.c.h.b16 %v1770
      %v4401 = vunpack.c.l.b16 %v1771
      %v4402 = vunpack.c.h.b16 %v1771
      %v4403 = vunpack.c.l.b16 %v1772
      %v4404 = vunpack.c.h.b16 %v1772
      %v4405 = vunpack.c.l.b16 %v1773
      %v4406 = vunpack.c.h.b16 %v1773
      %v4407 = vunpack.c.l.b16 %v1774
      %v4408 = vunpack.c.h.b16 %v1774
      %v4409 = vunpack.c.l.b16 %v1775
      %v4410 = vunpack.c.h.b16 %v1775
      %v4411 = vunpack.c.l.b16 %v1776
      %v4412 = vunpack.c.h.b16 %v1776
      %v4413 = vunpack.c.l.b16 %v1777
      %v4414 = vunpack.c.h.b16 %v1777
      %v4415 = vunpack.c.l.b16 %v1778
      %v4416 = vunpack.c.h.b16 %v1778
      %v4417 = vunpack.c.l.b16 %v1779
      %v4418 = vunpack.c.h.b16 %v1779
      %v4419 = vunpack.c.l.b16 %v1780
      %v4420 = vunpack.c.h.b16 %v1780
      %v4421 = vunpack.c.l.b16 %v1781
      %v4422 = vunpack.c.h.b16 %v1781
      %v4423 = vunpack.c.l.b16 %v1782
      %v4424 = vunpack.c.h.b16 %v1782
      %v4425 = vunpack.c.l.b16 %v1783
      %v4426 = vunpack.c.h.b16 %v1783
      %v4427 = vunpack.c.l.b16 %v1784
      %v4428 = vunpack.c.h.b16 %v1784
      %v4429 = vunpack.c.l.b16 %v1785
      %v4430 = vunpack.c.h.b16 %v1785
      %v4431 = vunpack.c.l.b16 %v1786
      %v4432 = vunpack.c.h.b16 %v1786
      %v4433 = vunpack.c.l.b16 %v1787
      %v4434 = vunpack.c.h.b16 %v1787
      %v4435 = vunpack.c.l.b16 %v1788
      %v4436 = vunpack.c.h.b16 %v1788
      %v4437 = vunpack.c.l.b16 %v1789
      %v4438 = vunpack.c.h.b16 %v1789
      %v4439 = vunpack.c.l.b16 %v1790
      %v4440 = vunpack.c.h.b16 %v1790
      %v4441 = vunpack.c.l.b16 %v1791
      %v4442 = vunpack.c.h.b16 %v1791
      %v4443 = vunpack.c.l.b16 %v1792
      %v4444 = vunpack.c.h.b16 %v1792
      %v4445 = vunpack.c.l.b16 %v1793
      %v4446 = vunpack.c.h.b16 %v1793
      %v4447 = vunpack.c.l.b16 %v1794
      %v4448 = vunpack.c.h.b16 %v1794
      %v4449 = vunpack.c.l.b16 %v1795
      %v4450 = vunpack.c.h.b16 %v1795
      %v4451 = vunpack.c.l.b16 %v1796
      %v4452 = vunpack.c.h.b16 %v1796
      %v4453 = vunpack.c.l.b16 %v1797
      %v4454 = vunpack.c.h.b16 %v1797
      %v4455 = vunpack.c.l.b16 %v1798
      %v4456 = vunpack.c.h.b16 %v1798
      %v4457 = vunpack.c.l.b16 %v1799
      %v4458 = vunpack.c.h.b16 %v1799
      %v4459 = vunpack.c.l.b16 %v1800
      %v4460 = vunpack.c.h.b16 %v1800
      %v4461 = vunpack.c.l.b16 %v1801
      %v4462 = vunpack.c.h.b16 %v1801
      %v4463 = vunpack.c.l.b16 %v1802
      %v4464 = vunpack.c.h.b16 %v1802
      %v4465 = vunpack.c.l.b16 %v1803
      %v4466 = vunpack.c.h.b16 %v1803
      %v4467 = vunpack.c.l.b16 %v1804
      %v4468 = vunpack.c.h.b16 %v1804
      %v4469 = vunpack.c.l.b16 %v1805
      %v4470 = vunpack.c.h.b16 %v1805
      %v4471 = vunpack.c.l.b16 %v1806
      %v4472 = vunpack.c.h.b16 %v1806
      %v4473 = vunpack.c.l.b16 %v1807
      %v4474 = vunpack.c.h.b16 %v1807
      %v4475 = vunpack.c.l.b16 %v1808
      %v4476 = vunpack.c.h.b16 %v1808
      %v4477 = vunpack.c.l.b16 %v1809
      %v4478 = vunpack.c.h.b16 %v1809
      %v4479 = vunpack.c.l.b16 %v1810
      %v4480 = vunpack.c.h.b16 %v1810
      %v4481 = vunpack.c.l.b16 %v1811
      %v4482 = vunpack.c.h.b16 %v1811
      %v4483 = vunpack.c.l.b16 %v1812
      %v4484 = vunpack.c.h.b16 %v1812
      %v4485 = vunpack.c.l.b16 %v1813
      %v4486 = vunpack.c.h.b16 %v1813
      %v4487 = vunpack.c.l.b16 %v1814
      %v4488 = vunpack.c.h.b16 %v1814
      %v4489 = vunpack.c.l.b16 %v1815
      %v4490 = vunpack.c.h.b16 %v1815
      %v4491 = vunpack.c.l.b16 %v1816
      %v4492 = vunpack.c.h.b16 %v1816
      %v4493 = vunpack.c.l.b16 %v1817
      %v4494 = vunpack.c.h.b16 %v1817
      %v4495 = vunpack.c.l.b16 %v1818
      %v4496 = vunpack.c.h.b16 %v1818
      %v4497 = vunpack.c.l.b16 %v1819
      %v4498 = vunpack.c.h.b16 %v1819
      %v4499 = vunpack.c.l.b16 %v1820
      %v4500 = vunpack.c.h.b16 %v1820
      %v4501 = vunpack.c.l.b16 %v1821
      %v4502 = vunpack.c.h.b16 %v1821
      %v4503 = vunpack.c.l.b16 %v1822
      %v4504 = vunpack.c.h.b16 %v1822
      %v4505 = vunpack.c.l.b16 %v1823
      %v4506 = vunpack.c.h.b16 %v1823
      %v4507 = vunpack.c.l.b16 %v1824
      %v4508 = vunpack.c.h.b16 %v1824
      %v4509 = vunpack.c.l.b16 %v1825
      %v4510 = vunpack.c.h.b16 %v1825
      %v4511 = vunpack.c.l.b16 %v1826
      %v4512 = vunpack.c.h.b16 %v1826
      %v4513 = vunpack.c.l.b16 %v1827
      %v4514 = vunpack.c.h.b16 %v1827
      %v4515 = vunpack.c.l.b16 %v1828
      %v4516 = vunpack.c.h.b16 %v1828
      %v4517 = vunpack.c.l.b16 %v1829
      %v4518 = vunpack.c.h.b16 %v1829
      %v4519 = vunpack.c.l.b16 %v1830
      %v4520 = vunpack.c.h.b16 %v1830
      %v4521 = vunpack.c.l.b16 %v1831
      %v4522 = vunpack.c.h.b16 %v1831
      %v4523 = vunpack.c.l.b16 %v1832
      %v4524 = vunpack.c.h.b16 %v1832
      %v4525 = vunpack.c.l.b16 %v1833
      %v4526 = vunpack.c.h.b16 %v1833
      %v4527 = vunpack.c.l.b16 %v1834
      %v4528 = vunpack.c.h.b16 %v1834
      %v4529 = vunpack.c.l.b16 %v1835
      %v4530 = vunpack.c.h.b16 %v1835
      %v4531 = vunpack.c.l.b16 %v1836
      %v4532 = vunpack.c.h.b16 %v1836
      %v4533 = vunpack.c.l.b16 %v1837
      %v4534 = vunpack.c.h.b16 %v1837
      %v4535 = vunpack.c.l.b16 %v1838
      %v4536 = vunpack.c.h.b16 %v1838
      %v4537 = vunpack.c.l.b16 %v1839
      %v4538 = vunpack.c.h.b16 %v1839
      %v4539 = vunpack.c.l.b16 %v1840
      %v4540 = vunpack.c.h.b16 %v1840
      %v4541 = vunpack.c.l.b16 %v1841
      %v4542 = vunpack.c.h.b16 %v1841
      %v4543 = vunpack.c.l.b16 %v1842
      %v4544 = vunpack.c.h.b16 %v1842
      %v4545 = vunpack.c.l.b16 %v1843
      %v4546 = vunpack.c.h.b16 %v1843
      %v4547 = vunpack.c.l.b16 %v1844
      %v4548 = vunpack.c.h.b16 %v1844
      %v4549 = vunpack.c.l.b16 %v1845
      %v4550 = vunpack.c.h.b16 %v1845
      %v4551 = vunpack.c.l.b16 %v1846
      %v4552 = vunpack.c.h.b16 %v1846
      %v4553 = vunpack.c.l.b16 %v1847
      %v4554 = vunpack.c.h.b16 %v1847
      %v4555 = vunpack.c.l.b16 %v1848
      %v4556 = vunpack.c.h.b16 %v1848
      %v4557 = vunpack.c.l.b16 %v1849
      %v4558 = vunpack.c.h.b16 %v1849
      %v4559 = vunpack.c.l.b16 %v1850
      %v4560 = vunpack.c.h.b16 %v1850
      %v4561 = vunpack.c.l.b16 %v1851
      %v4562 = vunpack.c.h.b16 %v1851
      %v4563 = vunpack.c.l.b16 %v1852
      %v4564 = vunpack.c.h.b16 %v1852
      %v4565 = vunpack.c.l.b16 %v1853
      %v4566 = vunpack.c.h.b16 %v1853
      %v4567 = vunpack.c.l.b16 %v1854
      %v4568 = vunpack.c.h.b16 %v1854
      %v4569 = vunpack.c.l.b16 %v1855
      %v4570 = vunpack.c.h.b16 %v1855
      %v4571 = vunpack.c.l.b16 %v1856
      %v4572 = vunpack.c.h.b16 %v1856
      %v4573 = vunpack.c.l.b16 %v1857
      %v4574 = vunpack.c.h.b16 %v1857
      %v4575 = vunpack.c.l.b16 %v1858
      %v4576 = vunpack.c.h.b16 %v1858
      %v4577 = vunpack.c.l.b16 %v1859
      %v4578 = vunpack.c.h.b16 %v1859
      %v4579 = vunpack.c.l.b16 %v1860
      %v4580 = vunpack.c.h.b16 %v1860
      %v4581 = vunpack.c.l.b16 %v1861
      %v4582 = vunpack.c.h.b16 %v1861
      %v4583 = vunpack.c.l.b16 %v1862
      %v4584 = vunpack.c.h.b16 %v1862
      %v4585 = vunpack.c.l.b16 %v1863
      %v4586 = vunpack.c.h.b16 %v1863
      %v4587 = vunpack.c.l.b16 %v1864
      %v4588 = vunpack.c.h.b16 %v1864
      %v4589 = vunpack.c.l.b16 %v1865
      %v4590 = vunpack.c.h.b16 %v1865
      %v4591 = vunpack.c.l.b16 %v1866
      %v4592 = vunpack.c.h.b16 %v1866
      %v4593 = vunpack.c.l.b16 %v1867
      %v4594 = vunpack.c.h.b16 %v1867
      %v4595 = vunpack.c.l.b16 %v1868
      %v4596 = vunpack.c.h.b16 %v1868
      %v4597 = vunpack.c.l.b16 %v1869
      %v4598 = vunpack.c.h.b16 %v1869
      %v4599 = vunpack.c.l.b16 %v1870
      %v4600 = vunpack.c.h.b16 %v1870
      %v4601 = vunpack.c.l.b16 %v1871
      %v4602 = vunpack.c.h.b16 %v1871
      %v4603 = vunpack.c.l.b16 %v1872
      %v4604 = vunpack.c.h.b16 %v1872
      %v4605 = vunpack.c.l.b16 %v1873
      %v4606 = vunpack.c.h.b16 %v1873
      %v4607 = vunpack.c.l.b16 %v1874
      %v4608 = vunpack.c.h.b16 %v1874
      %v4609 = vunpack.c.l.b16 %v1875
      %v4610 = vunpack.c.h.b16 %v1875
      %v4611 = vunpack.c.l.b16 %v1876
      %v4612 = vunpack.c.h.b16 %v1876
      %v4613 = vunpack.c.l.b16 %v1877
      %v4614 = vunpack.c.h.b16 %v1877
      %v4615 = vunpack.c.l.b16 %v1878
      %v4616 = vunpack.c.h.b16 %v1878
      %v4617 = vunpack.c.l.b16 %v1879
      %v4618 = vunpack.c.h.b16 %v1879
      %v4619 = vunpack.c.l.b16 %v1880
      %v4620 = vunpack.c.h.b16 %v1880
      %v4621 = vunpack.c.l.b16 %v1881
      %v4622 = vunpack.c.h.b16 %v1881
      %v4623 = vunpack.c.l.b16 %v1882
      %v4624 = vunpack.c.h.b16 %v1882
      %v4625 = vunpack.c.l.b16 %v1883
      %v4626 = vunpack.c.h.b16 %v1883
      %v4627 = vunpack.c.l.b16 %v1884
      %v4628 = vunpack.c.h.b16 %v1884
      %v4629 = vunpack.c.l.b16 %v1885
      %v4630 = vunpack.c.h.b16 %v1885
      %v4631 = vunpack.c.l.b16 %v1886
      %v4632 = vunpack.c.h.b16 %v1886
      %v4633 = vunpack.c.l.b16 %v1887
      %v4634 = vunpack.c.h.b16 %v1887
      %v4635 = vunpack.c.l.b16 %v1888
      %v4636 = vunpack.c.h.b16 %v1888
      %v4637 = vunpack.c.l.b16 %v1889
      %v4638 = vunpack.c.h.b16 %v1889
      %v4639 = vunpack.c.l.b16 %v1890
      %v4640 = vunpack.c.h.b16 %v1890
      %v4641 = vunpack.c.l.b16 %v1891
      %v4642 = vunpack.c.h.b16 %v1891
      %v4643 = vunpack.c.l.b16 %v1892
      %v4644 = vunpack.c.h.b16 %v1892
      %v4645 = vunpack.c.l.b16 %v1893
      %v4646 = vunpack.c.h.b16 %v1893
      %v4647 = vunpack.c.l.b16 %v1894
      %v4648 = vunpack.c.h.b16 %v1894
      %v4649 = vunpack.c.l.b16 %v1895
      %v4650 = vunpack.c.h.b16 %v1895
      %v4651 = vunpack.c.l.b16 %v1896
      %v4652 = vunpack.c.h.b16 %v1896
      %v4653 = vunpack.c.l.b16 %v1897
      %v4654 = vunpack.c.h.b16 %v1897
      %v4655 = vunpack.c.l.b16 %v1898
      %v4656 = vunpack.c.h.b16 %v1898
      %v4657 = vunpack.c.l.b16 %v1899
      %v4658 = vunpack.c.h.b16 %v1899
      %v4659 = vunpack.c.l.b16 %v1900
      %v4660 = vunpack.c.h.b16 %v1900
      %v4661 = vunpack.c.l.b16 %v1901
      %v4662 = vunpack.c.h.b16 %v1901
      %v4663 = vunpack.c.l.b16 %v1902
      %v4664 = vunpack.c.h.b16 %v1902
      %v4665 = vunpack.c.l.b16 %v1903
      %v4666 = vunpack.c.h.b16 %v1903
      %v4667 = vunpack.c.l.b16 %v1904
      %v4668 = vunpack.c.h.b16 %v1904
      %v4669 = vunpack.c.l.b16 %v1905
      %v4670 = vunpack.c.h.b16 %v1905
      %v4671 = vunpack.c.l.b16 %v1906
      %v4672 = vunpack.c.h.b16 %v1906
      %v4673 = vunpack.c.l.b16 %v1907
      %v4674 = vunpack.c.h.b16 %v1907
      %v4675 = vunpack.c.l.b16 %v1908
      %v4676 = vunpack.c.h.b16 %v1908
      %v4677 = vunpack.c.l.b16 %v1909
      %v4678 = vunpack.c.h.b16 %v1909
      %v4679 = vunpack.c.l.b16 %v1910
      %v4680 = vunpack.c.h.b16 %v1910
      %v4681 = vunpack.c.l.b16 %v1911
      %v4682 = vunpack.c.h.b16 %v1911
      %v4683 = vunpack.c.l.b16 %v1912
      %v4684 = vunpack.c.h.b16 %v1912
      %v4685 = vunpack.c.l.b16 %v1913
      %v4686 = vunpack.c.h.b16 %v1913
      %v4687 = vunpack.c.l.b16 %v1914
      %v4688 = vunpack.c.h.b16 %v1914
      %v4689 = vunpack.c.l.b16 %v1915
      %v4690 = vunpack.c.h.b16 %v1915
      %v4691 = vunpack.c.l.b16 %v1916
      %v4692 = vunpack.c.h.b16 %v1916
      %v4693 = vunpack.c.l.b16 %v1917
      %v4694 = vunpack.c.h.b16 %v1917
      %v4695 = vunpack.c.l.b16 %v1918
      %v4696 = vunpack.c.h.b16 %v1918
      %v4697 = vunpack.c.l.b16 %v1919
      %v4698 = vunpack.c.h.b16 %v1919
      %v4699 = vunpack.c.l.b16 %v1920
      %v4700 = vunpack.c.h.b16 %v1920
      %v4701 = vunpack.c.l.b16 %v1921
      %v4702 = vunpack.c.h.b16 %v1921
      %v4703 = vunpack.c.l.b16 %v1922
      %v4704 = vunpack.c.h.b16 %v1922
      %v4705 = vunpack.c.l.b16 %v1923
      %v4706 = vunpack.c.h.b16 %v1923
      %v4707 = vunpack.c.l.b16 %v1924
      %v4708 = vunpack.c.h.b16 %v1924
      %v4709 = vunpack.c.l.b16 %v1925
      %v4710 = vunpack.c.h.b16 %v1925
      %v4711 = vunpack.c.l.b16 %v1926
      %v4712 = vunpack.c.h.b16 %v1926
      %v4713 = vunpack.c.l.b16 %v1927
      %v4714 = vunpack.c.h.b16 %v1927
      %v4715 = vunpack.c.l.b16 %v1928
      %v4716 = vunpack.c.h.b16 %v1928
      %v4717 = vunpack.c.l.b16 %v1929
      %v4718 = vunpack.c.h.b16 %v1929
      %v4719 = vunpack.c.l.b16 %v1930
      %v4720 = vunpack.c.h.b16 %v1930
      %v4721 = vunpack.c.l.b16 %v1931
      %v4722 = vunpack.c.h.b16 %v1931
      %v4723 = vunpack.c.l.b16 %v1932
      %v4724 = vunpack.c.h.b16 %v1932
      %v4725 = vunpack.c.l.b16 %v1933
      %v4726 = vunpack.c.h.b16 %v1933
      %v4727 = vunpack.c.l.b16 %v1934
      %v4728 = vunpack.c.h.b16 %v1934
      %v4729 = vunpack.c.l.b16 %v1935
      %v4730 = vunpack.c.h.b16 %v1935
      %v4731 = vunpack.c.l.b16 %v1936
      %v4732 = vunpack.c.h.b16 %v1936
      %v4733 = vunpack.c.l.b16 %v1937
      %v4734 = vunpack.c.h.b16 %v1937
      %v4735 = vunpack.c.l.b16 %v1938
      %v4736 = vunpack.c.h.b16 %v1938
      %v4737 = vunpack.c.l.b16 %v1939
      %v4738 = vunpack.c.h.b16 %v1939
      %v4739 = vunpack.c.l.b16 %v1940
      %v4740 = vunpack.c.h.b16 %v1940
      %v4741 = vunpack.c.l.b16 %v1941
      %v4742 = vunpack.c.h.b16 %v1941
      %v4743 = vunpack.c.l.b16 %v1942
      %v4744 = vunpack.c.h.b16 %v1942
      %v4745 = vunpack.c.l.b16 %v1943
      %v4746 = vunpack.c.h.b16 %v1943
      %v4747 = vunpack.c.l.b16 %v1944
      %v4748 = vunpack.c.h.b16 %v1944
      %v4749 = vunpack.c.l.b16 %v1945
      %v4750 = vunpack.c.h.b16 %v1945
      %v4751 = vunpack.c.l.b16 %v1946
      %v4752 = vunpack.c.h.b16 %v1946
      %v4753 = vunpack.c.l.b16 %v1947
      %v4754 = vunpack.c.h.b16 %v1947
      %v4755 = vunpack.c.l.b16 %v1948
      %v4756 = vunpack.c.h.b16 %v1948
      %v4757 = vunpack.c.l.b16 %v1949
      %v4758 = vunpack.c.h.b16 %v1949
      %v4759 = vunpack.c.l.b16 %v1950
      %v4760 = vunpack.c.h.b16 %v1950
      %v4761 = vunpack.c.l.b16 %v1951
      %v4762 = vunpack.c.h.b16 %v1951
      %v4763 = vunpack.c.l.b16 %v1952
      %v4764 = vunpack.c.h.b16 %v1952
      %v4765 = vunpack.c.l.b16 %v1953
      %v4766 = vunpack.c.h.b16 %v1953
      %v4767 = vunpack.c.l.b16 %v1954
      %v4768 = vunpack.c.h.b16 %v1954
      %v4769 = vunpack.c.l.b16 %v1955
      %v4770 = vunpack.c.h.b16 %v1955
      %v4771 = vunpack.c.l.b16 %v1956
      %v4772 = vunpack.c.h.b16 %v1956
      %v4773 = vunpack.c.l.b16 %v1957
      %v4774 = vunpack.c.h.b16 %v1957
      %v4775 = vunpack.c.l.b16 %v1958
      %v4776 = vunpack.c.h.b16 %v1958
      %v4777 = vunpack.c.l.b16 %v1959
      %v4778 = vunpack.c.h.b16 %v1959
      %v4779 = vunpack.c.l.b16 %v1960
      %v4780 = vunpack.c.h.b16 %v1960
      %v4781 = vunpack.c.l.b16 %v1961
      %v4782 = vunpack.c.h.b16 %v1961
      %v4783 = vunpack.c.l.b16 %v1962
      %v4784 = vunpack.c.h.b16 %v1962
      %v4785 = vunpack.c.l.b16 %v1963
      %v4786 = vunpack.c.h.b16 %v1963
      %v4787 = vunpack.c.l.b16 %v1964
      %v4788 = vunpack.c.h.b16 %v1964
      %v4789 = vunpack.c.l.b16 %v1965
      %v4790 = vunpack.c.h.b16 %v1965
      %v4791 = vunpack.c.l.b16 %v1966
      %v4792 = vunpack.c.h.b16 %v1966
      %v4793 = vunpack.c.l.b16 %v1967
      %v4794 = vunpack.c.h.b16 %v1967
      %v4795 = vunpack.c.l.b16 %v1968
      %v4796 = vunpack.c.h.b16 %v1968
      %v4797 = vunpack.c.l.b16 %v1969
      %v4798 = vunpack.c.h.b16 %v1969
      %v4799 = vunpack.c.l.b16 %v1970
      %v4800 = vunpack.c.h.b16 %v1970
      %v4801 = vunpack.c.l.b16 %v1971
      %v4802 = vunpack.c.h.b16 %v1971
      %v4803 = vunpack.c.l.b16 %v1972
      %v4804 = vunpack.c.h.b16 %v1972
      %v4805 = vunpack.c.l.b16 %v1973
      %v4806 = vunpack.c.h.b16 %v1973
      %v4807 = vunpack.c.l.b16 %v1974
      %v4808 = vunpack.c.h.b16 %v1974
      %v4809 = vunpack.c.l.b16 %v1975
      %v4810 = vunpack.c.h.b16 %v1975
      %v4811 = vunpack.c.l.b16 %v1976
      %v4812 = vunpack.c.h.b16 %v1976
      %v4813 = vunpack.c.l.b16 %v1977
      %v4814 = vunpack.c.h.b16 %v1977
      %v4815 = vunpack.c.l.b16 %v1978
      %v4816 = vunpack.c.h.b16 %v1978
      %v4817 = vunpack.c.l.b16 %v1979
      %v4818 = vunpack.c.h.b16 %v1979
      %v4819 = vunpack.c.l.b16 %v1980
      %v4820 = vunpack.c.h.b16 %v1980
      %v4821 = vunpack.c.l.b16 %v1981
      %v4822 = vunpack.c.h.b16 %v1981
      %v4823 = vunpack.c.l.b16 %v1982
      %v4824 = vunpack.c.h.b16 %v1982
      %v4825 = vunpack.c.l.b16 %v1983
      %v4826 = vunpack.c.h.b16 %v1983
      %v4827 = vunpack.c.l.b16 %v1984
      %v4828 = vunpack.c.h.b16 %v1984
      %v4829 = vunpack.c.l.b16 %v1985
      %v4830 = vunpack.c.h.b16 %v1985
      %v4831 = vunpack.c.l.b16 %v1986
      %v4832 = vunpack.c.h.b16 %v1986
      %v4833 = vunpack.c.l.b16 %v1987
      %v4834 = vunpack.c.h.b16 %v1987
      %v4835 = vunpack.c.l.b16 %v1988
      %v4836 = vunpack.c.h.b16 %v1988
      %v4837 = vunpack.c.l.b16 %v1989
      %v4838 = vunpack.c.h.b16 %v1989
      %v4839 = vunpack.c.l.b16 %v1990
      %v4840 = vunpack.c.h.b16 %v1990
      %v4841 = vunpack.c.l.b16 %v1991
      %v4842 = vunpack.c.h.b16 %v1991
      %v4843 = vunpack.c.l.b16 %v1992
      %v4844 = vunpack.c.h.b16 %v1992
      %v4845 = vunpack.c.l.b16 %v1993
      %v4846 = vunpack.c.h.b16 %v1993
      %v4847 = vunpack.c.l.b16 %v1994
      %v4848 = vunpack.c.h.b16 %v1994
      %v4849 = vunpack.c.l.b16 %v1995
      %v4850 = vunpack.c.h.b16 %v1995
      %v4851 = vunpack.c.l.b16 %v1996
      %v4852 = vunpack.c.h.b16 %v1996
      %v4853 = vunpack.c.l.b16 %v1997
      %v4854 = vunpack.c.h.b16 %v1997
      %v4855 = vunpack.c.l.b16 %v1998
      %v4856 = vunpack.c.h.b16 %v1998
      %v4857 = vunpack.c.l.b16 %v1999
      %v4858 = vunpack.c.h.b16 %v1999
      %v4859 = vunpack.c.l.b16 %v2000
      %v4860 = vunpack.c.h.b16 %v2000
      %v4861 = vunpack.c.l.b16 %v2001
      %v4862 = vunpack.c.h.b16 %v2001
      %v4863 = vunpack.c.l.b16 %v2002
      %v4864 = vunpack.c.h.b16 %v2002
      %v4865 = vunpack.c.l.b16 %v2003
      %v4866 = vunpack.c.h.b16 %v2003
      %v4867 = vunpack.c.l.b16 %v2004
      %v4868 = vunpack.c.h.b16 %v2004
      %v4869 = vunpack.c.l.b16 %v2005
      %v4870 = vunpack.c.h.b16 %v2005
      %v4871 = vunpack.c.l.b16 %v2006
      %v4872 = vunpack.c.h.b16 %v2006
      %v4873 = vunpack.c.l.b16 %v2007
      %v4874 = vunpack.c.h.b16 %v2007
      %v4875 = vunpack.c.l.b16 %v2008
      %v4876 = vunpack.c.h.b16 %v2008
      %v4877 = vunpack.c.l.b16 %v2009
      %v4878 = vunpack.c.h.b16 %v2009
      %v4879 = vunpack.c.l.b16 %v2010
      %v4880 = vunpack.c.h.b16 %v2010
      %v4881 = vunpack.c.l.b16 %v2011
      %v4882 = vunpack.c.h.b16 %v2011
      %v4883 = vunpack.c.l.b16 %v2012
      %v4884 = vunpack.c.h.b16 %v2012
      %v4885 = vunpack.c.l.b16 %v2013
      %v4886 = vunpack.c.h.b16 %v2013
      %v4887 = vunpack.c.l.b16 %v2014
      %v4888 = vunpack.c.h.b16 %v2014
      %v4889 = vunpack.c.l.b16 %v2015
      %v4890 = vunpack.c.h.b16 %v2015
      %v4891 = vunpack.c.l.b16 %v2016
      %v4892 = vunpack.c.h.b16 %v2016
      %v4893 = vunpack.c.l.b16 %v2017
      %v4894 = vunpack.c.h.b16 %v2017
      %v4895 = vunpack.c.l.b16 %v2018
      %v4896 = vunpack.c.h.b16 %v2018
      %v4897 = vunpack.c.l.b16 %v2019
      %v4898 = vunpack.c.h.b16 %v2019
      %v4899 = vunpack.c.l.b16 %v2020
      %v4900 = vunpack.c.h.b16 %v2020
      %v4901 = vunpack.c.l.b16 %v2021
      %v4902 = vunpack.c.h.b16 %v2021
      %v4903 = vunpack.c.l.b16 %v2022
      %v4904 = vunpack.c.h.b16 %v2022
      %v4905 = vunpack.c.l.b16 %v2023
      %v4906 = vunpack.c.h.b16 %v2023
      %v4907 = vunpack.c.l.b16 %v2024
      %v4908 = vunpack.c.h.b16 %v2024
      %v4909 = vunpack.c.l.b16 %v2025
      %v4910 = vunpack.c.h.b16 %v2025
      %v4911 = vunpack.c.l.b16 %v2026
      %v4912 = vunpack.c.h.b16 %v2026
      %v4913 = vunpack.c.l.b16 %v2027
      %v4914 = vunpack.c.h.b16 %v2027
      %v4915 = vunpack.c.l.b16 %v2028
      %v4916 = vunpack.c.h.b16 %v2028
      %v4917 = vunpack.c.l.b16 %v2029
      %v4918 = vunpack.c.h.b16 %v2029
      %v4919 = vunpack.c.l.b16 %v2030
      %v4920 = vunpack.c.h.b16 %v2030
      %v4921 = vunpack.c.l.b16 %v2031
      %v4922 = vunpack.c.h.b16 %v2031
      %v4923 = vunpack.c.l.b16 %v2032
      %v4924 = vunpack.c.h.b16 %v2032
      %v4925 = vunpack.c.l.b16 %v2033
      %v4926 = vunpack.c.h.b16 %v2033
      %v4927 = vunpack.c.l.b16 %v2034
      %v4928 = vunpack.c.h.b16 %v2034
      %v4929 = vunpack.c.l.b16 %v2035
      %v4930 = vunpack.c.h.b16 %v2035
      %v4931 = vunpack.c.l.b16 %v2036
      %v4932 = vunpack.c.h.b16 %v2036
      %v4933 = vunpack.c.l.b16 %v2037
      %v4934 = vunpack.c.h.b16 %v2037
      %v4935 = vunpack.c.l.b16 %v2038
      %v4936 = vunpack.c.h.b16 %v2038
      %v4937 = vunpack.c.l.b16 %v2039
      %v4938 = vunpack.c.h.b16 %v2039
      %v4939 = vunpack.c.l.b16 %v2040
      %v4940 = vunpack.c.h.b16 %v2040
      %v4941 = vunpack.c.l.b16 %v2041
      %v4942 = vunpack.c.h.b16 %v2041
      %v4943 = vunpack.c.l.b16 %v2042
      %v4944 = vunpack.c.h.b16 %v2042
      %v4945 = vunpack.c.l.b16 %v2043
      %v4946 = vunpack.c.h.b16 %v2043
      %v4947 = vunpack.c.l.b16 %v2044
      %v4948 = vunpack.c.h.b16 %v2044
      %v4949 = vunpack.c.l.b16 %v2045
      %v4950 = vunpack.c.h.b16 %v2045
      %v4951 = vunpack.c.l.b16 %v2046
      %v4952 = vunpack.c.h.b16 %v2046
      %v4953 = vunpack.c.l.b16 %v2047
      %v4954 = vunpack.c.h.b16 %v2047
      %v4955 = vunpack.c.l.b16 %v2048
      %v4956 = vunpack.c.h.b16 %v2048
      %v4957 = vunpack.c.l.b16 %v2049
      %v4958 = vunpack.c.h.b16 %v2049
      %v4959 = vunpack.c.l.b16 %v2050
      %v4960 = vunpack.c.h.b16 %v2050
      %v4961 = vunpack.c.l.b16 %v2051
      %v4962 = vunpack.c.h.b16 %v2051
      %v4963 = vunpack.c.l.b16 %v2052
      %v4964 = vunpack.c.h.b16 %v2052
      %v4965 = vunpack.c.l.b16 %v2053
      %v4966 = vunpack.c.h.b16 %v2053
      %v4967 = vunpack.c.l.b16 %v2054
      %v4968 = vunpack.c.h.b16 %v2054
      %v4969 = vunpack.c.l.b16 %v2055
      %v4970 = vunpack.c.h.b16 %v2055
      %v4971 = vunpack.c.l.b16 %v2056
      %v4972 = vunpack.c.h.b16 %v2056
      %v4973 = vunpack.c.l.b16 %v2057
      %v4974 = vunpack.c.h.b16 %v2057
      %v4975 = vunpack.c.l.b16 %v2058
      %v4976 = vunpack.c.h.b16 %v2058
      %v4977 = vunpack.c.l.b16 %v2059
      %v4978 = vunpack.c.h.b16 %v2059
      %v4979 = vunpack.c.l.b16 %v2060
      %v4980 = vunpack.c.h.b16 %v2060
      %v4981 = vunpack.c.l.b16 %v2061
      %v4982 = vunpack.c.h.b16 %v2061
      %v4983 = vunpack.c.l.b16 %v2062
      %v4984 = vunpack.c.h.b16 %v2062
      %v4985 = vunpack.c.l.b16 %v2063
      %v4986 = vunpack.c.h.b16 %v2063
      %v4987 = vunpack.c.l.b16 %v2064
      %v4988 = vunpack.c.h.b16 %v2064
      %v4989 = vunpack.c.l.b16 %v2065
      %v4990 = vunpack.c.h.b16 %v2065
      %v4991 = vunpack.c.l.b16 %v2066
      %v4992 = vunpack.c.h.b16 %v2066
      %v4993 = vunpack.c.l.b16 %v2067
      %v4994 = vunpack.c.h.b16 %v2067
      %v4995 = vunpack.c.l.b16 %v2068
      %v4996 = vunpack.c.h.b16 %v2068
      %v4997 = vunpack.c.l.b16 %v2069
      %v4998 = vunpack.c.h.b16 %v2069
      %v4999 = vunpack.c.l.b16 %v2070
      %v5000 = vunpack.c.h.b16 %v2070
      %v5001 = vunpack.c.l.b16 %v2071
      %v5002 = vunpack.c.h.b16 %v2071
      %v5003 = vunpack.c.l.b16 %v2072
      %v5004 = vunpack.c.h.b16 %v2072
      %v5005 = vunpack.c.l.b16 %v2073
      %v5006 = vunpack.c.h.b16 %v2073
      %v5007 = vunpack.c.l.b16 %v2074
      %v5008 = vunpack.c.h.b16 %v2074
      %v5009 = vunpack.c.l.b16 %v2075
      %v5010 = vunpack.c.h.b16 %v2075
      %v5011 = vunpack.c.l.b16 %v2076
      %v5012 = vunpack.c.h.b16 %v2076
      %v5013 = vunpack.c.l.b16 %v2077
      %v5014 = vunpack.c.h.b16 %v2077
      %v5015 = vunpack.c.l.b16 %v2078
      %v5016 = vunpack.c.h.b16 %v2078
      %v5017 = vunpack.c.l.b16 %v2079
      %v5018 = vunpack.c.h.b16 %v2079
      %v5019 = vunpack.c.l.b16 %v2080
      %v5020 = vunpack.c.h.b16 %v2080
      %v5021 = vunpack.c.l.b16 %v2081
      %v5022 = vunpack.c.h.b16 %v2081
      %v5023 = vunpack.c.l.b16 %v2082
      %v5024 = vunpack.c.h.b16 %v2082
      %v5025 = vunpack.c.l.b16 %v2083
      %v5026 = vunpack.c.h.b16 %v2083
      %v5027 = vunpack.c.l.b16 %v2084
      %v5028 = vunpack.c.h.b16 %v2084
      %v5029 = vunpack.c.l.b16 %v2085
      %v5030 = vunpack.c.h.b16 %v2085
      %v5031 = vunpack.c.l.b16 %v2086
      %v5032 = vunpack.c.h.b16 %v2086
      %v5033 = vunpack.c.l.b16 %v2087
      %v5034 = vunpack.c.h.b16 %v2087
      %v5035 = vunpack.c.l.b16 %v2088
      %v5036 = vunpack.c.h.b16 %v2088
      %v5037 = vunpack.c.l.b16 %v2089
      %v5038 = vunpack.c.h.b16 %v2089
      %v5039 = vunpack.c.l.b16 %v2090
      %v5040 = vunpack.c.h.b16 %v2090
      %v5041 = vunpack.c.l.b16 %v2091
      %v5042 = vunpack.c.h.b16 %v2091
      %v5043 = vunpack.c.l.b16 %v2092
      %v5044 = vunpack.c.h.b16 %v2092
      %v5045 = vunpack.c.l.b16 %v2093
      %v5046 = vunpack.c.h.b16 %v2093
      %v5047 = vunpack.c.l.b16 %v2094
      %v5048 = vunpack.c.h.b16 %v2094
      %v5049 = vunpack.c.l.b16 %v2095
      %v5050 = vunpack.c.h.b16 %v2095
      %v5051 = vunpack.c.l.b16 %v2096
      %v5052 = vunpack.c.h.b16 %v2096
      %v5053 = vunpack.c.l.b16 %v2097
      %v5054 = vunpack.c.h.b16 %v2097
      %v5055 = vunpack.c.l.b16 %v2098
      %v5056 = vunpack.c.h.b16 %v2098
      %v5057 = vunpack.c.l.b16 %v2099
      %v5058 = vunpack.c.h.b16 %v2099
      %v5059 = vunpack.c.l.b16 %v2100
      %v5060 = vunpack.c.h.b16 %v2100
      %v5061 = vunpack.c.l.b16 %v2101
      %v5062 = vunpack.c.h.b16 %v2101
      %v5063 = vunpack.c.l.b16 %v2102
      %v5064 = vunpack.c.h.b16 %v2102
      %v5065 = vunpack.c.l.b16 %v2103
      %v5066 = vunpack.c.h.b16 %v2103
      %v5067 = vunpack.c.l.b16 %v2104
      %v5068 = vunpack.c.h.b16 %v2104
      %v5069 = vunpack.c.l.b16 %v2105
      %v5070 = vunpack.c.h.b16 %v2105
      %v5071 = vunpack.c.l.b16 %v2106
      %v5072 = vunpack.c.h.b16 %v2106
      %v5073 = vunpack.c.l.b16 %v2107
      %v5074 = vunpack.c.h.b16 %v2107
      %v5075 = vunpack.c.l.b16 %v2108
      %v5076 = vunpack.c.h.b16 %v2108
      %v5077 = vunpack.c.l.b16 %v2109
      %v5078 = vunpack.c.h.b16 %v2109
      %v5079 = vunpack.c.l.b16 %v2110
      %v5080 = vunpack.c.h.b16 %v2110
      %v5081 = vunpack.c.l.b16 %v2111
      %v5082 = vunpack.c.h.b16 %v2111
      %v5083 = vunpack.c.l.b16 %v2112
      %v5084 = vunpack.c.h.b16 %v2112
      %v5085 = vunpack.c.l.b16 %v2113
      %v5086 = vunpack.c.h.b16 %v2113
      %v5087 = vunpack.c.l.b16 %v2114
      %v5088 = vunpack.c.h.b16 %v2114
      %v5089 = vunpack.c.l.b16 %v2115
      %v5090 = vunpack.c.h.b16 %v2115
      %v5091 = vunpack.c.l.b16 %v2116
      %v5092 = vunpack.c.h.b16 %v2116
      %v5093 = vunpack.c.l.b16 %v2117
      %v5094 = vunpack.c.h.b16 %v2117
      %v5095 = vunpack.c.l.b16 %v2118
      %v5096 = vunpack.c.h.b16 %v2118
      %v5097 = vunpack.c.l.b16 %v2119
      %v5098 = vunpack.c.h.b16 %v2119
      %v5099 = vunpack.c.l.b16 %v2120
      %v5100 = vunpack.c.h.b16 %v2120
      %v5101 = vunpack.c.l.b16 %v2121
      %v5102 = vunpack.c.h.b16 %v2121
      %v5103 = vunpack.c.l.b16 %v2122
      %v5104 = vunpack.c.h.b16 %v2122
      %v5105 = vunpack.c.l.b16 %v2123
      %v5106 = vunpack.c.h.b16 %v2123
      %v5107 = vunpack.c.l.b16 %v2124
      %v5108 = vunpack.c.h.b16 %v2124
      %v5109 = vunpack.c.l.b16 %v2125
      %v5110 = vunpack.c.h.b16 %v2125
      %v5111 = vunpack.c.l.b16 %v2126
      %v5112 = vunpack.c.h.b16 %v2126
      %v5113 = vunpack.c.l.b16 %v2127
      %v5114 = vunpack.c.h.b16 %v2127
      %v5115 = vunpack.c.l.b16 %v2128
      %v5116 = vunpack.c.h.b16 %v2128
      %v5117 = vunpack.c.l.b16 %v2129
      %v5118 = vunpack.c.h.b16 %v2129
      %v5119 = vunpack.c.l.b16 %v2130
      %v5120 = vunpack.c.h.b16 %v2130
      %v5121 = vunpack.c.l.b16 %v2131
      %v5122 = vunpack.c.h.b16 %v2131
      %v5123 = vunpack.c.l.b16 %v2132
      %v5124 = vunpack.c.h.b16 %v2132
      %v5125 = vunpack.c.l.b16 %v2133
      %v5126 = vunpack.c.h.b16 %v2133
      %v5127 = vunpack.c.l.b16 %v2134
      %v5128 = vunpack.c.h.b16 %v2134
      %v5129 = vunpack.c.l.b16 %v2135
      %v5130 = vunpack.c.h.b16 %v2135
      %v5131 = vunpack.c.l.b16 %v2136
      %v5132 = vunpack.c.h.b16 %v2136
      %v5133 = vunpack.c.l.b16 %v2137
      %v5134 = vunpack.c.h.b16 %v2137
      %v5135 = vunpack.c.l.b16 %v2138
      %v5136 = vunpack.c.h.b16 %v2138
      %v5137 = vunpack.c.l.b16 %v2139
      %v5138 = vunpack.c.h.b16 %v2139
      %v5139 = vunpack.c.l.b16 %v2140
      %v5140 = vunpack.c.h.b16 %v2140
      %v5141 = vunpack.c.l.b16 %v2141
      %v5142 = vunpack.c.h.b16 %v2141
      %v5143 = vunpack.c.l.b16 %v2142
      %v5144 = vunpack.c.h.b16 %v2142
      %v5145 = vunpack.c.l.b16 %v2143
      %v5146 = vunpack.c.h.b16 %v2143
      %v5147 = vunpack.c.l.b16 %v2144
      %v5148 = vunpack.c.h.b16 %v2144
      %v5149 = vunpack.c.l.b16 %v2145
      %v5150 = vunpack.c.h.b16 %v2145
      %v5151 = vunpack.c.l.b16 %v2146
      %v5152 = vunpack.c.h.b16 %v2146
      %v5153 = vunpack.c.l.b16 %v2147
      %v5154 = vunpack.c.h.b16 %v2147
      %v5155 = vunpack.c.l.b16 %v2148
      %v5156 = vunpack.c.h.b16 %v2148
      %v5157 = vunpack.c.l.b16 %v2149
      %v5158 = vunpack.c.h.b16 %v2149
      %v5159 = vunpack.c.l.b16 %v2150
      %v5160 = vunpack.c.h.b16 %v2150
      %v5161 = vunpack.c.l.b16 %v2151
      %v5162 = vunpack.c.h.b16 %v2151
      %v5163 = vunpack.c.l.b16 %v2152
      %v5164 = vunpack.c.h.b16 %v2152
      %v5165 = vunpack.c.l.b16 %v2153
      %v5166 = vunpack.c.h.b16 %v2153
      %v5167 = vunpack.c.l.b16 %v2154
      %v5168 = vunpack.c.h.b16 %v2154
      %v5169 = vunpack.c.l.b16 %v2155
      %v5170 = vunpack.c.h.b16 %v2155
      %v5171 = vunpack.c.l.b16 %v2156
      %v5172 = vunpack.c.h.b16 %v2156
      %v5173 = vunpack.c.l.b16 %v2157
      %v5174 = vunpack.c.h.b16 %v2157
      %v5175 = vunpack.c.l.b16 %v2158
      %v5176 = vunpack.c.h.b16 %v2158
      %v5177 = vunpack.c.l.b16 %v2159
      %v5178 = vunpack.c.h.b16 %v2159
      %v5179 = vunpack.c.l.b16 %v2160
      %v5180 = vunpack.c.h.b16 %v2160
      %v5181 = vunpack.c.l.b16 %v2161
      %v5182 = vunpack.c.h.b16 %v2161
      %v5183 = vunpack.c.l.b16 %v2162
      %v5184 = vunpack.c.h.b16 %v2162
      %v5185 = vunpack.c.l.b16 %v2163
      %v5186 = vunpack.c.h.b16 %v2163
      %v5187 = vunpack.c.l.b16 %v2164
      %v5188 = vunpack.c.h.b16 %v2164
      %v5189 = vunpack.c.l.b16 %v2165
      %v5190 = vunpack.c.h.b16 %v2165
      %v5191 = vunpack.c.l.b16 %v2166
      %v5192 = vunpack.c.h.b16 %v2166
      %v5193 = vunpack.c.l.b16 %v2167
      %v5194 = vunpack.c.h.b16 %v2167
      %v5195 = vunpack.c.l.b16 %v2168
      %v5196 = vunpack.c.h.b16 %v2168
      %v5197 = vunpack.c.l.b16 %v2169
      %v5198 = vunpack.c.h.b16 %v2169
      %v5199 = vunpack.c.l.b16 %v2170
      %v5200 = vunpack.c.h.b16 %v2170
      %v5201 = vunpack.c.l.b16 %v2171
      %v5202 = vunpack.c.h.b16 %v2171
      %v5203 = vunpack.c.l.b16 %v2172
      %v5204 = vunpack.c.h.b16 %v2172
      %v5205 = vunpack.c.l.b16 %v2173
      %v5206 = vunpack.c.h.b16 %v2173
      %v5207 = vunpack.c.l.b16 %v2174
      %v5208 = vunpack.c.h.b16 %v2174
      %v5209 = vunpack.c.l.b16 %v2175
      %v5210 = vunpack.c.h.b16 %v2175
      %v5211 = vunpack.c.l.b16 %v2176
      %v5212 = vunpack.c.h.b16 %v2176
      %v5213 = vunpack.c.l.b16 %v2177
      %v5214 = vunpack.c.h.b16 %v2177
      %v5215 = vunpack.c.l.b16 %v2178
      %v5216 = vunpack.c.h.b16 %v2178
      %v5217 = vunpack.c.l.b16 %v2179
      %v5218 = vunpack.c.h.b16 %v2179
      %v5219 = vunpack.c.l.b16 %v2180
      %v5220 = vunpack.c.h.b16 %v2180
      %v5221 = vunpack.c.l.b16 %v2181
      %v5222 = vunpack.c.h.b16 %v2181
      %v5223 = vunpack.c.l.b16 %v2182
      %v5224 = vunpack.c.h.b16 %v2182
      %v5225 = vunpack.c.l.b16 %v2183
      %v5226 = vunpack.c.h.b16 %v2183
      %v5227 = vunpack.c.l.b16 %v2184
      %v5228 = vunpack.c.h.b16 %v2184
      %v5229 = vunpack.c.l.b16 %v2185
      %v5230 = vunpack.c.h.b16 %v2185
      %v5231 = vunpack.c.l.b16 %v2186
      %v5232 = vunpack.c.h.b16 %v2186
      %v5233 = vunpack.c.l.b16 %v2187
      %v5234 = vunpack.c.h.b16 %v2187
      %v5235 = vunpack.c.l.b16 %v2188
      %v5236 = vunpack.c.h.b16 %v2188
      %v5237 = vunpack.c.l.b16 %v2189
      %v5238 = vunpack.c.h.b16 %v2189
      %v5239 = vunpack.c.l.b16 %v2190
      %v5240 = vunpack.c.h.b16 %v2190
      %v5241 = vunpack.c.l.b16 %v2191
      %v5242 = vunpack.c.h.b16 %v2191
      %v5243 = vunpack.c.l.b16 %v2192
      %v5244 = vunpack.c.h.b16 %v2192
      %v5245 = vunpack.c.l.b16 %v2193
      %v5246 = vunpack.c.h.b16 %v2193
      %v5247 = vunpack.c.l.b16 %v2194
      %v5248 = vunpack.c.h.b16 %v2194
      %v5249 = vunpack.c.l.b16 %v2195
      %v5250 = vunpack.c.h.b16 %v2195
      %v5251 = vunpack.c.l.b16 %v2196
      %v5252 = vunpack.c.h.b16 %v2196
      %v5253 = vunpack.c.l.b16 %v2197
      %v5254 = vunpack.c.h.b16 %v2197
      %v5255 = vunpack.c.l.b16 %v2198
      %v5256 = vunpack.c.h.b16 %v2198
      %v5257 = vunpack.c.l.b16 %v2199
      %v5258 = vunpack.c.h.b16 %v2199
      %v5259 = vunpack.c.l.b16 %v2200
      %v5260 = vunpack.c.h.b16 %v2200
      %v5261 = vunpack.c.l.b16 %v2201
      %v5262 = vunpack.c.h.b16 %v2201
      %v5263 = vunpack.c.l.b16 %v2202
      %v5264 = vunpack.c.h.b16 %v2202
      %v5265 = vunpack.c.l.b16 %v2203
      %v5266 = vunpack.c.h.b16 %v2203
      %v5267 = vunpack.c.l.b16 %v2204
      %v5268 = vunpack.c.h.b16 %v2204
      %v5269 = vunpack.c.l.b16 %v2205
      %v5270 = vunpack.c.h.b16 %v2205
      %v5271 = vunpack.c.l.b16 %v2206
      %v5272 = vunpack.c.h.b16 %v2206
      %v5273 = vunpack.c.l.b16 %v2207
      %v5274 = vunpack.c.h.b16 %v2207
      %v5275 = vunpack.c.l.b16 %v2208
      %v5276 = vunpack.c.h.b16 %v2208
      %v5277 = vunpack.c.l.b16 %v2209
      %v5278 = vunpack.c.h.b16 %v2209
      %v5279 = vunpack.c.l.b16 %v2210
      %v5280 = vunpack.c.h.b16 %v2210
      %v5281 = vunpack.c.l.b16 %v2211
      %v5282 = vunpack.c.h.b16 %v2211
      %v5283 = vunpack.c.l.b16 %v2212
      %v5284 = vunpack.c.h.b16 %v2212
      %v5285 = vunpack.c.l.b16 %v2213
      %v5286 = vunpack.c.h.b16 %v2213
      %v5287 = vunpack.c.l.b16 %v2214
      %v5288 = vunpack.c.h.b16 %v2214
      %v5289 = vunpack.c.l.b16 %v2215
      %v5290 = vunpack.c.h.b16 %v2215
      %v5291 = vunpack.c.l.b16 %v2216
      %v5292 = vunpack.c.h.b16 %v2216
      %v5293 = vunpack.c.l.b16 %v2217
      %v5294 = vunpack.c.h.b16 %v2217
      %v5295 = vunpack.c.l.b16 %v2218
      %v5296 = vunpack.c.h.b16 %v2218
      %v5297 = vunpack.c.l.b16 %v2219
      %v5298 = vunpack.c.h.b16 %v2219
      %v5299 = vunpack.c.l.b16 %v2220
      %v5300 = vunpack.c.h.b16 %v2220
      %v5301 = vunpack.c.l.b16 %v2221
      %v5302 = vunpack.c.h.b16 %v2221
      %v5303 = vunpack.c.l.b16 %v2222
      %v5304 = vunpack.c.h.b16 %v2222
      %v5305 = vunpack.c.l.b16 %v2223
      %v5306 = vunpack.c.h.b16 %v2223
      %v5307 = vunpack.c.l.b16 %v2224
      %v5308 = vunpack.c.h.b16 %v2224
      %v5309 = vunpack.c.l.b16 %v2225
      %v5310 = vunpack.c.h.b16 %v2225
      %v5311 = vunpack.c.l.b16 %v2226
      %v5312 = vunpack.c.h.b16 %v2226
      %v5313 = vunpack.c.l.b16 %v2227
      %v5314 = vunpack.c.h.b16 %v2227
      %v5315 = vunpack.c.l.b16 %v2228
      %v5316 = vunpack.c.h.b16 %v2228
      %v5317 = vunpack.c.l.b16 %v2229
      %v5318 = vunpack.c.h.b16 %v2229
      %v5319 = vunpack.c.l.b16 %v2230
      %v5320 = vunpack.c.h.b16 %v2230
      %v5321 = vpack.c.b16 %v3281, %v3273
      %v5322 = vpack.c.b16 %v3282, %v3274
      %v5323 = vpack.c.b16 %v3283, %v3275
      %v5324 = vpack.c.b16 %v3284, %v3276
      %v5325 = vpack.c.b16 %v3285, %v3277
      %v5326 = vpack.c.b16 %v3286, %v3278
      %v5327 = vpack.c.b16 %v3287, %v3279
      %v5328 = vpack.c.b16 %v3288, %v3280
      %v5329 = vpack.c.b16 %v3297, %v3289
      %v5330 = vpack.c.b16 %v3298, %v3290
      %v5331 = vpack.c.b16 %v3299, %v3291
      %v5332 = vpack.c.b16 %v3300, %v3292
      %v5333 = vpack.c.b16 %v3301, %v3293
      %v5334 = vpack.c.b16 %v3302, %v3294
      %v5335 = vpack.c.b16 %v3303, %v3295
      %v5336 = vpack.c.b16 %v3304, %v3296
      %v5337 = vpack.c.b16 %v3313, %v3305
      %v5338 = vpack.c.b16 %v3314, %v3306
      %v5339 = vpack.c.b16 %v3315, %v3307
      %v5340 = vpack.c.b16 %v3316, %v3308
      %v5341 = vpack.c.b16 %v3317, %v3309
      %v5342 = vpack.c.b16 %v3318, %v3310
      %v5343 = vpack.c.b16 %v3319, %v3311
      %v5344 = vpack.c.b16 %v3320, %v3312
      %v5345 = vpack.c.b16 %v3329, %v3321
      %v5346 = vpack.c.b16 %v3330, %v3322
      %v5347 = vpack.c.b16 %v3331, %v3323
      %v5348 = vpack.c.b16 %v3332, %v3324
      %v5349 = vpack.c.b16 %v3333, %v3325
      %v5350 = vpack.c.b16 %v3334, %v3326
      %v5351 = vpack.c.b16 %v3335, %v3327
      %v5352 = vpack.c.b16 %v3336, %v3328
      %v5353 = vpack.c.b16 %v3345, %v3337
      %v5354 = vpack.c.b16 %v3346, %v3338
      %v5355 = vpack.c.b16 %v3347, %v3339
      %v5356 = vpack.c.b16 %v3348, %v3340
      %v5357 = vpack.c.b16 %v3349, %v3341
      %v5358 = vpack.c.b16 %v3350, %v3342
      %v5359 = vpack.c.b16 %v3351, %v3343
      %v5360 = vpack.c.b16 %v3352, %v3344
      %v5361 = vpack.c.b16 %v3361, %v3353
      %v5362 = vpack.c.b16 %v3362, %v3354
      %v5363 = vpack.c.b16 %v3363, %v3355
      %v5364 = vpack.c.b16 %v3364, %v3356
      %v5365 = vpack.c.b16 %v3365, %v3357
      %v5366 = vpack.c.b16 %v3366, %v3358
      %v5367 = vpack.c.b16 %v3367, %v3359
      %v5368 = vpack.c.b16 %v3368, %v3360
      %v5369 = vpack.c.b16 %v3377, %v3369
      %v5370 = vpack.c.b16 %v3378, %v3370
      %v5371 = vpack.c.b16 %v3379, %v3371
      %v5372 = vpack.c.b16 %v3380, %v3372
      %v5373 = vpack.c.b16 %v3381, %v3373
      %v5374 = vpack.c.b16 %v3382, %v3374
      %v5375 = vpack.c.b16 %v3383, %v3375
      %v5376 = vpack.c.b16 %v3384, %v3376
      %v5377 = vpack.c.b16 %v3393, %v3385
      %v5378 = vpack.c.b16 %v3394, %v3386
      %v5379 = vpack.c.b16 %v3395, %v3387
      %v5380 = vpack.c.b16 %v3396, %v3388
      %v5381 = vpack.c.b16 %v3397, %v3389
      %v5382 = vpack.c.b16 %v3398, %v3390
      %v5383 = vpack.c.b16 %v3399, %v3391
      %v5384 = vpack.c.b16 %v3400, %v3392
      %v5385 = vpack.c.b16 %v3409, %v3401
      %v5386 = vpack.c.b16 %v3410, %v3402
      %v5387 = vpack.c.b16 %v3411, %v3403
      %v5388 = vpack.c.b16 %v3412, %v3404
      %v5389 = vpack.c.b16 %v3413, %v3405
      %v5390 = vpack.c.b16 %v3414, %v3406
      %v5391 = vpack.c.b16 %v3415, %v3407
      %v5392 = vpack.c.b16 %v3416, %v3408
      %v5393 = vpack.c.b16 %v3425, %v3417
      %v5394 = vpack.c.b16 %v3426, %v3418
      %v5395 = vpack.c.b16 %v3427, %v3419
      %v5396 = vpack.c.b16 %v3428, %v3420
      %v5397 = vpack.c.b16 %v3429, %v3421
      %v5398 = vpack.c.b16 %v3430, %v3422
      %v5399 = vpack.c.b16 %v3431, %v3423
      %v5400 = vpack.c.b16 %v3432, %v3424
      %v5401 = vpack.c.b16 %v3441, %v3433
      %v5402 = vpack.c.b16 %v3442, %v3434
      %v5403 = vpack.c.b16 %v3443, %v3435
      %v5404 = vpack.c.b16 %v3444, %v3436
      %v5405 = vpack.c.b16 %v3445, %v3437
      %v5406 = vpack.c.b16 %v3446, %v3438
      %v5407 = vpack.c.b16 %v3447, %v3439
      %v5408 = vpack.c.b16 %v3448, %v3440
      %v5409 = vpack.c.b16 %v3457, %v3449
      %v5410 = vpack.c.b16 %v3458, %v3450
      %v5411 = vpack.c.b16 %v3459, %v3451
      %v5412 = vpack.c.b16 %v3460, %v3452
      %v5413 = vpack.c.b16 %v3461, %v3453
      %v5414 = vpack.c.b16 %v3462, %v3454
      %v5415 = vpack.c.b16 %v3463, %v3455
      %v5416 = vpack.c.b16 %v3464, %v3456
      %v5417 = vpack.c.b16 %v3473, %v3465
      %v5418 = vpack.c.b16 %v3474, %v3466
      %v5419 = vpack.c.b16 %v3475, %v3467
      %v5420 = vpack.c.b16 %v3476, %v3468
      %v5421 = vpack.c.b16 %v3477, %v3469
      %v5422 = vpack.c.b16 %v3478, %v3470
      %v5423 = vpack.c.b16 %v3479, %v3471
      %v5424 = vpack.c.b16 %v3480, %v3472
      %v5425 = vpack.c.b16 %v3489, %v3481
      %v5426 = vpack.c.b16 %v3490, %v3482
      %v5427 = vpack.c.b16 %v3491, %v3483
      %v5428 = vpack.c.b16 %v3492, %v3484
      %v5429 = vpack.c.b16 %v3493, %v3485
      %v5430 = vpack.c.b16 %v3494, %v3486
      %v5431 = vpack.c.b16 %v3495, %v3487
      %v5432 = vpack.c.b16 %v3496, %v3488
      %v5433 = vpack.c.b16 %v3505, %v3497
      %v5434 = vpack.c.b16 %v3506, %v3498
      %v5435 = vpack.c.b16 %v3507, %v3499
      %v5436 = vpack.c.b16 %v3508, %v3500
      %v5437 = vpack.c.b16 %v3509, %v3501
      %v5438 = vpack.c.b16 %v3510, %v3502
      %v5439 = vpack.c.b16 %v3511, %v3503
      %v5440 = vpack.c.b16 %v3512, %v3504
      %v5441 = vpack.c.b16 %v3521, %v3513
      %v5442 = vpack.c.b16 %v3522, %v3514
      %v5443 = vpack.c.b16 %v3523, %v3515
      %v5444 = vpack.c.b16 %v3524, %v3516
      %v5445 = vpack.c.b16 %v3525, %v3517
      %v5446 = vpack.c.b16 %v3526, %v3518
      %v5447 = vpack.c.b16 %v3527, %v3519
      %v5448 = vpack.c.b16 %v3528, %v3520
      %v5449 = vpack.c.b16 %v3537, %v3529
      %v5450 = vpack.c.b16 %v3538, %v3530
      %v5451 = vpack.c.b16 %v3539, %v3531
      %v5452 = vpack.c.b16 %v3540, %v3532
      %v5453 = vpack.c.b16 %v3541, %v3533
      %v5454 = vpack.c.b16 %v3542, %v3534
      %v5455 = vpack.c.b16 %v3543, %v3535
      %v5456 = vpack.c.b16 %v3544, %v3536
      %v5457 = vpack.c.b16 %v3553, %v3545
      %v5458 = vpack.c.b16 %v3554, %v3546
      %v5459 = vpack.c.b16 %v3555, %v3547
      %v5460 = vpack.c.b16 %v3556, %v3548
      %v5461 = vpack.c.b16 %v3557, %v3549
      %v5462 = vpack.c.b16 %v3558, %v3550
      %v5463 = vpack.c.b16 %v3559, %v3551
      %v5464 = vpack.c.b16 %v3560, %v3552
      %v5465 = vpack.c.b16 %v3569, %v3561
      %v5466 = vpack.c.b16 %v3570, %v3562
      %v5467 = vpack.c.b16 %v3571, %v3563
      %v5468 = vpack.c.b16 %v3572, %v3564
      %v5469 = vpack.c.b16 %v3573, %v3565
      %v5470 = vpack.c.b16 %v3574, %v3566
      %v5471 = vpack.c.b16 %v3575, %v3567
      %v5472 = vpack.c.b16 %v3576, %v3568
      %v5473 = vpack.c.b16 %v3585, %v3577
      %v5474 = vpack.c.b16 %v3586, %v3578
      %v5475 = vpack.c.b16 %v3587, %v3579
      %v5476 = vpack.c.b16 %v3588, %v3580
      %v5477 = vpack.c.b16 %v3589, %v3581
      %v5478 = vpack.c.b16 %v3590, %v3582
      %v5479 = vpack.c.b16 %v3591, %v3583
      %v5480 = vpack.c.b16 %v3592, %v3584
      %v5481 = vpack.c.b16 %v3601, %v3593
      %v5482 = vpack.c.b16 %v3602, %v3594
      %v5483 = vpack.c.b16 %v3603, %v3595
      %v5484 = vpack.c.b16 %v3604, %v3596
      %v5485 = vpack.c.b16 %v3605, %v3597
      %v5486 = vpack.c.b16 %v3606, %v3598
      %v5487 = vpack.c.b16 %v3607, %v3599
      %v5488 = vpack.c.b16 %v3608, %v3600
      %v5489 = vpack.c.b16 %v3617, %v3609
      %v5490 = vpack.c.b16 %v3618, %v3610
      %v5491 = vpack.c.b16 %v3619, %v3611
      %v5492 = vpack.c.b16 %v3620, %v3612
      %v5493 = vpack.c.b16 %v3621, %v3613
      %v5494 = vpack.c.b16 %v3622, %v3614
      %v5495 = vpack.c.b16 %v3623, %v3615
      %v5496 = vpack.c.b16 %v3624, %v3616
      %v5497 = vpack.c.b16 %v3633, %v3625
      %v5498 = vpack.c.b16 %v3634, %v3626
      %v5499 = vpack.c.b16 %v3635, %v3627
      %v5500 = vpack.c.b16 %v3636, %v3628
      %v5501 = vpack.c.b16 %v3637, %v3629
      %v5502 = vpack.c.b16 %v3638, %v3630
      %v5503 = vpack.c.b16 %v3639, %v3631
      %v5504 = vpack.c.b16 %v3640, %v3632
      %v5505 = vpack.c.b16 %v3649, %v3641
      %v5506 = vpack.c.b16 %v3650, %v3642
      %v5507 = vpack.c.b16 %v3651, %v3643
      %v5508 = vpack.c.b16 %v3652, %v3644
      %v5509 = vpack.c.b16 %v3653, %v3645
      %v5510 = vpack.c.b16 %v3654, %v3646
      %v5511 = vpack.c.b16 %v3655, %v3647
      %v5512 = vpack.c.b16 %v3656, %v3648
      %v5513 = vpack.c.b16 %v3665, %v3657
      %v5514 = vpack.c.b16 %v3666, %v3658
      %v5515 = vpack.c.b16 %v3667, %v3659
      %v5516 = vpack.c.b16 %v3668, %v3660
      %v5517 = vpack.c.b16 %v3669, %v3661
      %v5518 = vpack.c.b16 %v3670, %v3662
      %v5519 = vpack.c.b16 %v3671, %v3663
      %v5520 = vpack.c.b16 %v3672, %v3664
      %v5521 = vpack.c.b16 %v3681, %v3673
      %v5522 = vpack.c.b16 %v3682, %v3674
      %v5523 = vpack.c.b16 %v3683, %v3675
      %v5524 = vpack.c.b16 %v3684, %v3676
      %v5525 = vpack.c.b16 %v3685, %v3677
      %v5526 = vpack.c.b16 %v3686, %v3678
      %v5527 = vpack.c.b16 %v3687, %v3679
      %v5528 = vpack.c.b16 %v3688, %v3680
      %v5529 = vpack.c.b16 %v3697, %v3689
      %v5530 = vpack.c.b16 %v3698, %v3690
      %v5531 = vpack.c.b16 %v3699, %v3691
      %v5532 = vpack.c.b16 %v3700, %v3692
      %v5533 = vpack.c.b16 %v3701, %v3693
      %v5534 = vpack.c.b16 %v3702, %v3694
      %v5535 = vpack.c.b16 %v3703, %v3695
      %v5536 = vpack.c.b16 %v3704, %v3696
      %v5537 = vpack.c.b16 %v3713, %v3705
      %v5538 = vpack.c.b16 %v3714, %v3706
      %v5539 = vpack.c.b16 %v3715, %v3707
      %v5540 = vpack.c.b16 %v3716, %v3708
      %v5541 = vpack.c.b16 %v3717, %v3709
      %v5542 = vpack.c.b16 %v3718, %v3710
      %v5543 = vpack.c.b16 %v3719, %v3711
      %v5544 = vpack.c.b16 %v3720, %v3712
      %v5545 = vpack.c.b16 %v3729, %v3721
      %v5546 = vpack.c.b16 %v3730, %v3722
      %v5547 = vpack.c.b16 %v3731, %v3723
      %v5548 = vpack.c.b16 %v3732, %v3724
      %v5549 = vpack.c.b16 %v3733, %v3725
      %v5550 = vpack.c.b16 %v3734, %v3726
      %v5551 = vpack.c.b16 %v3735, %v3727
      %v5552 = vpack.c.b16 %v3736, %v3728
      %v5553 = vpack.c.b16 %v3745, %v3737
      %v5554 = vpack.c.b16 %v3746, %v3738
      %v5555 = vpack.c.b16 %v3747, %v3739
      %v5556 = vpack.c.b16 %v3748, %v3740
      %v5557 = vpack.c.b16 %v3749, %v3741
      %v5558 = vpack.c.b16 %v3750, %v3742
      %v5559 = vpack.c.b16 %v3751, %v3743
      %v5560 = vpack.c.b16 %v3752, %v3744
      %v5561 = vpack.c.b16 %v3761, %v3753
      %v5562 = vpack.c.b16 %v3762, %v3754
      %v5563 = vpack.c.b16 %v3763, %v3755
      %v5564 = vpack.c.b16 %v3764, %v3756
      %v5565 = vpack.c.b16 %v3765, %v3757
      %v5566 = vpack.c.b16 %v3766, %v3758
      %v5567 = vpack.c.b16 %v3767, %v3759
      %v5568 = vpack.c.b16 %v3768, %v3760
      %v5569 = vpack.c.b16 %v3777, %v3769
      %v5570 = vpack.c.b16 %v3778, %v3770
      %v5571 = vpack.c.b16 %v3779, %v3771
      %v5572 = vpack.c.b16 %v3780, %v3772
      %v5573 = vpack.c.b16 %v3781, %v3773
      %v5574 = vpack.c.b16 %v3782, %v3774
      %v5575 = vpack.c.b16 %v3783, %v3775
      %v5576 = vpack.c.b16 %v3784, %v3776
      %v5577 = vpack.c.b16 %v3793, %v3785
      %v5578 = vpack.c.b16 %v3794, %v3786
      %v5579 = vpack.c.b16 %v3795, %v3787
      %v5580 = vpack.c.b16 %v3796, %v3788
      %v5581 = vpack.c.b16 %v3797, %v3789
      %v5582 = vpack.c.b16 %v3798, %v3790
      %v5583 = vpack.c.b16 %v3799, %v3791
      %v5584 = vpack.c.b16 %v3800, %v3792
      %v5585 = vpack.c.b16 %v3809, %v3801
      %v5586 = vpack.c.b16 %v3810, %v3802
      %v5587 = vpack.c.b16 %v3811, %v3803
      %v5588 = vpack.c.b16 %v3812, %v3804
      %v5589 = vpack.c.b16 %v3813, %v3805
      %v5590 = vpack.c.b16 %v3814, %v3806
      %v5591 = vpack.c.b16 %v3815, %v3807
      %v5592 = vpack.c.b16 %v3816, %v3808
      %v5593 = vpack.c.b16 %v3825, %v3817
      %v5594 = vpack.c.b16 %v3826, %v3818
      %v5595 = vpack.c.b16 %v3827, %v3819
      %v5596 = vpack.c.b16 %v3828, %v3820
      %v5597 = vpack.c.b16 %v3829, %v3821
      %v5598 = vpack.c.b16 %v3830, %v3822
      %v5599 = vpack.c.b16 %v3831, %v3823
      %v5600 = vpack.c.b16 %v3832, %v3824
      %v5601 = vpack.c.b16 %v3841, %v3833
      %v5602 = vpack.c.b16 %v3842, %v3834
      %v5603 = vpack.c.b16 %v3843, %v3835
      %v5604 = vpack.c.b16 %v3844, %v3836
      %v5605 = vpack.c.b16 %v3845, %v3837
      %v5606 = vpack.c.b16 %v3846, %v3838
      %v5607 = vpack.c.b16 %v3847, %v3839
      %v5608 = vpack.c.b16 %v3848, %v3840
      %v5609 = vpack.c.b16 %v3857, %v3849
      %v5610 = vpack.c.b16 %v3858, %v3850
      %v5611 = vpack.c.b16 %v3859, %v3851
      %v5612 = vpack.c.b16 %v3860, %v3852
      %v5613 = vpack.c.b16 %v3861, %v3853
      %v5614 = vpack.c.b16 %v3862, %v3854
      %v5615 = vpack.c.b16 %v3863, %v3855
      %v5616 = vpack.c.b16 %v3864, %v3856
      %v5617 = vpack.c.b16 %v3873, %v3865
      %v5618 = vpack.c.b16 %v3874, %v3866
      %v5619 = vpack.c.b16 %v3875, %v3867
      %v5620 = vpack.c.b16 %v3876, %v3868
      %v5621 = vpack.c.b16 %v3877, %v3869
      %v5622 = vpack.c.b16 %v3878, %v3870
      %v5623 = vpack.c.b16 %v3879, %v3871
      %v5624 = vpack.c.b16 %v3880, %v3872
      %v5625 = vpack.c.b16 %v3889, %v3881
      %v5626 = vpack.c.b16 %v3890, %v3882
      %v5627 = vpack.c.b16 %v3891, %v3883
      %v5628 = vpack.c.b16 %v3892, %v3884
      %v5629 = vpack.c.b16 %v3893, %v3885
      %v5630 = vpack.c.b16 %v3894, %v3886
      %v5631 = vpack.c.b16 %v3895, %v3887
      %v5632 = vpack.c.b16 %v3896, %v3888
      %v5633 = vpack.c.b16 %v3905, %v3897
      %v5634 = vpack.c.b16 %v3906, %v3898
      %v5635 = vpack.c.b16 %v3907, %v3899
      %v5636 = vpack.c.b16 %v3908, %v3900
      %v5637 = vpack.c.b16 %v3909, %v3901
      %v5638 = vpack.c.b16 %v3910, %v3902
      %v5639 = vpack.c.b16 %v3911, %v3903
      %v5640 = vpack.c.b16 %v3912, %v3904
      %v5641 = vpack.c.b16 %v3921, %v3913
      %v5642 = vpack.c.b16 %v3922, %v3914
      %v5643 = vpack.c.b16 %v3923, %v3915
      %v5644 = vpack.c.b16 %v3924, %v3916
      %v5645 = vpack.c.b16 %v3925, %v3917
      %v5646 = vpack.c.b16 %v3926, %v3918
      %v5647 = vpack.c.b16 %v3927, %v3919
      %v5648 = vpack.c.b16 %v3928, %v3920
      %v5649 = vpack.c.b16 %v3937, %v3929
      %v5650 = vpack.c.b16 %v3938, %v3930
      %v5651 = vpack.c.b16 %v3939, %v3931
      %v5652 = vpack.c.b16 %v3940, %v3932
      %v5653 = vpack.c.b16 %v3941, %v3933
      %v5654 = vpack.c.b16 %v3942, %v3934
      %v5655 = vpack.c.b16 %v3943, %v3935
      %v5656 = vpack.c.b16 %v3944, %v3936
      %v5657 = vpack.c.b16 %v3953, %v3945
      %v5658 = vpack.c.b16 %v3954, %v3946
      %v5659 = vpack.c.b16 %v3955, %v3947
      %v5660 = vpack.c.b16 %v3956, %v3948
      %v5661 = vpack.c.b16 %v3957, %v3949
      %v5662 = vpack.c.b16 %v3958, %v3950
      %v5663 = vpack.c.b16 %v3959, %v3951
      %v5664 = vpack.c.b16 %v3960, %v3952
      %v5665 = vpack.c.b16 %v3969, %v3961
      %v5666 = vpack.c.b16 %v3970, %v3962
      %v5667 = vpack.c.b16 %v3971, %v3963
      %v5668 = vpack.c.b16 %v3972, %v3964
      %v5669 = vpack.c.b16 %v3973, %v3965
      %v5670 = vpack.c.b16 %v3974, %v3966
      %v5671 = vpack.c.b16 %v3975, %v3967
      %v5672 = vpack.c.b16 %v3976, %v3968
      %v5673 = vpack.c.b16 %v3985, %v3977
      %v5674 = vpack.c.b16 %v3986, %v3978
      %v5675 = vpack.c.b16 %v3987, %v3979
      %v5676 = vpack.c.b16 %v3988, %v3980
      %v5677 = vpack.c.b16 %v3989, %v3981
      %v5678 = vpack.c.b16 %v3990, %v3982
      %v5679 = vpack.c.b16 %v3991, %v3983
      %v5680 = vpack.c.b16 %v3992, %v3984
      %v5681 = vpack.c.b16 %v4001, %v3993
      %v5682 = vpack.c.b16 %v4002, %v3994
      %v5683 = vpack.c.b16 %v4003, %v3995
      %v5684 = vpack.c.b16 %v4004, %v3996
      %v5685 = vpack.c.b16 %v4005, %v3997
      %v5686 = vpack.c.b16 %v4006, %v3998
      %v5687 = vpack.c.b16 %v4007, %v3999
      %v5688 = vpack.c.b16 %v4008, %v4000
      %v5689 = vpack.c.b16 %v4017, %v4009
      %v5690 = vpack.c.b16 %v4018, %v4010
      %v5691 = vpack.c.b16 %v4019, %v4011
      %v5692 = vpack.c.b16 %v4020, %v4012
      %v5693 = vpack.c.b16 %v4021, %v4013
      %v5694 = vpack.c.b16 %v4022, %v4014
      %v5695 = vpack.c.b16 %v4023, %v4015
      %v5696 = vpack.c.b16 %v4024, %v4016
      %v5697 = vpack.c.b16 %v4033, %v4025
      %v5698 = vpack.c.b16 %v4034, %v4026
      %v5699 = vpack.c.b16 %v4035, %v4027
      %v5700 = vpack.c.b16 %v4036, %v4028
      %v5701 = vpack.c.b16 %v4037, %v4029
      %v5702 = vpack.c.b16 %v4038, %v4030
      %v5703 = vpack.c.b16 %v4039, %v4031
      %v5704 = vpack.c.b16 %v4040, %v4032
      %v5705 = vpack.c.b16 %v4049, %v4041
      %v5706 = vpack.c.b16 %v4050, %v4042
      %v5707 = vpack.c.b16 %v4051, %v4043
      %v5708 = vpack.c.b16 %v4052, %v4044
      %v5709 = vpack.c.b16 %v4053, %v4045
      %v5710 = vpack.c.b16 %v4054, %v4046
      %v5711 = vpack.c.b16 %v4055, %v4047
      %v5712 = vpack.c.b16 %v4056, %v4048
      %v5713 = vpack.c.b16 %v4065, %v4057
      %v5714 = vpack.c.b16 %v4066, %v4058
      %v5715 = vpack.c.b16 %v4067, %v4059
      %v5716 = vpack.c.b16 %v4068, %v4060
      %v5717 = vpack.c.b16 %v4069, %v4061
      %v5718 = vpack.c.b16 %v4070, %v4062
      %v5719 = vpack.c.b16 %v4071, %v4063
      %v5720 = vpack.c.b16 %v4072, %v4064
      %v5721 = vpack.c.b16 %v4081, %v4073
      %v5722 = vpack.c.b16 %v4082, %v4074
      %v5723 = vpack.c.b16 %v4083, %v4075
      %v5724 = vpack.c.b16 %v4084, %v4076
      %v5725 = vpack.c.b16 %v4085, %v4077
      %v5726 = vpack.c.b16 %v4086, %v4078
      %v5727 = vpack.c.b16 %v4087, %v4079
      %v5728 = vpack.c.b16 %v4088, %v4080
      %v5729 = vpack.c.b16 %v4097, %v4089
      %v5730 = vpack.c.b16 %v4098, %v4090
      %v5731 = vpack.c.b16 %v4099, %v4091
      %v5732 = vpack.c.b16 %v4100, %v4092
      %v5733 = vpack.c.b16 %v4101, %v4093
      %v5734 = vpack.c.b16 %v4102, %v4094
      %v5735 = vpack.c.b16 %v4103, %v4095
      %v5736 = vpack.c.b16 %v4104, %v4096
      %v5737 = vpack.c.b16 %v4113, %v4105
      %v5738 = vpack.c.b16 %v4114, %v4106
      %v5739 = vpack.c.b16 %v4115, %v4107
      %v5740 = vpack.c.b16 %v4116, %v4108
      %v5741 = vpack.c.b16 %v4117, %v4109
      %v5742 = vpack.c.b16 %v4118, %v4110
      %v5743 = vpack.c.b16 %v4119, %v4111
      %v5744 = vpack.c.b16 %v4120, %v4112
      %v5745 = vpack.c.b16 %v4129, %v4121
      %v5746 = vpack.c.b16 %v4130, %v4122
      %v5747 = vpack.c.b16 %v4131, %v4123
      %v5748 = vpack.c.b16 %v4132, %v4124
      %v5749 = vpack.c.b16 %v4133, %v4125
      %v5750 = vpack.c.b16 %v4134, %v4126
      %v5751 = vpack.c.b16 %v4135, %v4127
      %v5752 = vpack.c.b16 %v4136, %v4128
      %v5753 = vpack.c.b16 %v4145, %v4137
      %v5754 = vpack.c.b16 %v4146, %v4138
      %v5755 = vpack.c.b16 %v4147, %v4139
      %v5756 = vpack.c.b16 %v4148, %v4140
      %v5757 = vpack.c.b16 %v4149, %v4141
      %v5758 = vpack.c.b16 %v4150, %v4142
      %v5759 = vpack.c.b16 %v4151, %v4143
      %v5760 = vpack.c.b16 %v4152, %v4144
      %v5761 = vpack.c.b16 %v4161, %v4153
      %v5762 = vpack.c.b16 %v4162, %v4154
      %v5763 = vpack.c.b16 %v4163, %v4155
      %v5764 = vpack.c.b16 %v4164, %v4156
      %v5765 = vpack.c.b16 %v4165, %v4157
      %v5766 = vpack.c.b16 %v4166, %v4158
      %v5767 = vpack.c.b16 %v4167, %v4159
      %v5768 = vpack.c.b16 %v4168, %v4160
      %v5769 = vpack.c.b16 %v4177, %v4169
      %v5770 = vpack.c.b16 %v4178, %v4170
      %v5771 = vpack.c.b16 %v4179, %v4171
      %v5772 = vpack.c.b16 %v4180, %v4172
      %v5773 = vpack.c.b16 %v4181, %v4173
      %v5774 = vpack.c.b16 %v4182, %v4174
      %v5775 = vpack.c.b16 %v4183, %v4175
      %v5776 = vpack.c.b16 %v4184, %v4176
      %v5777 = vpack.c.b16 %v4193, %v4185
      %v5778 = vpack.c.b16 %v4194, %v4186
      %v5779 = vpack.c.b16 %v4195, %v4187
      %v5780 = vpack.c.b16 %v4196, %v4188
      %v5781 = vpack.c.b16 %v4197, %v4189
      %v5782 = vpack.c.b16 %v4198, %v4190
      %v5783 = vpack.c.b16 %v4199, %v4191
      %v5784 = vpack.c.b16 %v4200, %v4192
      %v5785 = vpack.c.b16 %v4209, %v4201
      %v5786 = vpack.c.b16 %v4210, %v4202
      %v5787 = vpack.c.b16 %v4211, %v4203
      %v5788 = vpack.c.b16 %v4212, %v4204
      %v5789 = vpack.c.b16 %v4213, %v4205
      %v5790 = vpack.c.b16 %v4214, %v4206
      %v5791 = vpack.c.b16 %v4215, %v4207
      %v5792 = vpack.c.b16 %v4216, %v4208
      %v5793 = vpack.c.b16 %v4225, %v4217
      %v5794 = vpack.c.b16 %v4226, %v4218
      %v5795 = vpack.c.b16 %v4227, %v4219
      %v5796 = vpack.c.b16 %v4228, %v4220
      %v5797 = vpack.c.b16 %v4229, %v4221
      %v5798 = vpack.c.b16 %v4230, %v4222
      %v5799 = vpack.c.b16 %v4231, %v4223
      %v5800 = vpack.c.b16 %v4232, %v4224
      %v5801 = vpack.c.b16 %v4241, %v4233
      %v5802 = vpack.c.b16 %v4242, %v4234
      %v5803 = vpack.c.b16 %v4243, %v4235
      %v5804 = vpack.c.b16 %v4244, %v4236
      %v5805 = vpack.c.b16 %v4245, %v4237
      %v5806 = vpack.c.b16 %v4246, %v4238
      %v5807 = vpack.c.b16 %v4247, %v4239
      %v5808 = vpack.c.b16 %v4248, %v4240
      %v5809 = vpack.c.b16 %v4257, %v4249
      %v5810 = vpack.c.b16 %v4258, %v4250
      %v5811 = vpack.c.b16 %v4259, %v4251
      %v5812 = vpack.c.b16 %v4260, %v4252
      %v5813 = vpack.c.b16 %v4261, %v4253
      %v5814 = vpack.c.b16 %v4262, %v4254
      %v5815 = vpack.c.b16 %v4263, %v4255
      %v5816 = vpack.c.b16 %v4264, %v4256
      %v5817 = vpack.c.b16 %v4273, %v4265
      %v5818 = vpack.c.b16 %v4274, %v4266
      %v5819 = vpack.c.b16 %v4275, %v4267
      %v5820 = vpack.c.b16 %v4276, %v4268
      %v5821 = vpack.c.b16 %v4277, %v4269
      %v5822 = vpack.c.b16 %v4278, %v4270
      %v5823 = vpack.c.b16 %v4279, %v4271
      %v5824 = vpack.c.b16 %v4280, %v4272
      %v5825 = vpack.c.b16 %v4289, %v4281
      %v5826 = vpack.c.b16 %v4290, %v4282
      %v5827 = vpack.c.b16 %v4291, %v4283
      %v5828 = vpack.c.b16 %v4292, %v4284
      %v5829 = vpack.c.b16 %v4293, %v4285
      %v5830 = vpack.c.b16 %v4294, %v4286
      %v5831 = vpack.c.b16 %v4295, %v4287
      %v5832 = vpack.c.b16 %v4296, %v4288
      %v5833 = vpack.c.b16 %v4305, %v4297
      %v5834 = vpack.c.b16 %v4306, %v4298
      %v5835 = vpack.c.b16 %v4307, %v4299
      %v5836 = vpack.c.b16 %v4308, %v4300
      %v5837 = vpack.c.b16 %v4309, %v4301
      %v5838 = vpack.c.b16 %v4310, %v4302
      %v5839 = vpack.c.b16 %v4311, %v4303
      %v5840 = vpack.c.b16 %v4312, %v4304
      %v5841 = vpack.c.b16 %v4321, %v4313
      %v5842 = vpack.c.b16 %v4322, %v4314
      %v5843 = vpack.c.b16 %v4323, %v4315
      %v5844 = vpack.c.b16 %v4324, %v4316
      %v5845 = vpack.c.b16 %v4325, %v4317
      %v5846 = vpack.c.b16 %v4326, %v4318
      %v5847 = vpack.c.b16 %v4327, %v4319
      %v5848 = vpack.c.b16 %v4328, %v4320
      %v5849 = vpack.c.b16 %v4337, %v4329
      %v5850 = vpack.c.b16 %v4338, %v4330
      %v5851 = vpack.c.b16 %v4339, %v4331
      %v5852 = vpack.c.b16 %v4340, %v4332
      %v5853 = vpack.c.b16 %v4341, %v4333
      %v5854 = vpack.c.b16 %v4342, %v4334
      %v5855 = vpack.c.b16 %v4343, %v4335
      %v5856 = vpack.c.b16 %v4344, %v4336
      %v5857 = vpack.c.b16 %v4353, %v4345
      %v5858 = vpack.c.b16 %v4354, %v4346
      %v5859 = vpack.c.b16 %v4355, %v4347
      %v5860 = vpack.c.b16 %v4356, %v4348
      %v5861 = vpack.c.b16 %v4357, %v4349
      %v5862 = vpack.c.b16 %v4358, %v4350
      %v5863 = vpack.c.b16 %v4359, %v4351
      %v5864 = vpack.c.b16 %v4360, %v4352
      %v5865 = vpack.c.b16 %v4369, %v4361
      %v5866 = vpack.c.b16 %v4370, %v4362
      %v5867 = vpack.c.b16 %v4371, %v4363
      %v5868 = vpack.c.b16 %v4372, %v4364
      %v5869 = vpack.c.b16 %v4373, %v4365
      %v5870 = vpack.c.b16 %v4374, %v4366
      %v5871 = vpack.c.b16 %v4375, %v4367
      %v5872 = vpack.c.b16 %v4376, %v4368
      %v5873 = vpack.c.b16 %v4385, %v4377
      %v5874 = vpack.c.b16 %v4386, %v4378
      %v5875 = vpack.c.b16 %v4387, %v4379
      %v5876 = vpack.c.b16 %v4388, %v4380
      %v5877 = vpack.c.b16 %v4389, %v4381
      %v5878 = vpack.c.b16 %v4390, %v4382
      %v5879 = vpack.c.b16 %v4391, %v4383
      %v5880 = vpack.c.b16 %v4392, %v4384
      %v5881 = vpack.c.b16 %v4401, %v4393
      %v5882 = vpack.c.b16 %v4402, %v4394
      %v5883 = vpack.c.b16 %v4403, %v4395
      %v5884 = vpack.c.b16 %v4404, %v4396
      %v5885 = vpack.c.b16 %v4405, %v4397
      %v5886 = vpack.c.b16 %v4406, %v4398
      %v5887 = vpack.c.b16 %v4407, %v4399
      %v5888 = vpack.c.b16 %v4408, %v4400
      %v5889 = vpack.c.b16 %v4417, %v4409
      %v5890 = vpack.c.b16 %v4418, %v4410
      %v5891 = vpack.c.b16 %v4419, %v4411
      %v5892 = vpack.c.b16 %v4420, %v4412
      %v5893 = vpack.c.b16 %v4421, %v4413
      %v5894 = vpack.c.b16 %v4422, %v4414
      %v5895 = vpack.c.b16 %v4423, %v4415
      %v5896 = vpack.c.b16 %v4424, %v4416
      %v5897 = vpack.c.b16 %v4433, %v4425
      %v5898 = vpack.c.b16 %v4434, %v4426
      %v5899 = vpack.c.b16 %v4435, %v4427
      %v5900 = vpack.c.b16 %v4436, %v4428
      %v5901 = vpack.c.b16 %v4437, %v4429
      %v5902 = vpack.c.b16 %v4438, %v4430
      %v5903 = vpack.c.b16 %v4439, %v4431
      %v5904 = vpack.c.b16 %v4440, %v4432
      %v5905 = vpack.c.b16 %v4449, %v4441
      %v5906 = vpack.c.b16 %v4450, %v4442
      %v5907 = vpack.c.b16 %v4451, %v4443
      %v5908 = vpack.c.b16 %v4452, %v4444
      %v5909 = vpack.c.b16 %v4453, %v4445
      %v5910 = vpack.c.b16 %v4454, %v4446
      %v5911 = vpack.c.b16 %v4455, %v4447
      %v5912 = vpack.c.b16 %v4456, %v4448
      %v5913 = vpack.c.b16 %v4465, %v4457
      %v5914 = vpack.c.b16 %v4466, %v4458
      %v5915 = vpack.c.b16 %v4467, %v4459
      %v5916 = vpack.c.b16 %v4468, %v4460
      %v5917 = vpack.c.b16 %v4469, %v4461
      %v5918 = vpack.c.b16 %v4470, %v4462
      %v5919 = vpack.c.b16 %v4471, %v4463
      %v5920 = vpack.c.b16 %v4472, %v4464
      %v5921 = vpack.c.b16 %v4481, %v4473
      %v5922 = vpack.c.b16 %v4482, %v4474
      %v5923 = vpack.c.b16 %v4483, %v4475
      %v5924 = vpack.c.b16 %v4484, %v4476
      %v5925 = vpack.c.b16 %v4485, %v4477
      %v5926 = vpack.c.b16 %v4486, %v4478
      %v5927 = vpack.c.b16 %v4487, %v4479
      %v5928 = vpack.c.b16 %v4488, %v4480
      %v5929 = vpack.c.b16 %v4497, %v4489
      %v5930 = vpack.c.b16 %v4498, %v4490
      %v5931 = vpack.c.b16 %v4499, %v4491
      %v5932 = vpack.c.b16 %v4500, %v4492
      %v5933 = vpack.c.b16 %v4501, %v4493
      %v5934 = vpack.c.b16 %v4502, %v4494
      %v5935 = vpack.c.b16 %v4503, %v4495
      %v5936 = vpack.c.b16 %v4504, %v4496
      %v5937 = vpack.c.b16 %v4513, %v4505
      %v5938 = vpack.c.b16 %v4514, %v4506
      %v5939 = vpack.c.b16 %v4515, %v4507
      %v5940 = vpack.c.b16 %v4516, %v4508
      %v5941 = vpack.c.b16 %v4517, %v4509
      %v5942 = vpack.c.b16 %v4518, %v4510
      %v5943 = vpack.c.b16 %v4519, %v4511
      %v5944 = vpack.c.b16 %v4520, %v4512
      %v5945 = vpack.c.b16 %v4529, %v4521
      %v5946 = vpack.c.b16 %v4530, %v4522
      %v5947 = vpack.c.b16 %v4531, %v4523
      %v5948 = vpack.c.b16 %v4532, %v4524
      %v5949 = vpack.c.b16 %v4533, %v4525
      %v5950 = vpack.c.b16 %v4534, %v4526
      %v5951 = vpack.c.b16 %v4535, %v4527
      %v5952 = vpack.c.b16 %v4536, %v4528
      %v5953 = vpack.c.b16 %v4545, %v4537
      %v5954 = vpack.c.b16 %v4546, %v4538
      %v5955 = vpack.c.b16 %v4547, %v4539
      %v5956 = vpack.c.b16 %v4548, %v4540
      %v5957 = vpack.c.b16 %v4549, %v4541
      %v5958 = vpack.c.b16 %v4550, %v4542
      %v5959 = vpack.c.b16 %v4551, %v4543
      %v5960 = vpack.c.b16 %v4552, %v4544
      %v5961 = vpack.c.b16 %v4561, %v4553
      %v5962 = vpack.c.b16 %v4562, %v4554
      %v5963 = vpack.c.b16 %v4563, %v4555
      %v5964 = vpack.c.b16 %v4564, %v4556
      %v5965 = vpack.c.b16 %v4565, %v4557
      %v5966 = vpack.c.b16 %v4566, %v4558
      %v5967 = vpack.c.b16 %v4567, %v4559
      %v5968 = vpack.c.b16 %v4568, %v4560
      %v5969 = vpack.c.b16 %v4577, %v4569
      %v5970 = vpack.c.b16 %v4578, %v4570
      %v5971 = vpack.c.b16 %v4579, %v4571
      %v5972 = vpack.c.b16 %v4580, %v4572
      %v5973 = vpack.c.b16 %v4581, %v4573
      %v5974 = vpack.c.b16 %v4582, %v4574
      %v5975 = vpack.c.b16 %v4583, %v4575
      %v5976 = vpack.c.b16 %v4584, %v4576
      %v5977 = vpack.c.b16 %v4593, %v4585
      %v5978 = vpack.c.b16 %v4594, %v4586
      %v5979 = vpack.c.b16 %v4595, %v4587
      %v5980 = vpack.c.b16 %v4596, %v4588
      %v5981 = vpack.c.b16 %v4597, %v4589
      %v5982 = vpack.c.b16 %v4598, %v4590
      %v5983 = vpack.c.b16 %v4599, %v4591
      %v5984 = vpack.c.b16 %v4600, %v4592
      %v5985 = vpack.c.b16 %v4609, %v4601
      %v5986 = vpack.c.b16 %v4610, %v4602
      %v5987 = vpack.c.b16 %v4611, %v4603
      %v5988 = vpack.c.b16 %v4612, %v4604
      %v5989 = vpack.c.b16 %v4613, %v4605
      %v5990 = vpack.c.b16 %v4614, %v4606
      %v5991 = vpack.c.b16 %v4615, %v4607
      %v5992 = vpack.c.b16 %v4616, %v4608
      %v5993 = vpack.c.b16 %v4625, %v4617
      %v5994 = vpack.c.b16 %v4626, %v4618
      %v5995 = vpack.c.b16 %v4627, %v4619
      %v5996 = vpack.c.b16 %v4628, %v4620
      %v5997 = vpack.c.b16 %v4629, %v4621
      %v5998 = vpack.c.b16 %v4630, %v4622
      %v5999 = vpack.c.b16 %v4631, %v4623
      %v6000 = vpack.c.b16 %v4632, %v4624
      %v6001 = vpack.c.b16 %v4641, %v4633
      %v6002 = vpack.c.b16 %v4642, %v4634
      %v6003 = vpack.c.b16 %v4643, %v4635
      %v6004 = vpack.c.b16 %v4644, %v4636
      %v6005 = vpack.c.b16 %v4645, %v4637
      %v6006 = vpack.c.b16 %v4646, %v4638
      %v6007 = vpack.c.b16 %v4647, %v4639
      %v6008 = vpack.c.b16 %v4648, %v4640
      %v6009 = vpack.c.b16 %v4657, %v4649
      %v6010 = vpack.c.b16 %v4658, %v4650
      %v6011 = vpack.c.b16 %v4659, %v4651
      %v6012 = vpack.c.b16 %v4660, %v4652
      %v6013 = vpack.c.b16 %v4661, %v4653
      %v6014 = vpack.c.b16 %v4662, %v4654
      %v6015 = vpack.c.b16 %v4663, %v4655
      %v6016 = vpack.c.b16 %v4664, %v4656
      %v6017 = vpack.c.b16 %v4673, %v4665
      %v6018 = vpack.c.b16 %v4674, %v4666
      %v6019 = vpack.c.b16 %v4675, %v4667
      %v6020 = vpack.c.b16 %v4676, %v4668
      %v6021 = vpack.c.b16 %v4677, %v4669
      %v6022 = vpack.c.b16 %v4678, %v4670
      %v6023 = vpack.c.b16 %v4679, %v4671
      %v6024 = vpack.c.b16 %v4680, %v4672
      %v6025 = vpack.c.b16 %v4689, %v4681
      %v6026 = vpack.c.b16 %v4690, %v4682
      %v6027 = vpack.c.b16 %v4691, %v4683
      %v6028 = vpack.c.b16 %v4692, %v4684
      %v6029 = vpack.c.b16 %v4693, %v4685
      %v6030 = vpack.c.b16 %v4694, %v4686
      %v6031 = vpack.c.b16 %v4695, %v4687
      %v6032 = vpack.c.b16 %v4696, %v4688
      %v6033 = vpack.c.b16 %v4705, %v4697
      %v6034 = vpack.c.b16 %v4706, %v4698
      %v6035 = vpack.c.b16 %v4707, %v4699
      %v6036 = vpack.c.b16 %v4708, %v4700
      %v6037 = vpack.c.b16 %v4709, %v4701
      %v6038 = vpack.c.b16 %v4710, %v4702
      %v6039 = vpack.c.b16 %v4711, %v4703
      %v6040 = vpack.c.b16 %v4712, %v4704
      %v6041 = vpack.c.b16 %v4721, %v4713
      %v6042 = vpack.c.b16 %v4722, %v4714
      %v6043 = vpack.c.b16 %v4723, %v4715
      %v6044 = vpack.c.b16 %v4724, %v4716
      %v6045 = vpack.c.b16 %v4725, %v4717
      %v6046 = vpack.c.b16 %v4726, %v4718
      %v6047 = vpack.c.b16 %v4727, %v4719
      %v6048 = vpack.c.b16 %v4728, %v4720
      %v6049 = vpack.c.b16 %v4737, %v4729
      %v6050 = vpack.c.b16 %v4738, %v4730
      %v6051 = vpack.c.b16 %v4739, %v4731
      %v6052 = vpack.c.b16 %v4740, %v4732
      %v6053 = vpack.c.b16 %v4741, %v4733
      %v6054 = vpack.c.b16 %v4742, %v4734
      %v6055 = vpack.c.b16 %v4743, %v4735
      %v6056 = vpack.c.b16 %v4744, %v4736
      %v6057 = vpack.c.b16 %v4753, %v4745
      %v6058 = vpack.c.b16 %v4754, %v4746
      %v6059 = vpack.c.b16 %v4755, %v4747
      %v6060 = vpack.c.b16 %v4756, %v4748
      %v6061 = vpack.c.b16 %v4757, %v4749
      %v6062 = vpack.c.b16 %v4758, %v4750
      %v6063 = vpack.c.b16 %v4759, %v4751
      %v6064 = vpack.c.b16 %v4760, %v4752
      %v6065 = vpack.c.b16 %v4769, %v4761
      %v6066 = vpack.c.b16 %v4770, %v4762
      %v6067 = vpack.c.b16 %v4771, %v4763
      %v6068 = vpack.c.b16 %v4772, %v4764
      %v6069 = vpack.c.b16 %v4773, %v4765
      %v6070 = vpack.c.b16 %v4774, %v4766
      %v6071 = vpack.c.b16 %v4775, %v4767
      %v6072 = vpack.c.b16 %v4776, %v4768
      %v6073 = vpack.c.b16 %v4785, %v4777
      %v6074 = vpack.c.b16 %v4786, %v4778
      %v6075 = vpack.c.b16 %v4787, %v4779
      %v6076 = vpack.c.b16 %v4788, %v4780
      %v6077 = vpack.c.b16 %v4789, %v4781
      %v6078 = vpack.c.b16 %v4790, %v4782
      %v6079 = vpack.c.b16 %v4791, %v4783
      %v6080 = vpack.c.b16 %v4792, %v4784
      %v6081 = vpack.c.b16 %v4801, %v4793
      %v6082 = vpack.c.b16 %v4802, %v4794
      %v6083 = vpack.c.b16 %v4803, %v4795
      %v6084 = vpack.c.b16 %v4804, %v4796
      %v6085 = vpack.c.b16 %v4805, %v4797
      %v6086 = vpack.c.b16 %v4806, %v4798
      %v6087 = vpack.c.b16 %v4807, %v4799
      %v6088 = vpack.c.b16 %v4808, %v4800
      %v6089 = vpack.c.b16 %v4817, %v4809
      %v6090 = vpack.c.b16 %v4818, %v4810
      %v6091 = vpack.c.b16 %v4819, %v4811
      %v6092 = vpack.c.b16 %v4820, %v4812
      %v6093 = vpack.c.b16 %v4821, %v4813
      %v6094 = vpack.c.b16 %v4822, %v4814
      %v6095 = vpack.c.b16 %v4823, %v4815
      %v6096 = vpack.c.b16 %v4824, %v4816
      %v6097 = vpack.c.b16 %v4833, %v4825
      %v6098 = vpack.c.b16 %v4834, %v4826
      %v6099 = vpack.c.b16 %v4835, %v4827
      %v6100 = vpack.c.b16 %v4836, %v4828
      %v6101 = vpack.c.b16 %v4837, %v4829
      %v6102 = vpack.c.b16 %v4838, %v4830
      %v6103 = vpack.c.b16 %v4839, %v4831
      %v6104 = vpack.c.b16 %v4840, %v4832
      %v6105 = vpack.c.b16 %v4849, %v4841
      %v6106 = vpack.c.b16 %v4850, %v4842
      %v6107 = vpack.c.b16 %v4851, %v4843
      %v6108 = vpack.c.b16 %v4852, %v4844
      %v6109 = vpack.c.b16 %v4853, %v4845
      %v6110 = vpack.c.b16 %v4854, %v4846
      %v6111 = vpack.c.b16 %v4855, %v4847
      %v6112 = vpack.c.b16 %v4856, %v4848
      %v6113 = vpack.c.b16 %v4865, %v4857
      %v6114 = vpack.c.b16 %v4866, %v4858
      %v6115 = vpack.c.b16 %v4867, %v4859
      %v6116 = vpack.c.b16 %v4868, %v4860
      %v6117 = vpack.c.b16 %v4869, %v4861
      %v6118 = vpack.c.b16 %v4870, %v4862
      %v6119 = vpack.c.b16 %v4871, %v4863
      %v6120 = vpack.c.b16 %v4872, %v4864
      %v6121 = vpack.c.b16 %v4881, %v4873
      %v6122 = vpack.c.b16 %v4882, %v4874
      %v6123 = vpack.c.b16 %v4883, %v4875
      %v6124 = vpack.c.b16 %v4884, %v4876
      %v6125 = vpack.c.b16 %v4885, %v4877
      %v6126 = vpack.c.b16 %v4886, %v4878
      %v6127 = vpack.c.b16 %v4887, %v4879
      %v6128 = vpack.c.b16 %v4888, %v4880
      %v6129 = vpack.c.b16 %v4897, %v4889
      %v6130 = vpack.c.b16 %v4898, %v4890
      %v6131 = vpack.c.b16 %v4899, %v4891
      %v6132 = vpack.c.b16 %v4900, %v4892
      %v6133 = vpack.c.b16 %v4901, %v4893
      %v6134 = vpack.c.b16 %v4902, %v4894
      %v6135 = vpack.c.b16 %v4903, %v4895
      %v6136 = vpack.c.b16 %v4904, %v4896
      %v6137 = vpack.c.b16 %v4913, %v4905
      %v6138 = vpack.c.b16 %v4914, %v4906
      %v6139 = vpack.c.b16 %v4915, %v4907
      %v6140 = vpack.c.b16 %v4916, %v4908
      %v6141 = vpack.c.b16 %v4917, %v4909
      %v6142 = vpack.c.b16 %v4918, %v4910
      %v6143 = vpack.c.b16 %v4919, %v4911
      %v6144 = vpack.c.b16 %v4920, %v4912
      %v6145 = vpack.c.b16 %v4929, %v4921
      %v6146 = vpack.c.b16 %v4930, %v4922
      %v6147 = vpack.c.b16 %v4931, %v4923
      %v6148 = vpack.c.b16 %v4932, %v4924
      %v6149 = vpack.c.b16 %v4933, %v4925
      %v6150 = vpack.c.b16 %v4934, %v4926
      %v6151 = vpack.c.b16 %v4935, %v4927
      %v6152 = vpack.c.b16 %v4936, %v4928
      %v6153 = vpack.c.b16 %v4945, %v4937
      %v6154 = vpack.c.b16 %v4946, %v4938
      %v6155 = vpack.c.b16 %v4947, %v4939
      %v6156 = vpack.c.b16 %v4948, %v4940
      %v6157 = vpack.c.b16 %v4949, %v4941
      %v6158 = vpack.c.b16 %v4950, %v4942
      %v6159 = vpack.c.b16 %v4951, %v4943
      %v6160 = vpack.c.b16 %v4952, %v4944
      %v6161 = vpack.c.b16 %v4961, %v4953
      %v6162 = vpack.c.b16 %v4962, %v4954
      %v6163 = vpack.c.b16 %v4963, %v4955
      %v6164 = vpack.c.b16 %v4964, %v4956
      %v6165 = vpack.c.b16 %v4965, %v4957
      %v6166 = vpack.c.b16 %v4966, %v4958
      %v6167 = vpack.c.b16 %v4967, %v4959
      %v6168 = vpack.c.b16 %v4968, %v4960
      %v6169 = vpack.c.b16 %v4977, %v4969
      %v6170 = vpack.c.b16 %v4978, %v4970
      %v6171 = vpack.c.b16 %v4979, %v4971
      %v6172 = vpack.c.b16 %v4980, %v4972
      %v6173 = vpack.c.b16 %v4981, %v4973
      %v6174 = vpack.c.b16 %v4982, %v4974
      %v6175 = vpack.c.b16 %v4983, %v4975
      %v6176 = vpack.c.b16 %v4984, %v4976
      %v6177 = vpack.c.b16 %v4993, %v4985
      %v6178 = vpack.c.b16 %v4994, %v4986
      %v6179 = vpack.c.b16 %v4995, %v4987
      %v6180 = vpack.c.b16 %v4996, %v4988
      %v6181 = vpack.c.b16 %v4997, %v4989
      %v6182 = vpack.c.b16 %v4998, %v4990
      %v6183 = vpack.c.b16 %v4999, %v4991
      %v6184 = vpack.c.b16 %v5000, %v4992
      %v6185 = vpack.c.b16 %v5009, %v5001
      %v6186 = vpack.c.b16 %v5010, %v5002
      %v6187 = vpack.c.b16 %v5011, %v5003
      %v6188 = vpack.c.b16 %v5012, %v5004
      %v6189 = vpack.c.b16 %v5013, %v5005
      %v6190 = vpack.c.b16 %v5014, %v5006
      %v6191 = vpack.c.b16 %v5015, %v5007
      %v6192 = vpack.c.b16 %v5016, %v5008
      %v6193 = vpack.c.b16 %v5025, %v5017
      %v6194 = vpack.c.b16 %v5026, %v5018
      %v6195 = vpack.c.b16 %v5027, %v5019
      %v6196 = vpack.c.b16 %v5028, %v5020
      %v6197 = vpack.c.b16 %v5029, %v5021
      %v6198 = vpack.c.b16 %v5030, %v5022
      %v6199 = vpack.c.b16 %v5031, %v5023
      %v6200 = vpack.c.b16 %v5032, %v5024
      %v6201 = vpack.c.b16 %v5041, %v5033
      %v6202 = vpack.c.b16 %v5042, %v5034
      %v6203 = vpack.c.b16 %v5043, %v5035
      %v6204 = vpack.c.b16 %v5044, %v5036
      %v6205 = vpack.c.b16 %v5045, %v5037
      %v6206 = vpack.c.b16 %v5046, %v5038
      %v6207 = vpack.c.b16 %v5047, %v5039
      %v6208 = vpack.c.b16 %v5048, %v5040
      %v6209 = vpack.c.b16 %v5057, %v5049
      %v6210 = vpack.c.b16 %v5058, %v5050
      %v6211 = vpack.c.b16 %v5059, %v5051
      %v6212 = vpack.c.b16 %v5060, %v5052
      %v6213 = vpack.c.b16 %v5061, %v5053
      %v6214 = vpack.c.b16 %v5062, %v5054
      %v6215 = vpack.c.b16 %v5063, %v5055
      %v6216 = vpack.c.b16 %v5064, %v5056
      %v6217 = vpack.c.b16 %v5073, %v5065
      %v6218 = vpack.c.b16 %v5074, %v5066
      %v6219 = vpack.c.b16 %v5075, %v5067
      %v6220 = vpack.c.b16 %v5076, %v5068
      %v6221 = vpack.c.b16 %v5077, %v5069
      %v6222 = vpack.c.b16 %v5078, %v5070
      %v6223 = vpack.c.b16 %v5079, %v5071
      %v6224 = vpack.c.b16 %v5080, %v5072
      %v6225 = vpack.c.b16 %v5089, %v5081
      %v6226 = vpack.c.b16 %v5090, %v5082
      %v6227 = vpack.c.b16 %v5091, %v5083
      %v6228 = vpack.c.b16 %v5092, %v5084
      %v6229 = vpack.c.b16 %v5093, %v5085
      %v6230 = vpack.c.b16 %v5094, %v5086
      %v6231 = vpack.c.b16 %v5095, %v5087
      %v6232 = vpack.c.b16 %v5096, %v5088
      %v6233 = vpack.c.b16 %v5105, %v5097
      %v6234 = vpack.c.b16 %v5106, %v5098
      %v6235 = vpack.c.b16 %v5107, %v5099
      %v6236 = vpack.c.b16 %v5108, %v5100
      %v6237 = vpack.c.b16 %v5109, %v5101
      %v6238 = vpack.c.b16 %v5110, %v5102
      %v6239 = vpack.c.b16 %v5111, %v5103
      %v6240 = vpack.c.b16 %v5112, %v5104
      %v6241 = vpack.c.b16 %v5121, %v5113
      %v6242 = vpack.c.b16 %v5122, %v5114
      %v6243 = vpack.c.b16 %v5123, %v5115
      %v6244 = vpack.c.b16 %v5124, %v5116
      %v6245 = vpack.c.b16 %v5125, %v5117
      %v6246 = vpack.c.b16 %v5126, %v5118
      %v6247 = vpack.c.b16 %v5127, %v5119
      %v6248 = vpack.c.b16 %v5128, %v5120
      %v6249 = vpack.c.b16 %v5137, %v5129
      %v6250 = vpack.c.b16 %v5138, %v5130
      %v6251 = vpack.c.b16 %v5139, %v5131
      %v6252 = vpack.c.b16 %v5140, %v5132
      %v6253 = vpack.c.b16 %v5141, %v5133
      %v6254 = vpack.c.b16 %v5142, %v5134
      %v6255 = vpack.c.b16 %v5143, %v5135
      %v6256 = vpack.c.b16 %v5144, %v5136
      %v6257 = vpack.c.b16 %v5153, %v5145
      %v6258 = vpack.c.b16 %v5154, %v5146
      %v6259 = vpack.c.b16 %v5155, %v5147
      %v6260 = vpack.c.b16 %v5156, %v5148
      %v6261 = vpack.c.b16 %v5157, %v5149
      %v6262 = vpack.c.b16 %v5158, %v5150
      %v6263 = vpack.c.b16 %v5159, %v5151
      %v6264 = vpack.c.b16 %v5160, %v5152
      %v6265 = vpack.c.b16 %v5169, %v5161
      %v6266 = vpack.c.b16 %v5170, %v5162
      %v6267 = vpack.c.b16 %v5171, %v5163
      %v6268 = vpack.c.b16 %v5172, %v5164
      %v6269 = vpack.c.b16 %v5173, %v5165
      %v6270 = vpack.c.b16 %v5174, %v5166
      %v6271 = vpack.c.b16 %v5175, %v5167
      %v6272 = vpack.c.b16 %v5176, %v5168
      %v6273 = vpack.c.b16 %v5185, %v5177
      %v6274 = vpack.c.b16 %v5186, %v5178
      %v6275 = vpack.c.b16 %v5187, %v5179
      %v6276 = vpack.c.b16 %v5188, %v5180
      %v6277 = vpack.c.b16 %v5189, %v5181
      %v6278 = vpack.c.b16 %v5190, %v5182
      %v6279 = vpack.c.b16 %v5191, %v5183
      %v6280 = vpack.c.b16 %v5192, %v5184
      %v6281 = vpack.c.b16 %v5201, %v5193
      %v6282 = vpack.c.b16 %v5202, %v5194
      %v6283 = vpack.c.b16 %v5203, %v5195
      %v6284 = vpack.c.b16 %v5204, %v5196
      %v6285 = vpack.c.b16 %v5205, %v5197
      %v6286 = vpack.c.b16 %v5206, %v5198
      %v6287 = vpack.c.b16 %v5207, %v5199
      %v6288 = vpack.c.b16 %v5208, %v5200
      %v6289 = vpack.c.b16 %v5217, %v5209
      %v6290 = vpack.c.b16 %v5218, %v5210
      %v6291 = vpack.c.b16 %v5219, %v5211
      %v6292 = vpack.c.b16 %v5220, %v5212
      %v6293 = vpack.c.b16 %v5221, %v5213
      %v6294 = vpack.c.b16 %v5222, %v5214
      %v6295 = vpack.c.b16 %v5223, %v5215
      %v6296 = vpack.c.b16 %v5224, %v5216
      %v6297 = vpack.c.b16 %v5233, %v5225
      %v6298 = vpack.c.b16 %v5234, %v5226
      %v6299 = vpack.c.b16 %v5235, %v5227
      %v6300 = vpack.c.b16 %v5236, %v5228
      %v6301 = vpack.c.b16 %v5237, %v5229
      %v6302 = vpack.c.b16 %v5238, %v5230
      %v6303 = vpack.c.b16 %v5239, %v5231
      %v6304 = vpack.c.b16 %v5240, %v5232
      %v6305 = vpack.c.b16 %v5249, %v5241
      %v6306 = vpack.c.b16 %v5250, %v5242
      %v6307 = vpack.c.b16 %v5251, %v5243
      %v6308 = vpack.c.b16 %v5252, %v5244
      %v6309 = vpack.c.b16 %v5253, %v5245
      %v6310 = vpack.c.b16 %v5254, %v5246
      %v6311 = vpack.c.b16 %v5255, %v5247
      %v6312 = vpack.c.b16 %v5256, %v5248
      %v6313 = vpack.c.b16 %v5265, %v5257
      %v6314 = vpack.c.b16 %v5266, %v5258
      %v6315 = vpack.c.b16 %v5267, %v5259
      %v6316 = vpack.c.b16 %v5268, %v5260
      %v6317 = vpack.c.b16 %v5269, %v5261
      %v6318 = vpack.c.b16 %v5270, %v5262
      %v6319 = vpack.c.b16 %v5271, %v5263
      %v6320 = vpack.c.b16 %v5272, %v5264
      %v6321 = vpack.c.b16 %v5281, %v5273
      %v6322 = vpack.c.b16 %v5282, %v5274
      %v6323 = vpack.c.b16 %v5283, %v5275
      %v6324 = vpack.c.b16 %v5284, %v5276
      %v6325 = vpack.c.b16 %v5285, %v5277
      %v6326 = vpack.c.b16 %v5286, %v5278
      %v6327 = vpack.c.b16 %v5287, %v5279
      %v6328 = vpack.c.b16 %v5288, %v5280
      %v6329 = vpack.c.b16 %v5297, %v5289
      %v6330 = vpack.c.b16 %v5298, %v5290
      %v6331 = vpack.c.b16 %v5299, %v5291
      %v6332 = vpack.c.b16 %v5300, %v5292
      %v6333 = vpack.c.b16 %v5301, %v5293
      %v6334 = vpack.c.b16 %v5302, %v5294
      %v6335 = vpack.c.b16 %v5303, %v5295
      %v6336 = vpack.c.b16 %v5304, %v5296
      %v6337 = vpack.c.b16 %v5313, %v5305
      %v6338 = vpack.c.b16 %v5314, %v5306
      %v6339 = vpack.c.b16 %v5315, %v5307
      %v6340 = vpack.c.b16 %v5316, %v5308
      %v6341 = vpack.c.b16 %v5317, %v5309
      %v6342 = vpack.c.b16 %v5318, %v5310
      %v6343 = vpack.c.b16 %v5319, %v5311
      %v6344 = vpack.c.b16 %v5320, %v5312
      %7369 = vmatpush.bf16.msra.mxu0 %v5377
      %7370 = vmatpush.bf16.msra.mxu0 %v5369
      %7371 = vmatpush.bf16.msra.mxu0 %v5361
      %7372 = vmatpush.bf16.msra.mxu0 %v5353
      %7373 = vmatpush.bf16.msra.mxu0 %v5345
      %7374 = vmatpush.bf16.msra.mxu0 %v5337
      %7375 = vmatpush.bf16.msra.mxu0 %v5329
      %7376 = vmatpush.bf16.msra.mxu0 %v5321
      %7377 = vmatmul.bf16.gmra.mxu0 %v1191
      %v7378 = vpop.f32.mrf.mxu0
      %v7379 = vadd.f32 %v2233, %v7378
      %v7380 = vpop.f32.mrf.mxu0
      %7381 = vdwg.mxu0
      %7382 = vmatpush.bf16.msra.mxu0 %v5441
      %7383 = vmatpush.bf16.msra.mxu0 %v5433
      %7384 = vmatpush.bf16.msra.mxu0 %v5425
      %7385 = vmatpush.bf16.msra.mxu0 %v5417
      %7386 = vmatpush.bf16.msra.mxu0 %v5409
      %7387 = vmatpush.bf16.msra.mxu0 %v5401
      %7388 = vmatpush.bf16.msra.mxu0 %v5393
      %7389 = vmatpush.bf16.msra.mxu0 %v5385
      %7390 = vmatmul.bf16.gmra.mxu0 %v1192
      %v7391 = vpop.f32.mrf.mxu0
      %v7392 = vadd.f32 %v7379, %v7391
      %v7393 = vpop.f32.mrf.mxu0
      %7394 = vdwg.mxu0
      %7395 = vmatpush.bf16.msra.mxu0 %v5505
      %7396 = vmatpush.bf16.msra.mxu0 %v5497
      %7397 = vmatpush.bf16.msra.mxu0 %v5489
      %7398 = vmatpush.bf16.msra.mxu0 %v5481
      %7399 = vmatpush.bf16.msra.mxu0 %v5473
      %7400 = vmatpush.bf16.msra.mxu0 %v5465
      %7401 = vmatpush.bf16.msra.mxu0 %v5457
      %7402 = vmatpush.bf16.msra.mxu0 %v5449
      %7403 = vmatmul.bf16.gmra.mxu0 %v1193
      %v7404 = vpop.f32.mrf.mxu0
      %v7405 = vadd.f32 %v7392, %v7404
      %v7406 = vpop.f32.mrf.mxu0
      %7407 = vdwg.mxu0
      %7408 = vmatpush.bf16.msra.mxu0 %v5569
      %7409 = vmatpush.bf16.msra.mxu0 %v5561
      %7410 = vmatpush.bf16.msra.mxu0 %v5553
      %7411 = vmatpush.bf16.msra.mxu0 %v5545
      %7412 = vmatpush.bf16.msra.mxu0 %v5537
      %7413 = vmatpush.bf16.msra.mxu0 %v5529
      %7414 = vmatpush.bf16.msra.mxu0 %v5521
      %7415 = vmatpush.bf16.msra.mxu0 %v5513
      %7416 = vmatmul.bf16.gmra.mxu0 %v1194
      %v7417 = vpop.f32.mrf.mxu0
      %v7418 = vadd.f32 %v7405, %v7417
      %v7419 = vpop.f32.mrf.mxu0
      %7420 = vdwg.mxu0
      %7421 = vmatpush.bf16.msra.mxu0 %v5633
      %7422 = vmatpush.bf16.msra.mxu0 %v5625
      %7423 = vmatpush.bf16.msra.mxu0 %v5617
      %7424 = vmatpush.bf16.msra.mxu0 %v5609
      %7425 = vmatpush.bf16.msra.mxu0 %v5601
      %7426 = vmatpush.bf16.msra.mxu0 %v5593
      %7427 = vmatpush.bf16.msra.mxu0 %v5585
      %7428 = vmatpush.bf16.msra.mxu0 %v5577
      %7429 = vmatmul.bf16.gmra.mxu0 %v1195
      %v7430 = vpop.f32.mrf.mxu0
      %v7431 = vadd.f32 %v7418, %v7430
      %v7432 = vpop.f32.mrf.mxu0
      %7433 = vdwg.mxu0
      %7434 = vmatpush.bf16.msra.mxu0 %v5697
      %7435 = vmatpush.bf16.msra.mxu0 %v5689
      %7436 = vmatpush.bf16.msra.mxu0 %v5681
      %7437 = vmatpush.bf16.msra.mxu0 %v5673
      %7438 = vmatpush.bf16.msra.mxu0 %v5665
      %7439 = vmatpush.bf16.msra.mxu0 %v5657
      %7440 = vmatpush.bf16.msra.mxu0 %v5649
      %7441 = vmatpush.bf16.msra.mxu0 %v5641
      %7442 = vmatmul.bf16.gmra.mxu0 %v1196
      %v7443 = vpop.f32.mrf.mxu0
      %v7444 = vadd.f32 %v7431, %v7443
      %v7445 = vpop.f32.mrf.mxu0
      %7446 = vdwg.mxu0
      %7447 = vmatpush.bf16.msra.mxu0 %v5761
      %7448 = vmatpush.bf16.msra.mxu0 %v5753
      %7449 = vmatpush.bf16.msra.mxu0 %v5745
      %7450 = vmatpush.bf16.msra.mxu0 %v5737
      %7451 = vmatpush.bf16.msra.mxu0 %v5729
      %7452 = vmatpush.bf16.msra.mxu0 %v5721
      %7453 = vmatpush.bf16.msra.mxu0 %v5713
      %7454 = vmatpush.bf16.msra.mxu0 %v5705
      %7455 = vmatmul.bf16.gmra.mxu0 %v1197
      %v7456 = vpop.f32.mrf.mxu0
      %v7457 = vadd.f32 %v7444, %v7456
      %v7458 = vpop.f32.mrf.mxu0
      %7459 = vdwg.mxu0
      %7460 = vmatpush.bf16.msra.mxu0 %v5825
      %7461 = vmatpush.bf16.msra.mxu0 %v5817
      %7462 = vmatpush.bf16.msra.mxu0 %v5809
      %7463 = vmatpush.bf16.msra.mxu0 %v5801
      %7464 = vmatpush.bf16.msra.mxu0 %v5793
      %7465 = vmatpush.bf16.msra.mxu0 %v5785
      %7466 = vmatpush.bf16.msra.mxu0 %v5777
      %7467 = vmatpush.bf16.msra.mxu0 %v5769
      %7468 = vmatmul.bf16.gmra.mxu0 %v1198
      %v7469 = vpop.f32.mrf.mxu0
      %v7470 = vadd.f32 %v7457, %v7469
      %v7471 = vpop.f32.mrf.mxu0
      %7472 = vdwg.mxu0
      %7473 = vmatpush.bf16.msra.mxu0 %v5889
      %7474 = vmatpush.bf16.msra.mxu0 %v5881
      %7475 = vmatpush.bf16.msra.mxu0 %v5873
      %7476 = vmatpush.bf16.msra.mxu0 %v5865
      %7477 = vmatpush.bf16.msra.mxu0 %v5857
      %7478 = vmatpush.bf16.msra.mxu0 %v5849
      %7479 = vmatpush.bf16.msra.mxu0 %v5841
      %7480 = vmatpush.bf16.msra.mxu0 %v5833
      %7481 = vmatmul.bf16.gmra.mxu0 %v1199
      %v7482 = vpop.f32.mrf.mxu0
      %v7483 = vadd.f32 %v7470, %v7482
      %v7484 = vpop.f32.mrf.mxu0
      %7485 = vdwg.mxu0
      %7486 = vmatpush.bf16.msra.mxu0 %v5953
      %7487 = vmatpush.bf16.msra.mxu0 %v5945
      %7488 = vmatpush.bf16.msra.mxu0 %v5937
      %7489 = vmatpush.bf16.msra.mxu0 %v5929
      %7490 = vmatpush.bf16.msra.mxu0 %v5921
      %7491 = vmatpush.bf16.msra.mxu0 %v5913
      %7492 = vmatpush.bf16.msra.mxu0 %v5905
      %7493 = vmatpush.bf16.msra.mxu0 %v5897
      %7494 = vmatmul.bf16.gmra.mxu0 %v1200
      %v7495 = vpop.f32.mrf.mxu0
      %v7496 = vadd.f32 %v7483, %v7495
      %v7497 = vpop.f32.mrf.mxu0
      %7498 = vdwg.mxu0
      %7499 = vmatpush.bf16.msra.mxu0 %v6017
      %7500 = vmatpush.bf16.msra.mxu0 %v6009
      %7501 = vmatpush.bf16.msra.mxu0 %v6001
      %7502 = vmatpush.bf16.msra.mxu0 %v5993
      %7503 = vmatpush.bf16.msra.mxu0 %v5985
      %7504 = vmatpush.bf16.msra.mxu0 %v5977
      %7505 = vmatpush.bf16.msra.mxu0 %v5969
      %7506 = vmatpush.bf16.msra.mxu0 %v5961
      %7507 = vmatmul.bf16.gmra.mxu0 %v1201
      %v7508 = vpop.f32.mrf.mxu0
      %v7509 = vadd.f32 %v7496, %v7508
      %v7510 = vpop.f32.mrf.mxu0
      %7511 = vdwg.mxu0
      %7512 = vmatpush.bf16.msra.mxu0 %v6081
      %7513 = vmatpush.bf16.msra.mxu0 %v6073
      %7514 = vmatpush.bf16.msra.mxu0 %v6065
      %7515 = vmatpush.bf16.msra.mxu0 %v6057
      %7516 = vmatpush.bf16.msra.mxu0 %v6049
      %7517 = vmatpush.bf16.msra.mxu0 %v6041
      %7518 = vmatpush.bf16.msra.mxu0 %v6033
      %7519 = vmatpush.bf16.msra.mxu0 %v6025
      %7520 = vmatmul.bf16.gmra.mxu0 %v1202
      %v7521 = vpop.f32.mrf.mxu0
      %v7522 = vadd.f32 %v7509, %v7521
      %v7523 = vpop.f32.mrf.mxu0
      %7524 = vdwg.mxu0
      %7525 = vmatpush.bf16.msra.mxu0 %v6145
      %7526 = vmatpush.bf16.msra.mxu0 %v6137
      %7527 = vmatpush.bf16.msra.mxu0 %v6129
      %7528 = vmatpush.bf16.msra.mxu0 %v6121
      %7529 = vmatpush.bf16.msra.mxu0 %v6113
      %7530 = vmatpush.bf16.msra.mxu0 %v6105
      %7531 = vmatpush.bf16.msra.mxu0 %v6097
      %7532 = vmatpush.bf16.msra.mxu0 %v6089
      %7533 = vmatmul.bf16.gmra.mxu0 %v1203
      %v7534 = vpop.f32.mrf.mxu0
      %v7535 = vadd.f32 %v7522, %v7534
      %v7536 = vpop.f32.mrf.mxu0
      %7537 = vdwg.mxu0
      %7538 = vmatpush.bf16.msra.mxu0 %v6209
      %7539 = vmatpush.bf16.msra.mxu0 %v6201
      %7540 = vmatpush.bf16.msra.mxu0 %v6193
      %7541 = vmatpush.bf16.msra.mxu0 %v6185
      %7542 = vmatpush.bf16.msra.mxu0 %v6177
      %7543 = vmatpush.bf16.msra.mxu0 %v6169
      %7544 = vmatpush.bf16.msra.mxu0 %v6161
      %7545 = vmatpush.bf16.msra.mxu0 %v6153
      %7546 = vmatmul.bf16.gmra.mxu0 %v1204
      %v7547 = vpop.f32.mrf.mxu0
      %v7548 = vadd.f32 %v7535, %v7547
      %v7549 = vpop.f32.mrf.mxu0
      %7550 = vdwg.mxu0
      %7551 = vmatpush.bf16.msra.mxu0 %v6273
      %7552 = vmatpush.bf16.msra.mxu0 %v6265
      %7553 = vmatpush.bf16.msra.mxu0 %v6257
      %7554 = vmatpush.bf16.msra.mxu0 %v6249
      %7555 = vmatpush.bf16.msra.mxu0 %v6241
      %7556 = vmatpush.bf16.msra.mxu0 %v6233
      %7557 = vmatpush.bf16.msra.mxu0 %v6225
      %7558 = vmatpush.bf16.msra.mxu0 %v6217
      %7559 = vmatmul.bf16.gmra.mxu0 %v1205
      %v7560 = vpop.f32.mrf.mxu0
      %v7561 = vadd.f32 %v7548, %v7560
      %v7562 = vpop.f32.mrf.mxu0
      %7563 = vdwg.mxu0
      %7564 = vmatpush.bf16.msra.mxu0 %v6337
      %7565 = vmatpush.bf16.msra.mxu0 %v6329
      %7566 = vmatpush.bf16.msra.mxu0 %v6321
      %7567 = vmatpush.bf16.msra.mxu0 %v6313
      %7568 = vmatpush.bf16.msra.mxu0 %v6305
      %7569 = vmatpush.bf16.msra.mxu0 %v6297
      %7570 = vmatpush.bf16.msra.mxu0 %v6289
      %7571 = vmatpush.bf16.msra.mxu0 %v6281
      %7572 = vmatmul.bf16.gmra.mxu0 %v1206
      %v7573 = vpop.f32.mrf.mxu0
      %v7574 = vadd.f32 %v7561, %v7573
      %v7575 = vpop.f32.mrf.mxu0
      %7576 = vdwg.mxu0
      %7577 = vmatpush.bf16.msra.mxu0 %v5378
      %7578 = vmatpush.bf16.msra.mxu0 %v5370
      %7579 = vmatpush.bf16.msra.mxu0 %v5362
      %7580 = vmatpush.bf16.msra.mxu0 %v5354
      %7581 = vmatpush.bf16.msra.mxu0 %v5346
      %7582 = vmatpush.bf16.msra.mxu0 %v5338
      %7583 = vmatpush.bf16.msra.mxu0 %v5330
      %7584 = vmatpush.bf16.msra.mxu0 %v5322
      %7585 = vmatmul.bf16.gmra.mxu0 %v1191
      %v7586 = vpop.f32.mrf.mxu0
      %v7587 = vadd.f32 %v2234, %v7586
      %v7588 = vpop.f32.mrf.mxu0
      %7589 = vdwg.mxu0
      %7590 = vmatpush.bf16.msra.mxu0 %v5442
      %7591 = vmatpush.bf16.msra.mxu0 %v5434
      %7592 = vmatpush.bf16.msra.mxu0 %v5426
      %7593 = vmatpush.bf16.msra.mxu0 %v5418
      %7594 = vmatpush.bf16.msra.mxu0 %v5410
      %7595 = vmatpush.bf16.msra.mxu0 %v5402
      %7596 = vmatpush.bf16.msra.mxu0 %v5394
      %7597 = vmatpush.bf16.msra.mxu0 %v5386
      %7598 = vmatmul.bf16.gmra.mxu0 %v1192
      %v7599 = vpop.f32.mrf.mxu0
      %v7600 = vadd.f32 %v7587, %v7599
      %v7601 = vpop.f32.mrf.mxu0
      %7602 = vdwg.mxu0
      %7603 = vmatpush.bf16.msra.mxu0 %v5506
      %7604 = vmatpush.bf16.msra.mxu0 %v5498
      %7605 = vmatpush.bf16.msra.mxu0 %v5490
      %7606 = vmatpush.bf16.msra.mxu0 %v5482
      %7607 = vmatpush.bf16.msra.mxu0 %v5474
      %7608 = vmatpush.bf16.msra.mxu0 %v5466
      %7609 = vmatpush.bf16.msra.mxu0 %v5458
      %7610 = vmatpush.bf16.msra.mxu0 %v5450
      %7611 = vmatmul.bf16.gmra.mxu0 %v1193
      %v7612 = vpop.f32.mrf.mxu0
      %v7613 = vadd.f32 %v7600, %v7612
      %v7614 = vpop.f32.mrf.mxu0
      %7615 = vdwg.mxu0
      %7616 = vmatpush.bf16.msra.mxu0 %v5570
      %7617 = vmatpush.bf16.msra.mxu0 %v5562
      %7618 = vmatpush.bf16.msra.mxu0 %v5554
      %7619 = vmatpush.bf16.msra.mxu0 %v5546
      %7620 = vmatpush.bf16.msra.mxu0 %v5538
      %7621 = vmatpush.bf16.msra.mxu0 %v5530
      %7622 = vmatpush.bf16.msra.mxu0 %v5522
      %7623 = vmatpush.bf16.msra.mxu0 %v5514
      %7624 = vmatmul.bf16.gmra.mxu0 %v1194
      %v7625 = vpop.f32.mrf.mxu0
      %v7626 = vadd.f32 %v7613, %v7625
      %v7627 = vpop.f32.mrf.mxu0
      %7628 = vdwg.mxu0
      %7629 = vmatpush.bf16.msra.mxu0 %v5634
      %7630 = vmatpush.bf16.msra.mxu0 %v5626
      %7631 = vmatpush.bf16.msra.mxu0 %v5618
      %7632 = vmatpush.bf16.msra.mxu0 %v5610
      %7633 = vmatpush.bf16.msra.mxu0 %v5602
      %7634 = vmatpush.bf16.msra.mxu0 %v5594
      %7635 = vmatpush.bf16.msra.mxu0 %v5586
      %7636 = vmatpush.bf16.msra.mxu0 %v5578
      %7637 = vmatmul.bf16.gmra.mxu0 %v1195
      %v7638 = vpop.f32.mrf.mxu0
      %v7639 = vadd.f32 %v7626, %v7638
      %v7640 = vpop.f32.mrf.mxu0
      %7641 = vdwg.mxu0
      %7642 = vmatpush.bf16.msra.mxu0 %v5698
      %7643 = vmatpush.bf16.msra.mxu0 %v5690
      %7644 = vmatpush.bf16.msra.mxu0 %v5682
      %7645 = vmatpush.bf16.msra.mxu0 %v5674
      %7646 = vmatpush.bf16.msra.mxu0 %v5666
      %7647 = vmatpush.bf16.msra.mxu0 %v5658
      %7648 = vmatpush.bf16.msra.mxu0 %v5650
      %7649 = vmatpush.bf16.msra.mxu0 %v5642
      %7650 = vmatmul.bf16.gmra.mxu0 %v1196
      %v7651 = vpop.f32.mrf.mxu0
      %v7652 = vadd.f32 %v7639, %v7651
      %v7653 = vpop.f32.mrf.mxu0
      %7654 = vdwg.mxu0
      %7655 = vmatpush.bf16.msra.mxu0 %v5762
      %7656 = vmatpush.bf16.msra.mxu0 %v5754
      %7657 = vmatpush.bf16.msra.mxu0 %v5746
      %7658 = vmatpush.bf16.msra.mxu0 %v5738
      %7659 = vmatpush.bf16.msra.mxu0 %v5730
      %7660 = vmatpush.bf16.msra.mxu0 %v5722
      %7661 = vmatpush.bf16.msra.mxu0 %v5714
      %7662 = vmatpush.bf16.msra.mxu0 %v5706
      %7663 = vmatmul.bf16.gmra.mxu0 %v1197
      %v7664 = vpop.f32.mrf.mxu0
      %v7665 = vadd.f32 %v7652, %v7664
      %v7666 = vpop.f32.mrf.mxu0
      %7667 = vdwg.mxu0
      %7668 = vmatpush.bf16.msra.mxu0 %v5826
      %7669 = vmatpush.bf16.msra.mxu0 %v5818
      %7670 = vmatpush.bf16.msra.mxu0 %v5810
      %7671 = vmatpush.bf16.msra.mxu0 %v5802
      %7672 = vmatpush.bf16.msra.mxu0 %v5794
      %7673 = vmatpush.bf16.msra.mxu0 %v5786
      %7674 = vmatpush.bf16.msra.mxu0 %v5778
      %7675 = vmatpush.bf16.msra.mxu0 %v5770
      %7676 = vmatmul.bf16.gmra.mxu0 %v1198
      %v7677 = vpop.f32.mrf.mxu0
      %v7678 = vadd.f32 %v7665, %v7677
      %v7679 = vpop.f32.mrf.mxu0
      %7680 = vdwg.mxu0
      %7681 = vmatpush.bf16.msra.mxu0 %v5890
      %7682 = vmatpush.bf16.msra.mxu0 %v5882
      %7683 = vmatpush.bf16.msra.mxu0 %v5874
      %7684 = vmatpush.bf16.msra.mxu0 %v5866
      %7685 = vmatpush.bf16.msra.mxu0 %v5858
      %7686 = vmatpush.bf16.msra.mxu0 %v5850
      %7687 = vmatpush.bf16.msra.mxu0 %v5842
      %7688 = vmatpush.bf16.msra.mxu0 %v5834
      %7689 = vmatmul.bf16.gmra.mxu0 %v1199
      %v7690 = vpop.f32.mrf.mxu0
      %v7691 = vadd.f32 %v7678, %v7690
      %v7692 = vpop.f32.mrf.mxu0
      %7693 = vdwg.mxu0
      %7694 = vmatpush.bf16.msra.mxu0 %v5954
      %7695 = vmatpush.bf16.msra.mxu0 %v5946
      %7696 = vmatpush.bf16.msra.mxu0 %v5938
      %7697 = vmatpush.bf16.msra.mxu0 %v5930
      %7698 = vmatpush.bf16.msra.mxu0 %v5922
      %7699 = vmatpush.bf16.msra.mxu0 %v5914
      %7700 = vmatpush.bf16.msra.mxu0 %v5906
      %7701 = vmatpush.bf16.msra.mxu0 %v5898
      %7702 = vmatmul.bf16.gmra.mxu0 %v1200
      %v7703 = vpop.f32.mrf.mxu0
      %v7704 = vadd.f32 %v7691, %v7703
      %v7705 = vpop.f32.mrf.mxu0
      %7706 = vdwg.mxu0
      %7707 = vmatpush.bf16.msra.mxu0 %v6018
      %7708 = vmatpush.bf16.msra.mxu0 %v6010
      %7709 = vmatpush.bf16.msra.mxu0 %v6002
      %7710 = vmatpush.bf16.msra.mxu0 %v5994
      %7711 = vmatpush.bf16.msra.mxu0 %v5986
      %7712 = vmatpush.bf16.msra.mxu0 %v5978
      %7713 = vmatpush.bf16.msra.mxu0 %v5970
      %7714 = vmatpush.bf16.msra.mxu0 %v5962
      %7715 = vmatmul.bf16.gmra.mxu0 %v1201
      %v7716 = vpop.f32.mrf.mxu0
      %v7717 = vadd.f32 %v7704, %v7716
      %v7718 = vpop.f32.mrf.mxu0
      %7719 = vdwg.mxu0
      %7720 = vmatpush.bf16.msra.mxu0 %v6082
      %7721 = vmatpush.bf16.msra.mxu0 %v6074
      %7722 = vmatpush.bf16.msra.mxu0 %v6066
      %7723 = vmatpush.bf16.msra.mxu0 %v6058
      %7724 = vmatpush.bf16.msra.mxu0 %v6050
      %7725 = vmatpush.bf16.msra.mxu0 %v6042
      %7726 = vmatpush.bf16.msra.mxu0 %v6034
      %7727 = vmatpush.bf16.msra.mxu0 %v6026
      %7728 = vmatmul.bf16.gmra.mxu0 %v1202
      %v7729 = vpop.f32.mrf.mxu0
      %v7730 = vadd.f32 %v7717, %v7729
      %v7731 = vpop.f32.mrf.mxu0
      %7732 = vdwg.mxu0
      %7733 = vmatpush.bf16.msra.mxu0 %v6146
      %7734 = vmatpush.bf16.msra.mxu0 %v6138
      %7735 = vmatpush.bf16.msra.mxu0 %v6130
      %7736 = vmatpush.bf16.msra.mxu0 %v6122
      %7737 = vmatpush.bf16.msra.mxu0 %v6114
      %7738 = vmatpush.bf16.msra.mxu0 %v6106
      %7739 = vmatpush.bf16.msra.mxu0 %v6098
      %7740 = vmatpush.bf16.msra.mxu0 %v6090
      %7741 = vmatmul.bf16.gmra.mxu0 %v1203
      %v7742 = vpop.f32.mrf.mxu0
      %v7743 = vadd.f32 %v7730, %v7742
      %v7744 = vpop.f32.mrf.mxu0
      %7745 = vdwg.mxu0
      %7746 = vmatpush.bf16.msra.mxu0 %v6210
      %7747 = vmatpush.bf16.msra.mxu0 %v6202
      %7748 = vmatpush.bf16.msra.mxu0 %v6194
      %7749 = vmatpush.bf16.msra.mxu0 %v6186
      %7750 = vmatpush.bf16.msra.mxu0 %v6178
      %7751 = vmatpush.bf16.msra.mxu0 %v6170
      %7752 = vmatpush.bf16.msra.mxu0 %v6162
      %7753 = vmatpush.bf16.msra.mxu0 %v6154
      %7754 = vmatmul.bf16.gmra.mxu0 %v1204
      %v7755 = vpop.f32.mrf.mxu0
      %v7756 = vadd.f32 %v7743, %v7755
      %v7757 = vpop.f32.mrf.mxu0
      %7758 = vdwg.mxu0
      %7759 = vmatpush.bf16.msra.mxu0 %v6274
      %7760 = vmatpush.bf16.msra.mxu0 %v6266
      %7761 = vmatpush.bf16.msra.mxu0 %v6258
      %7762 = vmatpush.bf16.msra.mxu0 %v6250
      %7763 = vmatpush.bf16.msra.mxu0 %v6242
      %7764 = vmatpush.bf16.msra.mxu0 %v6234
      %7765 = vmatpush.bf16.msra.mxu0 %v6226
      %7766 = vmatpush.bf16.msra.mxu0 %v6218
      %7767 = vmatmul.bf16.gmra.mxu0 %v1205
      %v7768 = vpop.f32.mrf.mxu0
      %v7769 = vadd.f32 %v7756, %v7768
      %v7770 = vpop.f32.mrf.mxu0
      %7771 = vdwg.mxu0
      %7772 = vmatpush.bf16.msra.mxu0 %v6338
      %7773 = vmatpush.bf16.msra.mxu0 %v6330
      %7774 = vmatpush.bf16.msra.mxu0 %v6322
      %7775 = vmatpush.bf16.msra.mxu0 %v6314
      %7776 = vmatpush.bf16.msra.mxu0 %v6306
      %7777 = vmatpush.bf16.msra.mxu0 %v6298
      %7778 = vmatpush.bf16.msra.mxu0 %v6290
      %7779 = vmatpush.bf16.msra.mxu0 %v6282
      %7780 = vmatmul.bf16.gmra.mxu0 %v1206
      %v7781 = vpop.f32.mrf.mxu0
      %v7782 = vadd.f32 %v7769, %v7781
      %v7783 = vpop.f32.mrf.mxu0
      %7784 = vdwg.mxu0
      %7785 = vmatpush.bf16.msra.mxu0 %v5379
      %7786 = vmatpush.bf16.msra.mxu0 %v5371
      %7787 = vmatpush.bf16.msra.mxu0 %v5363
      %7788 = vmatpush.bf16.msra.mxu0 %v5355
      %7789 = vmatpush.bf16.msra.mxu0 %v5347
      %7790 = vmatpush.bf16.msra.mxu0 %v5339
      %7791 = vmatpush.bf16.msra.mxu0 %v5331
      %7792 = vmatpush.bf16.msra.mxu0 %v5323
      %7793 = vmatmul.bf16.gmra.mxu0 %v1191
      %v7794 = vpop.f32.mrf.mxu0
      %v7795 = vadd.f32 %v2235, %v7794
      %v7796 = vpop.f32.mrf.mxu0
      %7797 = vdwg.mxu0
      %7798 = vmatpush.bf16.msra.mxu0 %v5443
      %7799 = vmatpush.bf16.msra.mxu0 %v5435
      %7800 = vmatpush.bf16.msra.mxu0 %v5427
      %7801 = vmatpush.bf16.msra.mxu0 %v5419
      %7802 = vmatpush.bf16.msra.mxu0 %v5411
      %7803 = vmatpush.bf16.msra.mxu0 %v5403
      %7804 = vmatpush.bf16.msra.mxu0 %v5395
      %7805 = vmatpush.bf16.msra.mxu0 %v5387
      %7806 = vmatmul.bf16.gmra.mxu0 %v1192
      %v7807 = vpop.f32.mrf.mxu0
      %v7808 = vadd.f32 %v7795, %v7807
      %v7809 = vpop.f32.mrf.mxu0
      %7810 = vdwg.mxu0
      %7811 = vmatpush.bf16.msra.mxu0 %v5507
      %7812 = vmatpush.bf16.msra.mxu0 %v5499
      %7813 = vmatpush.bf16.msra.mxu0 %v5491
      %7814 = vmatpush.bf16.msra.mxu0 %v5483
      %7815 = vmatpush.bf16.msra.mxu0 %v5475
      %7816 = vmatpush.bf16.msra.mxu0 %v5467
      %7817 = vmatpush.bf16.msra.mxu0 %v5459
      %7818 = vmatpush.bf16.msra.mxu0 %v5451
      %7819 = vmatmul.bf16.gmra.mxu0 %v1193
      %v7820 = vpop.f32.mrf.mxu0
      %v7821 = vadd.f32 %v7808, %v7820
      %v7822 = vpop.f32.mrf.mxu0
      %7823 = vdwg.mxu0
      %7824 = vmatpush.bf16.msra.mxu0 %v5571
      %7825 = vmatpush.bf16.msra.mxu0 %v5563
      %7826 = vmatpush.bf16.msra.mxu0 %v5555
      %7827 = vmatpush.bf16.msra.mxu0 %v5547
      %7828 = vmatpush.bf16.msra.mxu0 %v5539
      %7829 = vmatpush.bf16.msra.mxu0 %v5531
      %7830 = vmatpush.bf16.msra.mxu0 %v5523
      %7831 = vmatpush.bf16.msra.mxu0 %v5515
      %7832 = vmatmul.bf16.gmra.mxu0 %v1194
      %v7833 = vpop.f32.mrf.mxu0
      %v7834 = vadd.f32 %v7821, %v7833
      %v7835 = vpop.f32.mrf.mxu0
      %7836 = vdwg.mxu0
      %7837 = vmatpush.bf16.msra.mxu0 %v5635
      %7838 = vmatpush.bf16.msra.mxu0 %v5627
      %7839 = vmatpush.bf16.msra.mxu0 %v5619
      %7840 = vmatpush.bf16.msra.mxu0 %v5611
      %7841 = vmatpush.bf16.msra.mxu0 %v5603
      %7842 = vmatpush.bf16.msra.mxu0 %v5595
      %7843 = vmatpush.bf16.msra.mxu0 %v5587
      %7844 = vmatpush.bf16.msra.mxu0 %v5579
      %7845 = vmatmul.bf16.gmra.mxu0 %v1195
      %v7846 = vpop.f32.mrf.mxu0
      %v7847 = vadd.f32 %v7834, %v7846
      %v7848 = vpop.f32.mrf.mxu0
      %7849 = vdwg.mxu0
      %7850 = vmatpush.bf16.msra.mxu0 %v5699
      %7851 = vmatpush.bf16.msra.mxu0 %v5691
      %7852 = vmatpush.bf16.msra.mxu0 %v5683
      %7853 = vmatpush.bf16.msra.mxu0 %v5675
      %7854 = vmatpush.bf16.msra.mxu0 %v5667
      %7855 = vmatpush.bf16.msra.mxu0 %v5659
      %7856 = vmatpush.bf16.msra.mxu0 %v5651
      %7857 = vmatpush.bf16.msra.mxu0 %v5643
      %7858 = vmatmul.bf16.gmra.mxu0 %v1196
      %v7859 = vpop.f32.mrf.mxu0
      %v7860 = vadd.f32 %v7847, %v7859
      %v7861 = vpop.f32.mrf.mxu0
      %7862 = vdwg.mxu0
      %7863 = vmatpush.bf16.msra.mxu0 %v5763
      %7864 = vmatpush.bf16.msra.mxu0 %v5755
      %7865 = vmatpush.bf16.msra.mxu0 %v5747
      %7866 = vmatpush.bf16.msra.mxu0 %v5739
      %7867 = vmatpush.bf16.msra.mxu0 %v5731
      %7868 = vmatpush.bf16.msra.mxu0 %v5723
      %7869 = vmatpush.bf16.msra.mxu0 %v5715
      %7870 = vmatpush.bf16.msra.mxu0 %v5707
      %7871 = vmatmul.bf16.gmra.mxu0 %v1197
      %v7872 = vpop.f32.mrf.mxu0
      %v7873 = vadd.f32 %v7860, %v7872
      %v7874 = vpop.f32.mrf.mxu0
      %7875 = vdwg.mxu0
      %7876 = vmatpush.bf16.msra.mxu0 %v5827
      %7877 = vmatpush.bf16.msra.mxu0 %v5819
      %7878 = vmatpush.bf16.msra.mxu0 %v5811
      %7879 = vmatpush.bf16.msra.mxu0 %v5803
      %7880 = vmatpush.bf16.msra.mxu0 %v5795
      %7881 = vmatpush.bf16.msra.mxu0 %v5787
      %7882 = vmatpush.bf16.msra.mxu0 %v5779
      %7883 = vmatpush.bf16.msra.mxu0 %v5771
      %7884 = vmatmul.bf16.gmra.mxu0 %v1198
      %v7885 = vpop.f32.mrf.mxu0
      %v7886 = vadd.f32 %v7873, %v7885
      %v7887 = vpop.f32.mrf.mxu0
      %7888 = vdwg.mxu0
      %7889 = vmatpush.bf16.msra.mxu0 %v5891
      %7890 = vmatpush.bf16.msra.mxu0 %v5883
      %7891 = vmatpush.bf16.msra.mxu0 %v5875
      %7892 = vmatpush.bf16.msra.mxu0 %v5867
      %7893 = vmatpush.bf16.msra.mxu0 %v5859
      %7894 = vmatpush.bf16.msra.mxu0 %v5851
      %7895 = vmatpush.bf16.msra.mxu0 %v5843
      %7896 = vmatpush.bf16.msra.mxu0 %v5835
      %7897 = vmatmul.bf16.gmra.mxu0 %v1199
      %v7898 = vpop.f32.mrf.mxu0
      %v7899 = vadd.f32 %v7886, %v7898
      %v7900 = vpop.f32.mrf.mxu0
      %7901 = vdwg.mxu0
      %7902 = vmatpush.bf16.msra.mxu0 %v5955
      %7903 = vmatpush.bf16.msra.mxu0 %v5947
      %7904 = vmatpush.bf16.msra.mxu0 %v5939
      %7905 = vmatpush.bf16.msra.mxu0 %v5931
      %7906 = vmatpush.bf16.msra.mxu0 %v5923
      %7907 = vmatpush.bf16.msra.mxu0 %v5915
      %7908 = vmatpush.bf16.msra.mxu0 %v5907
      %7909 = vmatpush.bf16.msra.mxu0 %v5899
      %7910 = vmatmul.bf16.gmra.mxu0 %v1200
      %v7911 = vpop.f32.mrf.mxu0
      %v7912 = vadd.f32 %v7899, %v7911
      %v7913 = vpop.f32.mrf.mxu0
      %7914 = vdwg.mxu0
      %7915 = vmatpush.bf16.msra.mxu0 %v6019
      %7916 = vmatpush.bf16.msra.mxu0 %v6011
      %7917 = vmatpush.bf16.msra.mxu0 %v6003
      %7918 = vmatpush.bf16.msra.mxu0 %v5995
      %7919 = vmatpush.bf16.msra.mxu0 %v5987
      %7920 = vmatpush.bf16.msra.mxu0 %v5979
      %7921 = vmatpush.bf16.msra.mxu0 %v5971
      %7922 = vmatpush.bf16.msra.mxu0 %v5963
      %7923 = vmatmul.bf16.gmra.mxu0 %v1201
      %v7924 = vpop.f32.mrf.mxu0
      %v7925 = vadd.f32 %v7912, %v7924
      %v7926 = vpop.f32.mrf.mxu0
      %7927 = vdwg.mxu0
      %7928 = vmatpush.bf16.msra.mxu0 %v6083
      %7929 = vmatpush.bf16.msra.mxu0 %v6075
      %7930 = vmatpush.bf16.msra.mxu0 %v6067
      %7931 = vmatpush.bf16.msra.mxu0 %v6059
      %7932 = vmatpush.bf16.msra.mxu0 %v6051
      %7933 = vmatpush.bf16.msra.mxu0 %v6043
      %7934 = vmatpush.bf16.msra.mxu0 %v6035
      %7935 = vmatpush.bf16.msra.mxu0 %v6027
      %7936 = vmatmul.bf16.gmra.mxu0 %v1202
      %v7937 = vpop.f32.mrf.mxu0
      %v7938 = vadd.f32 %v7925, %v7937
      %v7939 = vpop.f32.mrf.mxu0
      %7940 = vdwg.mxu0
      %7941 = vmatpush.bf16.msra.mxu0 %v6147
      %7942 = vmatpush.bf16.msra.mxu0 %v6139
      %7943 = vmatpush.bf16.msra.mxu0 %v6131
      %7944 = vmatpush.bf16.msra.mxu0 %v6123
      %7945 = vmatpush.bf16.msra.mxu0 %v6115
      %7946 = vmatpush.bf16.msra.mxu0 %v6107
      %7947 = vmatpush.bf16.msra.mxu0 %v6099
      %7948 = vmatpush.bf16.msra.mxu0 %v6091
      %7949 = vmatmul.bf16.gmra.mxu0 %v1203
      %v7950 = vpop.f32.mrf.mxu0
      %v7951 = vadd.f32 %v7938, %v7950
      %v7952 = vpop.f32.mrf.mxu0
      %7953 = vdwg.mxu0
      %7954 = vmatpush.bf16.msra.mxu0 %v6211
      %7955 = vmatpush.bf16.msra.mxu0 %v6203
      %7956 = vmatpush.bf16.msra.mxu0 %v6195
      %7957 = vmatpush.bf16.msra.mxu0 %v6187
      %7958 = vmatpush.bf16.msra.mxu0 %v6179
      %7959 = vmatpush.bf16.msra.mxu0 %v6171
      %7960 = vmatpush.bf16.msra.mxu0 %v6163
      %7961 = vmatpush.bf16.msra.mxu0 %v6155
      %7962 = vmatmul.bf16.gmra.mxu0 %v1204
      %v7963 = vpop.f32.mrf.mxu0
      %v7964 = vadd.f32 %v7951, %v7963
      %v7965 = vpop.f32.mrf.mxu0
      %7966 = vdwg.mxu0
      %7967 = vmatpush.bf16.msra.mxu0 %v6275
      %7968 = vmatpush.bf16.msra.mxu0 %v6267
      %7969 = vmatpush.bf16.msra.mxu0 %v6259
      %7970 = vmatpush.bf16.msra.mxu0 %v6251
      %7971 = vmatpush.bf16.msra.mxu0 %v6243
      %7972 = vmatpush.bf16.msra.mxu0 %v6235
      %7973 = vmatpush.bf16.msra.mxu0 %v6227
      %7974 = vmatpush.bf16.msra.mxu0 %v6219
      %7975 = vmatmul.bf16.gmra.mxu0 %v1205
      %v7976 = vpop.f32.mrf.mxu0
      %v7977 = vadd.f32 %v7964, %v7976
      %v7978 = vpop.f32.mrf.mxu0
      %7979 = vdwg.mxu0
      %7980 = vmatpush.bf16.msra.mxu0 %v6339
      %7981 = vmatpush.bf16.msra.mxu0 %v6331
      %7982 = vmatpush.bf16.msra.mxu0 %v6323
      %7983 = vmatpush.bf16.msra.mxu0 %v6315
      %7984 = vmatpush.bf16.msra.mxu0 %v6307
      %7985 = vmatpush.bf16.msra.mxu0 %v6299
      %7986 = vmatpush.bf16.msra.mxu0 %v6291
      %7987 = vmatpush.bf16.msra.mxu0 %v6283
      %7988 = vmatmul.bf16.gmra.mxu0 %v1206
      %v7989 = vpop.f32.mrf.mxu0
      %v7990 = vadd.f32 %v7977, %v7989
      %v7991 = vpop.f32.mrf.mxu0
      %7992 = vdwg.mxu0
      %7993 = vmatpush.bf16.msra.mxu0 %v5380
      %7994 = vmatpush.bf16.msra.mxu0 %v5372
      %7995 = vmatpush.bf16.msra.mxu0 %v5364
      %7996 = vmatpush.bf16.msra.mxu0 %v5356
      %7997 = vmatpush.bf16.msra.mxu0 %v5348
      %7998 = vmatpush.bf16.msra.mxu0 %v5340
      %7999 = vmatpush.bf16.msra.mxu0 %v5332
      %8000 = vmatpush.bf16.msra.mxu0 %v5324
      %8001 = vmatmul.bf16.gmra.mxu0 %v1191
      %v8002 = vpop.f32.mrf.mxu0
      %v8003 = vadd.f32 %v2236, %v8002
      %v8004 = vpop.f32.mrf.mxu0
      %8005 = vdwg.mxu0
      %8006 = vmatpush.bf16.msra.mxu0 %v5444
      %8007 = vmatpush.bf16.msra.mxu0 %v5436
      %8008 = vmatpush.bf16.msra.mxu0 %v5428
      %8009 = vmatpush.bf16.msra.mxu0 %v5420
      %8010 = vmatpush.bf16.msra.mxu0 %v5412
      %8011 = vmatpush.bf16.msra.mxu0 %v5404
      %8012 = vmatpush.bf16.msra.mxu0 %v5396
      %8013 = vmatpush.bf16.msra.mxu0 %v5388
      %8014 = vmatmul.bf16.gmra.mxu0 %v1192
      %v8015 = vpop.f32.mrf.mxu0
      %v8016 = vadd.f32 %v8003, %v8015
      %v8017 = vpop.f32.mrf.mxu0
      %8018 = vdwg.mxu0
      %8019 = vmatpush.bf16.msra.mxu0 %v5508
      %8020 = vmatpush.bf16.msra.mxu0 %v5500
      %8021 = vmatpush.bf16.msra.mxu0 %v5492
      %8022 = vmatpush.bf16.msra.mxu0 %v5484
      %8023 = vmatpush.bf16.msra.mxu0 %v5476
      %8024 = vmatpush.bf16.msra.mxu0 %v5468
      %8025 = vmatpush.bf16.msra.mxu0 %v5460
      %8026 = vmatpush.bf16.msra.mxu0 %v5452
      %8027 = vmatmul.bf16.gmra.mxu0 %v1193
      %v8028 = vpop.f32.mrf.mxu0
      %v8029 = vadd.f32 %v8016, %v8028
      %v8030 = vpop.f32.mrf.mxu0
      %8031 = vdwg.mxu0
      %8032 = vmatpush.bf16.msra.mxu0 %v5572
      %8033 = vmatpush.bf16.msra.mxu0 %v5564
      %8034 = vmatpush.bf16.msra.mxu0 %v5556
      %8035 = vmatpush.bf16.msra.mxu0 %v5548
      %8036 = vmatpush.bf16.msra.mxu0 %v5540
      %8037 = vmatpush.bf16.msra.mxu0 %v5532
      %8038 = vmatpush.bf16.msra.mxu0 %v5524
      %8039 = vmatpush.bf16.msra.mxu0 %v5516
      %8040 = vmatmul.bf16.gmra.mxu0 %v1194
      %v8041 = vpop.f32.mrf.mxu0
      %v8042 = vadd.f32 %v8029, %v8041
      %v8043 = vpop.f32.mrf.mxu0
      %8044 = vdwg.mxu0
      %8045 = vmatpush.bf16.msra.mxu0 %v5636
      %8046 = vmatpush.bf16.msra.mxu0 %v5628
      %8047 = vmatpush.bf16.msra.mxu0 %v5620
      %8048 = vmatpush.bf16.msra.mxu0 %v5612
      %8049 = vmatpush.bf16.msra.mxu0 %v5604
      %8050 = vmatpush.bf16.msra.mxu0 %v5596
      %8051 = vmatpush.bf16.msra.mxu0 %v5588
      %8052 = vmatpush.bf16.msra.mxu0 %v5580
      %8053 = vmatmul.bf16.gmra.mxu0 %v1195
      %v8054 = vpop.f32.mrf.mxu0
      %v8055 = vadd.f32 %v8042, %v8054
      %v8056 = vpop.f32.mrf.mxu0
      %8057 = vdwg.mxu0
      %8058 = vmatpush.bf16.msra.mxu0 %v5700
      %8059 = vmatpush.bf16.msra.mxu0 %v5692
      %8060 = vmatpush.bf16.msra.mxu0 %v5684
      %8061 = vmatpush.bf16.msra.mxu0 %v5676
      %8062 = vmatpush.bf16.msra.mxu0 %v5668
      %8063 = vmatpush.bf16.msra.mxu0 %v5660
      %8064 = vmatpush.bf16.msra.mxu0 %v5652
      %8065 = vmatpush.bf16.msra.mxu0 %v5644
      %8066 = vmatmul.bf16.gmra.mxu0 %v1196
      %v8067 = vpop.f32.mrf.mxu0
      %v8068 = vadd.f32 %v8055, %v8067
      %v8069 = vpop.f32.mrf.mxu0
      %8070 = vdwg.mxu0
      %8071 = vmatpush.bf16.msra.mxu0 %v5764
      %8072 = vmatpush.bf16.msra.mxu0 %v5756
      %8073 = vmatpush.bf16.msra.mxu0 %v5748
      %8074 = vmatpush.bf16.msra.mxu0 %v5740
      %8075 = vmatpush.bf16.msra.mxu0 %v5732
      %8076 = vmatpush.bf16.msra.mxu0 %v5724
      %8077 = vmatpush.bf16.msra.mxu0 %v5716
      %8078 = vmatpush.bf16.msra.mxu0 %v5708
      %8079 = vmatmul.bf16.gmra.mxu0 %v1197
      %v8080 = vpop.f32.mrf.mxu0
      %v8081 = vadd.f32 %v8068, %v8080
      %v8082 = vpop.f32.mrf.mxu0
      %8083 = vdwg.mxu0
      %8084 = vmatpush.bf16.msra.mxu0 %v5828
      %8085 = vmatpush.bf16.msra.mxu0 %v5820
      %8086 = vmatpush.bf16.msra.mxu0 %v5812
      %8087 = vmatpush.bf16.msra.mxu0 %v5804
      %8088 = vmatpush.bf16.msra.mxu0 %v5796
      %8089 = vmatpush.bf16.msra.mxu0 %v5788
      %8090 = vmatpush.bf16.msra.mxu0 %v5780
      %8091 = vmatpush.bf16.msra.mxu0 %v5772
      %8092 = vmatmul.bf16.gmra.mxu0 %v1198
      %v8093 = vpop.f32.mrf.mxu0
      %v8094 = vadd.f32 %v8081, %v8093
      %v8095 = vpop.f32.mrf.mxu0
      %8096 = vdwg.mxu0
      %8097 = vmatpush.bf16.msra.mxu0 %v5892
      %8098 = vmatpush.bf16.msra.mxu0 %v5884
      %8099 = vmatpush.bf16.msra.mxu0 %v5876
      %8100 = vmatpush.bf16.msra.mxu0 %v5868
      %8101 = vmatpush.bf16.msra.mxu0 %v5860
      %8102 = vmatpush.bf16.msra.mxu0 %v5852
      %8103 = vmatpush.bf16.msra.mxu0 %v5844
      %8104 = vmatpush.bf16.msra.mxu0 %v5836
      %8105 = vmatmul.bf16.gmra.mxu0 %v1199
      %v8106 = vpop.f32.mrf.mxu0
      %v8107 = vadd.f32 %v8094, %v8106
      %v8108 = vpop.f32.mrf.mxu0
      %8109 = vdwg.mxu0
      %8110 = vmatpush.bf16.msra.mxu0 %v5956
      %8111 = vmatpush.bf16.msra.mxu0 %v5948
      %8112 = vmatpush.bf16.msra.mxu0 %v5940
      %8113 = vmatpush.bf16.msra.mxu0 %v5932
      %8114 = vmatpush.bf16.msra.mxu0 %v5924
      %8115 = vmatpush.bf16.msra.mxu0 %v5916
      %8116 = vmatpush.bf16.msra.mxu0 %v5908
      %8117 = vmatpush.bf16.msra.mxu0 %v5900
      %8118 = vmatmul.bf16.gmra.mxu0 %v1200
      %v8119 = vpop.f32.mrf.mxu0
      %v8120 = vadd.f32 %v8107, %v8119
      %v8121 = vpop.f32.mrf.mxu0
      %8122 = vdwg.mxu0
      %8123 = vmatpush.bf16.msra.mxu0 %v6020
      %8124 = vmatpush.bf16.msra.mxu0 %v6012
      %8125 = vmatpush.bf16.msra.mxu0 %v6004
      %8126 = vmatpush.bf16.msra.mxu0 %v5996
      %8127 = vmatpush.bf16.msra.mxu0 %v5988
      %8128 = vmatpush.bf16.msra.mxu0 %v5980
      %8129 = vmatpush.bf16.msra.mxu0 %v5972
      %8130 = vmatpush.bf16.msra.mxu0 %v5964
      %8131 = vmatmul.bf16.gmra.mxu0 %v1201
      %v8132 = vpop.f32.mrf.mxu0
      %v8133 = vadd.f32 %v8120, %v8132
      %v8134 = vpop.f32.mrf.mxu0
      %8135 = vdwg.mxu0
      %8136 = vmatpush.bf16.msra.mxu0 %v6084
      %8137 = vmatpush.bf16.msra.mxu0 %v6076
      %8138 = vmatpush.bf16.msra.mxu0 %v6068
      %8139 = vmatpush.bf16.msra.mxu0 %v6060
      %8140 = vmatpush.bf16.msra.mxu0 %v6052
      %8141 = vmatpush.bf16.msra.mxu0 %v6044
      %8142 = vmatpush.bf16.msra.mxu0 %v6036
      %8143 = vmatpush.bf16.msra.mxu0 %v6028
      %8144 = vmatmul.bf16.gmra.mxu0 %v1202
      %v8145 = vpop.f32.mrf.mxu0
      %v8146 = vadd.f32 %v8133, %v8145
      %v8147 = vpop.f32.mrf.mxu0
      %8148 = vdwg.mxu0
      %8149 = vmatpush.bf16.msra.mxu0 %v6148
      %8150 = vmatpush.bf16.msra.mxu0 %v6140
      %8151 = vmatpush.bf16.msra.mxu0 %v6132
      %8152 = vmatpush.bf16.msra.mxu0 %v6124
      %8153 = vmatpush.bf16.msra.mxu0 %v6116
      %8154 = vmatpush.bf16.msra.mxu0 %v6108
      %8155 = vmatpush.bf16.msra.mxu0 %v6100
      %8156 = vmatpush.bf16.msra.mxu0 %v6092
      %8157 = vmatmul.bf16.gmra.mxu0 %v1203
      %v8158 = vpop.f32.mrf.mxu0
      %v8159 = vadd.f32 %v8146, %v8158
      %v8160 = vpop.f32.mrf.mxu0
      %8161 = vdwg.mxu0
      %8162 = vmatpush.bf16.msra.mxu0 %v6212
      %8163 = vmatpush.bf16.msra.mxu0 %v6204
      %8164 = vmatpush.bf16.msra.mxu0 %v6196
      %8165 = vmatpush.bf16.msra.mxu0 %v6188
      %8166 = vmatpush.bf16.msra.mxu0 %v6180
      %8167 = vmatpush.bf16.msra.mxu0 %v6172
      %8168 = vmatpush.bf16.msra.mxu0 %v6164
      %8169 = vmatpush.bf16.msra.mxu0 %v6156
      %8170 = vmatmul.bf16.gmra.mxu0 %v1204
      %v8171 = vpop.f32.mrf.mxu0
      %v8172 = vadd.f32 %v8159, %v8171
      %v8173 = vpop.f32.mrf.mxu0
      %8174 = vdwg.mxu0
      %8175 = vmatpush.bf16.msra.mxu0 %v6276
      %8176 = vmatpush.bf16.msra.mxu0 %v6268
      %8177 = vmatpush.bf16.msra.mxu0 %v6260
      %8178 = vmatpush.bf16.msra.mxu0 %v6252
      %8179 = vmatpush.bf16.msra.mxu0 %v6244
      %8180 = vmatpush.bf16.msra.mxu0 %v6236
      %8181 = vmatpush.bf16.msra.mxu0 %v6228
      %8182 = vmatpush.bf16.msra.mxu0 %v6220
      %8183 = vmatmul.bf16.gmra.mxu0 %v1205
      %v8184 = vpop.f32.mrf.mxu0
      %v8185 = vadd.f32 %v8172, %v8184
      %v8186 = vpop.f32.mrf.mxu0
      %8187 = vdwg.mxu0
      %8188 = vmatpush.bf16.msra.mxu0 %v6340
      %8189 = vmatpush.bf16.msra.mxu0 %v6332
      %8190 = vmatpush.bf16.msra.mxu0 %v6324
      %8191 = vmatpush.bf16.msra.mxu0 %v6316
      %8192 = vmatpush.bf16.msra.mxu0 %v6308
      %8193 = vmatpush.bf16.msra.mxu0 %v6300
      %8194 = vmatpush.bf16.msra.mxu0 %v6292
      %8195 = vmatpush.bf16.msra.mxu0 %v6284
      %8196 = vmatmul.bf16.gmra.mxu0 %v1206
      %v8197 = vpop.f32.mrf.mxu0
      %v8198 = vadd.f32 %v8185, %v8197
      %v8199 = vpop.f32.mrf.mxu0
      %8200 = vdwg.mxu0
      %8201 = vmatpush.bf16.msra.mxu0 %v5381
      %8202 = vmatpush.bf16.msra.mxu0 %v5373
      %8203 = vmatpush.bf16.msra.mxu0 %v5365
      %8204 = vmatpush.bf16.msra.mxu0 %v5357
      %8205 = vmatpush.bf16.msra.mxu0 %v5349
      %8206 = vmatpush.bf16.msra.mxu0 %v5341
      %8207 = vmatpush.bf16.msra.mxu0 %v5333
      %8208 = vmatpush.bf16.msra.mxu0 %v5325
      %8209 = vmatmul.bf16.gmra.mxu0 %v1191
      %v8210 = vpop.f32.mrf.mxu0
      %v8211 = vadd.f32 %v2237, %v8210
      %v8212 = vpop.f32.mrf.mxu0
      %8213 = vdwg.mxu0
      %8214 = vmatpush.bf16.msra.mxu0 %v5445
      %8215 = vmatpush.bf16.msra.mxu0 %v5437
      %8216 = vmatpush.bf16.msra.mxu0 %v5429
      %8217 = vmatpush.bf16.msra.mxu0 %v5421
      %8218 = vmatpush.bf16.msra.mxu0 %v5413
      %8219 = vmatpush.bf16.msra.mxu0 %v5405
      %8220 = vmatpush.bf16.msra.mxu0 %v5397
      %8221 = vmatpush.bf16.msra.mxu0 %v5389
      %8222 = vmatmul.bf16.gmra.mxu0 %v1192
      %v8223 = vpop.f32.mrf.mxu0
      %v8224 = vadd.f32 %v8211, %v8223
      %v8225 = vpop.f32.mrf.mxu0
      %8226 = vdwg.mxu0
      %8227 = vmatpush.bf16.msra.mxu0 %v5509
      %8228 = vmatpush.bf16.msra.mxu0 %v5501
      %8229 = vmatpush.bf16.msra.mxu0 %v5493
      %8230 = vmatpush.bf16.msra.mxu0 %v5485
      %8231 = vmatpush.bf16.msra.mxu0 %v5477
      %8232 = vmatpush.bf16.msra.mxu0 %v5469
      %8233 = vmatpush.bf16.msra.mxu0 %v5461
      %8234 = vmatpush.bf16.msra.mxu0 %v5453
      %8235 = vmatmul.bf16.gmra.mxu0 %v1193
      %v8236 = vpop.f32.mrf.mxu0
      %v8237 = vadd.f32 %v8224, %v8236
      %v8238 = vpop.f32.mrf.mxu0
      %8239 = vdwg.mxu0
      %8240 = vmatpush.bf16.msra.mxu0 %v5573
      %8241 = vmatpush.bf16.msra.mxu0 %v5565
      %8242 = vmatpush.bf16.msra.mxu0 %v5557
      %8243 = vmatpush.bf16.msra.mxu0 %v5549
      %8244 = vmatpush.bf16.msra.mxu0 %v5541
      %8245 = vmatpush.bf16.msra.mxu0 %v5533
      %8246 = vmatpush.bf16.msra.mxu0 %v5525
      %8247 = vmatpush.bf16.msra.mxu0 %v5517
      %8248 = vmatmul.bf16.gmra.mxu0 %v1194
      %v8249 = vpop.f32.mrf.mxu0
      %v8250 = vadd.f32 %v8237, %v8249
      %v8251 = vpop.f32.mrf.mxu0
      %8252 = vdwg.mxu0
      %8253 = vmatpush.bf16.msra.mxu0 %v5637
      %8254 = vmatpush.bf16.msra.mxu0 %v5629
      %8255 = vmatpush.bf16.msra.mxu0 %v5621
      %8256 = vmatpush.bf16.msra.mxu0 %v5613
      %8257 = vmatpush.bf16.msra.mxu0 %v5605
      %8258 = vmatpush.bf16.msra.mxu0 %v5597
      %8259 = vmatpush.bf16.msra.mxu0 %v5589
      %8260 = vmatpush.bf16.msra.mxu0 %v5581
      %8261 = vmatmul.bf16.gmra.mxu0 %v1195
      %v8262 = vpop.f32.mrf.mxu0
      %v8263 = vadd.f32 %v8250, %v8262
      %v8264 = vpop.f32.mrf.mxu0
      %8265 = vdwg.mxu0
      %8266 = vmatpush.bf16.msra.mxu0 %v5701
      %8267 = vmatpush.bf16.msra.mxu0 %v5693
      %8268 = vmatpush.bf16.msra.mxu0 %v5685
      %8269 = vmatpush.bf16.msra.mxu0 %v5677
      %8270 = vmatpush.bf16.msra.mxu0 %v5669
      %8271 = vmatpush.bf16.msra.mxu0 %v5661
      %8272 = vmatpush.bf16.msra.mxu0 %v5653
      %8273 = vmatpush.bf16.msra.mxu0 %v5645
      %8274 = vmatmul.bf16.gmra.mxu0 %v1196
      %v8275 = vpop.f32.mrf.mxu0
      %v8276 = vadd.f32 %v8263, %v8275
      %v8277 = vpop.f32.mrf.mxu0
      %8278 = vdwg.mxu0
      %8279 = vmatpush.bf16.msra.mxu0 %v5765
      %8280 = vmatpush.bf16.msra.mxu0 %v5757
      %8281 = vmatpush.bf16.msra.mxu0 %v5749
      %8282 = vmatpush.bf16.msra.mxu0 %v5741
      %8283 = vmatpush.bf16.msra.mxu0 %v5733
      %8284 = vmatpush.bf16.msra.mxu0 %v5725
      %8285 = vmatpush.bf16.msra.mxu0 %v5717
      %8286 = vmatpush.bf16.msra.mxu0 %v5709
      %8287 = vmatmul.bf16.gmra.mxu0 %v1197
      %v8288 = vpop.f32.mrf.mxu0
      %v8289 = vadd.f32 %v8276, %v8288
      %v8290 = vpop.f32.mrf.mxu0
      %8291 = vdwg.mxu0
      %8292 = vmatpush.bf16.msra.mxu0 %v5829
      %8293 = vmatpush.bf16.msra.mxu0 %v5821
      %8294 = vmatpush.bf16.msra.mxu0 %v5813
      %8295 = vmatpush.bf16.msra.mxu0 %v5805
      %8296 = vmatpush.bf16.msra.mxu0 %v5797
      %8297 = vmatpush.bf16.msra.mxu0 %v5789
      %8298 = vmatpush.bf16.msra.mxu0 %v5781
      %8299 = vmatpush.bf16.msra.mxu0 %v5773
      %8300 = vmatmul.bf16.gmra.mxu0 %v1198
      %v8301 = vpop.f32.mrf.mxu0
      %v8302 = vadd.f32 %v8289, %v8301
      %v8303 = vpop.f32.mrf.mxu0
      %8304 = vdwg.mxu0
      %8305 = vmatpush.bf16.msra.mxu0 %v5893
      %8306 = vmatpush.bf16.msra.mxu0 %v5885
      %8307 = vmatpush.bf16.msra.mxu0 %v5877
      %8308 = vmatpush.bf16.msra.mxu0 %v5869
      %8309 = vmatpush.bf16.msra.mxu0 %v5861
      %8310 = vmatpush.bf16.msra.mxu0 %v5853
      %8311 = vmatpush.bf16.msra.mxu0 %v5845
      %8312 = vmatpush.bf16.msra.mxu0 %v5837
      %8313 = vmatmul.bf16.gmra.mxu0 %v1199
      %v8314 = vpop.f32.mrf.mxu0
      %v8315 = vadd.f32 %v8302, %v8314
      %v8316 = vpop.f32.mrf.mxu0
      %8317 = vdwg.mxu0
      %8318 = vmatpush.bf16.msra.mxu0 %v5957
      %8319 = vmatpush.bf16.msra.mxu0 %v5949
      %8320 = vmatpush.bf16.msra.mxu0 %v5941
      %8321 = vmatpush.bf16.msra.mxu0 %v5933
      %8322 = vmatpush.bf16.msra.mxu0 %v5925
      %8323 = vmatpush.bf16.msra.mxu0 %v5917
      %8324 = vmatpush.bf16.msra.mxu0 %v5909
      %8325 = vmatpush.bf16.msra.mxu0 %v5901
      %8326 = vmatmul.bf16.gmra.mxu0 %v1200
      %v8327 = vpop.f32.mrf.mxu0
      %v8328 = vadd.f32 %v8315, %v8327
      %v8329 = vpop.f32.mrf.mxu0
      %8330 = vdwg.mxu0
      %8331 = vmatpush.bf16.msra.mxu0 %v6021
      %8332 = vmatpush.bf16.msra.mxu0 %v6013
      %8333 = vmatpush.bf16.msra.mxu0 %v6005
      %8334 = vmatpush.bf16.msra.mxu0 %v5997
      %8335 = vmatpush.bf16.msra.mxu0 %v5989
      %8336 = vmatpush.bf16.msra.mxu0 %v5981
      %8337 = vmatpush.bf16.msra.mxu0 %v5973
      %8338 = vmatpush.bf16.msra.mxu0 %v5965
      %8339 = vmatmul.bf16.gmra.mxu0 %v1201
      %v8340 = vpop.f32.mrf.mxu0
      %v8341 = vadd.f32 %v8328, %v8340
      %v8342 = vpop.f32.mrf.mxu0
      %8343 = vdwg.mxu0
      %8344 = vmatpush.bf16.msra.mxu0 %v6085
      %8345 = vmatpush.bf16.msra.mxu0 %v6077
      %8346 = vmatpush.bf16.msra.mxu0 %v6069
      %8347 = vmatpush.bf16.msra.mxu0 %v6061
      %8348 = vmatpush.bf16.msra.mxu0 %v6053
      %8349 = vmatpush.bf16.msra.mxu0 %v6045
      %8350 = vmatpush.bf16.msra.mxu0 %v6037
      %8351 = vmatpush.bf16.msra.mxu0 %v6029
      %8352 = vmatmul.bf16.gmra.mxu0 %v1202
      %v8353 = vpop.f32.mrf.mxu0
      %v8354 = vadd.f32 %v8341, %v8353
      %v8355 = vpop.f32.mrf.mxu0
      %8356 = vdwg.mxu0
      %8357 = vmatpush.bf16.msra.mxu0 %v6149
      %8358 = vmatpush.bf16.msra.mxu0 %v6141
      %8359 = vmatpush.bf16.msra.mxu0 %v6133
      %8360 = vmatpush.bf16.msra.mxu0 %v6125
      %8361 = vmatpush.bf16.msra.mxu0 %v6117
      %8362 = vmatpush.bf16.msra.mxu0 %v6109
      %8363 = vmatpush.bf16.msra.mxu0 %v6101
      %8364 = vmatpush.bf16.msra.mxu0 %v6093
      %8365 = vmatmul.bf16.gmra.mxu0 %v1203
      %v8366 = vpop.f32.mrf.mxu0
      %v8367 = vadd.f32 %v8354, %v8366
      %v8368 = vpop.f32.mrf.mxu0
      %8369 = vdwg.mxu0
      %8370 = vmatpush.bf16.msra.mxu0 %v6213
      %8371 = vmatpush.bf16.msra.mxu0 %v6205
      %8372 = vmatpush.bf16.msra.mxu0 %v6197
      %8373 = vmatpush.bf16.msra.mxu0 %v6189
      %8374 = vmatpush.bf16.msra.mxu0 %v6181
      %8375 = vmatpush.bf16.msra.mxu0 %v6173
      %8376 = vmatpush.bf16.msra.mxu0 %v6165
      %8377 = vmatpush.bf16.msra.mxu0 %v6157
      %8378 = vmatmul.bf16.gmra.mxu0 %v1204
      %v8379 = vpop.f32.mrf.mxu0
      %v8380 = vadd.f32 %v8367, %v8379
      %v8381 = vpop.f32.mrf.mxu0
      %8382 = vdwg.mxu0
      %8383 = vmatpush.bf16.msra.mxu0 %v6277
      %8384 = vmatpush.bf16.msra.mxu0 %v6269
      %8385 = vmatpush.bf16.msra.mxu0 %v6261
      %8386 = vmatpush.bf16.msra.mxu0 %v6253
      %8387 = vmatpush.bf16.msra.mxu0 %v6245
      %8388 = vmatpush.bf16.msra.mxu0 %v6237
      %8389 = vmatpush.bf16.msra.mxu0 %v6229
      %8390 = vmatpush.bf16.msra.mxu0 %v6221
      %8391 = vmatmul.bf16.gmra.mxu0 %v1205
      %v8392 = vpop.f32.mrf.mxu0
      %v8393 = vadd.f32 %v8380, %v8392
      %v8394 = vpop.f32.mrf.mxu0
      %8395 = vdwg.mxu0
      %8396 = vmatpush.bf16.msra.mxu0 %v6341
      %8397 = vmatpush.bf16.msra.mxu0 %v6333
      %8398 = vmatpush.bf16.msra.mxu0 %v6325
      %8399 = vmatpush.bf16.msra.mxu0 %v6317
      %8400 = vmatpush.bf16.msra.mxu0 %v6309
      %8401 = vmatpush.bf16.msra.mxu0 %v6301
      %8402 = vmatpush.bf16.msra.mxu0 %v6293
      %8403 = vmatpush.bf16.msra.mxu0 %v6285
      %8404 = vmatmul.bf16.gmra.mxu0 %v1206
      %v8405 = vpop.f32.mrf.mxu0
      %v8406 = vadd.f32 %v8393, %v8405
      %v8407 = vpop.f32.mrf.mxu0
      %8408 = vdwg.mxu0
      %8409 = vmatpush.bf16.msra.mxu0 %v5382
      %8410 = vmatpush.bf16.msra.mxu0 %v5374
      %8411 = vmatpush.bf16.msra.mxu0 %v5366
      %8412 = vmatpush.bf16.msra.mxu0 %v5358
      %8413 = vmatpush.bf16.msra.mxu0 %v5350
      %8414 = vmatpush.bf16.msra.mxu0 %v5342
      %8415 = vmatpush.bf16.msra.mxu0 %v5334
      %8416 = vmatpush.bf16.msra.mxu0 %v5326
      %8417 = vmatmul.bf16.gmra.mxu0 %v1191
      %v8418 = vpop.f32.mrf.mxu0
      %v8419 = vadd.f32 %v2238, %v8418
      %v8420 = vpop.f32.mrf.mxu0
      %8421 = vdwg.mxu0
      %8422 = vmatpush.bf16.msra.mxu0 %v5446
      %8423 = vmatpush.bf16.msra.mxu0 %v5438
      %8424 = vmatpush.bf16.msra.mxu0 %v5430
      %8425 = vmatpush.bf16.msra.mxu0 %v5422
      %8426 = vmatpush.bf16.msra.mxu0 %v5414
      %8427 = vmatpush.bf16.msra.mxu0 %v5406
      %8428 = vmatpush.bf16.msra.mxu0 %v5398
      %8429 = vmatpush.bf16.msra.mxu0 %v5390
      %8430 = vmatmul.bf16.gmra.mxu0 %v1192
      %v8431 = vpop.f32.mrf.mxu0
      %v8432 = vadd.f32 %v8419, %v8431
      %v8433 = vpop.f32.mrf.mxu0
      %8434 = vdwg.mxu0
      %8435 = vmatpush.bf16.msra.mxu0 %v5510
      %8436 = vmatpush.bf16.msra.mxu0 %v5502
      %8437 = vmatpush.bf16.msra.mxu0 %v5494
      %8438 = vmatpush.bf16.msra.mxu0 %v5486
      %8439 = vmatpush.bf16.msra.mxu0 %v5478
      %8440 = vmatpush.bf16.msra.mxu0 %v5470
      %8441 = vmatpush.bf16.msra.mxu0 %v5462
      %8442 = vmatpush.bf16.msra.mxu0 %v5454
      %8443 = vmatmul.bf16.gmra.mxu0 %v1193
      %v8444 = vpop.f32.mrf.mxu0
      %v8445 = vadd.f32 %v8432, %v8444
      %v8446 = vpop.f32.mrf.mxu0
      %8447 = vdwg.mxu0
      %8448 = vmatpush.bf16.msra.mxu0 %v5574
      %8449 = vmatpush.bf16.msra.mxu0 %v5566
      %8450 = vmatpush.bf16.msra.mxu0 %v5558
      %8451 = vmatpush.bf16.msra.mxu0 %v5550
      %8452 = vmatpush.bf16.msra.mxu0 %v5542
      %8453 = vmatpush.bf16.msra.mxu0 %v5534
      %8454 = vmatpush.bf16.msra.mxu0 %v5526
      %8455 = vmatpush.bf16.msra.mxu0 %v5518
      %8456 = vmatmul.bf16.gmra.mxu0 %v1194
      %v8457 = vpop.f32.mrf.mxu0
      %v8458 = vadd.f32 %v8445, %v8457
      %v8459 = vpop.f32.mrf.mxu0
      %8460 = vdwg.mxu0
      %8461 = vmatpush.bf16.msra.mxu0 %v5638
      %8462 = vmatpush.bf16.msra.mxu0 %v5630
      %8463 = vmatpush.bf16.msra.mxu0 %v5622
      %8464 = vmatpush.bf16.msra.mxu0 %v5614
      %8465 = vmatpush.bf16.msra.mxu0 %v5606
      %8466 = vmatpush.bf16.msra.mxu0 %v5598
      %8467 = vmatpush.bf16.msra.mxu0 %v5590
      %8468 = vmatpush.bf16.msra.mxu0 %v5582
      %8469 = vmatmul.bf16.gmra.mxu0 %v1195
      %v8470 = vpop.f32.mrf.mxu0
      %v8471 = vadd.f32 %v8458, %v8470
      %v8472 = vpop.f32.mrf.mxu0
      %8473 = vdwg.mxu0
      %8474 = vmatpush.bf16.msra.mxu0 %v5702
      %8475 = vmatpush.bf16.msra.mxu0 %v5694
      %8476 = vmatpush.bf16.msra.mxu0 %v5686
      %8477 = vmatpush.bf16.msra.mxu0 %v5678
      %8478 = vmatpush.bf16.msra.mxu0 %v5670
      %8479 = vmatpush.bf16.msra.mxu0 %v5662
      %8480 = vmatpush.bf16.msra.mxu0 %v5654
      %8481 = vmatpush.bf16.msra.mxu0 %v5646
      %8482 = vmatmul.bf16.gmra.mxu0 %v1196
      %v8483 = vpop.f32.mrf.mxu0
      %v8484 = vadd.f32 %v8471, %v8483
      %v8485 = vpop.f32.mrf.mxu0
      %8486 = vdwg.mxu0
      %8487 = vmatpush.bf16.msra.mxu0 %v5766
      %8488 = vmatpush.bf16.msra.mxu0 %v5758
      %8489 = vmatpush.bf16.msra.mxu0 %v5750
      %8490 = vmatpush.bf16.msra.mxu0 %v5742
      %8491 = vmatpush.bf16.msra.mxu0 %v5734
      %8492 = vmatpush.bf16.msra.mxu0 %v5726
      %8493 = vmatpush.bf16.msra.mxu0 %v5718
      %8494 = vmatpush.bf16.msra.mxu0 %v5710
      %8495 = vmatmul.bf16.gmra.mxu0 %v1197
      %v8496 = vpop.f32.mrf.mxu0
      %v8497 = vadd.f32 %v8484, %v8496
      %v8498 = vpop.f32.mrf.mxu0
      %8499 = vdwg.mxu0
      %8500 = vmatpush.bf16.msra.mxu0 %v5830
      %8501 = vmatpush.bf16.msra.mxu0 %v5822
      %8502 = vmatpush.bf16.msra.mxu0 %v5814
      %8503 = vmatpush.bf16.msra.mxu0 %v5806
      %8504 = vmatpush.bf16.msra.mxu0 %v5798
      %8505 = vmatpush.bf16.msra.mxu0 %v5790
      %8506 = vmatpush.bf16.msra.mxu0 %v5782
      %8507 = vmatpush.bf16.msra.mxu0 %v5774
      %8508 = vmatmul.bf16.gmra.mxu0 %v1198
      %v8509 = vpop.f32.mrf.mxu0
      %v8510 = vadd.f32 %v8497, %v8509
      %v8511 = vpop.f32.mrf.mxu0
      %8512 = vdwg.mxu0
      %8513 = vmatpush.bf16.msra.mxu0 %v5894
      %8514 = vmatpush.bf16.msra.mxu0 %v5886
      %8515 = vmatpush.bf16.msra.mxu0 %v5878
      %8516 = vmatpush.bf16.msra.mxu0 %v5870
      %8517 = vmatpush.bf16.msra.mxu0 %v5862
      %8518 = vmatpush.bf16.msra.mxu0 %v5854
      %8519 = vmatpush.bf16.msra.mxu0 %v5846
      %8520 = vmatpush.bf16.msra.mxu0 %v5838
      %8521 = vmatmul.bf16.gmra.mxu0 %v1199
      %v8522 = vpop.f32.mrf.mxu0
      %v8523 = vadd.f32 %v8510, %v8522
      %v8524 = vpop.f32.mrf.mxu0
      %8525 = vdwg.mxu0
      %8526 = vmatpush.bf16.msra.mxu0 %v5958
      %8527 = vmatpush.bf16.msra.mxu0 %v5950
      %8528 = vmatpush.bf16.msra.mxu0 %v5942
      %8529 = vmatpush.bf16.msra.mxu0 %v5934
      %8530 = vmatpush.bf16.msra.mxu0 %v5926
      %8531 = vmatpush.bf16.msra.mxu0 %v5918
      %8532 = vmatpush.bf16.msra.mxu0 %v5910
      %8533 = vmatpush.bf16.msra.mxu0 %v5902
      %8534 = vmatmul.bf16.gmra.mxu0 %v1200
      %v8535 = vpop.f32.mrf.mxu0
      %v8536 = vadd.f32 %v8523, %v8535
      %v8537 = vpop.f32.mrf.mxu0
      %8538 = vdwg.mxu0
      %8539 = vmatpush.bf16.msra.mxu0 %v6022
      %8540 = vmatpush.bf16.msra.mxu0 %v6014
      %8541 = vmatpush.bf16.msra.mxu0 %v6006
      %8542 = vmatpush.bf16.msra.mxu0 %v5998
      %8543 = vmatpush.bf16.msra.mxu0 %v5990
      %8544 = vmatpush.bf16.msra.mxu0 %v5982
      %8545 = vmatpush.bf16.msra.mxu0 %v5974
      %8546 = vmatpush.bf16.msra.mxu0 %v5966
      %8547 = vmatmul.bf16.gmra.mxu0 %v1201
      %v8548 = vpop.f32.mrf.mxu0
      %v8549 = vadd.f32 %v8536, %v8548
      %v8550 = vpop.f32.mrf.mxu0
      %8551 = vdwg.mxu0
      %8552 = vmatpush.bf16.msra.mxu0 %v6086
      %8553 = vmatpush.bf16.msra.mxu0 %v6078
      %8554 = vmatpush.bf16.msra.mxu0 %v6070
      %8555 = vmatpush.bf16.msra.mxu0 %v6062
      %8556 = vmatpush.bf16.msra.mxu0 %v6054
      %8557 = vmatpush.bf16.msra.mxu0 %v6046
      %8558 = vmatpush.bf16.msra.mxu0 %v6038
      %8559 = vmatpush.bf16.msra.mxu0 %v6030
      %8560 = vmatmul.bf16.gmra.mxu0 %v1202
      %v8561 = vpop.f32.mrf.mxu0
      %v8562 = vadd.f32 %v8549, %v8561
      %v8563 = vpop.f32.mrf.mxu0
      %8564 = vdwg.mxu0
      %8565 = vmatpush.bf16.msra.mxu0 %v6150
      %8566 = vmatpush.bf16.msra.mxu0 %v6142
      %8567 = vmatpush.bf16.msra.mxu0 %v6134
      %8568 = vmatpush.bf16.msra.mxu0 %v6126
      %8569 = vmatpush.bf16.msra.mxu0 %v6118
      %8570 = vmatpush.bf16.msra.mxu0 %v6110
      %8571 = vmatpush.bf16.msra.mxu0 %v6102
      %8572 = vmatpush.bf16.msra.mxu0 %v6094
      %8573 = vmatmul.bf16.gmra.mxu0 %v1203
      %v8574 = vpop.f32.mrf.mxu0
      %v8575 = vadd.f32 %v8562, %v8574
      %v8576 = vpop.f32.mrf.mxu0
      %8577 = vdwg.mxu0
      %8578 = vmatpush.bf16.msra.mxu0 %v6214
      %8579 = vmatpush.bf16.msra.mxu0 %v6206
      %8580 = vmatpush.bf16.msra.mxu0 %v6198
      %8581 = vmatpush.bf16.msra.mxu0 %v6190
      %8582 = vmatpush.bf16.msra.mxu0 %v6182
      %8583 = vmatpush.bf16.msra.mxu0 %v6174
      %8584 = vmatpush.bf16.msra.mxu0 %v6166
      %8585 = vmatpush.bf16.msra.mxu0 %v6158
      %8586 = vmatmul.bf16.gmra.mxu0 %v1204
      %v8587 = vpop.f32.mrf.mxu0
      %v8588 = vadd.f32 %v8575, %v8587
      %v8589 = vpop.f32.mrf.mxu0
      %8590 = vdwg.mxu0
      %8591 = vmatpush.bf16.msra.mxu0 %v6278
      %8592 = vmatpush.bf16.msra.mxu0 %v6270
      %8593 = vmatpush.bf16.msra.mxu0 %v6262
      %8594 = vmatpush.bf16.msra.mxu0 %v6254
      %8595 = vmatpush.bf16.msra.mxu0 %v6246
      %8596 = vmatpush.bf16.msra.mxu0 %v6238
      %8597 = vmatpush.bf16.msra.mxu0 %v6230
      %8598 = vmatpush.bf16.msra.mxu0 %v6222
      %8599 = vmatmul.bf16.gmra.mxu0 %v1205
      %v8600 = vpop.f32.mrf.mxu0
      %v8601 = vadd.f32 %v8588, %v8600
      %v8602 = vpop.f32.mrf.mxu0
      %8603 = vdwg.mxu0
      %8604 = vmatpush.bf16.msra.mxu0 %v6342
      %8605 = vmatpush.bf16.msra.mxu0 %v6334
      %8606 = vmatpush.bf16.msra.mxu0 %v6326
      %8607 = vmatpush.bf16.msra.mxu0 %v6318
      %8608 = vmatpush.bf16.msra.mxu0 %v6310
      %8609 = vmatpush.bf16.msra.mxu0 %v6302
      %8610 = vmatpush.bf16.msra.mxu0 %v6294
      %8611 = vmatpush.bf16.msra.mxu0 %v6286
      %8612 = vmatmul.bf16.gmra.mxu0 %v1206
      %v8613 = vpop.f32.mrf.mxu0
      %v8614 = vadd.f32 %v8601, %v8613
      %v8615 = vpop.f32.mrf.mxu0
      %8616 = vdwg.mxu0
      %8617 = vmatpush.bf16.msra.mxu0 %v5383
      %8618 = vmatpush.bf16.msra.mxu0 %v5375
      %8619 = vmatpush.bf16.msra.mxu0 %v5367
      %8620 = vmatpush.bf16.msra.mxu0 %v5359
      %8621 = vmatpush.bf16.msra.mxu0 %v5351
      %8622 = vmatpush.bf16.msra.mxu0 %v5343
      %8623 = vmatpush.bf16.msra.mxu0 %v5335
      %8624 = vmatpush.bf16.msra.mxu0 %v5327
      %8625 = vmatmul.bf16.gmra.mxu0 %v1191
      %v8626 = vpop.f32.mrf.mxu0
      %v8627 = vadd.f32 %v2239, %v8626
      %v8628 = vpop.f32.mrf.mxu0
      %8629 = vdwg.mxu0
      %8630 = vmatpush.bf16.msra.mxu0 %v5447
      %8631 = vmatpush.bf16.msra.mxu0 %v5439
      %8632 = vmatpush.bf16.msra.mxu0 %v5431
      %8633 = vmatpush.bf16.msra.mxu0 %v5423
      %8634 = vmatpush.bf16.msra.mxu0 %v5415
      %8635 = vmatpush.bf16.msra.mxu0 %v5407
      %8636 = vmatpush.bf16.msra.mxu0 %v5399
      %8637 = vmatpush.bf16.msra.mxu0 %v5391
      %8638 = vmatmul.bf16.gmra.mxu0 %v1192
      %v8639 = vpop.f32.mrf.mxu0
      %v8640 = vadd.f32 %v8627, %v8639
      %v8641 = vpop.f32.mrf.mxu0
      %8642 = vdwg.mxu0
      %8643 = vmatpush.bf16.msra.mxu0 %v5511
      %8644 = vmatpush.bf16.msra.mxu0 %v5503
      %8645 = vmatpush.bf16.msra.mxu0 %v5495
      %8646 = vmatpush.bf16.msra.mxu0 %v5487
      %8647 = vmatpush.bf16.msra.mxu0 %v5479
      %8648 = vmatpush.bf16.msra.mxu0 %v5471
      %8649 = vmatpush.bf16.msra.mxu0 %v5463
      %8650 = vmatpush.bf16.msra.mxu0 %v5455
      %8651 = vmatmul.bf16.gmra.mxu0 %v1193
      %v8652 = vpop.f32.mrf.mxu0
      %v8653 = vadd.f32 %v8640, %v8652
      %v8654 = vpop.f32.mrf.mxu0
      %8655 = vdwg.mxu0
      %8656 = vmatpush.bf16.msra.mxu0 %v5575
      %8657 = vmatpush.bf16.msra.mxu0 %v5567
      %8658 = vmatpush.bf16.msra.mxu0 %v5559
      %8659 = vmatpush.bf16.msra.mxu0 %v5551
      %8660 = vmatpush.bf16.msra.mxu0 %v5543
      %8661 = vmatpush.bf16.msra.mxu0 %v5535
      %8662 = vmatpush.bf16.msra.mxu0 %v5527
      %8663 = vmatpush.bf16.msra.mxu0 %v5519
      %8664 = vmatmul.bf16.gmra.mxu0 %v1194
      %v8665 = vpop.f32.mrf.mxu0
      %v8666 = vadd.f32 %v8653, %v8665
      %v8667 = vpop.f32.mrf.mxu0
      %8668 = vdwg.mxu0
      %8669 = vmatpush.bf16.msra.mxu0 %v5639
      %8670 = vmatpush.bf16.msra.mxu0 %v5631
      %8671 = vmatpush.bf16.msra.mxu0 %v5623
      %8672 = vmatpush.bf16.msra.mxu0 %v5615
      %8673 = vmatpush.bf16.msra.mxu0 %v5607
      %8674 = vmatpush.bf16.msra.mxu0 %v5599
      %8675 = vmatpush.bf16.msra.mxu0 %v5591
      %8676 = vmatpush.bf16.msra.mxu0 %v5583
      %8677 = vmatmul.bf16.gmra.mxu0 %v1195
      %v8678 = vpop.f32.mrf.mxu0
      %v8679 = vadd.f32 %v8666, %v8678
      %v8680 = vpop.f32.mrf.mxu0
      %8681 = vdwg.mxu0
      %8682 = vmatpush.bf16.msra.mxu0 %v5703
      %8683 = vmatpush.bf16.msra.mxu0 %v5695
      %8684 = vmatpush.bf16.msra.mxu0 %v5687
      %8685 = vmatpush.bf16.msra.mxu0 %v5679
      %8686 = vmatpush.bf16.msra.mxu0 %v5671
      %8687 = vmatpush.bf16.msra.mxu0 %v5663
      %8688 = vmatpush.bf16.msra.mxu0 %v5655
      %8689 = vmatpush.bf16.msra.mxu0 %v5647
      %8690 = vmatmul.bf16.gmra.mxu0 %v1196
      %v8691 = vpop.f32.mrf.mxu0
      %v8692 = vadd.f32 %v8679, %v8691
      %v8693 = vpop.f32.mrf.mxu0
      %8694 = vdwg.mxu0
      %8695 = vmatpush.bf16.msra.mxu0 %v5767
      %8696 = vmatpush.bf16.msra.mxu0 %v5759
      %8697 = vmatpush.bf16.msra.mxu0 %v5751
      %8698 = vmatpush.bf16.msra.mxu0 %v5743
      %8699 = vmatpush.bf16.msra.mxu0 %v5735
      %8700 = vmatpush.bf16.msra.mxu0 %v5727
      %8701 = vmatpush.bf16.msra.mxu0 %v5719
      %8702 = vmatpush.bf16.msra.mxu0 %v5711
      %8703 = vmatmul.bf16.gmra.mxu0 %v1197
      %v8704 = vpop.f32.mrf.mxu0
      %v8705 = vadd.f32 %v8692, %v8704
      %v8706 = vpop.f32.mrf.mxu0
      %8707 = vdwg.mxu0
      %8708 = vmatpush.bf16.msra.mxu0 %v5831
      %8709 = vmatpush.bf16.msra.mxu0 %v5823
      %8710 = vmatpush.bf16.msra.mxu0 %v5815
      %8711 = vmatpush.bf16.msra.mxu0 %v5807
      %8712 = vmatpush.bf16.msra.mxu0 %v5799
      %8713 = vmatpush.bf16.msra.mxu0 %v5791
      %8714 = vmatpush.bf16.msra.mxu0 %v5783
      %8715 = vmatpush.bf16.msra.mxu0 %v5775
      %8716 = vmatmul.bf16.gmra.mxu0 %v1198
      %v8717 = vpop.f32.mrf.mxu0
      %v8718 = vadd.f32 %v8705, %v8717
      %v8719 = vpop.f32.mrf.mxu0
      %8720 = vdwg.mxu0
      %8721 = vmatpush.bf16.msra.mxu0 %v5895
      %8722 = vmatpush.bf16.msra.mxu0 %v5887
      %8723 = vmatpush.bf16.msra.mxu0 %v5879
      %8724 = vmatpush.bf16.msra.mxu0 %v5871
      %8725 = vmatpush.bf16.msra.mxu0 %v5863
      %8726 = vmatpush.bf16.msra.mxu0 %v5855
      %8727 = vmatpush.bf16.msra.mxu0 %v5847
      %8728 = vmatpush.bf16.msra.mxu0 %v5839
      %8729 = vmatmul.bf16.gmra.mxu0 %v1199
      %v8730 = vpop.f32.mrf.mxu0
      %v8731 = vadd.f32 %v8718, %v8730
      %v8732 = vpop.f32.mrf.mxu0
      %8733 = vdwg.mxu0
      %8734 = vmatpush.bf16.msra.mxu0 %v5959
      %8735 = vmatpush.bf16.msra.mxu0 %v5951
      %8736 = vmatpush.bf16.msra.mxu0 %v5943
      %8737 = vmatpush.bf16.msra.mxu0 %v5935
      %8738 = vmatpush.bf16.msra.mxu0 %v5927
      %8739 = vmatpush.bf16.msra.mxu0 %v5919
      %8740 = vmatpush.bf16.msra.mxu0 %v5911
      %8741 = vmatpush.bf16.msra.mxu0 %v5903
      %8742 = vmatmul.bf16.gmra.mxu0 %v1200
      %v8743 = vpop.f32.mrf.mxu0
      %v8744 = vadd.f32 %v8731, %v8743
      %v8745 = vpop.f32.mrf.mxu0
      %8746 = vdwg.mxu0
      %8747 = vmatpush.bf16.msra.mxu0 %v6023
      %8748 = vmatpush.bf16.msra.mxu0 %v6015
      %8749 = vmatpush.bf16.msra.mxu0 %v6007
      %8750 = vmatpush.bf16.msra.mxu0 %v5999
      %8751 = vmatpush.bf16.msra.mxu0 %v5991
      %8752 = vmatpush.bf16.msra.mxu0 %v5983
      %8753 = vmatpush.bf16.msra.mxu0 %v5975
      %8754 = vmatpush.bf16.msra.mxu0 %v5967
      %8755 = vmatmul.bf16.gmra.mxu0 %v1201
      %v8756 = vpop.f32.mrf.mxu0
      %v8757 = vadd.f32 %v8744, %v8756
      %v8758 = vpop.f32.mrf.mxu0
      %8759 = vdwg.mxu0
      %8760 = vmatpush.bf16.msra.mxu0 %v6087
      %8761 = vmatpush.bf16.msra.mxu0 %v6079
      %8762 = vmatpush.bf16.msra.mxu0 %v6071
      %8763 = vmatpush.bf16.msra.mxu0 %v6063
      %8764 = vmatpush.bf16.msra.mxu0 %v6055
      %8765 = vmatpush.bf16.msra.mxu0 %v6047
      %8766 = vmatpush.bf16.msra.mxu0 %v6039
      %8767 = vmatpush.bf16.msra.mxu0 %v6031
      %8768 = vmatmul.bf16.gmra.mxu0 %v1202
      %v8769 = vpop.f32.mrf.mxu0
      %v8770 = vadd.f32 %v8757, %v8769
      %v8771 = vpop.f32.mrf.mxu0
      %8772 = vdwg.mxu0
      %8773 = vmatpush.bf16.msra.mxu0 %v6151
      %8774 = vmatpush.bf16.msra.mxu0 %v6143
      %8775 = vmatpush.bf16.msra.mxu0 %v6135
      %8776 = vmatpush.bf16.msra.mxu0 %v6127
      %8777 = vmatpush.bf16.msra.mxu0 %v6119
      %8778 = vmatpush.bf16.msra.mxu0 %v6111
      %8779 = vmatpush.bf16.msra.mxu0 %v6103
      %8780 = vmatpush.bf16.msra.mxu0 %v6095
      %8781 = vmatmul.bf16.gmra.mxu0 %v1203
      %v8782 = vpop.f32.mrf.mxu0
      %v8783 = vadd.f32 %v8770, %v8782
      %v8784 = vpop.f32.mrf.mxu0
      %8785 = vdwg.mxu0
      %8786 = vmatpush.bf16.msra.mxu0 %v6215
      %8787 = vmatpush.bf16.msra.mxu0 %v6207
      %8788 = vmatpush.bf16.msra.mxu0 %v6199
      %8789 = vmatpush.bf16.msra.mxu0 %v6191
      %8790 = vmatpush.bf16.msra.mxu0 %v6183
      %8791 = vmatpush.bf16.msra.mxu0 %v6175
      %8792 = vmatpush.bf16.msra.mxu0 %v6167
      %8793 = vmatpush.bf16.msra.mxu0 %v6159
      %8794 = vmatmul.bf16.gmra.mxu0 %v1204
      %v8795 = vpop.f32.mrf.mxu0
      %v8796 = vadd.f32 %v8783, %v8795
      %v8797 = vpop.f32.mrf.mxu0
      %8798 = vdwg.mxu0
      %8799 = vmatpush.bf16.msra.mxu0 %v6279
      %8800 = vmatpush.bf16.msra.mxu0 %v6271
      %8801 = vmatpush.bf16.msra.mxu0 %v6263
      %8802 = vmatpush.bf16.msra.mxu0 %v6255
      %8803 = vmatpush.bf16.msra.mxu0 %v6247
      %8804 = vmatpush.bf16.msra.mxu0 %v6239
      %8805 = vmatpush.bf16.msra.mxu0 %v6231
      %8806 = vmatpush.bf16.msra.mxu0 %v6223
      %8807 = vmatmul.bf16.gmra.mxu0 %v1205
      %v8808 = vpop.f32.mrf.mxu0
      %v8809 = vadd.f32 %v8796, %v8808
      %v8810 = vpop.f32.mrf.mxu0
      %8811 = vdwg.mxu0
      %8812 = vmatpush.bf16.msra.mxu0 %v6343
      %8813 = vmatpush.bf16.msra.mxu0 %v6335
      %8814 = vmatpush.bf16.msra.mxu0 %v6327
      %8815 = vmatpush.bf16.msra.mxu0 %v6319
      %8816 = vmatpush.bf16.msra.mxu0 %v6311
      %8817 = vmatpush.bf16.msra.mxu0 %v6303
      %8818 = vmatpush.bf16.msra.mxu0 %v6295
      %8819 = vmatpush.bf16.msra.mxu0 %v6287
      %8820 = vmatmul.bf16.gmra.mxu0 %v1206
      %v8821 = vpop.f32.mrf.mxu0
      %v8822 = vadd.f32 %v8809, %v8821
      %v8823 = vpop.f32.mrf.mxu0
      %8824 = vdwg.mxu0
      %8825 = vmatpush.bf16.msra.mxu0 %v5384
      %8826 = vmatpush.bf16.msra.mxu0 %v5376
      %8827 = vmatpush.bf16.msra.mxu0 %v5368
      %8828 = vmatpush.bf16.msra.mxu0 %v5360
      %8829 = vmatpush.bf16.msra.mxu0 %v5352
      %8830 = vmatpush.bf16.msra.mxu0 %v5344
      %8831 = vmatpush.bf16.msra.mxu0 %v5336
      %8832 = vmatpush.bf16.msra.mxu0 %v5328
      %8833 = vmatmul.bf16.gmra.mxu0 %v1191
      %v8834 = vpop.f32.mrf.mxu0
      %v8835 = vadd.f32 %v2240, %v8834
      %v8836 = vpop.f32.mrf.mxu0
      %8837 = vdwg.mxu0
      %8838 = vmatpush.bf16.msra.mxu0 %v5448
      %8839 = vmatpush.bf16.msra.mxu0 %v5440
      %8840 = vmatpush.bf16.msra.mxu0 %v5432
      %8841 = vmatpush.bf16.msra.mxu0 %v5424
      %8842 = vmatpush.bf16.msra.mxu0 %v5416
      %8843 = vmatpush.bf16.msra.mxu0 %v5408
      %8844 = vmatpush.bf16.msra.mxu0 %v5400
      %8845 = vmatpush.bf16.msra.mxu0 %v5392
      %8846 = vmatmul.bf16.gmra.mxu0 %v1192
      %v8847 = vpop.f32.mrf.mxu0
      %v8848 = vadd.f32 %v8835, %v8847
      %v8849 = vpop.f32.mrf.mxu0
      %8850 = vdwg.mxu0
      %8851 = vmatpush.bf16.msra.mxu0 %v5512
      %8852 = vmatpush.bf16.msra.mxu0 %v5504
      %8853 = vmatpush.bf16.msra.mxu0 %v5496
      %8854 = vmatpush.bf16.msra.mxu0 %v5488
      %8855 = vmatpush.bf16.msra.mxu0 %v5480
      %8856 = vmatpush.bf16.msra.mxu0 %v5472
      %8857 = vmatpush.bf16.msra.mxu0 %v5464
      %8858 = vmatpush.bf16.msra.mxu0 %v5456
      %8859 = vmatmul.bf16.gmra.mxu0 %v1193
      %v8860 = vpop.f32.mrf.mxu0
      %v8861 = vadd.f32 %v8848, %v8860
      %v8862 = vpop.f32.mrf.mxu0
      %8863 = vdwg.mxu0
      %8864 = vmatpush.bf16.msra.mxu0 %v5576
      %8865 = vmatpush.bf16.msra.mxu0 %v5568
      %8866 = vmatpush.bf16.msra.mxu0 %v5560
      %8867 = vmatpush.bf16.msra.mxu0 %v5552
      %8868 = vmatpush.bf16.msra.mxu0 %v5544
      %8869 = vmatpush.bf16.msra.mxu0 %v5536
      %8870 = vmatpush.bf16.msra.mxu0 %v5528
      %8871 = vmatpush.bf16.msra.mxu0 %v5520
      %8872 = vmatmul.bf16.gmra.mxu0 %v1194
      %v8873 = vpop.f32.mrf.mxu0
      %v8874 = vadd.f32 %v8861, %v8873
      %v8875 = vpop.f32.mrf.mxu0
      %8876 = vdwg.mxu0
      %8877 = vmatpush.bf16.msra.mxu0 %v5640
      %8878 = vmatpush.bf16.msra.mxu0 %v5632
      %8879 = vmatpush.bf16.msra.mxu0 %v5624
      %8880 = vmatpush.bf16.msra.mxu0 %v5616
      %8881 = vmatpush.bf16.msra.mxu0 %v5608
      %8882 = vmatpush.bf16.msra.mxu0 %v5600
      %8883 = vmatpush.bf16.msra.mxu0 %v5592
      %8884 = vmatpush.bf16.msra.mxu0 %v5584
      %8885 = vmatmul.bf16.gmra.mxu0 %v1195
      %v8886 = vpop.f32.mrf.mxu0
      %v8887 = vadd.f32 %v8874, %v8886
      %v8888 = vpop.f32.mrf.mxu0
      %8889 = vdwg.mxu0
      %8890 = vmatpush.bf16.msra.mxu0 %v5704
      %8891 = vmatpush.bf16.msra.mxu0 %v5696
      %8892 = vmatpush.bf16.msra.mxu0 %v5688
      %8893 = vmatpush.bf16.msra.mxu0 %v5680
      %8894 = vmatpush.bf16.msra.mxu0 %v5672
      %8895 = vmatpush.bf16.msra.mxu0 %v5664
      %8896 = vmatpush.bf16.msra.mxu0 %v5656
      %8897 = vmatpush.bf16.msra.mxu0 %v5648
      %8898 = vmatmul.bf16.gmra.mxu0 %v1196
      %v8899 = vpop.f32.mrf.mxu0
      %v8900 = vadd.f32 %v8887, %v8899
      %v8901 = vpop.f32.mrf.mxu0
      %8902 = vdwg.mxu0
      %8903 = vmatpush.bf16.msra.mxu0 %v5768
      %8904 = vmatpush.bf16.msra.mxu0 %v5760
      %8905 = vmatpush.bf16.msra.mxu0 %v5752
      %8906 = vmatpush.bf16.msra.mxu0 %v5744
      %8907 = vmatpush.bf16.msra.mxu0 %v5736
      %8908 = vmatpush.bf16.msra.mxu0 %v5728
      %8909 = vmatpush.bf16.msra.mxu0 %v5720
      %8910 = vmatpush.bf16.msra.mxu0 %v5712
      %8911 = vmatmul.bf16.gmra.mxu0 %v1197
      %v8912 = vpop.f32.mrf.mxu0
      %v8913 = vadd.f32 %v8900, %v8912
      %v8914 = vpop.f32.mrf.mxu0
      %8915 = vdwg.mxu0
      %8916 = vmatpush.bf16.msra.mxu0 %v5832
      %8917 = vmatpush.bf16.msra.mxu0 %v5824
      %8918 = vmatpush.bf16.msra.mxu0 %v5816
      %8919 = vmatpush.bf16.msra.mxu0 %v5808
      %8920 = vmatpush.bf16.msra.mxu0 %v5800
      %8921 = vmatpush.bf16.msra.mxu0 %v5792
      %8922 = vmatpush.bf16.msra.mxu0 %v5784
      %8923 = vmatpush.bf16.msra.mxu0 %v5776
      %8924 = vmatmul.bf16.gmra.mxu0 %v1198
      %v8925 = vpop.f32.mrf.mxu0
      %v8926 = vadd.f32 %v8913, %v8925
      %v8927 = vpop.f32.mrf.mxu0
      %8928 = vdwg.mxu0
      %8929 = vmatpush.bf16.msra.mxu0 %v5896
      %8930 = vmatpush.bf16.msra.mxu0 %v5888
      %8931 = vmatpush.bf16.msra.mxu0 %v5880
      %8932 = vmatpush.bf16.msra.mxu0 %v5872
      %8933 = vmatpush.bf16.msra.mxu0 %v5864
      %8934 = vmatpush.bf16.msra.mxu0 %v5856
      %8935 = vmatpush.bf16.msra.mxu0 %v5848
      %8936 = vmatpush.bf16.msra.mxu0 %v5840
      %8937 = vmatmul.bf16.gmra.mxu0 %v1199
      %v8938 = vpop.f32.mrf.mxu0
      %v8939 = vadd.f32 %v8926, %v8938
      %v8940 = vpop.f32.mrf.mxu0
      %8941 = vdwg.mxu0
      %8942 = vmatpush.bf16.msra.mxu0 %v5960
      %8943 = vmatpush.bf16.msra.mxu0 %v5952
      %8944 = vmatpush.bf16.msra.mxu0 %v5944
      %8945 = vmatpush.bf16.msra.mxu0 %v5936
      %8946 = vmatpush.bf16.msra.mxu0 %v5928
      %8947 = vmatpush.bf16.msra.mxu0 %v5920
      %8948 = vmatpush.bf16.msra.mxu0 %v5912
      %8949 = vmatpush.bf16.msra.mxu0 %v5904
      %8950 = vmatmul.bf16.gmra.mxu0 %v1200
      %v8951 = vpop.f32.mrf.mxu0
      %v8952 = vadd.f32 %v8939, %v8951
      %v8953 = vpop.f32.mrf.mxu0
      %8954 = vdwg.mxu0
      %8955 = vmatpush.bf16.msra.mxu0 %v6024
      %8956 = vmatpush.bf16.msra.mxu0 %v6016
      %8957 = vmatpush.bf16.msra.mxu0 %v6008
      %8958 = vmatpush.bf16.msra.mxu0 %v6000
      %8959 = vmatpush.bf16.msra.mxu0 %v5992
      %8960 = vmatpush.bf16.msra.mxu0 %v5984
      %8961 = vmatpush.bf16.msra.mxu0 %v5976
      %8962 = vmatpush.bf16.msra.mxu0 %v5968
      %8963 = vmatmul.bf16.gmra.mxu0 %v1201
      %v8964 = vpop.f32.mrf.mxu0
      %v8965 = vadd.f32 %v8952, %v8964
      %v8966 = vpop.f32.mrf.mxu0
      %8967 = vdwg.mxu0
      %8968 = vmatpush.bf16.msra.mxu0 %v6088
      %8969 = vmatpush.bf16.msra.mxu0 %v6080
      %8970 = vmatpush.bf16.msra.mxu0 %v6072
      %8971 = vmatpush.bf16.msra.mxu0 %v6064
      %8972 = vmatpush.bf16.msra.mxu0 %v6056
      %8973 = vmatpush.bf16.msra.mxu0 %v6048
      %8974 = vmatpush.bf16.msra.mxu0 %v6040
      %8975 = vmatpush.bf16.msra.mxu0 %v6032
      %8976 = vmatmul.bf16.gmra.mxu0 %v1202
      %v8977 = vpop.f32.mrf.mxu0
      %v8978 = vadd.f32 %v8965, %v8977
      %v8979 = vpop.f32.mrf.mxu0
      %8980 = vdwg.mxu0
      %8981 = vmatpush.bf16.msra.mxu0 %v6152
      %8982 = vmatpush.bf16.msra.mxu0 %v6144
      %8983 = vmatpush.bf16.msra.mxu0 %v6136
      %8984 = vmatpush.bf16.msra.mxu0 %v6128
      %8985 = vmatpush.bf16.msra.mxu0 %v6120
      %8986 = vmatpush.bf16.msra.mxu0 %v6112
      %8987 = vmatpush.bf16.msra.mxu0 %v6104
      %8988 = vmatpush.bf16.msra.mxu0 %v6096
      %8989 = vmatmul.bf16.gmra.mxu0 %v1203
      %v8990 = vpop.f32.mrf.mxu0
      %v8991 = vadd.f32 %v8978, %v8990
      %v8992 = vpop.f32.mrf.mxu0
      %8993 = vdwg.mxu0
      %8994 = vmatpush.bf16.msra.mxu0 %v6216
      %8995 = vmatpush.bf16.msra.mxu0 %v6208
      %8996 = vmatpush.bf16.msra.mxu0 %v6200
      %8997 = vmatpush.bf16.msra.mxu0 %v6192
      %8998 = vmatpush.bf16.msra.mxu0 %v6184
      %8999 = vmatpush.bf16.msra.mxu0 %v6176
      %9000 = vmatpush.bf16.msra.mxu0 %v6168
      %9001 = vmatpush.bf16.msra.mxu0 %v6160
      %9002 = vmatmul.bf16.gmra.mxu0 %v1204
      %v9003 = vpop.f32.mrf.mxu0
      %v9004 = vadd.f32 %v8991, %v9003
      %v9005 = vpop.f32.mrf.mxu0
      %9006 = vdwg.mxu0
      %9007 = vmatpush.bf16.msra.mxu0 %v6280
      %9008 = vmatpush.bf16.msra.mxu0 %v6272
      %9009 = vmatpush.bf16.msra.mxu0 %v6264
      %9010 = vmatpush.bf16.msra.mxu0 %v6256
      %9011 = vmatpush.bf16.msra.mxu0 %v6248
      %9012 = vmatpush.bf16.msra.mxu0 %v6240
      %9013 = vmatpush.bf16.msra.mxu0 %v6232
      %9014 = vmatpush.bf16.msra.mxu0 %v6224
      %9015 = vmatmul.bf16.gmra.mxu0 %v1205
      %v9016 = vpop.f32.mrf.mxu0
      %v9017 = vadd.f32 %v9004, %v9016
      %v9018 = vpop.f32.mrf.mxu0
      %9019 = vdwg.mxu0
      %9020 = vmatpush.bf16.msra.mxu0 %v6344
      %9021 = vmatpush.bf16.msra.mxu0 %v6336
      %9022 = vmatpush.bf16.msra.mxu0 %v6328
      %9023 = vmatpush.bf16.msra.mxu0 %v6320
      %9024 = vmatpush.bf16.msra.mxu0 %v6312
      %9025 = vmatpush.bf16.msra.mxu0 %v6304
      %9026 = vmatpush.bf16.msra.mxu0 %v6296
      %9027 = vmatpush.bf16.msra.mxu0 %v6288
      %9028 = vmatmul.bf16.gmra.mxu0 %v1206
      %v9029 = vpop.f32.mrf.mxu0
      %v9030 = vadd.f32 %v9017, %v9029
      %v9031 = vpop.f32.mrf.mxu0
      %9032 = vdwg.mxu0
      %v9033 = vmax.f32 %v7574, 0.0
      %v9034 = vmax.f32 %v7782, 0.0
      %v9035 = vmax.f32 %v7990, 0.0
      %v9036 = vmax.f32 %v8198, 0.0
      %v9037 = vmax.f32 %v8406, 0.0
      %v9038 = vmax.f32 %v8614, 0.0
      %v9039 = vmax.f32 %v8822, 0.0
      %v9040 = vmax.f32 %v9030, 0.0
      %v9041 = vpack.c.bf16 %v9033, %v9033
      %v9042 = vpack.c.bf16 %v9034, %v9034
      %v9043 = vpack.c.bf16 %v9035, %v9035
      %v9044 = vpack.c.bf16 %v9036, %v9036
      %v9045 = vpack.c.bf16 %v9037, %v9037
      %v9046 = vpack.c.bf16 %v9038, %v9038
      %v9047 = vpack.c.bf16 %v9039, %v9039
      %v9048 = vpack.c.bf16 %v9040, %v9040
      %v9049 = vld [vmem:[#allocation12] sm:$0xf]
      %v9050 = vld [vmem:[#allocation12 + $0x4] sm:$0xf]
      %v9051 = vld [vmem:[#allocation12 + $0x8] sm:$0xf]
      %v9052 = vld [vmem:[#allocation12 + $0xc] sm:$0xf]
      %v9053 = vld [vmem:[#allocation12 + $0x10] sm:$0xf]
      %v9054 = vld [vmem:[#allocation12 + $0x14] sm:$0xf]
      %v9055 = vld [vmem:[#allocation12 + $0x18] sm:$0xf]
      %v9056 = vld [vmem:[#allocation12 + $0x1c] sm:$0xf]
      %v9057 = vld [vmem:[#allocation12 + $0x20] sm:$0xf]
      %v9058 = vld [vmem:[#allocation12 + $0x24] sm:$0xf]
      %v9059 = vld [vmem:[#allocation12 + $0x28] sm:$0xf]
      %v9060 = vld [vmem:[#allocation12 + $0x2c] sm:$0xf]
      %v9061 = vld [vmem:[#allocation12 + $0x30] sm:$0xf]
      %v9062 = vld [vmem:[#allocation12 + $0x34] sm:$0xf]
      %v9063 = vld [vmem:[#allocation12 + $0x38] sm:$0xf]
      %v9064 = vld [vmem:[#allocation12 + $0x3c] sm:$0xf]
      %v9065 = vld [vmem:[#allocation12 + $0x40] sm:$0xf]
      %v9066 = vld [vmem:[#allocation12 + $0x44] sm:$0xf]
      %v9067 = vld [vmem:[#allocation12 + $0x48] sm:$0xf]
      %v9068 = vld [vmem:[#allocation12 + $0x4c] sm:$0xf]
      %v9069 = vld [vmem:[#allocation12 + $0x50] sm:$0xf]
      %v9070 = vld [vmem:[#allocation12 + $0x54] sm:$0xf]
      %v9071 = vld [vmem:[#allocation12 + $0x58] sm:$0xf]
      %v9072 = vld [vmem:[#allocation12 + $0x5c] sm:$0xf]
      %v9073 = vld [vmem:[#allocation12 + $0x60] sm:$0xf]
      %v9074 = vld [vmem:[#allocation12 + $0x64] sm:$0xf]
      %v9075 = vld [vmem:[#allocation12 + $0x68] sm:$0xf]
      %v9076 = vld [vmem:[#allocation12 + $0x6c] sm:$0xf]
      %v9077 = vld [vmem:[#allocation12 + $0x70] sm:$0xf]
      %v9078 = vld [vmem:[#allocation12 + $0x74] sm:$0xf]
      %v9079 = vld [vmem:[#allocation12 + $0x78] sm:$0xf]
      %v9080 = vld [vmem:[#allocation12 + $0x7c] sm:$0xf]
      %v9081 = vld [vmem:[#allocation12 + $0x80] sm:$0xf]
      %v9082 = vld [vmem:[#allocation12 + $0x84] sm:$0xf]
      %v9083 = vld [vmem:[#allocation12 + $0x88] sm:$0xf]
      %v9084 = vld [vmem:[#allocation12 + $0x8c] sm:$0xf]
      %v9085 = vld [vmem:[#allocation12 + $0x90] sm:$0xf]
      %v9086 = vld [vmem:[#allocation12 + $0x94] sm:$0xf]
      %v9087 = vld [vmem:[#allocation12 + $0x98] sm:$0xf]
      %v9088 = vld [vmem:[#allocation12 + $0x9c] sm:$0xf]
      %v9089 = vld [vmem:[#allocation12 + $0xa0] sm:$0xf]
      %v9090 = vld [vmem:[#allocation12 + $0xa4] sm:$0xf]
      %v9091 = vld [vmem:[#allocation12 + $0xa8] sm:$0xf]
      %v9092 = vld [vmem:[#allocation12 + $0xac] sm:$0xf]
      %v9093 = vld [vmem:[#allocation12 + $0xb0] sm:$0xf]
      %v9094 = vld [vmem:[#allocation12 + $0xb4] sm:$0xf]
      %v9095 = vld [vmem:[#allocation12 + $0xb8] sm:$0xf]
      %v9096 = vld [vmem:[#allocation12 + $0xbc] sm:$0xf]
      %v9097 = vld [vmem:[#allocation12 + $0xc0] sm:$0xf]
      %v9098 = vld [vmem:[#allocation12 + $0xc4] sm:$0xf]
      %v9099 = vld [vmem:[#allocation12 + $0xc8] sm:$0xf]
      %v9100 = vld [vmem:[#allocation12 + $0xcc] sm:$0xf]
      %v9101 = vld [vmem:[#allocation12 + $0xd0] sm:$0xf]
      %v9102 = vld [vmem:[#allocation12 + $0xd4] sm:$0xf]
      %v9103 = vld [vmem:[#allocation12 + $0xd8] sm:$0xf]
      %v9104 = vld [vmem:[#allocation12 + $0xdc] sm:$0xf]
      %v9105 = vld [vmem:[#allocation12 + $0xe0] sm:$0xf]
      %v9106 = vld [vmem:[#allocation12 + $0xe4] sm:$0xf]
      %v9107 = vld [vmem:[#allocation12 + $0xe8] sm:$0xf]
      %v9108 = vld [vmem:[#allocation12 + $0xec] sm:$0xf]
      %v9109 = vld [vmem:[#allocation12 + $0xf0] sm:$0xf]
      %v9110 = vld [vmem:[#allocation12 + $0xf4] sm:$0xf]
      %v9111 = vld [vmem:[#allocation12 + $0xf8] sm:$0xf]
      %v9112 = vld [vmem:[#allocation12 + $0xfc] sm:$0xf]
      %v9113 = vld [vmem:[#allocation12 + $0x100] sm:$0xf]
      %v9114 = vld [vmem:[#allocation12 + $0x104] sm:$0xf]
      %v9115 = vld [vmem:[#allocation12 + $0x108] sm:$0xf]
      %v9116 = vld [vmem:[#allocation12 + $0x10c] sm:$0xf]
      %v9117 = vld [vmem:[#allocation12 + $0x110] sm:$0xf]
      %v9118 = vld [vmem:[#allocation12 + $0x114] sm:$0xf]
      %v9119 = vld [vmem:[#allocation12 + $0x118] sm:$0xf]
      %v9120 = vld [vmem:[#allocation12 + $0x11c] sm:$0xf]
      %v9121 = vld [vmem:[#allocation12 + $0x120] sm:$0xf]
      %v9122 = vld [vmem:[#allocation12 + $0x124] sm:$0xf]
      %v9123 = vld [vmem:[#allocation12 + $0x128] sm:$0xf]
      %v9124 = vld [vmem:[#allocation12 + $0x12c] sm:$0xf]
      %v9125 = vld [vmem:[#allocation12 + $0x130] sm:$0xf]
      %v9126 = vld [vmem:[#allocation12 + $0x134] sm:$0xf]
      %v9127 = vld [vmem:[#allocation12 + $0x138] sm:$0xf]
      %v9128 = vld [vmem:[#allocation12 + $0x13c] sm:$0xf]
      %v9129 = vld [vmem:[#allocation12 + $0x140] sm:$0xf]
      %v9130 = vld [vmem:[#allocation12 + $0x144] sm:$0xf]
      %v9131 = vld [vmem:[#allocation12 + $0x148] sm:$0xf]
      %v9132 = vld [vmem:[#allocation12 + $0x14c] sm:$0xf]
      %v9133 = vld [vmem:[#allocation12 + $0x150] sm:$0xf]
      %v9134 = vld [vmem:[#allocation12 + $0x154] sm:$0xf]
      %v9135 = vld [vmem:[#allocation12 + $0x158] sm:$0xf]
      %v9136 = vld [vmem:[#allocation12 + $0x15c] sm:$0xf]
      %v9137 = vld [vmem:[#allocation12 + $0x160] sm:$0xf]
      %v9138 = vld [vmem:[#allocation12 + $0x164] sm:$0xf]
      %v9139 = vld [vmem:[#allocation12 + $0x168] sm:$0xf]
      %v9140 = vld [vmem:[#allocation12 + $0x16c] sm:$0xf]
      %v9141 = vld [vmem:[#allocation12 + $0x170] sm:$0xf]
      %v9142 = vld [vmem:[#allocation12 + $0x174] sm:$0xf]
      %v9143 = vld [vmem:[#allocation12 + $0x178] sm:$0xf]
      %v9144 = vld [vmem:[#allocation12 + $0x17c] sm:$0xf]
      %v9145 = vld [vmem:[#allocation12 + $0x180] sm:$0xf]
      %v9146 = vld [vmem:[#allocation12 + $0x184] sm:$0xf]
      %v9147 = vld [vmem:[#allocation12 + $0x188] sm:$0xf]
      %v9148 = vld [vmem:[#allocation12 + $0x18c] sm:$0xf]
      %v9149 = vld [vmem:[#allocation12 + $0x190] sm:$0xf]
      %v9150 = vld [vmem:[#allocation12 + $0x194] sm:$0xf]
      %v9151 = vld [vmem:[#allocation12 + $0x198] sm:$0xf]
      %v9152 = vld [vmem:[#allocation12 + $0x19c] sm:$0xf]
      %v9153 = vld [vmem:[#allocation12 + $0x1a0] sm:$0xf]
      %v9154 = vld [vmem:[#allocation12 + $0x1a4] sm:$0xf]
      %v9155 = vld [vmem:[#allocation12 + $0x1a8] sm:$0xf]
      %v9156 = vld [vmem:[#allocation12 + $0x1ac] sm:$0xf]
      %v9157 = vld [vmem:[#allocation12 + $0x1b0] sm:$0xf]
      %v9158 = vld [vmem:[#allocation12 + $0x1b4] sm:$0xf]
      %v9159 = vld [vmem:[#allocation12 + $0x1b8] sm:$0xf]
      %v9160 = vld [vmem:[#allocation12 + $0x1bc] sm:$0xf]
      %v9161 = vld [vmem:[#allocation12 + $0x1c0] sm:$0xf]
      %v9162 = vld [vmem:[#allocation12 + $0x1c4] sm:$0xf]
      %v9163 = vld [vmem:[#allocation12 + $0x1c8] sm:$0xf]
      %v9164 = vld [vmem:[#allocation12 + $0x1cc] sm:$0xf]
      %v9165 = vld [vmem:[#allocation12 + $0x1d0] sm:$0xf]
      %v9166 = vld [vmem:[#allocation12 + $0x1d4] sm:$0xf]
      %v9167 = vld [vmem:[#allocation12 + $0x1d8] sm:$0xf]
      %v9168 = vld [vmem:[#allocation12 + $0x1dc] sm:$0xf]
      %v9169 = vld [vmem:[#allocation12 + $0x1e0] sm:$0xf]
      %v9170 = vld [vmem:[#allocation12 + $0x1e4] sm:$0xf]
      %v9171 = vld [vmem:[#allocation12 + $0x1e8] sm:$0xf]
      %v9172 = vld [vmem:[#allocation12 + $0x1ec] sm:$0xf]
      %v9173 = vld [vmem:[#allocation12 + $0x1f0] sm:$0xf]
      %v9174 = vld [vmem:[#allocation12 + $0x1f4] sm:$0xf]
      %v9175 = vld [vmem:[#allocation12 + $0x1f8] sm:$0xf]
      %v9176 = vld [vmem:[#allocation12 + $0x1fc] sm:$0xf]
      %v9177 = vld [vmem:[#allocation14] sm:$0x1]
      %v9179 = vperm.slane %v9177, 0
      %v9309 = vunpack.c.l.b16 %v9049
      %v9310 = vunpack.c.l.b16 %v9050
      %v9311 = vunpack.c.l.b16 %v9051
      %v9312 = vunpack.c.l.b16 %v9052
      %v9313 = vunpack.c.l.b16 %v9053
      %v9314 = vunpack.c.l.b16 %v9054
      %v9315 = vunpack.c.l.b16 %v9055
      %v9316 = vunpack.c.l.b16 %v9056
      %v9317 = vunpack.c.l.b16 %v9057
      %v9318 = vunpack.c.l.b16 %v9058
      %v9319 = vunpack.c.l.b16 %v9059
      %v9320 = vunpack.c.l.b16 %v9060
      %v9321 = vunpack.c.l.b16 %v9061
      %v9322 = vunpack.c.l.b16 %v9062
      %v9323 = vunpack.c.l.b16 %v9063
      %v9324 = vunpack.c.l.b16 %v9064
      %v9325 = vunpack.c.l.b16 %v9065
      %v9326 = vunpack.c.l.b16 %v9066
      %v9327 = vunpack.c.l.b16 %v9067
      %v9328 = vunpack.c.l.b16 %v9068
      %v9329 = vunpack.c.l.b16 %v9069
      %v9330 = vunpack.c.l.b16 %v9070
      %v9331 = vunpack.c.l.b16 %v9071
      %v9332 = vunpack.c.l.b16 %v9072
      %v9333 = vunpack.c.l.b16 %v9073
      %v9334 = vunpack.c.l.b16 %v9074
      %v9335 = vunpack.c.l.b16 %v9075
      %v9336 = vunpack.c.l.b16 %v9076
      %v9337 = vunpack.c.l.b16 %v9077
      %v9338 = vunpack.c.l.b16 %v9078
      %v9339 = vunpack.c.l.b16 %v9079
      %v9340 = vunpack.c.l.b16 %v9080
      %v9341 = vunpack.c.l.b16 %v9081
      %v9342 = vunpack.c.l.b16 %v9082
      %v9343 = vunpack.c.l.b16 %v9083
      %v9344 = vunpack.c.l.b16 %v9084
      %v9345 = vunpack.c.l.b16 %v9085
      %v9346 = vunpack.c.l.b16 %v9086
      %v9347 = vunpack.c.l.b16 %v9087
      %v9348 = vunpack.c.l.b16 %v9088
      %v9349 = vunpack.c.l.b16 %v9089
      %v9350 = vunpack.c.l.b16 %v9090
      %v9351 = vunpack.c.l.b16 %v9091
      %v9352 = vunpack.c.l.b16 %v9092
      %v9353 = vunpack.c.l.b16 %v9093
      %v9354 = vunpack.c.l.b16 %v9094
      %v9355 = vunpack.c.l.b16 %v9095
      %v9356 = vunpack.c.l.b16 %v9096
      %v9357 = vunpack.c.l.b16 %v9097
      %v9358 = vunpack.c.l.b16 %v9098
      %v9359 = vunpack.c.l.b16 %v9099
      %v9360 = vunpack.c.l.b16 %v9100
      %v9361 = vunpack.c.l.b16 %v9101
      %v9362 = vunpack.c.l.b16 %v9102
      %v9363 = vunpack.c.l.b16 %v9103
      %v9364 = vunpack.c.l.b16 %v9104
      %v9365 = vunpack.c.l.b16 %v9105
      %v9366 = vunpack.c.l.b16 %v9106
      %v9367 = vunpack.c.l.b16 %v9107
      %v9368 = vunpack.c.l.b16 %v9108
      %v9369 = vunpack.c.l.b16 %v9109
      %v9370 = vunpack.c.l.b16 %v9110
      %v9371 = vunpack.c.l.b16 %v9111
      %v9372 = vunpack.c.l.b16 %v9112
      %v9373 = vunpack.c.l.b16 %v9113
      %v9374 = vunpack.c.l.b16 %v9114
      %v9375 = vunpack.c.l.b16 %v9115
      %v9376 = vunpack.c.l.b16 %v9116
      %v9377 = vunpack.c.l.b16 %v9117
      %v9378 = vunpack.c.l.b16 %v9118
      %v9379 = vunpack.c.l.b16 %v9119
      %v9380 = vunpack.c.l.b16 %v9120
      %v9381 = vunpack.c.l.b16 %v9121
      %v9382 = vunpack.c.l.b16 %v9122
      %v9383 = vunpack.c.l.b16 %v9123
      %v9384 = vunpack.c.l.b16 %v9124
      %v9385 = vunpack.c.l.b16 %v9125
      %v9386 = vunpack.c.l.b16 %v9126
      %v9387 = vunpack.c.l.b16 %v9127
      %v9388 = vunpack.c.l.b16 %v9128
      %v9389 = vunpack.c.l.b16 %v9129
      %v9390 = vunpack.c.l.b16 %v9130
      %v9391 = vunpack.c.l.b16 %v9131
      %v9392 = vunpack.c.l.b16 %v9132
      %v9393 = vunpack.c.l.b16 %v9133
      %v9394 = vunpack.c.l.b16 %v9134
      %v9395 = vunpack.c.l.b16 %v9135
      %v9396 = vunpack.c.l.b16 %v9136
      %v9397 = vunpack.c.l.b16 %v9137
      %v9398 = vunpack.c.l.b16 %v9138
      %v9399 = vunpack.c.l.b16 %v9139
      %v9400 = vunpack.c.l.b16 %v9140
      %v9401 = vunpack.c.l.b16 %v9141
      %v9402 = vunpack.c.l.b16 %v9142
      %v9403 = vunpack.c.l.b16 %v9143
      %v9404 = vunpack.c.l.b16 %v9144
      %v9405 = vunpack.c.l.b16 %v9145
      %v9406 = vunpack.c.l.b16 %v9146
      %v9407 = vunpack.c.l.b16 %v9147
      %v9408 = vunpack.c.l.b16 %v9148
      %v9409 = vunpack.c.l.b16 %v9149
      %v9410 = vunpack.c.l.b16 %v9150
      %v9411 = vunpack.c.l.b16 %v9151
      %v9412 = vunpack.c.l.b16 %v9152
      %v9413 = vunpack.c.l.b16 %v9153
      %v9414 = vunpack.c.l.b16 %v9154
      %v9415 = vunpack.c.l.b16 %v9155
      %v9416 = vunpack.c.l.b16 %v9156
      %v9417 = vunpack.c.l.b16 %v9157
      %v9418 = vunpack.c.l.b16 %v9158
      %v9419 = vunpack.c.l.b16 %v9159
      %v9420 = vunpack.c.l.b16 %v9160
      %v9421 = vunpack.c.l.b16 %v9161
      %v9422 = vunpack.c.l.b16 %v9162
      %v9423 = vunpack.c.l.b16 %v9163
      %v9424 = vunpack.c.l.b16 %v9164
      %v9425 = vunpack.c.l.b16 %v9165
      %v9426 = vunpack.c.l.b16 %v9166
      %v9427 = vunpack.c.l.b16 %v9167
      %v9428 = vunpack.c.l.b16 %v9168
      %v9429 = vunpack.c.l.b16 %v9169
      %v9430 = vunpack.c.l.b16 %v9170
      %v9431 = vunpack.c.l.b16 %v9171
      %v9432 = vunpack.c.l.b16 %v9172
      %v9433 = vunpack.c.l.b16 %v9173
      %v9434 = vunpack.c.l.b16 %v9174
      %v9435 = vunpack.c.l.b16 %v9175
      %v9436 = vunpack.c.l.b16 %v9176
      %v9437 = vpack.c.b16 %v9310, %v9309
      %v9438 = vpack.c.b16 %v9312, %v9311
      %v9439 = vpack.c.b16 %v9314, %v9313
      %v9440 = vpack.c.b16 %v9316, %v9315
      %v9441 = vpack.c.b16 %v9318, %v9317
      %v9442 = vpack.c.b16 %v9320, %v9319
      %v9443 = vpack.c.b16 %v9322, %v9321
      %v9444 = vpack.c.b16 %v9324, %v9323
      %v9445 = vpack.c.b16 %v9326, %v9325
      %v9446 = vpack.c.b16 %v9328, %v9327
      %v9447 = vpack.c.b16 %v9330, %v9329
      %v9448 = vpack.c.b16 %v9332, %v9331
      %v9449 = vpack.c.b16 %v9334, %v9333
      %v9450 = vpack.c.b16 %v9336, %v9335
      %v9451 = vpack.c.b16 %v9338, %v9337
      %v9452 = vpack.c.b16 %v9340, %v9339
      %v9453 = vpack.c.b16 %v9342, %v9341
      %v9454 = vpack.c.b16 %v9344, %v9343
      %v9455 = vpack.c.b16 %v9346, %v9345
      %v9456 = vpack.c.b16 %v9348, %v9347
      %v9457 = vpack.c.b16 %v9350, %v9349
      %v9458 = vpack.c.b16 %v9352, %v9351
      %v9459 = vpack.c.b16 %v9354, %v9353
      %v9460 = vpack.c.b16 %v9356, %v9355
      %v9461 = vpack.c.b16 %v9358, %v9357
      %v9462 = vpack.c.b16 %v9360, %v9359
      %v9463 = vpack.c.b16 %v9362, %v9361
      %v9464 = vpack.c.b16 %v9364, %v9363
      %v9465 = vpack.c.b16 %v9366, %v9365
      %v9466 = vpack.c.b16 %v9368, %v9367
      %v9467 = vpack.c.b16 %v9370, %v9369
      %v9468 = vpack.c.b16 %v9372, %v9371
      %v9469 = vpack.c.b16 %v9374, %v9373
      %v9470 = vpack.c.b16 %v9376, %v9375
      %v9471 = vpack.c.b16 %v9378, %v9377
      %v9472 = vpack.c.b16 %v9380, %v9379
      %v9473 = vpack.c.b16 %v9382, %v9381
      %v9474 = vpack.c.b16 %v9384, %v9383
      %v9475 = vpack.c.b16 %v9386, %v9385
      %v9476 = vpack.c.b16 %v9388, %v9387
      %v9477 = vpack.c.b16 %v9390, %v9389
      %v9478 = vpack.c.b16 %v9392, %v9391
      %v9479 = vpack.c.b16 %v9394, %v9393
      %v9480 = vpack.c.b16 %v9396, %v9395
      %v9481 = vpack.c.b16 %v9398, %v9397
      %v9482 = vpack.c.b16 %v9400, %v9399
      %v9483 = vpack.c.b16 %v9402, %v9401
      %v9484 = vpack.c.b16 %v9404, %v9403
      %v9485 = vpack.c.b16 %v9406, %v9405
      %v9486 = vpack.c.b16 %v9408, %v9407
      %v9487 = vpack.c.b16 %v9410, %v9409
      %v9488 = vpack.c.b16 %v9412, %v9411
      %v9489 = vpack.c.b16 %v9414, %v9413
      %v9490 = vpack.c.b16 %v9416, %v9415
      %v9491 = vpack.c.b16 %v9418, %v9417
      %v9492 = vpack.c.b16 %v9420, %v9419
      %v9493 = vpack.c.b16 %v9422, %v9421
      %v9494 = vpack.c.b16 %v9424, %v9423
      %v9495 = vpack.c.b16 %v9426, %v9425
      %v9496 = vpack.c.b16 %v9428, %v9427
      %v9497 = vpack.c.b16 %v9430, %v9429
      %v9498 = vpack.c.b16 %v9432, %v9431
      %v9499 = vpack.c.b16 %v9434, %v9433
      %v9500 = vpack.c.b16 %v9436, %v9435
      %9565 = vmatpush.bf16.msra.mxu0 %v9444
      %9566 = vmatpush.bf16.msra.mxu0 %v9443
      %9567 = vmatpush.bf16.msra.mxu0 %v9442
      %9568 = vmatpush.bf16.msra.mxu0 %v9441
      %9569 = vmatpush.bf16.msra.mxu0 %v9440
      %9570 = vmatpush.bf16.msra.mxu0 %v9439
      %9571 = vmatpush.bf16.msra.mxu0 %v9438
      %9572 = vmatpush.bf16.msra.mxu0 %v9437
      %9573 = vmatmul.bf16.gmra.mxu0 %v9041
      %v9574 = vpop.f32.mrf.mxu0
      %v9575 = vadd.f32 %v9179, %v9574
      %v9576 = vpop.f32.mrf.mxu0
      %9577 = vdwg.mxu0
      %9578 = vmatpush.bf16.msra.mxu0 %v9452
      %9579 = vmatpush.bf16.msra.mxu0 %v9451
      %9580 = vmatpush.bf16.msra.mxu0 %v9450
      %9581 = vmatpush.bf16.msra.mxu0 %v9449
      %9582 = vmatpush.bf16.msra.mxu0 %v9448
      %9583 = vmatpush.bf16.msra.mxu0 %v9447
      %9584 = vmatpush.bf16.msra.mxu0 %v9446
      %9585 = vmatpush.bf16.msra.mxu0 %v9445
      %9586 = vmatmul.bf16.gmra.mxu0 %v9042
      %v9587 = vpop.f32.mrf.mxu0
      %v9588 = vadd.f32 %v9575, %v9587
      %v9589 = vpop.f32.mrf.mxu0
      %9590 = vdwg.mxu0
      %9591 = vmatpush.bf16.msra.mxu0 %v9460
      %9592 = vmatpush.bf16.msra.mxu0 %v9459
      %9593 = vmatpush.bf16.msra.mxu0 %v9458
      %9594 = vmatpush.bf16.msra.mxu0 %v9457
      %9595 = vmatpush.bf16.msra.mxu0 %v9456
      %9596 = vmatpush.bf16.msra.mxu0 %v9455
      %9597 = vmatpush.bf16.msra.mxu0 %v9454
      %9598 = vmatpush.bf16.msra.mxu0 %v9453
      %9599 = vmatmul.bf16.gmra.mxu0 %v9043
      %v9600 = vpop.f32.mrf.mxu0
      %v9601 = vadd.f32 %v9588, %v9600
      %v9602 = vpop.f32.mrf.mxu0
      %9603 = vdwg.mxu0
      %9604 = vmatpush.bf16.msra.mxu0 %v9468
      %9605 = vmatpush.bf16.msra.mxu0 %v9467
      %9606 = vmatpush.bf16.msra.mxu0 %v9466
      %9607 = vmatpush.bf16.msra.mxu0 %v9465
      %9608 = vmatpush.bf16.msra.mxu0 %v9464
      %9609 = vmatpush.bf16.msra.mxu0 %v9463
      %9610 = vmatpush.bf16.msra.mxu0 %v9462
      %9611 = vmatpush.bf16.msra.mxu0 %v9461
      %9612 = vmatmul.bf16.gmra.mxu0 %v9044
      %v9613 = vpop.f32.mrf.mxu0
      %v9614 = vadd.f32 %v9601, %v9613
      %v9615 = vpop.f32.mrf.mxu0
      %9616 = vdwg.mxu0
      %9617 = vmatpush.bf16.msra.mxu0 %v9476
      %9618 = vmatpush.bf16.msra.mxu0 %v9475
      %9619 = vmatpush.bf16.msra.mxu0 %v9474
      %9620 = vmatpush.bf16.msra.mxu0 %v9473
      %9621 = vmatpush.bf16.msra.mxu0 %v9472
      %9622 = vmatpush.bf16.msra.mxu0 %v9471
      %9623 = vmatpush.bf16.msra.mxu0 %v9470
      %9624 = vmatpush.bf16.msra.mxu0 %v9469
      %9625 = vmatmul.bf16.gmra.mxu0 %v9045
      %v9626 = vpop.f32.mrf.mxu0
      %v9627 = vadd.f32 %v9614, %v9626
      %v9628 = vpop.f32.mrf.mxu0
      %9629 = vdwg.mxu0
      %9630 = vmatpush.bf16.msra.mxu0 %v9484
      %9631 = vmatpush.bf16.msra.mxu0 %v9483
      %9632 = vmatpush.bf16.msra.mxu0 %v9482
      %9633 = vmatpush.bf16.msra.mxu0 %v9481
      %9634 = vmatpush.bf16.msra.mxu0 %v9480
      %9635 = vmatpush.bf16.msra.mxu0 %v9479
      %9636 = vmatpush.bf16.msra.mxu0 %v9478
      %9637 = vmatpush.bf16.msra.mxu0 %v9477
      %9638 = vmatmul.bf16.gmra.mxu0 %v9046
      %v9639 = vpop.f32.mrf.mxu0
      %v9640 = vadd.f32 %v9627, %v9639
      %v9641 = vpop.f32.mrf.mxu0
      %9642 = vdwg.mxu0
      %9643 = vmatpush.bf16.msra.mxu0 %v9492
      %9644 = vmatpush.bf16.msra.mxu0 %v9491
      %9645 = vmatpush.bf16.msra.mxu0 %v9490
      %9646 = vmatpush.bf16.msra.mxu0 %v9489
      %9647 = vmatpush.bf16.msra.mxu0 %v9488
      %9648 = vmatpush.bf16.msra.mxu0 %v9487
      %9649 = vmatpush.bf16.msra.mxu0 %v9486
      %9650 = vmatpush.bf16.msra.mxu0 %v9485
      %9651 = vmatmul.bf16.gmra.mxu0 %v9047
      %v9652 = vpop.f32.mrf.mxu0
      %v9653 = vadd.f32 %v9640, %v9652
      %v9654 = vpop.f32.mrf.mxu0
      %9655 = vdwg.mxu0
      %9656 = vmatpush.bf16.msra.mxu0 %v9500
      %9657 = vmatpush.bf16.msra.mxu0 %v9499
      %9658 = vmatpush.bf16.msra.mxu0 %v9498
      %9659 = vmatpush.bf16.msra.mxu0 %v9497
      %9660 = vmatpush.bf16.msra.mxu0 %v9496
      %9661 = vmatpush.bf16.msra.mxu0 %v9495
      %9662 = vmatpush.bf16.msra.mxu0 %v9494
      %9663 = vmatpush.bf16.msra.mxu0 %v9493
      %9664 = vmatmul.bf16.gmra.mxu0 %v9048
      %v9665 = vpop.f32.mrf.mxu0
      %v9666 = vadd.f32 %v9653, %v9665
      %v9667 = vpop.f32.mrf.mxu0
      %9668 = vdwg.mxu0
      %9669 = vst [vmem:[#allocation15] sm:$0x3] %v9666
    $region65: #{tpu_custom_call.1} parent=1 // pred_fallthru
      _
    // Predicated region
    $region66: #{tpu_custom_call.1} parent=1 // pred_check
      _
    $region67: #{tpu_custom_call.1} parent=1 // pred_check_branch
      %9671 = sbr.rel (0) target = $region69
    $region68: #{tpu_custom_call.1} parent=1 // pred_region
      %9673 = vsyncadd [#allocation5], 0
      %s9675 = sshll.u32 [#allocation15], 4
      %s9676 = int_to_ptr.vmem [resolvable:$true] %s9675
      %s9677 = sshll.u32 %s7, 4
      %s9678 = int_to_ptr.hbm [resolvable:$true] %s9677
      %9680 = dma.vmem_to_hbm [thread:$0]  %s9676, 32, %s9678, [#allocation5]
    $region69: #{tpu_custom_call.1} parent=1 // pred_fallthru
      _
    // Predicated region
    $region70: #{tpu_custom_call.1} parent=1 // pred_check
      _
    $region71: #{tpu_custom_call.1} parent=1 // pred_check_branch
      %9682 = sbr.rel (0) target = $region73
    $region72: #{tpu_custom_call.1} parent=1 // pred_region
      %9684 = dma.done [#allocation5], 32
    $region73: #{tpu_custom_call.1} parent=1 // pred_fallthru
      _
    %9685 = vsyncpa [#allocation4], 1
    %9686 = vsyncpa [#allocation7], 1
    %9687 = vsyncpa [#allocation10], 1
    %9688 = vsyncpa [#allocation13], 1
    %9689 = vsyncpa [#allocation5], 1

</llo_original>
